<compile_context>
chip_gen: v7x
topology: tpu7x:2x2x1
jax: 0.10.0
libtpu: 0.0.40
codegen_flags: <defaults>
</compile_context>

<pallas_src>
import math
from functools import partial

import jax
import jax.numpy as jnp
from jax import lax
from jax.experimental import pallas as pl
from jax.experimental.pallas import tpu as pltpu


# ---------------------------------------------------------------------------
# Structured operands: layer := relu(bias + sum_kh (A_kh @ X) @ B_kh) on a
# 2-D channel-minor slab X[row, col*cin + ci].
# ---------------------------------------------------------------------------
def _encoder_operands(w, b, h_in, w_in, *, k, stride=2):
    """Conv2dSamePad(k, stride) + Conv2d(cin, cout, k, stride) + ReLU.
    w: (cout, cin, k, k) PyTorch Conv2d layout, b: (cout,)."""
    cout, cin = int(w.shape[0]), int(w.shape[1])
    oh = -(-h_in // stride)
    ow = -(-w_in // stride)
    pad_h = (oh - 1) * stride + k - h_in
    pad_w = (ow - 1) * stride + k - w_in
    pt = pad_h // 2            # TF 'SAME': the extra pixel goes bottom/right
    pl_ = pad_w // 2
    # A[kh, i, h] = [h == stride*i + kh - pt]   (out-of-range -> zero pad)
    rows = (stride * jnp.arange(oh)[None, :, None]
            + jnp.arange(k)[:, None, None] - pt)
    A = (rows == jnp.arange(h_in)[None, None, :]).astype(jnp.float32)
    # sel[kw, j, n] = [j == stride*n + kw - pl_]
    cols = (stride * jnp.arange(ow)[None, None, :]
            + jnp.arange(k)[:, None, None] - pl_)
    sel = (cols == jnp.arange(w_in)[None, :, None]).astype(jnp.float32)
    # B[kh, j*cin+ci, n*cout+co] = sum_kw sel[kw,j,n] * w[co,ci,kh,kw]
    B = jnp.einsum('wjn,oihw->hjino', sel, w).reshape(k, w_in * cin, ow * cout)
    bias_row = jnp.tile(b, ow)[None, :]                       # (1, ow*cout)
    return (A, B, bias_row), (oh, ow, cout)


def _decoder_operands(w, b, h_in, w_in, out_size, *, k, stride=2):
    """ConvTranspose2d(cin, cout, k, stride) + ConvTranspose2dSamePad + ReLU.
    w: (cin, cout, k, k) PyTorch ConvTranspose2d layout, b: (cout,)."""
    cin, cout = int(w.shape[0]), int(w.shape[1])
    th, tw = out_size
    hf = (h_in - 1) * stride + k
    wf = (w_in - 1) * stride + k
    ct = (hf - th) // 2       # SAME crop: extra row/col removed bottom/right
    cl = (wf - tw) // 2
    # A[kh, u, i] = [stride*i + kh == u + ct]
    lhs_r = (stride * jnp.arange(h_in)[None, None, :]
             + jnp.arange(k)[:, None, None])
    A = (lhs_r == (jnp.arange(th) + ct)[None, :, None]).astype(jnp.float32)
    # sel[kw, j, v] = [stride*j + kw == v + cl]
    lhs_c = (stride * jnp.arange(w_in)[None, :, None]
             + jnp.arange(k)[:, None, None])
    sel = (lhs_c == (jnp.arange(tw) + cl)[None, None, :]).astype(jnp.float32)
    # B[kh, j*cin+ci, v*cout+co] = sum_kw sel[kw,j,v] * w[ci,co,kh,kw]
    B = jnp.einsum('wjv,iohw->hjivo', sel, w).reshape(k, w_in * cin, tw * cout)
    bias_row = jnp.tile(b, tw)[None, :]                       # (1, tw*cout)
    return (A, B, bias_row), (th, tw, cout)


# ---------------------------------------------------------------------------
# Fully fused ConvAE forward (NCHW in/out).
# ---------------------------------------------------------------------------
def convae_forward(x_nchw, enc_params, dec_params, kernels, sizes):
    n, cin0, h0, w0 = x_nchw.shape
    # NCHW -> channel-minor 2-D slabs (N, H, W*C); trivial for cin0 == 1.
    x2d = jnp.transpose(x_nchw, (0, 2, 3, 1)).reshape(n, h0, w0 * cin0)

    # Per-layer structured operands (built from weights only; no per-layer
    # activation layout ops remain in the wrapper).
    ops, klist = [], []
    h, w = h0, w0
    cout = cin0
    for (wt, b), k in zip(enc_params, kernels):
        (A, B, c), (h, w, cout) = _encoder_operands(wt, b, h, w, k=k)
        ops.append((A, B, c))
        klist.append(k)
    for (wt, b), k, sz in zip(dec_params, list(reversed(kernels)), sizes):
        (A, B, c), (h, w, cout) = _decoder_operands(wt, b, h, w, tuple(sz), k=k)
        ops.append((A, B, c))
        klist.append(k)
    out_h, out_w, out_c = h, w, cout
    n_layers = len(ops)
    ks = tuple(klist)

    def kernel(*refs):
        x_ref, o_ref = refs[0], refs[-1]
        hval = x_ref[...]                                   # (rows, cols*cin)
        for li in range(n_layers):
            a_ref, b_ref, c_ref = refs[1 + 3 * li: 4 + 3 * li]
            acc = None
            for kh in range(ks[li]):
                t = jnp.dot(a_ref[kh], hval,
                            preferred_element_type=jnp.float32)
                y = jnp.dot(t, b_ref[kh],
                            preferred_element_type=jnp.float32)
                acc = y if acc is None else acc + y
            hval = jnp.maximum(acc + c_ref[...], 0.0)
        o_ref[...] = hval.astype(o_ref.dtype)

    in_arrays = [x2d]
    in_specs = [pl.BlockSpec((None, h0, w0 * cin0), lambda i: (i, 0, 0))]
    flops_per_sample = 0
    for (A, B, c) in ops:
        in_arrays += [A, B, c]
        in_specs += [pl.BlockSpec(A.shape, lambda i: (0, 0, 0)),
                     pl.BlockSpec(B.shape, lambda i: (0, 0, 0)),
                     pl.BlockSpec(c.shape, lambda i: (0, 0))]
        kk, oh_l, hin_l = A.shape
        _, kdim_l, owc_l = B.shape
        flops_per_sample += 2 * kk * oh_l * kdim_l * (hin_l + owc_l)

    itemsize = jnp.dtype(x_nchw.dtype).itemsize
    bytes_accessed = (sum(int(a.size) * a.dtype.itemsize for a in in_arrays)
                      + n * out_h * out_w * out_c * itemsize)

    out2d = pl.pallas_call(
        kernel,
        out_shape=jax.ShapeDtypeStruct((n, out_h, out_w * out_c),
                                       x_nchw.dtype),
        grid=(n,),
        in_specs=in_specs,
        out_specs=pl.BlockSpec((None, out_h, out_w * out_c),
                               lambda i: (i, 0, 0)),
        compiler_params=pltpu.CompilerParams(
            dimension_semantics=("parallel",)),
        cost_estimate=pl.CostEstimate(flops=int(flops_per_sample * n),
                                      transcendentals=0,
                                      bytes_accessed=int(bytes_accessed)),
    )(*in_arrays)

    return out2d.reshape(n, out_h, out_w, out_c).transpose(0, 3, 1, 2)


# ---------------------------------------------------------------------------
# Pure-JAX reference mirroring the PyTorch module exactly.
# ---------------------------------------------------------------------------
def _ref_forward(x, enc_params, dec_params, kernels, sizes):
    h = x
    for (w, b), k in zip(enc_params, kernels):
        _, _, hh, ww = h.shape
        oh = math.ceil(hh / 2)
        ow = math.ceil(ww / 2)
        ph = (oh - 1) * 2 + k - hh
        pw = (ow - 1) * 2 + k - ww
        pt, plf = ph // 2, pw // 2
        hp = jnp.pad(h, ((0, 0), (0, 0), (pt, ph - pt), (plf, pw - plf)))
        h = lax.conv_general_dilated(hp, w, (2, 2), 'VALID',
                                     dimension_numbers=('NCHW', 'OIHW', 'NCHW'))
        h = jnp.maximum(h + b[None, :, None, None], 0.0)
    for (w, b), k, sz in zip(dec_params, list(reversed(kernels)), sizes):
        wf = jnp.transpose(w[:, :, ::-1, ::-1], (1, 0, 2, 3))
        y = lax.conv_general_dilated(h, wf, (1, 1),
                                     [(k - 1, k - 1), (k - 1, k - 1)],
                                     lhs_dilation=(2, 2),
                                     dimension_numbers=('NCHW', 'OIHW', 'NCHW'))
        hfull, wfull = y.shape[2], y.shape[3]
        ct = (hfull - sz[0]) // 2
        cl = (wfull - sz[1]) // 2
        y = y[:, :, ct:ct + sz[0], cl:cl + sz[1]]
        h = jnp.maximum(y + b[None, :, None, None], 0.0)
    return h


if __name__ == "__main__":
    # Same configuration the yaleb ConvAE hard-codes (48x42 YaleB faces).
    channels = [1, 10, 20, 30]
    kernels = [5, 3, 3]
    sizes = [[12, 11], [24, 21], [48, 42]]

    key = jax.random.PRNGKey(0)
    keys = list(jax.random.split(key, 2 * (len(channels) - 1) * 2 + 1))

    def nxt():
        return keys.pop()

    enc_params = []
    for i in range(1, len(channels)):
        cin, cout, k = channels[i - 1], channels[i], kernels[i - 1]
        w = 0.1 * jax.random.normal(nxt(), (cout, cin, k, k), jnp.float32)
        b = 0.1 * jax.random.normal(nxt(), (cout,), jnp.float32)
        enc_params.append((w, b))

    rch = list(reversed(channels))
    rk = list(reversed(kernels))
    dec_params = []
    for i in range(len(rch) - 1):
        cin, cout, k = rch[i], rch[i + 1], rk[i]
        w = 0.1 * jax.random.normal(nxt(), (cin, cout, k, k), jnp.float32)
        b = 0.1 * jax.random.normal(nxt(), (cout,), jnp.float32)
        dec_params.append((w, b))

    x = jax.random.normal(nxt(), (2, 1, 48, 42), jnp.float32)

    fwd = jax.jit(partial(convae_forward, kernels=kernels, sizes=sizes))
    out = jax.block_until_ready(fwd(x, enc_params, dec_params))

    ref = jax.block_until_ready(
        _ref_forward(x, enc_params, dec_params, kernels, sizes))

    assert out.shape == ref.shape == (2, 1, 48, 42), (out.shape, ref.shape)
    assert jnp.allclose(out, ref, rtol=2e-2, atol=2e-2), float(
        jnp.max(jnp.abs(out - ref)))
    print("KERNEL_OK")
</pallas_src>

<mosaic_0001>
module attributes {stable_mosaic.version = 11 : i64} {
  func.func @kernel(%arg0: i32, %arg1: memref<1x48x42xf32, #tpu.memory_space<vmem>>, %arg2: memref<5x24x48xf32, #tpu.memory_space<vmem>>, %arg3: memref<5x42x210xf32, #tpu.memory_space<vmem>>, %arg4: memref<1x210xf32, #tpu.memory_space<vmem>>, %arg5: memref<3x12x24xf32, #tpu.memory_space<vmem>>, %arg6: memref<3x210x220xf32, #tpu.memory_space<vmem>>, %arg7: memref<1x220xf32, #tpu.memory_space<vmem>>, %arg8: memref<3x6x12xf32, #tpu.memory_space<vmem>>, %arg9: memref<3x220x180xf32, #tpu.memory_space<vmem>>, %arg10: memref<1x180xf32, #tpu.memory_space<vmem>>, %arg11: memref<3x12x6xf32, #tpu.memory_space<vmem>>, %arg12: memref<3x180x220xf32, #tpu.memory_space<vmem>>, %arg13: memref<1x220xf32, #tpu.memory_space<vmem>>, %arg14: memref<3x24x12xf32, #tpu.memory_space<vmem>>, %arg15: memref<3x220x210xf32, #tpu.memory_space<vmem>>, %arg16: memref<1x210xf32, #tpu.memory_space<vmem>>, %arg17: memref<5x48x24xf32, #tpu.memory_space<vmem>>, %arg18: memref<5x210x42xf32, #tpu.memory_space<vmem>>, %arg19: memref<1x42xf32, #tpu.memory_space<vmem>>, %arg20: memref<1x48x42xf32, #tpu.memory_space<vmem>>) attributes {dimension_semantics = [#tpu.dimension_semantics<parallel>], iteration_bounds = array<i64: 2>, scalar_prefetch = 0 : i64, scratch_operands = 0 : i64, tpu.core_type = #tpu.core_type<tc>, window_params = [{transform_indices = @transform_0, window_bounds = array<i64: 1, 48, 42>}, {pipeline_mode = #tpu.pipeline_mode<synchronous>, transform_indices = @transform_1, window_bounds = array<i64: 5, 24, 48>}, {pipeline_mode = #tpu.pipeline_mode<synchronous>, transform_indices = @transform_2, window_bounds = array<i64: 5, 42, 210>}, {pipeline_mode = #tpu.pipeline_mode<synchronous>, transform_indices = @transform_3, window_bounds = array<i64: 1, 210>}, {pipeline_mode = #tpu.pipeline_mode<synchronous>, transform_indices = @transform_4, window_bounds = array<i64: 3, 12, 24>}, {pipeline_mode = #tpu.pipeline_mode<synchronous>, transform_indices = @transform_5, window_bounds = array<i64: 3, 210, 220>}, {pipeline_mode = #tpu.pipeline_mode<synchronous>, transform_indices = @transform_6, window_bounds = array<i64: 1, 220>}, {pipeline_mode = #tpu.pipeline_mode<synchronous>, transform_indices = @transform_7, window_bounds = array<i64: 3, 6, 12>}, {pipeline_mode = #tpu.pipeline_mode<synchronous>, transform_indices = @transform_8, window_bounds = array<i64: 3, 220, 180>}, {pipeline_mode = #tpu.pipeline_mode<synchronous>, transform_indices = @transform_9, window_bounds = array<i64: 1, 180>}, {pipeline_mode = #tpu.pipeline_mode<synchronous>, transform_indices = @transform_10, window_bounds = array<i64: 3, 12, 6>}, {pipeline_mode = #tpu.pipeline_mode<synchronous>, transform_indices = @transform_11, window_bounds = array<i64: 3, 180, 220>}, {pipeline_mode = #tpu.pipeline_mode<synchronous>, transform_indices = @transform_12, window_bounds = array<i64: 1, 220>}, {pipeline_mode = #tpu.pipeline_mode<synchronous>, transform_indices = @transform_13, window_bounds = array<i64: 3, 24, 12>}, {pipeline_mode = #tpu.pipeline_mode<synchronous>, transform_indices = @transform_14, window_bounds = array<i64: 3, 220, 210>}, {pipeline_mode = #tpu.pipeline_mode<synchronous>, transform_indices = @transform_15, window_bounds = array<i64: 1, 210>}, {pipeline_mode = #tpu.pipeline_mode<synchronous>, transform_indices = @transform_16, window_bounds = array<i64: 5, 48, 24>}, {pipeline_mode = #tpu.pipeline_mode<synchronous>, transform_indices = @transform_17, window_bounds = array<i64: 5, 210, 42>}, {pipeline_mode = #tpu.pipeline_mode<synchronous>, transform_indices = @transform_18, window_bounds = array<i64: 1, 42>}, {transform_indices = @transform_19, window_bounds = array<i64: 1, 48, 42>}]} {
    %c0 = arith.constant 0 : index
    %c0_0 = arith.constant 0 : index
    %c0_1 = arith.constant 0 : index
    %0 = vector.load %arg1[%c0, %c0_0, %c0_1] : memref<1x48x42xf32, #tpu.memory_space<vmem>>, vector<1x48x42xf32>
    %1 = vector.shape_cast %0 : vector<1x48x42xf32> to vector<48x42xf32>
    %c0_2 = arith.constant 0 : index
    %c0_3 = arith.constant 0 : index
    %c0_4 = arith.constant 0 : index
    %2 = vector.load %arg2[%c0_2, %c0_3, %c0_4] : memref<5x24x48xf32, #tpu.memory_space<vmem>>, vector<1x24x48xf32>
    %3 = vector.shape_cast %2 : vector<1x24x48xf32> to vector<24x48xf32>
    %cst = arith.constant dense<0.000000e+00> : vector<24x42xf32>
    %4 = tpu.matmul %3, %1, %cst {dimension_numbers = #tpu.dot_dimension_numbers<[1], [0], [0], [1], [0, 0, 1, 1], [], []>} : vector<24x48xf32>, vector<48x42xf32>, vector<24x42xf32> -> vector<24x42xf32>
    %c0_5 = arith.constant 0 : index
    %c0_6 = arith.constant 0 : index
    %c0_7 = arith.constant 0 : index
    %5 = vector.load %arg3[%c0_5, %c0_6, %c0_7] : memref<5x42x210xf32, #tpu.memory_space<vmem>>, vector<1x42x210xf32>
    %6 = vector.shape_cast %5 : vector<1x42x210xf32> to vector<42x210xf32>
    %cst_8 = arith.constant dense<0.000000e+00> : vector<24x210xf32>
    %7 = tpu.matmul %4, %6, %cst_8 {dimension_numbers = #tpu.dot_dimension_numbers<[1], [0], [0], [1], [0, 0, 1, 1], [], []>} : vector<24x42xf32>, vector<42x210xf32>, vector<24x210xf32> -> vector<24x210xf32>
    %c1 = arith.constant 1 : index
    %c0_9 = arith.constant 0 : index
    %c0_10 = arith.constant 0 : index
    %8 = vector.load %arg2[%c1, %c0_9, %c0_10] : memref<5x24x48xf32, #tpu.memory_space<vmem>>, vector<1x24x48xf32>
    %9 = vector.shape_cast %8 : vector<1x24x48xf32> to vector<24x48xf32>
    %cst_11 = arith.constant dense<0.000000e+00> : vector<24x42xf32>
    %10 = tpu.matmul %9, %1, %cst_11 {dimension_numbers = #tpu.dot_dimension_numbers<[1], [0], [0], [1], [0, 0, 1, 1], [], []>} : vector<24x48xf32>, vector<48x42xf32>, vector<24x42xf32> -> vector<24x42xf32>
    %c1_12 = arith.constant 1 : index
    %c0_13 = arith.constant 0 : index
    %c0_14 = arith.constant 0 : index
    %11 = vector.load %arg3[%c1_12, %c0_13, %c0_14] : memref<5x42x210xf32, #tpu.memory_space<vmem>>, vector<1x42x210xf32>
    %12 = vector.shape_cast %11 : vector<1x42x210xf32> to vector<42x210xf32>
    %cst_15 = arith.constant dense<0.000000e+00> : vector<24x210xf32>
    %13 = tpu.matmul %10, %12, %cst_15 {dimension_numbers = #tpu.dot_dimension_numbers<[1], [0], [0], [1], [0, 0, 1, 1], [], []>} : vector<24x42xf32>, vector<42x210xf32>, vector<24x210xf32> -> vector<24x210xf32>
    %14 = arith.addf %7, %13 : vector<24x210xf32>
    %c2 = arith.constant 2 : index
    %c0_16 = arith.constant 0 : index
    %c0_17 = arith.constant 0 : index
    %15 = vector.load %arg2[%c2, %c0_16, %c0_17] : memref<5x24x48xf32, #tpu.memory_space<vmem>>, vector<1x24x48xf32>
    %16 = vector.shape_cast %15 : vector<1x24x48xf32> to vector<24x48xf32>
    %cst_18 = arith.constant dense<0.000000e+00> : vector<24x42xf32>
    %17 = tpu.matmul %16, %1, %cst_18 {dimension_numbers = #tpu.dot_dimension_numbers<[1], [0], [0], [1], [0, 0, 1, 1], [], []>} : vector<24x48xf32>, vector<48x42xf32>, vector<24x42xf32> -> vector<24x42xf32>
    %c2_19 = arith.constant 2 : index
    %c0_20 = arith.constant 0 : index
    %c0_21 = arith.constant 0 : index
    %18 = vector.load %arg3[%c2_19, %c0_20, %c0_21] : memref<5x42x210xf32, #tpu.memory_space<vmem>>, vector<1x42x210xf32>
    %19 = vector.shape_cast %18 : vector<1x42x210xf32> to vector<42x210xf32>
    %cst_22 = arith.constant dense<0.000000e+00> : vector<24x210xf32>
    %20 = tpu.matmul %17, %19, %cst_22 {dimension_numbers = #tpu.dot_dimension_numbers<[1], [0], [0], [1], [0, 0, 1, 1], [], []>} : vector<24x42xf32>, vector<42x210xf32>, vector<24x210xf32> -> vector<24x210xf32>
    %21 = arith.addf %14, %20 : vector<24x210xf32>
    %c3 = arith.constant 3 : index
    %c0_23 = arith.constant 0 : index
    %c0_24 = arith.constant 0 : index
    %22 = vector.load %arg2[%c3, %c0_23, %c0_24] : memref<5x24x48xf32, #tpu.memory_space<vmem>>, vector<1x24x48xf32>
    %23 = vector.shape_cast %22 : vector<1x24x48xf32> to vector<24x48xf32>
    %cst_25 = arith.constant dense<0.000000e+00> : vector<24x42xf32>
    %24 = tpu.matmul %23, %1, %cst_25 {dimension_numbers = #tpu.dot_dimension_numbers<[1], [0], [0], [1], [0, 0, 1, 1], [], []>} : vector<24x48xf32>, vector<48x42xf32>, vector<24x42xf32> -> vector<24x42xf32>
    %c3_26 = arith.constant 3 : index
    %c0_27 = arith.constant 0 : index
    %c0_28 = arith.constant 0 : index
    %25 = vector.load %arg3[%c3_26, %c0_27, %c0_28] : memref<5x42x210xf32, #tpu.memory_space<vmem>>, vector<1x42x210xf32>
    %26 = vector.shape_cast %25 : vector<1x42x210xf32> to vector<42x210xf32>
    %cst_29 = arith.constant dense<0.000000e+00> : vector<24x210xf32>
    %27 = tpu.matmul %24, %26, %cst_29 {dimension_numbers = #tpu.dot_dimension_numbers<[1], [0], [0], [1], [0, 0, 1, 1], [], []>} : vector<24x42xf32>, vector<42x210xf32>, vector<24x210xf32> -> vector<24x210xf32>
    %28 = arith.addf %21, %27 : vector<24x210xf32>
    %c4 = arith.constant 4 : index
    %c0_30 = arith.constant 0 : index
    %c0_31 = arith.constant 0 : index
    %29 = vector.load %arg2[%c4, %c0_30, %c0_31] : memref<5x24x48xf32, #tpu.memory_space<vmem>>, vector<1x24x48xf32>
    %30 = vector.shape_cast %29 : vector<1x24x48xf32> to vector<24x48xf32>
    %cst_32 = arith.constant dense<0.000000e+00> : vector<24x42xf32>
    %31 = tpu.matmul %30, %1, %cst_32 {dimension_numbers = #tpu.dot_dimension_numbers<[1], [0], [0], [1], [0, 0, 1, 1], [], []>} : vector<24x48xf32>, vector<48x42xf32>, vector<24x42xf32> -> vector<24x42xf32>
    %c4_33 = arith.constant 4 : index
    %c0_34 = arith.constant 0 : index
    %c0_35 = arith.constant 0 : index
    %32 = vector.load %arg3[%c4_33, %c0_34, %c0_35] : memref<5x42x210xf32, #tpu.memory_space<vmem>>, vector<1x42x210xf32>
    %33 = vector.shape_cast %32 : vector<1x42x210xf32> to vector<42x210xf32>
    %cst_36 = arith.constant dense<0.000000e+00> : vector<24x210xf32>
    %34 = tpu.matmul %31, %33, %cst_36 {dimension_numbers = #tpu.dot_dimension_numbers<[1], [0], [0], [1], [0, 0, 1, 1], [], []>} : vector<24x42xf32>, vector<42x210xf32>, vector<24x210xf32> -> vector<24x210xf32>
    %35 = arith.addf %28, %34 : vector<24x210xf32>
    %c0_37 = arith.constant 0 : index
    %c0_38 = arith.constant 0 : index
    %36 = vector.load %arg4[%c0_37, %c0_38] : memref<1x210xf32, #tpu.memory_space<vmem>>, vector<1x210xf32>
    %37 = vector.broadcast %36 : vector<1x210xf32> to vector<24x210xf32>
    %38 = arith.addf %35, %37 : vector<24x210xf32>
    %cst_39 = arith.constant 0.000000e+00 : f32
    %39 = vector.broadcast %cst_39 : f32 to vector<24x210xf32>
    %40 = arith.maximumf %38, %39 : vector<24x210xf32>
    %c0_40 = arith.constant 0 : index
    %c0_41 = arith.constant 0 : index
    %c0_42 = arith.constant 0 : index
    %41 = vector.load %arg5[%c0_40, %c0_41, %c0_42] : memref<3x12x24xf32, #tpu.memory_space<vmem>>, vector<1x12x24xf32>
    %42 = vector.shape_cast %41 : vector<1x12x24xf32> to vector<12x24xf32>
    %cst_43 = arith.constant dense<0.000000e+00> : vector<12x210xf32>
    %43 = tpu.matmul %42, %40, %cst_43 {dimension_numbers = #tpu.dot_dimension_numbers<[1], [0], [0], [1], [0, 0, 1, 1], [], []>} : vector<12x24xf32>, vector<24x210xf32>, vector<12x210xf32> -> vector<12x210xf32>
    %c0_44 = arith.constant 0 : index
    %c0_45 = arith.constant 0 : index
    %c0_46 = arith.constant 0 : index
    %44 = vector.load %arg6[%c0_44, %c0_45, %c0_46] : memref<3x210x220xf32, #tpu.memory_space<vmem>>, vector<1x210x220xf32>
    %45 = vector.shape_cast %44 : vector<1x210x220xf32> to vector<210x220xf32>
    %cst_47 = arith.constant dense<0.000000e+00> : vector<12x220xf32>
    %46 = tpu.matmul %43, %45, %cst_47 {dimension_numbers = #tpu.dot_dimension_numbers<[1], [0], [0], [1], [0, 0, 1, 1], [], []>} : vector<12x210xf32>, vector<210x220xf32>, vector<12x220xf32> -> vector<12x220xf32>
    %c1_48 = arith.constant 1 : index
    %c0_49 = arith.constant 0 : index
    %c0_50 = arith.constant 0 : index
    %47 = vector.load %arg5[%c1_48, %c0_49, %c0_50] : memref<3x12x24xf32, #tpu.memory_space<vmem>>, vector<1x12x24xf32>
    %48 = vector.shape_cast %47 : vector<1x12x24xf32> to vector<12x24xf32>
    %cst_51 = arith.constant dense<0.000000e+00> : vector<12x210xf32>
    %49 = tpu.matmul %48, %40, %cst_51 {dimension_numbers = #tpu.dot_dimension_numbers<[1], [0], [0], [1], [0, 0, 1, 1], [], []>} : vector<12x24xf32>, vector<24x210xf32>, vector<12x210xf32> -> vector<12x210xf32>
    %c1_52 = arith.constant 1 : index
    %c0_53 = arith.constant 0 : index
    %c0_54 = arith.constant 0 : index
    %50 = vector.load %arg6[%c1_52, %c0_53, %c0_54] : memref<3x210x220xf32, #tpu.memory_space<vmem>>, vector<1x210x220xf32>
    %51 = vector.shape_cast %50 : vector<1x210x220xf32> to vector<210x220xf32>
    %cst_55 = arith.constant dense<0.000000e+00> : vector<12x220xf32>
    %52 = tpu.matmul %49, %51, %cst_55 {dimension_numbers = #tpu.dot_dimension_numbers<[1], [0], [0], [1], [0, 0, 1, 1], [], []>} : vector<12x210xf32>, vector<210x220xf32>, vector<12x220xf32> -> vector<12x220xf32>
    %53 = arith.addf %46, %52 : vector<12x220xf32>
    %c2_56 = arith.constant 2 : index
    %c0_57 = arith.constant 0 : index
    %c0_58 = arith.constant 0 : index
    %54 = vector.load %arg5[%c2_56, %c0_57, %c0_58] : memref<3x12x24xf32, #tpu.memory_space<vmem>>, vector<1x12x24xf32>
    %55 = vector.shape_cast %54 : vector<1x12x24xf32> to vector<12x24xf32>
    %cst_59 = arith.constant dense<0.000000e+00> : vector<12x210xf32>
    %56 = tpu.matmul %55, %40, %cst_59 {dimension_numbers = #tpu.dot_dimension_numbers<[1], [0], [0], [1], [0, 0, 1, 1], [], []>} : vector<12x24xf32>, vector<24x210xf32>, vector<12x210xf32> -> vector<12x210xf32>
    %c2_60 = arith.constant 2 : index
    %c0_61 = arith.constant 0 : index
    %c0_62 = arith.constant 0 : index
    %57 = vector.load %arg6[%c2_60, %c0_61, %c0_62] : memref<3x210x220xf32, #tpu.memory_space<vmem>>, vector<1x210x220xf32>
    %58 = vector.shape_cast %57 : vector<1x210x220xf32> to vector<210x220xf32>
    %cst_63 = arith.constant dense<0.000000e+00> : vector<12x220xf32>
    %59 = tpu.matmul %56, %58, %cst_63 {dimension_numbers = #tpu.dot_dimension_numbers<[1], [0], [0], [1], [0, 0, 1, 1], [], []>} : vector<12x210xf32>, vector<210x220xf32>, vector<12x220xf32> -> vector<12x220xf32>
    %60 = arith.addf %53, %59 : vector<12x220xf32>
    %c0_64 = arith.constant 0 : index
    %c0_65 = arith.constant 0 : index
    %61 = vector.load %arg7[%c0_64, %c0_65] : memref<1x220xf32, #tpu.memory_space<vmem>>, vector<1x220xf32>
    %62 = vector.broadcast %61 : vector<1x220xf32> to vector<12x220xf32>
    %63 = arith.addf %60, %62 : vector<12x220xf32>
    %cst_66 = arith.constant 0.000000e+00 : f32
    %64 = vector.broadcast %cst_66 : f32 to vector<12x220xf32>
    %65 = arith.maximumf %63, %64 : vector<12x220xf32>
    %c0_67 = arith.constant 0 : index
    %c0_68 = arith.constant 0 : index
    %c0_69 = arith.constant 0 : index
    %66 = vector.load %arg8[%c0_67, %c0_68, %c0_69] : memref<3x6x12xf32, #tpu.memory_space<vmem>>, vector<1x6x12xf32>
    %67 = vector.shape_cast %66 : vector<1x6x12xf32> to vector<6x12xf32>
    %cst_70 = arith.constant dense<0.000000e+00> : vector<6x220xf32>
    %68 = tpu.matmul %67, %65, %cst_70 {dimension_numbers = #tpu.dot_dimension_numbers<[1], [0], [0], [1], [0, 0, 1, 1], [], []>} : vector<6x12xf32>, vector<12x220xf32>, vector<6x220xf32> -> vector<6x220xf32>
    %c0_71 = arith.constant 0 : index
    %c0_72 = arith.constant 0 : index
    %c0_73 = arith.constant 0 : index
    %69 = vector.load %arg9[%c0_71, %c0_72, %c0_73] : memref<3x220x180xf32, #tpu.memory_space<vmem>>, vector<1x220x180xf32>
    %70 = vector.shape_cast %69 : vector<1x220x180xf32> to vector<220x180xf32>
    %cst_74 = arith.constant dense<0.000000e+00> : vector<6x180xf32>
    %71 = tpu.matmul %68, %70, %cst_74 {dimension_numbers = #tpu.dot_dimension_numbers<[1], [0], [0], [1], [0, 0, 1, 1], [], []>} : vector<6x220xf32>, vector<220x180xf32>, vector<6x180xf32> -> vector<6x180xf32>
    %c1_75 = arith.constant 1 : index
    %c0_76 = arith.constant 0 : index
    %c0_77 = arith.constant 0 : index
    %72 = vector.load %arg8[%c1_75, %c0_76, %c0_77] : memref<3x6x12xf32, #tpu.memory_space<vmem>>, vector<1x6x12xf32>
    %73 = vector.shape_cast %72 : vector<1x6x12xf32> to vector<6x12xf32>
    %cst_78 = arith.constant dense<0.000000e+00> : vector<6x220xf32>
    %74 = tpu.matmul %73, %65, %cst_78 {dimension_numbers = #tpu.dot_dimension_numbers<[1], [0], [0], [1], [0, 0, 1, 1], [], []>} : vector<6x12xf32>, vector<12x220xf32>, vector<6x220xf32> -> vector<6x220xf32>
    %c1_79 = arith.constant 1 : index
    %c0_80 = arith.constant 0 : index
    %c0_81 = arith.constant 0 : index
    %75 = vector.load %arg9[%c1_79, %c0_80, %c0_81] : memref<3x220x180xf32, #tpu.memory_space<vmem>>, vector<1x220x180xf32>
    %76 = vector.shape_cast %75 : vector<1x220x180xf32> to vector<220x180xf32>
    %cst_82 = arith.constant dense<0.000000e+00> : vector<6x180xf32>
    %77 = tpu.matmul %74, %76, %cst_82 {dimension_numbers = #tpu.dot_dimension_numbers<[1], [0], [0], [1], [0, 0, 1, 1], [], []>} : vector<6x220xf32>, vector<220x180xf32>, vector<6x180xf32> -> vector<6x180xf32>
    %78 = arith.addf %71, %77 : vector<6x180xf32>
    %c2_83 = arith.constant 2 : index
    %c0_84 = arith.constant 0 : index
    %c0_85 = arith.constant 0 : index
    %79 = vector.load %arg8[%c2_83, %c0_84, %c0_85] : memref<3x6x12xf32, #tpu.memory_space<vmem>>, vector<1x6x12xf32>
    %80 = vector.shape_cast %79 : vector<1x6x12xf32> to vector<6x12xf32>
    %cst_86 = arith.constant dense<0.000000e+00> : vector<6x220xf32>
    %81 = tpu.matmul %80, %65, %cst_86 {dimension_numbers = #tpu.dot_dimension_numbers<[1], [0], [0], [1], [0, 0, 1, 1], [], []>} : vector<6x12xf32>, vector<12x220xf32>, vector<6x220xf32> -> vector<6x220xf32>
    %c2_87 = arith.constant 2 : index
    %c0_88 = arith.constant 0 : index
    %c0_89 = arith.constant 0 : index
    %82 = vector.load %arg9[%c2_87, %c0_88, %c0_89] : memref<3x220x180xf32, #tpu.memory_space<vmem>>, vector<1x220x180xf32>
    %83 = vector.shape_cast %82 : vector<1x220x180xf32> to vector<220x180xf32>
    %cst_90 = arith.constant dense<0.000000e+00> : vector<6x180xf32>
    %84 = tpu.matmul %81, %83, %cst_90 {dimension_numbers = #tpu.dot_dimension_numbers<[1], [0], [0], [1], [0, 0, 1, 1], [], []>} : vector<6x220xf32>, vector<220x180xf32>, vector<6x180xf32> -> vector<6x180xf32>
    %85 = arith.addf %78, %84 : vector<6x180xf32>
    %c0_91 = arith.constant 0 : index
    %c0_92 = arith.constant 0 : index
    %86 = vector.load %arg10[%c0_91, %c0_92] : memref<1x180xf32, #tpu.memory_space<vmem>>, vector<1x180xf32>
    %87 = vector.broadcast %86 : vector<1x180xf32> to vector<6x180xf32>
    %88 = arith.addf %85, %87 : vector<6x180xf32>
    %cst_93 = arith.constant 0.000000e+00 : f32
    %89 = vector.broadcast %cst_93 : f32 to vector<6x180xf32>
    %90 = arith.maximumf %88, %89 : vector<6x180xf32>
    %c0_94 = arith.constant 0 : index
    %c0_95 = arith.constant 0 : index
    %c0_96 = arith.constant 0 : index
    %91 = vector.load %arg11[%c0_94, %c0_95, %c0_96] : memref<3x12x6xf32, #tpu.memory_space<vmem>>, vector<1x12x6xf32>
    %92 = vector.shape_cast %91 : vector<1x12x6xf32> to vector<12x6xf32>
    %cst_97 = arith.constant dense<0.000000e+00> : vector<12x180xf32>
    %93 = tpu.matmul %92, %90, %cst_97 {dimension_numbers = #tpu.dot_dimension_numbers<[1], [0], [0], [1], [0, 0, 1, 1], [], []>} : vector<12x6xf32>, vector<6x180xf32>, vector<12x180xf32> -> vector<12x180xf32>
    %c0_98 = arith.constant 0 : index
    %c0_99 = arith.constant 0 : index
    %c0_100 = arith.constant 0 : index
    %94 = vector.load %arg12[%c0_98, %c0_99, %c0_100] : memref<3x180x220xf32, #tpu.memory_space<vmem>>, vector<1x180x220xf32>
    %95 = vector.shape_cast %94 : vector<1x180x220xf32> to vector<180x220xf32>
    %cst_101 = arith.constant dense<0.000000e+00> : vector<12x220xf32>
    %96 = tpu.matmul %93, %95, %cst_101 {dimension_numbers = #tpu.dot_dimension_numbers<[1], [0], [0], [1], [0, 0, 1, 1], [], []>} : vector<12x180xf32>, vector<180x220xf32>, vector<12x220xf32> -> vector<12x220xf32>
    %c1_102 = arith.constant 1 : index
    %c0_103 = arith.constant 0 : index
    %c0_104 = arith.constant 0 : index
    %97 = vector.load %arg11[%c1_102, %c0_103, %c0_104] : memref<3x12x6xf32, #tpu.memory_space<vmem>>, vector<1x12x6xf32>
    %98 = vector.shape_cast %97 : vector<1x12x6xf32> to vector<12x6xf32>
    %cst_105 = arith.constant dense<0.000000e+00> : vector<12x180xf32>
    %99 = tpu.matmul %98, %90, %cst_105 {dimension_numbers = #tpu.dot_dimension_numbers<[1], [0], [0], [1], [0, 0, 1, 1], [], []>} : vector<12x6xf32>, vector<6x180xf32>, vector<12x180xf32> -> vector<12x180xf32>
    %c1_106 = arith.constant 1 : index
    %c0_107 = arith.constant 0 : index
    %c0_108 = arith.constant 0 : index
    %100 = vector.load %arg12[%c1_106, %c0_107, %c0_108] : memref<3x180x220xf32, #tpu.memory_space<vmem>>, vector<1x180x220xf32>
    %101 = vector.shape_cast %100 : vector<1x180x220xf32> to vector<180x220xf32>
    %cst_109 = arith.constant dense<0.000000e+00> : vector<12x220xf32>
    %102 = tpu.matmul %99, %101, %cst_109 {dimension_numbers = #tpu.dot_dimension_numbers<[1], [0], [0], [1], [0, 0, 1, 1], [], []>} : vector<12x180xf32>, vector<180x220xf32>, vector<12x220xf32> -> vector<12x220xf32>
    %103 = arith.addf %96, %102 : vector<12x220xf32>
    %c2_110 = arith.constant 2 : index
    %c0_111 = arith.constant 0 : index
    %c0_112 = arith.constant 0 : index
    %104 = vector.load %arg11[%c2_110, %c0_111, %c0_112] : memref<3x12x6xf32, #tpu.memory_space<vmem>>, vector<1x12x6xf32>
    %105 = vector.shape_cast %104 : vector<1x12x6xf32> to vector<12x6xf32>
    %cst_113 = arith.constant dense<0.000000e+00> : vector<12x180xf32>
    %106 = tpu.matmul %105, %90, %cst_113 {dimension_numbers = #tpu.dot_dimension_numbers<[1], [0], [0], [1], [0, 0, 1, 1], [], []>} : vector<12x6xf32>, vector<6x180xf32>, vector<12x180xf32> -> vector<12x180xf32>
    %c2_114 = arith.constant 2 : index
    %c0_115 = arith.constant 0 : index
    %c0_116 = arith.constant 0 : index
    %107 = vector.load %arg12[%c2_114, %c0_115, %c0_116] : memref<3x180x220xf32, #tpu.memory_space<vmem>>, vector<1x180x220xf32>
    %108 = vector.shape_cast %107 : vector<1x180x220xf32> to vector<180x220xf32>
    %cst_117 = arith.constant dense<0.000000e+00> : vector<12x220xf32>
    %109 = tpu.matmul %106, %108, %cst_117 {dimension_numbers = #tpu.dot_dimension_numbers<[1], [0], [0], [1], [0, 0, 1, 1], [], []>} : vector<12x180xf32>, vector<180x220xf32>, vector<12x220xf32> -> vector<12x220xf32>
    %110 = arith.addf %103, %109 : vector<12x220xf32>
    %c0_118 = arith.constant 0 : index
    %c0_119 = arith.constant 0 : index
    %111 = vector.load %arg13[%c0_118, %c0_119] : memref<1x220xf32, #tpu.memory_space<vmem>>, vector<1x220xf32>
    %112 = vector.broadcast %111 : vector<1x220xf32> to vector<12x220xf32>
    %113 = arith.addf %110, %112 : vector<12x220xf32>
    %cst_120 = arith.constant 0.000000e+00 : f32
    %114 = vector.broadcast %cst_120 : f32 to vector<12x220xf32>
    %115 = arith.maximumf %113, %114 : vector<12x220xf32>
    %c0_121 = arith.constant 0 : index
    %c0_122 = arith.constant 0 : index
    %c0_123 = arith.constant 0 : index
    %116 = vector.load %arg14[%c0_121, %c0_122, %c0_123] : memref<3x24x12xf32, #tpu.memory_space<vmem>>, vector<1x24x12xf32>
    %117 = vector.shape_cast %116 : vector<1x24x12xf32> to vector<24x12xf32>
    %cst_124 = arith.constant dense<0.000000e+00> : vector<24x220xf32>
    %118 = tpu.matmul %117, %115, %cst_124 {dimension_numbers = #tpu.dot_dimension_numbers<[1], [0], [0], [1], [0, 0, 1, 1], [], []>} : vector<24x12xf32>, vector<12x220xf32>, vector<24x220xf32> -> vector<24x220xf32>
    %c0_125 = arith.constant 0 : index
    %c0_126 = arith.constant 0 : index
    %c0_127 = arith.constant 0 : index
    %119 = vector.load %arg15[%c0_125, %c0_126, %c0_127] : memref<3x220x210xf32, #tpu.memory_space<vmem>>, vector<1x220x210xf32>
    %120 = vector.shape_cast %119 : vector<1x220x210xf32> to vector<220x210xf32>
    %cst_128 = arith.constant dense<0.000000e+00> : vector<24x210xf32>
    %121 = tpu.matmul %118, %120, %cst_128 {dimension_numbers = #tpu.dot_dimension_numbers<[1], [0], [0], [1], [0, 0, 1, 1], [], []>} : vector<24x220xf32>, vector<220x210xf32>, vector<24x210xf32> -> vector<24x210xf32>
    %c1_129 = arith.constant 1 : index
    %c0_130 = arith.constant 0 : index
    %c0_131 = arith.constant 0 : index
    %122 = vector.load %arg14[%c1_129, %c0_130, %c0_131] : memref<3x24x12xf32, #tpu.memory_space<vmem>>, vector<1x24x12xf32>
    %123 = vector.shape_cast %122 : vector<1x24x12xf32> to vector<24x12xf32>
    %cst_132 = arith.constant dense<0.000000e+00> : vector<24x220xf32>
    %124 = tpu.matmul %123, %115, %cst_132 {dimension_numbers = #tpu.dot_dimension_numbers<[1], [0], [0], [1], [0, 0, 1, 1], [], []>} : vector<24x12xf32>, vector<12x220xf32>, vector<24x220xf32> -> vector<24x220xf32>
    %c1_133 = arith.constant 1 : index
    %c0_134 = arith.constant 0 : index
    %c0_135 = arith.constant 0 : index
    %125 = vector.load %arg15[%c1_133, %c0_134, %c0_135] : memref<3x220x210xf32, #tpu.memory_space<vmem>>, vector<1x220x210xf32>
    %126 = vector.shape_cast %125 : vector<1x220x210xf32> to vector<220x210xf32>
    %cst_136 = arith.constant dense<0.000000e+00> : vector<24x210xf32>
    %127 = tpu.matmul %124, %126, %cst_136 {dimension_numbers = #tpu.dot_dimension_numbers<[1], [0], [0], [1], [0, 0, 1, 1], [], []>} : vector<24x220xf32>, vector<220x210xf32>, vector<24x210xf32> -> vector<24x210xf32>
    %128 = arith.addf %121, %127 : vector<24x210xf32>
    %c2_137 = arith.constant 2 : index
    %c0_138 = arith.constant 0 : index
    %c0_139 = arith.constant 0 : index
    %129 = vector.load %arg14[%c2_137, %c0_138, %c0_139] : memref<3x24x12xf32, #tpu.memory_space<vmem>>, vector<1x24x12xf32>
    %130 = vector.shape_cast %129 : vector<1x24x12xf32> to vector<24x12xf32>
    %cst_140 = arith.constant dense<0.000000e+00> : vector<24x220xf32>
    %131 = tpu.matmul %130, %115, %cst_140 {dimension_numbers = #tpu.dot_dimension_numbers<[1], [0], [0], [1], [0, 0, 1, 1], [], []>} : vector<24x12xf32>, vector<12x220xf32>, vector<24x220xf32> -> vector<24x220xf32>
    %c2_141 = arith.constant 2 : index
    %c0_142 = arith.constant 0 : index
    %c0_143 = arith.constant 0 : index
    %132 = vector.load %arg15[%c2_141, %c0_142, %c0_143] : memref<3x220x210xf32, #tpu.memory_space<vmem>>, vector<1x220x210xf32>
    %133 = vector.shape_cast %132 : vector<1x220x210xf32> to vector<220x210xf32>
    %cst_144 = arith.constant dense<0.000000e+00> : vector<24x210xf32>
    %134 = tpu.matmul %131, %133, %cst_144 {dimension_numbers = #tpu.dot_dimension_numbers<[1], [0], [0], [1], [0, 0, 1, 1], [], []>} : vector<24x220xf32>, vector<220x210xf32>, vector<24x210xf32> -> vector<24x210xf32>
    %135 = arith.addf %128, %134 : vector<24x210xf32>
    %c0_145 = arith.constant 0 : index
    %c0_146 = arith.constant 0 : index
    %136 = vector.load %arg16[%c0_145, %c0_146] : memref<1x210xf32, #tpu.memory_space<vmem>>, vector<1x210xf32>
    %137 = vector.broadcast %136 : vector<1x210xf32> to vector<24x210xf32>
    %138 = arith.addf %135, %137 : vector<24x210xf32>
    %cst_147 = arith.constant 0.000000e+00 : f32
    %139 = vector.broadcast %cst_147 : f32 to vector<24x210xf32>
    %140 = arith.maximumf %138, %139 : vector<24x210xf32>
    %c0_148 = arith.constant 0 : index
    %c0_149 = arith.constant 0 : index
    %c0_150 = arith.constant 0 : index
    %141 = vector.load %arg17[%c0_148, %c0_149, %c0_150] : memref<5x48x24xf32, #tpu.memory_space<vmem>>, vector<1x48x24xf32>
    %142 = vector.shape_cast %141 : vector<1x48x24xf32> to vector<48x24xf32>
    %cst_151 = arith.constant dense<0.000000e+00> : vector<48x210xf32>
    %143 = tpu.matmul %142, %140, %cst_151 {dimension_numbers = #tpu.dot_dimension_numbers<[1], [0], [0], [1], [0, 0, 1, 1], [], []>} : vector<48x24xf32>, vector<24x210xf32>, vector<48x210xf32> -> vector<48x210xf32>
    %c0_152 = arith.constant 0 : index
    %c0_153 = arith.constant 0 : index
    %c0_154 = arith.constant 0 : index
    %144 = vector.load %arg18[%c0_152, %c0_153, %c0_154] : memref<5x210x42xf32, #tpu.memory_space<vmem>>, vector<1x210x42xf32>
    %145 = vector.shape_cast %144 : vector<1x210x42xf32> to vector<210x42xf32>
    %cst_155 = arith.constant dense<0.000000e+00> : vector<48x42xf32>
    %146 = tpu.matmul %143, %145, %cst_155 {dimension_numbers = #tpu.dot_dimension_numbers<[1], [0], [0], [1], [0, 0, 1, 1], [], []>} : vector<48x210xf32>, vector<210x42xf32>, vector<48x42xf32> -> vector<48x42xf32>
    %c1_156 = arith.constant 1 : index
    %c0_157 = arith.constant 0 : index
    %c0_158 = arith.constant 0 : index
    %147 = vector.load %arg17[%c1_156, %c0_157, %c0_158] : memref<5x48x24xf32, #tpu.memory_space<vmem>>, vector<1x48x24xf32>
    %148 = vector.shape_cast %147 : vector<1x48x24xf32> to vector<48x24xf32>
    %cst_159 = arith.constant dense<0.000000e+00> : vector<48x210xf32>
    %149 = tpu.matmul %148, %140, %cst_159 {dimension_numbers = #tpu.dot_dimension_numbers<[1], [0], [0], [1], [0, 0, 1, 1], [], []>} : vector<48x24xf32>, vector<24x210xf32>, vector<48x210xf32> -> vector<48x210xf32>
    %c1_160 = arith.constant 1 : index
    %c0_161 = arith.constant 0 : index
    %c0_162 = arith.constant 0 : index
    %150 = vector.load %arg18[%c1_160, %c0_161, %c0_162] : memref<5x210x42xf32, #tpu.memory_space<vmem>>, vector<1x210x42xf32>
    %151 = vector.shape_cast %150 : vector<1x210x42xf32> to vector<210x42xf32>
    %cst_163 = arith.constant dense<0.000000e+00> : vector<48x42xf32>
    %152 = tpu.matmul %149, %151, %cst_163 {dimension_numbers = #tpu.dot_dimension_numbers<[1], [0], [0], [1], [0, 0, 1, 1], [], []>} : vector<48x210xf32>, vector<210x42xf32>, vector<48x42xf32> -> vector<48x42xf32>
    %153 = arith.addf %146, %152 : vector<48x42xf32>
    %c2_164 = arith.constant 2 : index
    %c0_165 = arith.constant 0 : index
    %c0_166 = arith.constant 0 : index
    %154 = vector.load %arg17[%c2_164, %c0_165, %c0_166] : memref<5x48x24xf32, #tpu.memory_space<vmem>>, vector<1x48x24xf32>
    %155 = vector.shape_cast %154 : vector<1x48x24xf32> to vector<48x24xf32>
    %cst_167 = arith.constant dense<0.000000e+00> : vector<48x210xf32>
    %156 = tpu.matmul %155, %140, %cst_167 {dimension_numbers = #tpu.dot_dimension_numbers<[1], [0], [0], [1], [0, 0, 1, 1], [], []>} : vector<48x24xf32>, vector<24x210xf32>, vector<48x210xf32> -> vector<48x210xf32>
    %c2_168 = arith.constant 2 : index
    %c0_169 = arith.constant 0 : index
    %c0_170 = arith.constant 0 : index
    %157 = vector.load %arg18[%c2_168, %c0_169, %c0_170] : memref<5x210x42xf32, #tpu.memory_space<vmem>>, vector<1x210x42xf32>
    %158 = vector.shape_cast %157 : vector<1x210x42xf32> to vector<210x42xf32>
    %cst_171 = arith.constant dense<0.000000e+00> : vector<48x42xf32>
    %159 = tpu.matmul %156, %158, %cst_171 {dimension_numbers = #tpu.dot_dimension_numbers<[1], [0], [0], [1], [0, 0, 1, 1], [], []>} : vector<48x210xf32>, vector<210x42xf32>, vector<48x42xf32> -> vector<48x42xf32>
    %160 = arith.addf %153, %159 : vector<48x42xf32>
    %c3_172 = arith.constant 3 : index
    %c0_173 = arith.constant 0 : index
    %c0_174 = arith.constant 0 : index
    %161 = vector.load %arg17[%c3_172, %c0_173, %c0_174] : memref<5x48x24xf32, #tpu.memory_space<vmem>>, vector<1x48x24xf32>
    %162 = vector.shape_cast %161 : vector<1x48x24xf32> to vector<48x24xf32>
    %cst_175 = arith.constant dense<0.000000e+00> : vector<48x210xf32>
    %163 = tpu.matmul %162, %140, %cst_175 {dimension_numbers = #tpu.dot_dimension_numbers<[1], [0], [0], [1], [0, 0, 1, 1], [], []>} : vector<48x24xf32>, vector<24x210xf32>, vector<48x210xf32> -> vector<48x210xf32>
    %c3_176 = arith.constant 3 : index
    %c0_177 = arith.constant 0 : index
    %c0_178 = arith.constant 0 : index
    %164 = vector.load %arg18[%c3_176, %c0_177, %c0_178] : memref<5x210x42xf32, #tpu.memory_space<vmem>>, vector<1x210x42xf32>
    %165 = vector.shape_cast %164 : vector<1x210x42xf32> to vector<210x42xf32>
    %cst_179 = arith.constant dense<0.000000e+00> : vector<48x42xf32>
    %166 = tpu.matmul %163, %165, %cst_179 {dimension_numbers = #tpu.dot_dimension_numbers<[1], [0], [0], [1], [0, 0, 1, 1], [], []>} : vector<48x210xf32>, vector<210x42xf32>, vector<48x42xf32> -> vector<48x42xf32>
    %167 = arith.addf %160, %166 : vector<48x42xf32>
    %c4_180 = arith.constant 4 : index
    %c0_181 = arith.constant 0 : index
    %c0_182 = arith.constant 0 : index
    %168 = vector.load %arg17[%c4_180, %c0_181, %c0_182] : memref<5x48x24xf32, #tpu.memory_space<vmem>>, vector<1x48x24xf32>
    %169 = vector.shape_cast %168 : vector<1x48x24xf32> to vector<48x24xf32>
    %cst_183 = arith.constant dense<0.000000e+00> : vector<48x210xf32>
    %170 = tpu.matmul %169, %140, %cst_183 {dimension_numbers = #tpu.dot_dimension_numbers<[1], [0], [0], [1], [0, 0, 1, 1], [], []>} : vector<48x24xf32>, vector<24x210xf32>, vector<48x210xf32> -> vector<48x210xf32>
    %c4_184 = arith.constant 4 : index
    %c0_185 = arith.constant 0 : index
    %c0_186 = arith.constant 0 : index
    %171 = vector.load %arg18[%c4_184, %c0_185, %c0_186] : memref<5x210x42xf32, #tpu.memory_space<vmem>>, vector<1x210x42xf32>
    %172 = vector.shape_cast %171 : vector<1x210x42xf32> to vector<210x42xf32>
    %cst_187 = arith.constant dense<0.000000e+00> : vector<48x42xf32>
    %173 = tpu.matmul %170, %172, %cst_187 {dimension_numbers = #tpu.dot_dimension_numbers<[1], [0], [0], [1], [0, 0, 1, 1], [], []>} : vector<48x210xf32>, vector<210x42xf32>, vector<48x42xf32> -> vector<48x42xf32>
    %174 = arith.addf %167, %173 : vector<48x42xf32>
    %c0_188 = arith.constant 0 : index
    %c0_189 = arith.constant 0 : index
    %175 = vector.load %arg19[%c0_188, %c0_189] : memref<1x42xf32, #tpu.memory_space<vmem>>, vector<1x42xf32>
    %176 = vector.broadcast %175 : vector<1x42xf32> to vector<48x42xf32>
    %177 = arith.addf %174, %176 : vector<48x42xf32>
    %cst_190 = arith.constant 0.000000e+00 : f32
    %178 = vector.broadcast %cst_190 : f32 to vector<48x42xf32>
    %179 = arith.maximumf %177, %178 : vector<48x42xf32>
    %c0_191 = arith.constant 0 : index
    %c0_192 = arith.constant 0 : index
    %c0_193 = arith.constant 0 : index
    %180 = vector.load %arg20[%c0_191, %c0_192, %c0_193] : memref<1x48x42xf32, #tpu.memory_space<vmem>>, vector<1x48x42xf32>
    %181 = vector.shape_cast %180 : vector<1x48x42xf32> to vector<48x42xf32>
    %182 = vector.shape_cast %179 : vector<48x42xf32> to vector<1x48x42xf32>
    tpu.vector_store %arg20[%c0_191, %c0_192, %c0_193], %182 {strides = array<i32>} : memref<1x48x42xf32, #tpu.memory_space<vmem>>, vector<1x48x42xf32>,
    return
  }
  func.func @transform_0(%arg0: i32) -> (i32, i32, i32) {
    %c0_i32 = arith.constant 0 : i32
    %c0_i32_0 = arith.constant 0 : i32
    %c0_i32_1 = arith.constant 0 : i32
    return %arg0, %c0_i32, %c0_i32_0 : i32, i32, i32
  }
  func.func @transform_1(%arg0: i32) -> (i32, i32, i32) {
    %c0_i32 = arith.constant 0 : i32
    %c0_i32_0 = arith.constant 0 : i32
    %c0_i32_1 = arith.constant 0 : i32
    %c0_i32_2 = arith.constant 0 : i32
    return %c0_i32, %c0_i32_0, %c0_i32_1 : i32, i32, i32
  }
  func.func @transform_2(%arg0: i32) -> (i32, i32, i32) {
    %c0_i32 = arith.constant 0 : i32
    %c0_i32_0 = arith.constant 0 : i32
    %c0_i32_1 = arith.constant 0 : i32
    %c0_i32_2 = arith.constant 0 : i32
    return %c0_i32, %c0_i32_0, %c0_i32_1 : i32, i32, i32
  }
  func.func @transform_3(%arg0: i32) -> (i32, i32) {
    %c0_i32 = arith.constant 0 : i32
    %c0_i32_0 = arith.constant 0 : i32
    %c0_i32_1 = arith.constant 0 : i32
    return %c0_i32, %c0_i32_0 : i32, i32
  }
  func.func @transform_4(%arg0: i32) -> (i32, i32, i32) {
    %c0_i32 = arith.constant 0 : i32
    %c0_i32_0 = arith.constant 0 : i32
    %c0_i32_1 = arith.constant 0 : i32
    %c0_i32_2 = arith.constant 0 : i32
    return %c0_i32, %c0_i32_0, %c0_i32_1 : i32, i32, i32
  }
  func.func @transform_5(%arg0: i32) -> (i32, i32, i32) {
    %c0_i32 = arith.constant 0 : i32
    %c0_i32_0 = arith.constant 0 : i32
    %c0_i32_1 = arith.constant 0 : i32
    %c0_i32_2 = arith.constant 0 : i32
    return %c0_i32, %c0_i32_0, %c0_i32_1 : i32, i32, i32
  }
  func.func @transform_6(%arg0: i32) -> (i32, i32) {
    %c0_i32 = arith.constant 0 : i32
    %c0_i32_0 = arith.constant 0 : i32
    %c0_i32_1 = arith.constant 0 : i32
    return %c0_i32, %c0_i32_0 : i32, i32
  }
  func.func @transform_7(%arg0: i32) -> (i32, i32, i32) {
    %c0_i32 = arith.constant 0 : i32
    %c0_i32_0 = arith.constant 0 : i32
    %c0_i32_1 = arith.constant 0 : i32
    %c0_i32_2 = arith.constant 0 : i32
    return %c0_i32, %c0_i32_0, %c0_i32_1 : i32, i32, i32
  }
  func.func @transform_8(%arg0: i32) -> (i32, i32, i32) {
    %c0_i32 = arith.constant 0 : i32
    %c0_i32_0 = arith.constant 0 : i32
    %c0_i32_1 = arith.constant 0 : i32
    %c0_i32_2 = arith.constant 0 : i32
    return %c0_i32, %c0_i32_0, %c0_i32_1 : i32, i32, i32
  }
  func.func @transform_9(%arg0: i32) -> (i32, i32) {
    %c0_i32 = arith.constant 0 : i32
    %c0_i32_0 = arith.constant 0 : i32
    %c0_i32_1 = arith.constant 0 : i32
    return %c0_i32, %c0_i32_0 : i32, i32
  }
  func.func @transform_10(%arg0: i32) -> (i32, i32, i32) {
    %c0_i32 = arith.constant 0 : i32
    %c0_i32_0 = arith.constant 0 : i32
    %c0_i32_1 = arith.constant 0 : i32
    %c0_i32_2 = arith.constant 0 : i32
    return %c0_i32, %c0_i32_0, %c0_i32_1 : i32, i32, i32
  }
  func.func @transform_11(%arg0: i32) -> (i32, i32, i32) {
    %c0_i32 = arith.constant 0 : i32
    %c0_i32_0 = arith.constant 0 : i32
    %c0_i32_1 = arith.constant 0 : i32
    %c0_i32_2 = arith.constant 0 : i32
    return %c0_i32, %c0_i32_0, %c0_i32_1 : i32, i32, i32
  }
  func.func @transform_12(%arg0: i32) -> (i32, i32) {
    %c0_i32 = arith.constant 0 : i32
    %c0_i32_0 = arith.constant 0 : i32
    %c0_i32_1 = arith.constant 0 : i32
    return %c0_i32, %c0_i32_0 : i32, i32
  }
  func.func @transform_13(%arg0: i32) -> (i32, i32, i32) {
    %c0_i32 = arith.constant 0 : i32
    %c0_i32_0 = arith.constant 0 : i32
    %c0_i32_1 = arith.constant 0 : i32
    %c0_i32_2 = arith.constant 0 : i32
    return %c0_i32, %c0_i32_0, %c0_i32_1 : i32, i32, i32
  }
  func.func @transform_14(%arg0: i32) -> (i32, i32, i32) {
    %c0_i32 = arith.constant 0 : i32
    %c0_i32_0 = arith.constant 0 : i32
    %c0_i32_1 = arith.constant 0 : i32
    %c0_i32_2 = arith.constant 0 : i32
    return %c0_i32, %c0_i32_0, %c0_i32_1 : i32, i32, i32
  }
  func.func @transform_15(%arg0: i32) -> (i32, i32) {
    %c0_i32 = arith.constant 0 : i32
    %c0_i32_0 = arith.constant 0 : i32
    %c0_i32_1 = arith.constant 0 : i32
    return %c0_i32, %c0_i32_0 : i32, i32
  }
  func.func @transform_16(%arg0: i32) -> (i32, i32, i32) {
    %c0_i32 = arith.constant 0 : i32
    %c0_i32_0 = arith.constant 0 : i32
    %c0_i32_1 = arith.constant 0 : i32
    %c0_i32_2 = arith.constant 0 : i32
    return %c0_i32, %c0_i32_0, %c0_i32_1 : i32, i32, i32
  }
  func.func @transform_17(%arg0: i32) -> (i32, i32, i32) {
    %c0_i32 = arith.constant 0 : i32
    %c0_i32_0 = arith.constant 0 : i32
    %c0_i32_1 = arith.constant 0 : i32
    %c0_i32_2 = arith.constant 0 : i32
    return %c0_i32, %c0_i32_0, %c0_i32_1 : i32, i32, i32
  }
  func.func @transform_18(%arg0: i32) -> (i32, i32) {
    %c0_i32 = arith.constant 0 : i32
    %c0_i32_0 = arith.constant 0 : i32
    %c0_i32_1 = arith.constant 0 : i32
    return %c0_i32, %c0_i32_0 : i32, i32
  }
  func.func @transform_19(%arg0: i32) -> (i32, i32, i32) {
    %c0_i32 = arith.constant 0 : i32
    %c0_i32_0 = arith.constant 0 : i32
    %c0_i32_1 = arith.constant 0 : i32
    return %arg0, %c0_i32, %c0_i32_0 : i32, i32, i32
  }
}

</mosaic_0001>

<llo_original>
// kernel: tile.33
$region0: #{tile.33}
  #allocation0 [shape = 's32[1]{0}', space=sflag, size = 0x4, scoped, tag = 'scoped memory for tile.33']
  %s0 = inlined_call_operand.vmem [shape: f32[10], index: 0, kind: input, shape index: {}]
  %s1 = inlined_call_operand.vmem [shape: f32[21,10], index: 1, kind: output, shape index: {}]
  // Predicated region
  $region2: #{tile.33} parent=0 // pred_check
    _
  $region3: #{tile.33} parent=0 // pred_check_branch
    %3 = sbr.rel (0) target = $region5
  $region4: #{tile.33} parent=0 // pred_region
    _
  $region5: #{tile.33} parent=0 // pred_fallthru
    _
  %v4 = vld [vmem:[%s0] ss:$0 sm:$0xff]
  %5 = vst [vmem:[%s1] sm:$0xff] %v4
  %s6 = scalar_lea.vmem %s1, 8
  %7 = vst [vmem:[%s6] sm:$0xff] %v4
  %s8 = scalar_lea.vmem %s1, 16
  %9 = vst [vmem:[%s8] sm:$0xff] %v4

// kernel: tile.34
$region0: #{tile.34}
  %s0 = inlined_call_operand.vmem [shape: f32[21,10], index: 0, kind: input, shape index: {}]
  %s1 = inlined_call_operand.vmem [shape: f32[1,210], index: 1, kind: output, shape index: {}]
  $region1: #{tile.34} parent=0
    #allocation0 [shape = 'u8[8192]{0}', space=vmem, size = 0x2000, scoped, tag = 'scoped mem for output reshape']
    %v2 = vld [vmem:[%s0] sm:$0x1]
    %vm3 = vcmask 80896
    %4 = vst.msk [vmem:[#allocation0] sm:$0x1] %vm3, %v2
    %s5 = scalar_lea.vmem %s0, 12
    %v6 = vld [vmem:[%s5] sm:$0x1]
    %s7 = scalar_lea.vmem %s0, 12
    %v8 = vld [vmem:[%s7] sm:$0x1]
    %vm9 = vcmask 64512
    %v10 = vsel %vm9, %v8, %v6
    %11 = vrot.lane.b32.xlu0 %v10, 120
    %v12 = vpop.permute.xlu0 %11
    %vm13 = vcmask 15360
    %s14 = scalar_lea.vmem [#allocation0], 8
    %15 = vst.msk [vmem:[%s14] sm:$0x1] %vm13, %v12
    %vm16 = vcmask 1048512
    %17 = vst.msk [vmem:[#allocation0] sm:$0x1] %vm16, %v12
    %s18 = scalar_lea.vmem %s0, 11
    %v19 = vld [vmem:[%s18] sm:$0x1]
    %20 = vrot.lane.b32.xlu0 %v19, 110
    %v21 = vpop.permute.xlu0 %20
    %vm22 = vcmask 982896
    %23 = vst.msk [vmem:[#allocation0] sm:$0x1] %vm22, %v21
    %s24 = scalar_lea.vmem %s0, 10
    %v25 = vld [vmem:[%s24] sm:$0x1]
    %26 = vrot.lane.b32.xlu0 %v25, 100
    %v27 = vpop.permute.xlu0 %26
    %vm28 = vcmask 900896
    %29 = vst.msk [vmem:[#allocation0] sm:$0x1] %vm28, %v27
    %s30 = scalar_lea.vmem %s0, 9
    %v31 = vld [vmem:[%s30] sm:$0x1]
    %32 = vrot.lane.b32.xlu0 %v31, 90
    %v33 = vpop.permute.xlu0 %32
    %vm34 = vcmask 818896
    %35 = vst.msk [vmem:[#allocation0] sm:$0x1] %vm34, %v33
    %s36 = scalar_lea.vmem %s0, 8
    %v37 = vld [vmem:[%s36] sm:$0x1]
    %38 = vrot.lane.b32.xlu0 %v37, 80
    %v39 = vpop.permute.xlu0 %38
    %vm40 = vcmask 736896
    %41 = vst.msk [vmem:[#allocation0] sm:$0x1] %vm40, %v39
    %s42 = scalar_lea.vmem %s0, 20
    %v43 = vld [vmem:[%s42] sm:$0x1]
    %44 = vrot.lane.b32.xlu0 %v43, 72
    %v45 = vpop.permute.xlu0 %44
    %vm46 = vcmask 671296
    %s47 = scalar_lea.vmem [#allocation0], 8
    %48 = vst.msk [vmem:[%s47] sm:$0x1] %vm46, %v45
    %s49 = scalar_lea.vmem %s0, 7
    %v50 = vld [vmem:[%s49] sm:$0x1]
    %51 = vrot.lane.b32.xlu0 %v50, 70
    %v52 = vpop.permute.xlu0 %51
    %vm53 = vcmask 654896
    %54 = vst.msk [vmem:[#allocation0] sm:$0x1] %vm53, %v52
    %s55 = scalar_lea.vmem %s0, 19
    %v56 = vld [vmem:[%s55] sm:$0x1]
    %57 = vrot.lane.b32.xlu0 %v56, 62
    %v58 = vpop.permute.xlu0 %57
    %vm59 = vcmask 589296
    %s60 = scalar_lea.vmem [#allocation0], 8
    %61 = vst.msk [vmem:[%s60] sm:$0x1] %vm59, %v58
    %s62 = scalar_lea.vmem %s0, 6
    %v63 = vld [vmem:[%s62] sm:$0x1]
    %64 = vrot.lane.b32.xlu0 %v63, 60
    %v65 = vpop.permute.xlu0 %64
    %vm66 = vcmask 572896
    %67 = vst.msk [vmem:[#allocation0] sm:$0x1] %vm66, %v65
    %s68 = scalar_lea.vmem %s0, 18
    %v69 = vld [vmem:[%s68] sm:$0x1]
    %70 = vrot.lane.b32.xlu0 %v69, 52
    %v71 = vpop.permute.xlu0 %70
    %vm72 = vcmask 507296
    %s73 = scalar_lea.vmem [#allocation0], 8
    %74 = vst.msk [vmem:[%s73] sm:$0x1] %vm72, %v71
    %s75 = scalar_lea.vmem %s0, 5
    %v76 = vld [vmem:[%s75] sm:$0x1]
    %77 = vrot.lane.b32.xlu0 %v76, 50
    %v78 = vpop.permute.xlu0 %77
    %vm79 = vcmask 490896
    %80 = vst.msk [vmem:[#allocation0] sm:$0x1] %vm79, %v78
    %s81 = scalar_lea.vmem %s0, 17
    %v82 = vld [vmem:[%s81] sm:$0x1]
    %83 = vrot.lane.b32.xlu0 %v82, 42
    %v84 = vpop.permute.xlu0 %83
    %vm85 = vcmask 425296
    %s86 = scalar_lea.vmem [#allocation0], 8
    %87 = vst.msk [vmem:[%s86] sm:$0x1] %vm85, %v84
    %s88 = scalar_lea.vmem %s0, 4
    %v89 = vld [vmem:[%s88] sm:$0x1]
    %90 = vrot.lane.b32.xlu0 %v89, 40
    %v91 = vpop.permute.xlu0 %90
    %vm92 = vcmask 408896
    %93 = vst.msk [vmem:[#allocation0] sm:$0x1] %vm92, %v91
    %s94 = scalar_lea.vmem %s0, 16
    %v95 = vld [vmem:[%s94] sm:$0x1]
    %96 = vrot.lane.b32.xlu0 %v95, 32
    %v97 = vpop.permute.xlu0 %96
    %vm98 = vcmask 343296
    %s99 = scalar_lea.vmem [#allocation0], 8
    %100 = vst.msk [vmem:[%s99] sm:$0x1] %vm98, %v97
    %s101 = scalar_lea.vmem %s0, 3
    %v102 = vld [vmem:[%s101] sm:$0x1]
    %103 = vrot.lane.b32.xlu0 %v102, 30
    %v104 = vpop.permute.xlu0 %103
    %vm105 = vcmask 326896
    %106 = vst.msk [vmem:[#allocation0] sm:$0x1] %vm105, %v104
    %s107 = scalar_lea.vmem %s0, 15
    %v108 = vld [vmem:[%s107] sm:$0x1]
    %109 = vrot.lane.b32.xlu0 %v108, 22
    %v110 = vpop.permute.xlu0 %109
    %vm111 = vcmask 261296
    %s112 = scalar_lea.vmem [#allocation0], 8
    %113 = vst.msk [vmem:[%s112] sm:$0x1] %vm111, %v110
    %s114 = scalar_lea.vmem %s0, 2
    %v115 = vld [vmem:[%s114] sm:$0x1]
    %116 = vrot.lane.b32.xlu0 %v115, 20
    %v117 = vpop.permute.xlu0 %116
    %vm118 = vcmask 244896
    %119 = vst.msk [vmem:[#allocation0] sm:$0x1] %vm118, %v117
    %s120 = scalar_lea.vmem %s0, 14
    %v121 = vld [vmem:[%s120] sm:$0x1]
    %122 = vrot.lane.b32.xlu0 %v121, 12
    %v123 = vpop.permute.xlu0 %122
    %vm124 = vcmask 179296
    %s125 = scalar_lea.vmem [#allocation0], 8
    %126 = vst.msk [vmem:[%s125] sm:$0x1] %vm124, %v123
    %s127 = scalar_lea.vmem %s0, 1
    %v128 = vld [vmem:[%s127] sm:$0x1]
    %129 = vrot.lane.b32.xlu0 %v128, 10
    %v130 = vpop.permute.xlu0 %129
    %vm131 = vcmask 162896
    %132 = vst.msk [vmem:[#allocation0] sm:$0x1] %vm131, %v130
    %s133 = scalar_lea.vmem %s0, 13
    %v134 = vld [vmem:[%s133] sm:$0x1]
    %135 = vrot.lane.b32.xlu0 %v134, 2
    %v136 = vpop.permute.xlu0 %135
    %vm137 = vcmask 97296
    %s138 = scalar_lea.vmem [#allocation0], 8
    %139 = vst.msk [vmem:[%s138] sm:$0x1] %vm137, %v136
    %s141 = sshllo.u32 0, 1
    %v143 = vld [vmem:[#allocation0] sm:%s141]
    %s144 = sshllo.u32 0, 1
    %145 = vst [vmem:[%s1] sm:%s144] %v143
    %s146 = scalar_lea.vmem [#allocation0], 8
    %v147 = vld [vmem:[%s146] sm:%s141]
    %s148 = sshllo.u32 0, 1
    %s149 = scalar_lea.vmem %s1, 1
    %150 = vst [vmem:[%s149] sm:%s148] %v147

// kernel: tile.38
$region0: #{tile.38}
  #allocation0 [shape = 's32[1]{0}', space=sflag, size = 0x4, scoped, tag = 'scoped memory for tile.38']
  %s0 = inlined_call_operand.vmem [shape: f32[20], index: 0, kind: input, shape index: {}]
  %s1 = inlined_call_operand.vmem [shape: f32[11,20], index: 1, kind: output, shape index: {}]
  // Predicated region
  $region2: #{tile.38} parent=0 // pred_check
    _
  $region3: #{tile.38} parent=0 // pred_check_branch
    %3 = sbr.rel (0) target = $region5
  $region4: #{tile.38} parent=0 // pred_region
    _
  $region5: #{tile.38} parent=0 // pred_fallthru
    _
  %v4 = vld [vmem:[%s0] ss:$0 sm:$0xff]
  %5 = vst [vmem:[%s1] sm:$0xff] %v4
  %s6 = scalar_lea.vmem %s1, 8
  %7 = vst [vmem:[%s6] sm:$0xff] %v4

// kernel: tile.39
$region0: #{tile.39}
  %s0 = inlined_call_operand.vmem [shape: f32[11,20], index: 0, kind: input, shape index: {}]
  %s1 = inlined_call_operand.vmem [shape: f32[1,220], index: 1, kind: output, shape index: {}]
  $region1: #{tile.39} parent=0
    #allocation0 [shape = 'u8[8192]{0}', space=vmem, size = 0x2000, scoped, tag = 'scoped mem for output reshape']
    %v2 = vld [vmem:[%s0] sm:$0x1]
    %vm3 = vcmask 162816
    %4 = vst.msk [vmem:[#allocation0] sm:$0x1] %vm3, %v2
    %s5 = scalar_lea.vmem %s0, 6
    %v6 = vld [vmem:[%s5] sm:$0x1]
    %s7 = scalar_lea.vmem %s0, 6
    %v8 = vld [vmem:[%s7] sm:$0x1]
    %vm9 = vcmask 64512
    %v10 = vsel %vm9, %v8, %v6
    %11 = vrot.lane.b32.xlu0 %v10, 120
    %v12 = vpop.permute.xlu0 %11
    %vm13 = vcmask 97280
    %s14 = scalar_lea.vmem [#allocation0], 8
    %15 = vst.msk [vmem:[%s14] sm:$0x1] %vm13, %v12
    %vm16 = vcmask 1048512
    %17 = vst.msk [vmem:[#allocation0] sm:$0x1] %vm16, %v12
    %s18 = scalar_lea.vmem %s0, 5
    %v19 = vld [vmem:[%s18] sm:$0x1]
    %20 = vrot.lane.b32.xlu0 %v19, 100
    %v21 = vpop.permute.xlu0 %20
    %vm22 = vcmask 982816
    %23 = vst.msk [vmem:[#allocation0] sm:$0x1] %vm22, %v21
    %s24 = scalar_lea.vmem %s0, 4
    %v25 = vld [vmem:[%s24] sm:$0x1]
    %26 = vrot.lane.b32.xlu0 %v25, 80
    %v27 = vpop.permute.xlu0 %26
    %vm28 = vcmask 818816
    %29 = vst.msk [vmem:[#allocation0] sm:$0x1] %vm28, %v27
    %s30 = scalar_lea.vmem %s0, 10
    %v31 = vld [vmem:[%s30] sm:$0x1]
    %32 = vrot.lane.b32.xlu0 %v31, 72
    %v33 = vpop.permute.xlu0 %32
    %vm34 = vcmask 753216
    %s35 = scalar_lea.vmem [#allocation0], 8
    %36 = vst.msk [vmem:[%s35] sm:$0x1] %vm34, %v33
    %s37 = scalar_lea.vmem %s0, 3
    %v38 = vld [vmem:[%s37] sm:$0x1]
    %39 = vrot.lane.b32.xlu0 %v38, 60
    %v40 = vpop.permute.xlu0 %39
    %vm41 = vcmask 654816
    %42 = vst.msk [vmem:[#allocation0] sm:$0x1] %vm41, %v40
    %s43 = scalar_lea.vmem %s0, 9
    %v44 = vld [vmem:[%s43] sm:$0x1]
    %45 = vrot.lane.b32.xlu0 %v44, 52
    %v46 = vpop.permute.xlu0 %45
    %vm47 = vcmask 589216
    %s48 = scalar_lea.vmem [#allocation0], 8
    %49 = vst.msk [vmem:[%s48] sm:$0x1] %vm47, %v46
    %s50 = scalar_lea.vmem %s0, 2
    %v51 = vld [vmem:[%s50] sm:$0x1]
    %52 = vrot.lane.b32.xlu0 %v51, 40
    %v53 = vpop.permute.xlu0 %52
    %vm54 = vcmask 490816
    %55 = vst.msk [vmem:[#allocation0] sm:$0x1] %vm54, %v53
    %s56 = scalar_lea.vmem %s0, 8
    %v57 = vld [vmem:[%s56] sm:$0x1]
    %58 = vrot.lane.b32.xlu0 %v57, 32
    %v59 = vpop.permute.xlu0 %58
    %vm60 = vcmask 425216
    %s61 = scalar_lea.vmem [#allocation0], 8
    %62 = vst.msk [vmem:[%s61] sm:$0x1] %vm60, %v59
    %s63 = scalar_lea.vmem %s0, 1
    %v64 = vld [vmem:[%s63] sm:$0x1]
    %65 = vrot.lane.b32.xlu0 %v64, 20
    %v66 = vpop.permute.xlu0 %65
    %vm67 = vcmask 326816
    %68 = vst.msk [vmem:[#allocation0] sm:$0x1] %vm67, %v66
    %s69 = scalar_lea.vmem %s0, 7
    %v70 = vld [vmem:[%s69] sm:$0x1]
    %71 = vrot.lane.b32.xlu0 %v70, 12
    %v72 = vpop.permute.xlu0 %71
    %vm73 = vcmask 261216
    %s74 = scalar_lea.vmem [#allocation0], 8
    %75 = vst.msk [vmem:[%s74] sm:$0x1] %vm73, %v72
    %s77 = sshllo.u32 0, 1
    %v79 = vld [vmem:[#allocation0] sm:%s77]
    %s80 = sshllo.u32 0, 1
    %81 = vst [vmem:[%s1] sm:%s80] %v79
    %s82 = scalar_lea.vmem [#allocation0], 8
    %v83 = vld [vmem:[%s82] sm:%s77]
    %s84 = sshllo.u32 0, 1
    %s85 = scalar_lea.vmem %s1, 1
    %86 = vst [vmem:[%s85] sm:%s84] %v83

// kernel: tile.43
$region0: #{tile.43}
  #allocation0 [shape = 's32[1]{0}', space=sflag, size = 0x4, scoped, tag = 'scoped memory for tile.43']
  %s0 = inlined_call_operand.vmem [shape: f32[30], index: 0, kind: input, shape index: {}]
  %s1 = inlined_call_operand.vmem [shape: f32[6,30], index: 1, kind: output, shape index: {}]
  // Predicated region
  $region2: #{tile.43} parent=0 // pred_check
    _
  $region3: #{tile.43} parent=0 // pred_check_branch
    %3 = sbr.rel (0) target = $region5
  $region4: #{tile.43} parent=0 // pred_region
    _
  $region5: #{tile.43} parent=0 // pred_fallthru
    _
  %v4 = vld [vmem:[%s0] ss:$0 sm:$0xff]
  %5 = vst [vmem:[%s1] sm:$0xff] %v4

// kernel: tile.44
$region0: #{tile.44}
  %s0 = inlined_call_operand.vmem [shape: f32[6,30], index: 0, kind: input, shape index: {}]
  %s1 = inlined_call_operand.vmem [shape: f32[1,180], index: 1, kind: output, shape index: {}]
  $region1: #{tile.44} parent=0
    #allocation0 [shape = 'u8[8192]{0}', space=vmem, size = 0x2000, scoped, tag = 'scoped mem for output reshape']
    %v2 = vld [vmem:[%s0] sm:$0x1]
    %vm3 = vcmask 244736
    %4 = vst.msk [vmem:[#allocation0] sm:$0x1] %vm3, %v2
    %s5 = scalar_lea.vmem %s0, 4
    %v6 = vld [vmem:[%s5] sm:$0x1]
    %s7 = scalar_lea.vmem %s0, 4
    %v8 = vld [vmem:[%s7] sm:$0x1]
    %vm9 = vcmask 64512
    %v10 = vsel %vm9, %v8, %v6
    %11 = vrot.lane.b32.xlu0 %v10, 120
    %v12 = vpop.permute.xlu0 %11
    %vm13 = vcmask 179200
    %s14 = scalar_lea.vmem [#allocation0], 8
    %15 = vst.msk [vmem:[%s14] sm:$0x1] %vm13, %v12
    %vm16 = vcmask 1048512
    %17 = vst.msk [vmem:[#allocation0] sm:$0x1] %vm16, %v12
    %s18 = scalar_lea.vmem %s0, 3
    %v19 = vld [vmem:[%s18] sm:$0x1]
    %20 = vrot.lane.b32.xlu0 %v19, 90
    %v21 = vpop.permute.xlu0 %20
    %vm22 = vcmask 982736
    %23 = vst.msk [vmem:[#allocation0] sm:$0x1] %vm22, %v21
    %s24 = scalar_lea.vmem %s0, 2
    %v25 = vld [vmem:[%s24] sm:$0x1]
    %26 = vrot.lane.b32.xlu0 %v25, 60
    %v27 = vpop.permute.xlu0 %26
    %vm28 = vcmask 736736
    %29 = vst.msk [vmem:[#allocation0] sm:$0x1] %vm28, %v27
    %s30 = scalar_lea.vmem %s0, 1
    %v31 = vld [vmem:[%s30] sm:$0x1]
    %32 = vrot.lane.b32.xlu0 %v31, 30
    %v33 = vpop.permute.xlu0 %32
    %vm34 = vcmask 490736
    %35 = vst.msk [vmem:[#allocation0] sm:$0x1] %vm34, %v33
    %s36 = scalar_lea.vmem %s0, 5
    %v37 = vld [vmem:[%s36] sm:$0x1]
    %38 = vrot.lane.b32.xlu0 %v37, 22
    %v39 = vpop.permute.xlu0 %38
    %vm40 = vcmask 425136
    %s41 = scalar_lea.vmem [#allocation0], 8
    %42 = vst.msk [vmem:[%s41] sm:$0x1] %vm40, %v39
    %s44 = sshllo.u32 0, 1
    %v46 = vld [vmem:[#allocation0] sm:%s44]
    %s47 = sshllo.u32 0, 1
    %48 = vst [vmem:[%s1] sm:%s47] %v46
    %s49 = scalar_lea.vmem [#allocation0], 8
    %v50 = vld [vmem:[%s49] sm:%s44]
    %s51 = sshllo.u32 0, 1
    %s52 = scalar_lea.vmem %s1, 1
    %53 = vst [vmem:[%s52] sm:%s51] %v50

// kernel: convae_forward.1
$region0: #{convae_forward.1}
  #allocation0 [shape = 'u32[]', space=smem, size = 0x4, offset = 0x4, fixed_abs, tag = 'smem constant byte address 0x4 - core index']
  #allocation1 [shape = 'u32[144,128]{1,0:T(1,128)}', space=vmem, size = 0x12000, scoped, tag = 'internal scratch']
  %s0 = inlined_call_operand.vmem [shape: f32[2,48,42], index: 0, kind: input, shape index: {}]
  %s1 = inlined_call_operand.vmem [shape: f32[5,24,48], index: 1, kind: input, shape index: {}]
  %s2 = inlined_call_operand.vmem [shape: f32[5,42,210], index: 2, kind: input, shape index: {}]
  %s3 = inlined_call_operand.vmem [shape: f32[1,210], index: 3, kind: input, shape index: {}]
  %s4 = inlined_call_operand.vmem [shape: f32[3,12,24], index: 4, kind: input, shape index: {}]
  %s5 = inlined_call_operand.vmem [shape: f32[3,210,220], index: 5, kind: input, shape index: {}]
  %s6 = inlined_call_operand.vmem [shape: f32[1,220], index: 6, kind: input, shape index: {}]
  %s7 = inlined_call_operand.vmem [shape: f32[3,6,12], index: 7, kind: input, shape index: {}]
  %s8 = inlined_call_operand.vmem [shape: f32[3,220,180], index: 8, kind: input, shape index: {}]
  %s9 = inlined_call_operand.vmem [shape: f32[1,180], index: 9, kind: input, shape index: {}]
  %s10 = inlined_call_operand.vmem [shape: f32[3,12,6], index: 10, kind: input, shape index: {}]
  %s11 = inlined_call_operand.vmem [shape: f32[3,180,220], index: 11, kind: input, shape index: {}]
  %s12 = inlined_call_operand.vmem [shape: f32[1,220], index: 12, kind: input, shape index: {}]
  %s13 = inlined_call_operand.vmem [shape: f32[3,24,12], index: 13, kind: input, shape index: {}]
  %s14 = inlined_call_operand.vmem [shape: f32[3,220,210], index: 14, kind: input, shape index: {}]
  %s15 = inlined_call_operand.vmem [shape: f32[1,210], index: 15, kind: input, shape index: {}]
  %s16 = inlined_call_operand.vmem [shape: f32[5,48,24], index: 16, kind: input, shape index: {}]
  %s17 = inlined_call_operand.vmem [shape: f32[5,210,42], index: 17, kind: input, shape index: {}]
  %s18 = inlined_call_operand.vmem [shape: f32[1,42], index: 18, kind: input, shape index: {}]
  %s19 = inlined_call_operand.vmem [shape: f32[2,48,42], index: 19, kind: output, shape index: {}]
  %s20 = sld [smem:[#allocation0]]
  $region109: #{convae_forward.1} parent=0
    _
  %s22 = ssub.s32 1, %s20
  %s23 = scalar_select 0, %s22, %s20
  loop: start=0, step=1, limit=4
  $region2: #{convae_forward.1} parent=0 // loop_pre_header
    _
  $region3: #{convae_forward.1} parent=0 // loop_header
    %s25 = sphi 0, %s29
    %p26 = scmp.ge.s32.totalorder %s25, 4
    %s35 = sphi 0, %s37
    %s38 = sphi 0, %s35
    %s39 = sphi 0, %s38
    %s55 = sphi 0, %s39
    %s59 = sphi 0, %s59
    %s61 = sphi 0, %s59
    %s62 = sphi 0, %s61
    %s76 = sphi 0, %s62
    %s80 = sphi 0, %s80
    %s82 = sphi 0, %s80
    %s83 = sphi 0, %s82
    %s97 = sphi 0, %s83
    %s101 = sphi 0, %s101
    %s103 = sphi 0, %s101
    %s104 = sphi 0, %s103
    %s118 = sphi 0, %s104
    %s122 = sphi 0, %s122
    %s124 = sphi 0, %s122
    %s125 = sphi 0, %s124
    %s139 = sphi 0, %s125
    %s143 = sphi 0, %s143
    %s145 = sphi 0, %s143
    %s146 = sphi 0, %s145
    %s160 = sphi 0, %s146
    %s164 = sphi 0, %s164
    %s166 = sphi 0, %s164
    %s167 = sphi 0, %s166
    %s181 = sphi 0, %s167
    %s185 = sphi 0, %s185
    %s187 = sphi 0, %s185
    %s188 = sphi 0, %s187
    %s202 = sphi 0, %s188
    %s206 = sphi 0, %s206
    %s208 = sphi 0, %s206
    %s209 = sphi 0, %s208
    %s223 = sphi 0, %s209
    %s227 = sphi 0, %s227
    %s229 = sphi 0, %s227
    %s230 = sphi 0, %s229
    %s244 = sphi 0, %s230
    %s248 = sphi 0, %s248
    %s250 = sphi 0, %s248
    %s251 = sphi 0, %s250
    %s265 = sphi 0, %s251
    %s269 = sphi 0, %s269
    %s271 = sphi 0, %s269
    %s272 = sphi 0, %s271
    %s286 = sphi 0, %s272
    %s290 = sphi 0, %s290
    %s292 = sphi 0, %s290
    %s293 = sphi 0, %s292
    %s307 = sphi 0, %s293
    %s311 = sphi 0, %s311
    %s313 = sphi 0, %s311
    %s314 = sphi 0, %s313
    %s328 = sphi 0, %s314
    %s332 = sphi 0, %s332
    %s334 = sphi 0, %s332
    %s335 = sphi 0, %s334
    %s349 = sphi 0, %s335
    %s353 = sphi 0, %s353
    %s355 = sphi 0, %s353
    %s356 = sphi 0, %s355
    %s370 = sphi 0, %s356
    %s374 = sphi 0, %s374
    %s376 = sphi 0, %s374
    %s377 = sphi 0, %s376
    %s391 = sphi 0, %s377
    %s395 = sphi 0, %s395
    %s397 = sphi 0, %s395
    %s398 = sphi 0, %s397
    %s412 = sphi 0, %s398
    %s416 = sphi 0, %s416
    %s418 = sphi 0, %s416
    %s419 = sphi 0, %s418
    %s433 = sphi 0, %s419
    %s439 = sphi 0, %s441
    %s442 = sphi 0, %s439
    %s443 = sphi 0, %s442
    %s459 = sphi 0, %s443
  $region4: #{convae_forward.1} parent=0 // loop_header_branch
    %28 = sbr.rel (%p26) target = $region8
  $region5: #{convae_forward.1} parent=0 // loop_body
    %s30 = ssub.s32 %s25, 1
    %s31 = ssub.s32 %s25, 2
    %s32 = sadd.s32 %s25, 1
    %s33 = ssub.s32 %s25, %s32
    %p34 = scmp.eq.s32.totalorder %s33, 0
    %s36 = sadd.s32 %s35, 1
    %s37 = scalar_select %p34, %s35, %s36
    %p40 = pneg %p34
    %p41 = scmp.eq.s32.totalorder %s25, 1
    %p42 = por %p40, %p41
    %p43 = scmp.ne.s32.totalorder %s35, %s38
    %p44 = scmp.eq.s32.totalorder %s25, 0
    %p45 = por %p43, %p44
    %p46 = scmp.ne.s32.totalorder %s35, %s38
    %p47 = scmp.eq.s32.totalorder %s30, 1
    %p48 = por %p46, %p47
    %p49 = scmp.ne.s32.totalorder %s38, %s39
    %p50 = scmp.eq.s32.totalorder %s30, 0
    %p51 = por %p49, %p50
    %p52 = scmp.ne.s32.totalorder %s38, %s39
    %p53 = scmp.eq.s32.totalorder %s31, 1
    %p54 = por %p52, %p53
    %p56 = scmp.ne.s32.totalorder %s39, %s55
    %p57 = scmp.eq.s32.totalorder %s31, 0
    %p58 = por %p56, %p57
    %s60 = sadd.s32 %s59, 1
    %p63 = scmp.eq.s32.totalorder %s25, 1
    %p64 = scmp.ne.s32.totalorder %s59, %s61
    %p65 = scmp.eq.s32.totalorder %s25, 0
    %p66 = por %p64, %p65
    %p67 = scmp.ne.s32.totalorder %s59, %s61
    %p68 = scmp.eq.s32.totalorder %s30, 1
    %p69 = por %p67, %p68
    %p70 = scmp.ne.s32.totalorder %s61, %s62
    %p71 = scmp.eq.s32.totalorder %s30, 0
    %p72 = por %p70, %p71
    %p73 = scmp.ne.s32.totalorder %s61, %s62
    %p74 = scmp.eq.s32.totalorder %s31, 1
    %p75 = por %p73, %p74
    %p77 = scmp.ne.s32.totalorder %s62, %s76
    %p78 = scmp.eq.s32.totalorder %s31, 0
    %p79 = por %p77, %p78
    %s81 = sadd.s32 %s80, 1
    %p84 = scmp.eq.s32.totalorder %s25, 1
    %p85 = scmp.ne.s32.totalorder %s80, %s82
    %p86 = scmp.eq.s32.totalorder %s25, 0
    %p87 = por %p85, %p86
    %p88 = scmp.ne.s32.totalorder %s80, %s82
    %p89 = scmp.eq.s32.totalorder %s30, 1
    %p90 = por %p88, %p89
    %p91 = scmp.ne.s32.totalorder %s82, %s83
    %p92 = scmp.eq.s32.totalorder %s30, 0
    %p93 = por %p91, %p92
    %p94 = scmp.ne.s32.totalorder %s82, %s83
    %p95 = scmp.eq.s32.totalorder %s31, 1
    %p96 = por %p94, %p95
    %p98 = scmp.ne.s32.totalorder %s83, %s97
    %p99 = scmp.eq.s32.totalorder %s31, 0
    %p100 = por %p98, %p99
    %s102 = sadd.s32 %s101, 1
    %p105 = scmp.eq.s32.totalorder %s25, 1
    %p106 = scmp.ne.s32.totalorder %s101, %s103
    %p107 = scmp.eq.s32.totalorder %s25, 0
    %p108 = por %p106, %p107
    %p109 = scmp.ne.s32.totalorder %s101, %s103
    %p110 = scmp.eq.s32.totalorder %s30, 1
    %p111 = por %p109, %p110
    %p112 = scmp.ne.s32.totalorder %s103, %s104
    %p113 = scmp.eq.s32.totalorder %s30, 0
    %p114 = por %p112, %p113
    %p115 = scmp.ne.s32.totalorder %s103, %s104
    %p116 = scmp.eq.s32.totalorder %s31, 1
    %p117 = por %p115, %p116
    %p119 = scmp.ne.s32.totalorder %s104, %s118
    %p120 = scmp.eq.s32.totalorder %s31, 0
    %p121 = por %p119, %p120
    %s123 = sadd.s32 %s122, 1
    %p126 = scmp.eq.s32.totalorder %s25, 1
    %p127 = scmp.ne.s32.totalorder %s122, %s124
    %p128 = scmp.eq.s32.totalorder %s25, 0
    %p129 = por %p127, %p128
    %p130 = scmp.ne.s32.totalorder %s122, %s124
    %p131 = scmp.eq.s32.totalorder %s30, 1
    %p132 = por %p130, %p131
    %p133 = scmp.ne.s32.totalorder %s124, %s125
    %p134 = scmp.eq.s32.totalorder %s30, 0
    %p135 = por %p133, %p134
    %p136 = scmp.ne.s32.totalorder %s124, %s125
    %p137 = scmp.eq.s32.totalorder %s31, 1
    %p138 = por %p136, %p137
    %p140 = scmp.ne.s32.totalorder %s125, %s139
    %p141 = scmp.eq.s32.totalorder %s31, 0
    %p142 = por %p140, %p141
    %s144 = sadd.s32 %s143, 1
    %p147 = scmp.eq.s32.totalorder %s25, 1
    %p148 = scmp.ne.s32.totalorder %s143, %s145
    %p149 = scmp.eq.s32.totalorder %s25, 0
    %p150 = por %p148, %p149
    %p151 = scmp.ne.s32.totalorder %s143, %s145
    %p152 = scmp.eq.s32.totalorder %s30, 1
    %p153 = por %p151, %p152
    %p154 = scmp.ne.s32.totalorder %s145, %s146
    %p155 = scmp.eq.s32.totalorder %s30, 0
    %p156 = por %p154, %p155
    %p157 = scmp.ne.s32.totalorder %s145, %s146
    %p158 = scmp.eq.s32.totalorder %s31, 1
    %p159 = por %p157, %p158
    %p161 = scmp.ne.s32.totalorder %s146, %s160
    %p162 = scmp.eq.s32.totalorder %s31, 0
    %p163 = por %p161, %p162
    %s165 = sadd.s32 %s164, 1
    %p168 = scmp.eq.s32.totalorder %s25, 1
    %p169 = scmp.ne.s32.totalorder %s164, %s166
    %p170 = scmp.eq.s32.totalorder %s25, 0
    %p171 = por %p169, %p170
    %p172 = scmp.ne.s32.totalorder %s164, %s166
    %p173 = scmp.eq.s32.totalorder %s30, 1
    %p174 = por %p172, %p173
    %p175 = scmp.ne.s32.totalorder %s166, %s167
    %p176 = scmp.eq.s32.totalorder %s30, 0
    %p177 = por %p175, %p176
    %p178 = scmp.ne.s32.totalorder %s166, %s167
    %p179 = scmp.eq.s32.totalorder %s31, 1
    %p180 = por %p178, %p179
    %p182 = scmp.ne.s32.totalorder %s167, %s181
    %p183 = scmp.eq.s32.totalorder %s31, 0
    %p184 = por %p182, %p183
    %s186 = sadd.s32 %s185, 1
    %p189 = scmp.eq.s32.totalorder %s25, 1
    %p190 = scmp.ne.s32.totalorder %s185, %s187
    %p191 = scmp.eq.s32.totalorder %s25, 0
    %p192 = por %p190, %p191
    %p193 = scmp.ne.s32.totalorder %s185, %s187
    %p194 = scmp.eq.s32.totalorder %s30, 1
    %p195 = por %p193, %p194
    %p196 = scmp.ne.s32.totalorder %s187, %s188
    %p197 = scmp.eq.s32.totalorder %s30, 0
    %p198 = por %p196, %p197
    %p199 = scmp.ne.s32.totalorder %s187, %s188
    %p200 = scmp.eq.s32.totalorder %s31, 1
    %p201 = por %p199, %p200
    %p203 = scmp.ne.s32.totalorder %s188, %s202
    %p204 = scmp.eq.s32.totalorder %s31, 0
    %p205 = por %p203, %p204
    %s207 = sadd.s32 %s206, 1
    %p210 = scmp.eq.s32.totalorder %s25, 1
    %p211 = scmp.ne.s32.totalorder %s206, %s208
    %p212 = scmp.eq.s32.totalorder %s25, 0
    %p213 = por %p211, %p212
    %p214 = scmp.ne.s32.totalorder %s206, %s208
    %p215 = scmp.eq.s32.totalorder %s30, 1
    %p216 = por %p214, %p215
    %p217 = scmp.ne.s32.totalorder %s208, %s209
    %p218 = scmp.eq.s32.totalorder %s30, 0
    %p219 = por %p217, %p218
    %p220 = scmp.ne.s32.totalorder %s208, %s209
    %p221 = scmp.eq.s32.totalorder %s31, 1
    %p222 = por %p220, %p221
    %p224 = scmp.ne.s32.totalorder %s209, %s223
    %p225 = scmp.eq.s32.totalorder %s31, 0
    %p226 = por %p224, %p225
    %s228 = sadd.s32 %s227, 1
    %p231 = scmp.eq.s32.totalorder %s25, 1
    %p232 = scmp.ne.s32.totalorder %s227, %s229
    %p233 = scmp.eq.s32.totalorder %s25, 0
    %p234 = por %p232, %p233
    %p235 = scmp.ne.s32.totalorder %s227, %s229
    %p236 = scmp.eq.s32.totalorder %s30, 1
    %p237 = por %p235, %p236
    %p238 = scmp.ne.s32.totalorder %s229, %s230
    %p239 = scmp.eq.s32.totalorder %s30, 0
    %p240 = por %p238, %p239
    %p241 = scmp.ne.s32.totalorder %s229, %s230
    %p242 = scmp.eq.s32.totalorder %s31, 1
    %p243 = por %p241, %p242
    %p245 = scmp.ne.s32.totalorder %s230, %s244
    %p246 = scmp.eq.s32.totalorder %s31, 0
    %p247 = por %p245, %p246
    %s249 = sadd.s32 %s248, 1
    %p252 = scmp.eq.s32.totalorder %s25, 1
    %p253 = scmp.ne.s32.totalorder %s248, %s250
    %p254 = scmp.eq.s32.totalorder %s25, 0
    %p255 = por %p253, %p254
    %p256 = scmp.ne.s32.totalorder %s248, %s250
    %p257 = scmp.eq.s32.totalorder %s30, 1
    %p258 = por %p256, %p257
    %p259 = scmp.ne.s32.totalorder %s250, %s251
    %p260 = scmp.eq.s32.totalorder %s30, 0
    %p261 = por %p259, %p260
    %p262 = scmp.ne.s32.totalorder %s250, %s251
    %p263 = scmp.eq.s32.totalorder %s31, 1
    %p264 = por %p262, %p263
    %p266 = scmp.ne.s32.totalorder %s251, %s265
    %p267 = scmp.eq.s32.totalorder %s31, 0
    %p268 = por %p266, %p267
    %s270 = sadd.s32 %s269, 1
    %p273 = scmp.eq.s32.totalorder %s25, 1
    %p274 = scmp.ne.s32.totalorder %s269, %s271
    %p275 = scmp.eq.s32.totalorder %s25, 0
    %p276 = por %p274, %p275
    %p277 = scmp.ne.s32.totalorder %s269, %s271
    %p278 = scmp.eq.s32.totalorder %s30, 1
    %p279 = por %p277, %p278
    %p280 = scmp.ne.s32.totalorder %s271, %s272
    %p281 = scmp.eq.s32.totalorder %s30, 0
    %p282 = por %p280, %p281
    %p283 = scmp.ne.s32.totalorder %s271, %s272
    %p284 = scmp.eq.s32.totalorder %s31, 1
    %p285 = por %p283, %p284
    %p287 = scmp.ne.s32.totalorder %s272, %s286
    %p288 = scmp.eq.s32.totalorder %s31, 0
    %p289 = por %p287, %p288
    %s291 = sadd.s32 %s290, 1
    %p294 = scmp.eq.s32.totalorder %s25, 1
    %p295 = scmp.ne.s32.totalorder %s290, %s292
    %p296 = scmp.eq.s32.totalorder %s25, 0
    %p297 = por %p295, %p296
    %p298 = scmp.ne.s32.totalorder %s290, %s292
    %p299 = scmp.eq.s32.totalorder %s30, 1
    %p300 = por %p298, %p299
    %p301 = scmp.ne.s32.totalorder %s292, %s293
    %p302 = scmp.eq.s32.totalorder %s30, 0
    %p303 = por %p301, %p302
    %p304 = scmp.ne.s32.totalorder %s292, %s293
    %p305 = scmp.eq.s32.totalorder %s31, 1
    %p306 = por %p304, %p305
    %p308 = scmp.ne.s32.totalorder %s293, %s307
    %p309 = scmp.eq.s32.totalorder %s31, 0
    %p310 = por %p308, %p309
    %s312 = sadd.s32 %s311, 1
    %p315 = scmp.eq.s32.totalorder %s25, 1
    %p316 = scmp.ne.s32.totalorder %s311, %s313
    %p317 = scmp.eq.s32.totalorder %s25, 0
    %p318 = por %p316, %p317
    %p319 = scmp.ne.s32.totalorder %s311, %s313
    %p320 = scmp.eq.s32.totalorder %s30, 1
    %p321 = por %p319, %p320
    %p322 = scmp.ne.s32.totalorder %s313, %s314
    %p323 = scmp.eq.s32.totalorder %s30, 0
    %p324 = por %p322, %p323
    %p325 = scmp.ne.s32.totalorder %s313, %s314
    %p326 = scmp.eq.s32.totalorder %s31, 1
    %p327 = por %p325, %p326
    %p329 = scmp.ne.s32.totalorder %s314, %s328
    %p330 = scmp.eq.s32.totalorder %s31, 0
    %p331 = por %p329, %p330
    %s333 = sadd.s32 %s332, 1
    %p336 = scmp.eq.s32.totalorder %s25, 1
    %p337 = scmp.ne.s32.totalorder %s332, %s334
    %p338 = scmp.eq.s32.totalorder %s25, 0
    %p339 = por %p337, %p338
    %p340 = scmp.ne.s32.totalorder %s332, %s334
    %p341 = scmp.eq.s32.totalorder %s30, 1
    %p342 = por %p340, %p341
    %p343 = scmp.ne.s32.totalorder %s334, %s335
    %p344 = scmp.eq.s32.totalorder %s30, 0
    %p345 = por %p343, %p344
    %p346 = scmp.ne.s32.totalorder %s334, %s335
    %p347 = scmp.eq.s32.totalorder %s31, 1
    %p348 = por %p346, %p347
    %p350 = scmp.ne.s32.totalorder %s335, %s349
    %p351 = scmp.eq.s32.totalorder %s31, 0
    %p352 = por %p350, %p351
    %s354 = sadd.s32 %s353, 1
    %p357 = scmp.eq.s32.totalorder %s25, 1
    %p358 = scmp.ne.s32.totalorder %s353, %s355
    %p359 = scmp.eq.s32.totalorder %s25, 0
    %p360 = por %p358, %p359
    %p361 = scmp.ne.s32.totalorder %s353, %s355
    %p362 = scmp.eq.s32.totalorder %s30, 1
    %p363 = por %p361, %p362
    %p364 = scmp.ne.s32.totalorder %s355, %s356
    %p365 = scmp.eq.s32.totalorder %s30, 0
    %p366 = por %p364, %p365
    %p367 = scmp.ne.s32.totalorder %s355, %s356
    %p368 = scmp.eq.s32.totalorder %s31, 1
    %p369 = por %p367, %p368
    %p371 = scmp.ne.s32.totalorder %s356, %s370
    %p372 = scmp.eq.s32.totalorder %s31, 0
    %p373 = por %p371, %p372
    %s375 = sadd.s32 %s374, 1
    %p378 = scmp.eq.s32.totalorder %s25, 1
    %p379 = scmp.ne.s32.totalorder %s374, %s376
    %p380 = scmp.eq.s32.totalorder %s25, 0
    %p381 = por %p379, %p380
    %p382 = scmp.ne.s32.totalorder %s374, %s376
    %p383 = scmp.eq.s32.totalorder %s30, 1
    %p384 = por %p382, %p383
    %p385 = scmp.ne.s32.totalorder %s376, %s377
    %p386 = scmp.eq.s32.totalorder %s30, 0
    %p387 = por %p385, %p386
    %p388 = scmp.ne.s32.totalorder %s376, %s377
    %p389 = scmp.eq.s32.totalorder %s31, 1
    %p390 = por %p388, %p389
    %p392 = scmp.ne.s32.totalorder %s377, %s391
    %p393 = scmp.eq.s32.totalorder %s31, 0
    %p394 = por %p392, %p393
    %s396 = sadd.s32 %s395, 1
    %p399 = scmp.eq.s32.totalorder %s25, 1
    %p400 = scmp.ne.s32.totalorder %s395, %s397
    %p401 = scmp.eq.s32.totalorder %s25, 0
    %p402 = por %p400, %p401
    %p403 = scmp.ne.s32.totalorder %s395, %s397
    %p404 = scmp.eq.s32.totalorder %s30, 1
    %p405 = por %p403, %p404
    %p406 = scmp.ne.s32.totalorder %s397, %s398
    %p407 = scmp.eq.s32.totalorder %s30, 0
    %p408 = por %p406, %p407
    %p409 = scmp.ne.s32.totalorder %s397, %s398
    %p410 = scmp.eq.s32.totalorder %s31, 1
    %p411 = por %p409, %p410
    %p413 = scmp.ne.s32.totalorder %s398, %s412
    %p414 = scmp.eq.s32.totalorder %s31, 0
    %p415 = por %p413, %p414
    %s417 = sadd.s32 %s416, 1
    %p420 = scmp.eq.s32.totalorder %s25, 1
    %p421 = scmp.ne.s32.totalorder %s416, %s418
    %p422 = scmp.eq.s32.totalorder %s25, 0
    %p423 = por %p421, %p422
    %p424 = scmp.ne.s32.totalorder %s416, %s418
    %p425 = scmp.eq.s32.totalorder %s30, 1
    %p426 = por %p424, %p425
    %p427 = scmp.ne.s32.totalorder %s418, %s419
    %p428 = scmp.eq.s32.totalorder %s30, 0
    %p429 = por %p427, %p428
    %p430 = scmp.ne.s32.totalorder %s418, %s419
    %p431 = scmp.eq.s32.totalorder %s31, 1
    %p432 = por %p430, %p431
    %p434 = scmp.ne.s32.totalorder %s419, %s433
    %p435 = scmp.eq.s32.totalorder %s31, 0
    %p436 = por %p434, %p435
    %s437 = ssub.s32 %s25, %s32
    %p438 = scmp.eq.s32.totalorder %s437, 0
    %s440 = sadd.s32 %s439, 1
    %s441 = scalar_select %p438, %s439, %s440
    %p444 = pneg %p438
    %p445 = scmp.eq.s32.totalorder %s25, 1
    %p446 = por %p444, %p445
    %p447 = scmp.ne.s32.totalorder %s439, %s442
    %p448 = scmp.eq.s32.totalorder %s25, 0
    %p449 = por %p447, %p448
    %p450 = scmp.ne.s32.totalorder %s439, %s442
    %p451 = scmp.eq.s32.totalorder %s30, 1
    %p452 = por %p450, %p451
    %p453 = scmp.ne.s32.totalorder %s442, %s443
    %p454 = scmp.eq.s32.totalorder %s30, 0
    %p455 = por %p453, %p454
    %p456 = scmp.ne.s32.totalorder %s442, %s443
    %p457 = scmp.eq.s32.totalorder %s31, 1
    %p458 = por %p456, %p457
    %p460 = scmp.ne.s32.totalorder %s443, %s459
    %p461 = scmp.eq.s32.totalorder %s31, 0
    %p462 = por %p460, %p461
    %p463 = scmp.le.s32.totalorder 1, %s25
    %p464 = scmp.lt.s32.totalorder %s25, 3
    %p465 = pnand %p463, %p464
    %p466 = pneg %p465
    // Predicated region
    $region9: #{convae_forward.1} parent=5 // pred_check
      _
    $region10: #{convae_forward.1} parent=5 // pred_check_branch
      %468 = sbr.rel (%p465) target = $region12
    $region11: #{convae_forward.1} parent=5 // pred_region
      %s469 = ssub.s32 %s25, 1
      // Predicated region
      $region13: #{convae_forward.1} parent=11 // pred_check
        %p470 = pneg %p72
      $region14: #{convae_forward.1} parent=11 // pred_check_branch
        %472 = sbr.rel (%p470) target = $region16
      $region15: #{convae_forward.1} parent=11 // pred_region
        _
      $region16: #{convae_forward.1} parent=11 // pred_fallthru
        _
      // Predicated region
      $region17: #{convae_forward.1} parent=11 // pred_check
        %p473 = pneg %p93
      $region18: #{convae_forward.1} parent=11 // pred_check_branch
        %475 = sbr.rel (%p473) target = $region20
      $region19: #{convae_forward.1} parent=11 // pred_region
        _
      $region20: #{convae_forward.1} parent=11 // pred_fallthru
        _
      // Predicated region
      $region21: #{convae_forward.1} parent=11 // pred_check
        %p476 = pneg %p114
      $region22: #{convae_forward.1} parent=11 // pred_check_branch
        %478 = sbr.rel (%p476) target = $region24
      $region23: #{convae_forward.1} parent=11 // pred_region
        _
      $region24: #{convae_forward.1} parent=11 // pred_fallthru
        _
      // Predicated region
      $region25: #{convae_forward.1} parent=11 // pred_check
        %p479 = pneg %p135
      $region26: #{convae_forward.1} parent=11 // pred_check_branch
        %481 = sbr.rel (%p479) target = $region28
      $region27: #{convae_forward.1} parent=11 // pred_region
        _
      $region28: #{convae_forward.1} parent=11 // pred_fallthru
        _
      // Predicated region
      $region29: #{convae_forward.1} parent=11 // pred_check
        %p482 = pneg %p156
      $region30: #{convae_forward.1} parent=11 // pred_check_branch
        %484 = sbr.rel (%p482) target = $region32
      $region31: #{convae_forward.1} parent=11 // pred_region
        _
      $region32: #{convae_forward.1} parent=11 // pred_fallthru
        _
      // Predicated region
      $region33: #{convae_forward.1} parent=11 // pred_check
        %p485 = pneg %p177
      $region34: #{convae_forward.1} parent=11 // pred_check_branch
        %487 = sbr.rel (%p485) target = $region36
      $region35: #{convae_forward.1} parent=11 // pred_region
        _
      $region36: #{convae_forward.1} parent=11 // pred_fallthru
        _
      // Predicated region
      $region37: #{convae_forward.1} parent=11 // pred_check
        %p488 = pneg %p198
      $region38: #{convae_forward.1} parent=11 // pred_check_branch
        %490 = sbr.rel (%p488) target = $region40
      $region39: #{convae_forward.1} parent=11 // pred_region
        _
      $region40: #{convae_forward.1} parent=11 // pred_fallthru
        _
      // Predicated region
      $region41: #{convae_forward.1} parent=11 // pred_check
        %p491 = pneg %p219
      $region42: #{convae_forward.1} parent=11 // pred_check_branch
        %493 = sbr.rel (%p491) target = $region44
      $region43: #{convae_forward.1} parent=11 // pred_region
        _
      $region44: #{convae_forward.1} parent=11 // pred_fallthru
        _
      // Predicated region
      $region45: #{convae_forward.1} parent=11 // pred_check
        %p494 = pneg %p240
      $region46: #{convae_forward.1} parent=11 // pred_check_branch
        %496 = sbr.rel (%p494) target = $region48
      $region47: #{convae_forward.1} parent=11 // pred_region
        _
      $region48: #{convae_forward.1} parent=11 // pred_fallthru
        _
      // Predicated region
      $region49: #{convae_forward.1} parent=11 // pred_check
        %p497 = pneg %p261
      $region50: #{convae_forward.1} parent=11 // pred_check_branch
        %499 = sbr.rel (%p497) target = $region52
      $region51: #{convae_forward.1} parent=11 // pred_region
        _
      $region52: #{convae_forward.1} parent=11 // pred_fallthru
        _
      // Predicated region
      $region53: #{convae_forward.1} parent=11 // pred_check
        %p500 = pneg %p282
      $region54: #{convae_forward.1} parent=11 // pred_check_branch
        %502 = sbr.rel (%p500) target = $region56
      $region55: #{convae_forward.1} parent=11 // pred_region
        _
      $region56: #{convae_forward.1} parent=11 // pred_fallthru
        _
      // Predicated region
      $region57: #{convae_forward.1} parent=11 // pred_check
        %p503 = pneg %p303
      $region58: #{convae_forward.1} parent=11 // pred_check_branch
        %505 = sbr.rel (%p503) target = $region60
      $region59: #{convae_forward.1} parent=11 // pred_region
        _
      $region60: #{convae_forward.1} parent=11 // pred_fallthru
        _
      // Predicated region
      $region61: #{convae_forward.1} parent=11 // pred_check
        %p506 = pneg %p324
      $region62: #{convae_forward.1} parent=11 // pred_check_branch
        %508 = sbr.rel (%p506) target = $region64
      $region63: #{convae_forward.1} parent=11 // pred_region
        _
      $region64: #{convae_forward.1} parent=11 // pred_fallthru
        _
      // Predicated region
      $region65: #{convae_forward.1} parent=11 // pred_check
        %p509 = pneg %p345
      $region66: #{convae_forward.1} parent=11 // pred_check_branch
        %511 = sbr.rel (%p509) target = $region68
      $region67: #{convae_forward.1} parent=11 // pred_region
        _
      $region68: #{convae_forward.1} parent=11 // pred_fallthru
        _
      // Predicated region
      $region69: #{convae_forward.1} parent=11 // pred_check
        %p512 = pneg %p366
      $region70: #{convae_forward.1} parent=11 // pred_check_branch
        %514 = sbr.rel (%p512) target = $region72
      $region71: #{convae_forward.1} parent=11 // pred_region
        _
      $region72: #{convae_forward.1} parent=11 // pred_fallthru
        _
      // Predicated region
      $region73: #{convae_forward.1} parent=11 // pred_check
        %p515 = pneg %p387
      $region74: #{convae_forward.1} parent=11 // pred_check_branch
        %517 = sbr.rel (%p515) target = $region76
      $region75: #{convae_forward.1} parent=11 // pred_region
        _
      $region76: #{convae_forward.1} parent=11 // pred_fallthru
        _
      // Predicated region
      $region77: #{convae_forward.1} parent=11 // pred_check
        %p518 = pneg %p408
      $region78: #{convae_forward.1} parent=11 // pred_check_branch
        %520 = sbr.rel (%p518) target = $region80
      $region79: #{convae_forward.1} parent=11 // pred_region
        _
      $region80: #{convae_forward.1} parent=11 // pred_fallthru
        _
      // Predicated region
      $region81: #{convae_forward.1} parent=11 // pred_check
        %p521 = pneg %p429
      $region82: #{convae_forward.1} parent=11 // pred_check_branch
        %523 = sbr.rel (%p521) target = $region84
      $region83: #{convae_forward.1} parent=11 // pred_region
        _
      $region84: #{convae_forward.1} parent=11 // pred_fallthru
        _
    $region12: #{convae_forward.1} parent=5 // pred_fallthru
      _
    %p524 = scmp.lt.s32.totalorder %s25, 2
    // Predicated region
    $region85: #{convae_forward.1} parent=5 // pred_check
      %p525 = pneg %p524
    $region86: #{convae_forward.1} parent=5 // pred_check_branch
      %527 = sbr.rel (%p525) target = $region88
    $region87: #{convae_forward.1} parent=5 // pred_region
      // Predicated region
      $region89: #{convae_forward.1} parent=87 // pred_check
        %p528 = pneg %p45
      $region90: #{convae_forward.1} parent=87 // pred_check_branch
        %530 = sbr.rel (%p528) target = $region92
      $region91: #{convae_forward.1} parent=87 // pred_region
        %p531 = scmp.lt.s32.totalorder %s25, 1
        %s532 = scalar_select %p531, %s25, 1
        %s533 = smul.addr %s532, 6
        %s534 = smul.addr %s533, 8
        %s535 = scalar_lea.vmem %s0, %s534
      $region92: #{convae_forward.1} parent=87 // pred_fallthru
        _
    $region88: #{convae_forward.1} parent=5 // pred_fallthru
      _
    %p536 = scmp.le.s32.totalorder 1, %s25
    %p537 = scmp.lt.s32.totalorder %s25, 3
    %p538 = pnand %p536, %p537
    %p539 = pneg %p538
    // Predicated region
    $region93: #{convae_forward.1} parent=5 // pred_check
      _
    $region94: #{convae_forward.1} parent=5 // pred_check_branch
      %541 = sbr.rel (%p538) target = $region96
    $region95: #{convae_forward.1} parent=5 // pred_region
      %s542 = ssub.s32 %s25, 1
      %p543 = scmp.lt.s32.totalorder %s30, 1
      %s544 = scalar_select %p543, %s30, 1
      %s545 = smul.addr %s544, 6
      %s546 = smul.addr %s545, 8
      %s547 = scalar_lea.vmem %s0, %s546
      %p548 = pneg %p51
      %p549 = pneg %p48
      %p550 = pneg %p72
      %p551 = pneg %p69
      %p552 = pneg %p93
      %p553 = pneg %p90
      %p554 = pneg %p114
      %p555 = pneg %p111
      %p556 = pneg %p135
      %p557 = pneg %p132
      %p558 = pneg %p156
      %p559 = pneg %p153
      %p560 = pneg %p177
      %p561 = pneg %p174
      %p562 = pneg %p198
      %p563 = pneg %p195
      %p564 = pneg %p219
      %p565 = pneg %p216
      %p566 = pneg %p240
      %p567 = pneg %p237
      %p568 = pneg %p261
      %p569 = pneg %p258
      %p570 = pneg %p282
      %p571 = pneg %p279
      %p572 = pneg %p303
      %p573 = pneg %p300
      %p574 = pneg %p324
      %p575 = pneg %p321
      %p576 = pneg %p345
      %p577 = pneg %p342
      %p578 = pneg %p366
      %p579 = pneg %p363
      %p580 = pneg %p387
      %p581 = pneg %p384
      %p582 = pneg %p408
      %p583 = pneg %p405
      %p584 = pneg %p429
      %p585 = pneg %p426
      %p586 = pneg %p455
      %p587 = pneg %p452
      %p588 = scmp.lt.s32.totalorder %s30, 1
      %s589 = scalar_select %p588, %s30, 1
      %s590 = smul.addr %s589, 6
      %s591 = smul.addr %s590, 8
      %s592 = scalar_lea.vmem %s19, %s591
      %p593 = scmp.lt.s32.totalorder %s30, 1
      %s594 = scalar_select %p593, %s30, 1
      %s595 = smul.addr %s594, 6
      %s596 = smul.addr %s595, 8
      %s597 = scalar_lea.vmem %s0, %s596
      %p598 = scmp.lt.s32.totalorder %s30, 1
      %s599 = scalar_select %p598, %s30, 1
      %s600 = smul.addr %s599, 6
      %s601 = smul.addr %s600, 8
      %s602 = scalar_lea.vmem %s19, %s601
      %v603 = vld [vmem:[%s597] sm:$0xff]
      %v604 = vld [vmem:[%s597 + $0x8] sm:$0xff]
      %v605 = vld [vmem:[%s597 + $0x10] sm:$0xff]
      %v606 = vld [vmem:[%s597 + $0x18] sm:$0xff]
      %v607 = vld [vmem:[%s597 + $0x20] sm:$0xff]
      %v608 = vld [vmem:[%s597 + $0x28] sm:$0xff]
      %v609 = vld [vmem:[%s1] sm:$0xff]
      %v610 = vld [vmem:[%s1 + $0x8] sm:$0xff]
      %v611 = vld [vmem:[%s1 + $0x10] sm:$0xff]
      %vm612 = vcmask 392192
      %v614 = vsel %vm612, %v609, 0
      %v617 = vsel %vm612, %v610, 0
      %v620 = vsel %vm612, %v611, 0
      %622 = vmatprep.subr.mxu0 0.0
      %623 = vmatpush1.msra.mxu0 %v603
      %624 = vmatprep.subr.mxu0 0.0
      %625 = vmatpush1.msra.mxu0 %v604
      %626 = vmatprep.subr.mxu0 0.0
      %627 = vmatpush1.msra.mxu0 %v605
      %628 = vmatprep.subr.mxu0 0.0
      %629 = vmatpush1.msra.mxu0 %v606
      %630 = vmatprep.subr.mxu0 0.0
      %631 = vmatpush1.msra.mxu0 %v607
      %632 = vmatprep.subr.mxu0 0.0
      %633 = vmatpush1.msra.mxu0 %v608
      %634 = vmatprep.subr.mxu0 0.0
      %635 = vmatpush1.msra.mxu0 0.0
      %636 = vmatprep.subr.mxu0 0.0
      %637 = vmatpush1.msra.mxu0 0.0
      %638 = vmatprep.subr.mxu0 0.0
      %639 = vmatpush1.msra.mxu0 0.0
      %640 = vmatprep.subr.mxu0 0.0
      %641 = vmatpush1.msra.mxu0 0.0
      %642 = vmatprep.subr.mxu0 0.0
      %643 = vmatpush1.msra.mxu0 0.0
      %644 = vmatprep.subr.mxu0 0.0
      %645 = vmatpush1.msra.mxu0 0.0
      %646 = vmatprep.subr.mxu0 0.0
      %647 = vmatpush1.msra.mxu0 0.0
      %648 = vmatprep.subr.mxu0 0.0
      %649 = vmatpush1.msra.mxu0 0.0
      %650 = vmatprep.subr.mxu0 0.0
      %651 = vmatpush1.msra.mxu0 0.0
      %652 = vmatprep.subr.mxu0 0.0
      %653 = vmatpush1.msra.mxu0 0.0
      %654 = vmatprep.subr.mxu0 0.0
      %655 = vmatpush1.msra.mxu0 0.0
      %656 = vmatprep.subr.mxu0 0.0
      %657 = vmatpush1.msra.mxu0 0.0
      %658 = vmatprep.subr.mxu0 0.0
      %659 = vmatpush1.msra.mxu0 0.0
      %660 = vmatprep.subr.mxu0 0.0
      %661 = vmatpush1.msra.mxu0 0.0
      %662 = vmatprep.subr.mxu0 0.0
      %663 = vmatpush1.msra.mxu0 0.0
      %664 = vmatprep.subr.mxu0 0.0
      %665 = vmatpush1.msra.mxu0 0.0
      %666 = vmatprep.subr.mxu0 0.0
      %667 = vmatpush1.msra.mxu0 0.0
      %668 = vmatprep.subr.mxu0 0.0
      %669 = vmatpush1.msra.mxu0 0.0
      %670 = vmatprep.subr.mxu0 0.0
      %671 = vmatpush1.msra.mxu0 0.0
      %672 = vmatprep.subr.mxu0 0.0
      %673 = vmatpush1.msra.mxu0 0.0
      %674 = vmatprep.subr.mxu0 0.0
      %675 = vmatpush1.msra.mxu0 0.0
      %676 = vmatprep.subr.mxu0 0.0
      %677 = vmatpush1.msra.mxu0 0.0
      %678 = vmatprep.subr.mxu0 0.0
      %679 = vmatpush1.msra.mxu0 0.0
      %680 = vmatprep.subr.mxu0 0.0
      %681 = vmatpush1.msra.mxu0 0.0
      %682 = vmatprep.subr.mxu0 0.0
      %683 = vmatpush1.msra.mxu0 0.0
      %684 = vmatprep.subr.mxu0 0.0
      %685 = vmatpush1.msra.mxu0 0.0
      %686 = vmatprep.mubr.f32.mxu0 0.0
      %687 = vmatmul.mubr.f32.gmra.mrb[0].mxu0 %v614
      %v688 = vpop.f32.mrb[0].mxu0
      %v689 = vadd.f32 0.0, %v688
      %v690 = vpop.f32.mrb[0].mxu0
      %691 = vmatprep.mubr.f32.mxu0 0.0
      %692 = vmatmul.mubr.f32.gmra.mrb[0].mxu0 %v617
      %v693 = vpop.f32.mrb[0].mxu0
      %v694 = vadd.f32 0.0, %v693
      %v695 = vpop.f32.mrb[0].mxu0
      %696 = vmatprep.mubr.f32.mxu0 0.0
      %697 = vmatmul.mubr.f32.gmra.mrb[0].mxu0 %v620
      %v698 = vpop.f32.mrb[0].mxu0
      %v699 = vadd.f32 0.0, %v698
      %v700 = vpop.f32.mrb[0].mxu0
      %701 = vdwg.mxu0
      %v702 = vld [vmem:[%s2] sm:$0xff]
      %v703 = vld [vmem:[%s2 + $0x8] sm:$0xff]
      %v704 = vld [vmem:[%s2 + $0x10] sm:$0xff]
      %v705 = vld [vmem:[%s2 + $0x18] sm:$0xff]
      %v706 = vld [vmem:[%s2 + $0x20] sm:$0xff]
      %v707 = vld [vmem:[%s2 + $0x28] sm:$0xff]
      %v708 = vld [vmem:[%s2 + $0x30] sm:$0xff]
      %v709 = vld [vmem:[%s2 + $0x38] sm:$0xff]
      %v710 = vld [vmem:[%s2 + $0x40] sm:$0xff]
      %v711 = vld [vmem:[%s2 + $0x48] sm:$0xff]
      %v712 = vld [vmem:[%s2 + $0x50] sm:$0x3]
      %v713 = vld [vmem:[%s2 + $0x58] sm:$0x3]
      %s714 = scalar_lea.vmem %s1, 24
      %v715 = vld [vmem:[%s714] sm:$0xff]
      %v716 = vld [vmem:[%s714 + $0x8] sm:$0xff]
      %v717 = vld [vmem:[%s714 + $0x10] sm:$0xff]
      %v719 = vsel %vm612, %v715, 0
      %v722 = vsel %vm612, %v716, 0
      %v725 = vsel %vm612, %v717, 0
      %727 = vmatprep.subr.mxu0 0.0
      %728 = vmatpush1.msra.mxu0 %v603
      %729 = vmatprep.subr.mxu0 0.0
      %730 = vmatpush1.msra.mxu0 %v604
      %731 = vmatprep.subr.mxu0 0.0
      %732 = vmatpush1.msra.mxu0 %v605
      %733 = vmatprep.subr.mxu0 0.0
      %734 = vmatpush1.msra.mxu0 %v606
      %735 = vmatprep.subr.mxu0 0.0
      %736 = vmatpush1.msra.mxu0 %v607
      %737 = vmatprep.subr.mxu0 0.0
      %738 = vmatpush1.msra.mxu0 %v608
      %739 = vmatprep.subr.mxu0 0.0
      %740 = vmatpush1.msra.mxu0 0.0
      %741 = vmatprep.subr.mxu0 0.0
      %742 = vmatpush1.msra.mxu0 0.0
      %743 = vmatprep.subr.mxu0 0.0
      %744 = vmatpush1.msra.mxu0 0.0
      %745 = vmatprep.subr.mxu0 0.0
      %746 = vmatpush1.msra.mxu0 0.0
      %747 = vmatprep.subr.mxu0 0.0
      %748 = vmatpush1.msra.mxu0 0.0
      %749 = vmatprep.subr.mxu0 0.0
      %750 = vmatpush1.msra.mxu0 0.0
      %751 = vmatprep.subr.mxu0 0.0
      %752 = vmatpush1.msra.mxu0 0.0
      %753 = vmatprep.subr.mxu0 0.0
      %754 = vmatpush1.msra.mxu0 0.0
      %755 = vmatprep.subr.mxu0 0.0
      %756 = vmatpush1.msra.mxu0 0.0
      %757 = vmatprep.subr.mxu0 0.0
      %758 = vmatpush1.msra.mxu0 0.0
      %759 = vmatprep.subr.mxu0 0.0
      %760 = vmatpush1.msra.mxu0 0.0
      %761 = vmatprep.subr.mxu0 0.0
      %762 = vmatpush1.msra.mxu0 0.0
      %763 = vmatprep.subr.mxu0 0.0
      %764 = vmatpush1.msra.mxu0 0.0
      %765 = vmatprep.subr.mxu0 0.0
      %766 = vmatpush1.msra.mxu0 0.0
      %767 = vmatprep.subr.mxu0 0.0
      %768 = vmatpush1.msra.mxu0 0.0
      %769 = vmatprep.subr.mxu0 0.0
      %770 = vmatpush1.msra.mxu0 0.0
      %771 = vmatprep.subr.mxu0 0.0
      %772 = vmatpush1.msra.mxu0 0.0
      %773 = vmatprep.subr.mxu0 0.0
      %774 = vmatpush1.msra.mxu0 0.0
      %775 = vmatprep.subr.mxu0 0.0
      %776 = vmatpush1.msra.mxu0 0.0
      %777 = vmatprep.subr.mxu0 0.0
      %778 = vmatpush1.msra.mxu0 0.0
      %779 = vmatprep.subr.mxu0 0.0
      %780 = vmatpush1.msra.mxu0 0.0
      %781 = vmatprep.subr.mxu0 0.0
      %782 = vmatpush1.msra.mxu0 0.0
      %783 = vmatprep.subr.mxu0 0.0
      %784 = vmatpush1.msra.mxu0 0.0
      %785 = vmatprep.subr.mxu0 0.0
      %786 = vmatpush1.msra.mxu0 0.0
      %787 = vmatprep.subr.mxu0 0.0
      %788 = vmatpush1.msra.mxu0 0.0
      %789 = vmatprep.subr.mxu0 0.0
      %790 = vmatpush1.msra.mxu0 0.0
      %791 = vmatprep.mubr.f32.mxu0 0.0
      %792 = vmatmul.mubr.f32.gmra.mrb[0].mxu0 %v719
      %v793 = vpop.f32.mrb[0].mxu0
      %v794 = vadd.f32 0.0, %v793
      %v795 = vpop.f32.mrb[0].mxu0
      %796 = vmatprep.mubr.f32.mxu0 0.0
      %797 = vmatmul.mubr.f32.gmra.mrb[0].mxu0 %v722
      %v798 = vpop.f32.mrb[0].mxu0
      %v799 = vadd.f32 0.0, %v798
      %v800 = vpop.f32.mrb[0].mxu0
      %801 = vmatprep.mubr.f32.mxu0 0.0
      %802 = vmatmul.mubr.f32.gmra.mrb[0].mxu0 %v725
      %v803 = vpop.f32.mrb[0].mxu0
      %v804 = vadd.f32 0.0, %v803
      %v805 = vpop.f32.mrb[0].mxu0
      %806 = vdwg.mxu0
      %s807 = scalar_lea.vmem %s2, 96
      %v808 = vld [vmem:[%s807] sm:$0xff]
      %v809 = vld [vmem:[%s807 + $0x8] sm:$0xff]
      %v810 = vld [vmem:[%s807 + $0x10] sm:$0xff]
      %v811 = vld [vmem:[%s807 + $0x18] sm:$0xff]
      %v812 = vld [vmem:[%s807 + $0x20] sm:$0xff]
      %v813 = vld [vmem:[%s807 + $0x28] sm:$0xff]
      %v814 = vld [vmem:[%s807 + $0x30] sm:$0xff]
      %v815 = vld [vmem:[%s807 + $0x38] sm:$0xff]
      %v816 = vld [vmem:[%s807 + $0x40] sm:$0xff]
      %v817 = vld [vmem:[%s807 + $0x48] sm:$0xff]
      %v818 = vld [vmem:[%s807 + $0x50] sm:$0x3]
      %v819 = vld [vmem:[%s807 + $0x58] sm:$0x3]
      %vm820 = vcmask 343040
      %v822 = vsel %vm820, %v794, 0
      %v825 = vsel %vm820, %v799, 0
      %v828 = vsel %vm820, %v804, 0
      %vm830 = vcmask 1041408
      %v832 = vsel %vm830, %v818, 0
      %v835 = vsel %vm830, %v819, 0
      %837 = vmatprep.subr.mxu0 %v809
      %838 = vmatpush1.msra.mxu0 %v808
      %839 = vmatprep.subr.mxu0 %v811
      %840 = vmatpush1.msra.mxu0 %v810
      %841 = vmatprep.subr.mxu0 %v813
      %842 = vmatpush1.msra.mxu0 %v812
      %843 = vmatprep.subr.mxu0 %v815
      %844 = vmatpush1.msra.mxu0 %v814
      %845 = vmatprep.subr.mxu0 %v817
      %846 = vmatpush1.msra.mxu0 %v816
      %847 = vmatprep.subr.mxu0 %v835
      %848 = vmatpush1.msra.mxu0 %v832
      %849 = vmatprep.subr.mxu0 0.0
      %850 = vmatpush1.msra.mxu0 0.0
      %851 = vmatprep.subr.mxu0 0.0
      %852 = vmatpush1.msra.mxu0 0.0
      %853 = vmatprep.subr.mxu0 0.0
      %854 = vmatpush1.msra.mxu0 0.0
      %855 = vmatprep.subr.mxu0 0.0
      %856 = vmatpush1.msra.mxu0 0.0
      %857 = vmatprep.subr.mxu0 0.0
      %858 = vmatpush1.msra.mxu0 0.0
      %859 = vmatprep.subr.mxu0 0.0
      %860 = vmatpush1.msra.mxu0 0.0
      %861 = vmatprep.subr.mxu0 0.0
      %862 = vmatpush1.msra.mxu0 0.0
      %863 = vmatprep.subr.mxu0 0.0
      %864 = vmatpush1.msra.mxu0 0.0
      %865 = vmatprep.subr.mxu0 0.0
      %866 = vmatpush1.msra.mxu0 0.0
      %867 = vmatprep.subr.mxu0 0.0
      %868 = vmatpush1.msra.mxu0 0.0
      %869 = vmatprep.subr.mxu0 0.0
      %870 = vmatpush1.msra.mxu0 0.0
      %871 = vmatprep.subr.mxu0 0.0
      %872 = vmatpush1.msra.mxu0 0.0
      %873 = vmatprep.subr.mxu0 0.0
      %874 = vmatpush1.msra.mxu0 0.0
      %875 = vmatprep.subr.mxu0 0.0
      %876 = vmatpush1.msra.mxu0 0.0
      %877 = vmatprep.subr.mxu0 0.0
      %878 = vmatpush1.msra.mxu0 0.0
      %879 = vmatprep.subr.mxu0 0.0
      %880 = vmatpush1.msra.mxu0 0.0
      %881 = vmatprep.subr.mxu0 0.0
      %882 = vmatpush1.msra.mxu0 0.0
      %883 = vmatprep.subr.mxu0 0.0
      %884 = vmatpush1.msra.mxu0 0.0
      %885 = vmatprep.subr.mxu0 0.0
      %886 = vmatpush1.msra.mxu0 0.0
      %887 = vmatprep.subr.mxu0 0.0
      %888 = vmatpush1.msra.mxu0 0.0
      %889 = vmatprep.subr.mxu0 0.0
      %890 = vmatpush1.msra.mxu0 0.0
      %891 = vmatprep.subr.mxu0 0.0
      %892 = vmatpush1.msra.mxu0 0.0
      %893 = vmatprep.subr.mxu0 0.0
      %894 = vmatpush1.msra.mxu0 0.0
      %895 = vmatprep.subr.mxu0 0.0
      %896 = vmatpush1.msra.mxu0 0.0
      %897 = vmatprep.subr.mxu0 0.0
      %898 = vmatpush1.msra.mxu0 0.0
      %899 = vmatprep.subr.mxu0 0.0
      %900 = vmatpush1.msra.mxu0 0.0
      %901 = vmatprep.mubr.f32.mxu0 0.0
      %902 = vmatmul.mubr.f32.gmra.mrb[0].mxu0 %v822
      %v903 = vpop.f32.mrb[0].mxu0
      %v904 = vadd.f32 0.0, %v903
      %v905 = vpop.f32.mrb[0].mxu0
      %v906 = vadd.f32 0.0, %v905
      %907 = vmatprep.mubr.f32.mxu0 0.0
      %908 = vmatmul.mubr.f32.gmra.mrb[0].mxu0 %v825
      %v909 = vpop.f32.mrb[0].mxu0
      %v910 = vadd.f32 0.0, %v909
      %v911 = vpop.f32.mrb[0].mxu0
      %v912 = vadd.f32 0.0, %v911
      %913 = vmatprep.mubr.f32.mxu0 0.0
      %914 = vmatmul.mubr.f32.gmra.mrb[0].mxu0 %v828
      %v915 = vpop.f32.mrb[0].mxu0
      %v916 = vadd.f32 0.0, %v915
      %v917 = vpop.f32.mrb[0].mxu0
      %v918 = vadd.f32 0.0, %v917
      %919 = vdwg.mxu0
      %v921 = vsel %vm820, %v689, 0
      %v924 = vsel %vm820, %v694, 0
      %v927 = vsel %vm820, %v699, 0
      %v930 = vsel %vm830, %v712, 0
      %v933 = vsel %vm830, %v713, 0
      %935 = vmatprep.subr.mxu0 %v703
      %936 = vmatpush1.msra.mxu0 %v702
      %937 = vmatprep.subr.mxu0 %v705
      %938 = vmatpush1.msra.mxu0 %v704
      %939 = vmatprep.subr.mxu0 %v707
      %940 = vmatpush1.msra.mxu0 %v706
      %941 = vmatprep.subr.mxu0 %v709
      %942 = vmatpush1.msra.mxu0 %v708
      %943 = vmatprep.subr.mxu0 %v711
      %944 = vmatpush1.msra.mxu0 %v710
      %945 = vmatprep.subr.mxu0 %v933
      %946 = vmatpush1.msra.mxu0 %v930
      %947 = vmatprep.subr.mxu0 0.0
      %948 = vmatpush1.msra.mxu0 0.0
      %949 = vmatprep.subr.mxu0 0.0
      %950 = vmatpush1.msra.mxu0 0.0
      %951 = vmatprep.subr.mxu0 0.0
      %952 = vmatpush1.msra.mxu0 0.0
      %953 = vmatprep.subr.mxu0 0.0
      %954 = vmatpush1.msra.mxu0 0.0
      %955 = vmatprep.subr.mxu0 0.0
      %956 = vmatpush1.msra.mxu0 0.0
      %957 = vmatprep.subr.mxu0 0.0
      %958 = vmatpush1.msra.mxu0 0.0
      %959 = vmatprep.subr.mxu0 0.0
      %960 = vmatpush1.msra.mxu0 0.0
      %961 = vmatprep.subr.mxu0 0.0
      %962 = vmatpush1.msra.mxu0 0.0
      %963 = vmatprep.subr.mxu0 0.0
      %964 = vmatpush1.msra.mxu0 0.0
      %965 = vmatprep.subr.mxu0 0.0
      %966 = vmatpush1.msra.mxu0 0.0
      %967 = vmatprep.subr.mxu0 0.0
      %968 = vmatpush1.msra.mxu0 0.0
      %969 = vmatprep.subr.mxu0 0.0
      %970 = vmatpush1.msra.mxu0 0.0
      %971 = vmatprep.subr.mxu0 0.0
      %972 = vmatpush1.msra.mxu0 0.0
      %973 = vmatprep.subr.mxu0 0.0
      %974 = vmatpush1.msra.mxu0 0.0
      %975 = vmatprep.subr.mxu0 0.0
      %976 = vmatpush1.msra.mxu0 0.0
      %977 = vmatprep.subr.mxu0 0.0
      %978 = vmatpush1.msra.mxu0 0.0
      %979 = vmatprep.subr.mxu0 0.0
      %980 = vmatpush1.msra.mxu0 0.0
      %981 = vmatprep.subr.mxu0 0.0
      %982 = vmatpush1.msra.mxu0 0.0
      %983 = vmatprep.subr.mxu0 0.0
      %984 = vmatpush1.msra.mxu0 0.0
      %985 = vmatprep.subr.mxu0 0.0
      %986 = vmatpush1.msra.mxu0 0.0
      %987 = vmatprep.subr.mxu0 0.0
      %988 = vmatpush1.msra.mxu0 0.0
      %989 = vmatprep.subr.mxu0 0.0
      %990 = vmatpush1.msra.mxu0 0.0
      %991 = vmatprep.subr.mxu0 0.0
      %992 = vmatpush1.msra.mxu0 0.0
      %993 = vmatprep.subr.mxu0 0.0
      %994 = vmatpush1.msra.mxu0 0.0
      %995 = vmatprep.subr.mxu0 0.0
      %996 = vmatpush1.msra.mxu0 0.0
      %997 = vmatprep.subr.mxu0 0.0
      %998 = vmatpush1.msra.mxu0 0.0
      %999 = vmatprep.mubr.f32.mxu0 0.0
      %1000 = vmatmul.mubr.f32.gmra.mrb[0].mxu0 %v921
      %v1001 = vpop.f32.mrb[0].mxu0
      %v1002 = vadd.f32 %v904, %v1001
      %v1003 = vpop.f32.mrb[0].mxu0
      %v1004 = vadd.f32 %v906, %v1003
      %1005 = vmatprep.mubr.f32.mxu0 0.0
      %1006 = vmatmul.mubr.f32.gmra.mrb[0].mxu0 %v924
      %v1007 = vpop.f32.mrb[0].mxu0
      %v1008 = vadd.f32 %v910, %v1007
      %v1009 = vpop.f32.mrb[0].mxu0
      %v1010 = vadd.f32 %v912, %v1009
      %1011 = vmatprep.mubr.f32.mxu0 0.0
      %1012 = vmatmul.mubr.f32.gmra.mrb[0].mxu0 %v927
      %v1013 = vpop.f32.mrb[0].mxu0
      %v1014 = vadd.f32 %v916, %v1013
      %v1015 = vpop.f32.mrb[0].mxu0
      %v1016 = vadd.f32 %v918, %v1015
      %1017 = vdwg.mxu0
      %s1018 = scalar_lea.vmem %s1, 48
      %v1019 = vld [vmem:[%s1018] sm:$0xff]
      %v1020 = vld [vmem:[%s1018 + $0x8] sm:$0xff]
      %v1021 = vld [vmem:[%s1018 + $0x10] sm:$0xff]
      %v1023 = vsel %vm612, %v1019, 0
      %v1026 = vsel %vm612, %v1020, 0
      %v1029 = vsel %vm612, %v1021, 0
      %1031 = vmatprep.subr.mxu0 0.0
      %1032 = vmatpush1.msra.mxu0 %v603
      %1033 = vmatprep.subr.mxu0 0.0
      %1034 = vmatpush1.msra.mxu0 %v604
      %1035 = vmatprep.subr.mxu0 0.0
      %1036 = vmatpush1.msra.mxu0 %v605
      %1037 = vmatprep.subr.mxu0 0.0
      %1038 = vmatpush1.msra.mxu0 %v606
      %1039 = vmatprep.subr.mxu0 0.0
      %1040 = vmatpush1.msra.mxu0 %v607
      %1041 = vmatprep.subr.mxu0 0.0
      %1042 = vmatpush1.msra.mxu0 %v608
      %1043 = vmatprep.subr.mxu0 0.0
      %1044 = vmatpush1.msra.mxu0 0.0
      %1045 = vmatprep.subr.mxu0 0.0
      %1046 = vmatpush1.msra.mxu0 0.0
      %1047 = vmatprep.subr.mxu0 0.0
      %1048 = vmatpush1.msra.mxu0 0.0
      %1049 = vmatprep.subr.mxu0 0.0
      %1050 = vmatpush1.msra.mxu0 0.0
      %1051 = vmatprep.subr.mxu0 0.0
      %1052 = vmatpush1.msra.mxu0 0.0
      %1053 = vmatprep.subr.mxu0 0.0
      %1054 = vmatpush1.msra.mxu0 0.0
      %1055 = vmatprep.subr.mxu0 0.0
      %1056 = vmatpush1.msra.mxu0 0.0
      %1057 = vmatprep.subr.mxu0 0.0
      %1058 = vmatpush1.msra.mxu0 0.0
      %1059 = vmatprep.subr.mxu0 0.0
      %1060 = vmatpush1.msra.mxu0 0.0
      %1061 = vmatprep.subr.mxu0 0.0
      %1062 = vmatpush1.msra.mxu0 0.0
      %1063 = vmatprep.subr.mxu0 0.0
      %1064 = vmatpush1.msra.mxu0 0.0
      %1065 = vmatprep.subr.mxu0 0.0
      %1066 = vmatpush1.msra.mxu0 0.0
      %1067 = vmatprep.subr.mxu0 0.0
      %1068 = vmatpush1.msra.mxu0 0.0
      %1069 = vmatprep.subr.mxu0 0.0
      %1070 = vmatpush1.msra.mxu0 0.0
      %1071 = vmatprep.subr.mxu0 0.0
      %1072 = vmatpush1.msra.mxu0 0.0
      %1073 = vmatprep.subr.mxu0 0.0
      %1074 = vmatpush1.msra.mxu0 0.0
      %1075 = vmatprep.subr.mxu0 0.0
      %1076 = vmatpush1.msra.mxu0 0.0
      %1077 = vmatprep.subr.mxu0 0.0
      %1078 = vmatpush1.msra.mxu0 0.0
      %1079 = vmatprep.subr.mxu0 0.0
      %1080 = vmatpush1.msra.mxu0 0.0
      %1081 = vmatprep.subr.mxu0 0.0
      %1082 = vmatpush1.msra.mxu0 0.0
      %1083 = vmatprep.subr.mxu0 0.0
      %1084 = vmatpush1.msra.mxu0 0.0
      %1085 = vmatprep.subr.mxu0 0.0
      %1086 = vmatpush1.msra.mxu0 0.0
      %1087 = vmatprep.subr.mxu0 0.0
      %1088 = vmatpush1.msra.mxu0 0.0
      %1089 = vmatprep.subr.mxu0 0.0
      %1090 = vmatpush1.msra.mxu0 0.0
      %1091 = vmatprep.subr.mxu0 0.0
      %1092 = vmatpush1.msra.mxu0 0.0
      %1093 = vmatprep.subr.mxu0 0.0
      %1094 = vmatpush1.msra.mxu0 0.0
      %1095 = vmatprep.mubr.f32.mxu0 0.0
      %1096 = vmatmul.mubr.f32.gmra.mrb[0].mxu0 %v1023
      %v1097 = vpop.f32.mrb[0].mxu0
      %v1098 = vadd.f32 0.0, %v1097
      %v1099 = vpop.f32.mrb[0].mxu0
      %1100 = vmatprep.mubr.f32.mxu0 0.0
      %1101 = vmatmul.mubr.f32.gmra.mrb[0].mxu0 %v1026
      %v1102 = vpop.f32.mrb[0].mxu0
      %v1103 = vadd.f32 0.0, %v1102
      %v1104 = vpop.f32.mrb[0].mxu0
      %1105 = vmatprep.mubr.f32.mxu0 0.0
      %1106 = vmatmul.mubr.f32.gmra.mrb[0].mxu0 %v1029
      %v1107 = vpop.f32.mrb[0].mxu0
      %v1108 = vadd.f32 0.0, %v1107
      %v1109 = vpop.f32.mrb[0].mxu0
      %1110 = vdwg.mxu0
      %s1111 = scalar_lea.vmem %s2, 192
      %v1112 = vld [vmem:[%s1111] sm:$0xff]
      %v1113 = vld [vmem:[%s1111 + $0x8] sm:$0xff]
      %v1114 = vld [vmem:[%s1111 + $0x10] sm:$0xff]
      %v1115 = vld [vmem:[%s1111 + $0x18] sm:$0xff]
      %v1116 = vld [vmem:[%s1111 + $0x20] sm:$0xff]
      %v1117 = vld [vmem:[%s1111 + $0x28] sm:$0xff]
      %v1118 = vld [vmem:[%s1111 + $0x30] sm:$0xff]
      %v1119 = vld [vmem:[%s1111 + $0x38] sm:$0xff]
      %v1120 = vld [vmem:[%s1111 + $0x40] sm:$0xff]
      %v1121 = vld [vmem:[%s1111 + $0x48] sm:$0xff]
      %v1122 = vld [vmem:[%s1111 + $0x50] sm:$0x3]
      %v1123 = vld [vmem:[%s1111 + $0x58] sm:$0x3]
      %v1125 = vsel %vm820, %v1098, 0
      %v1128 = vsel %vm820, %v1103, 0
      %v1131 = vsel %vm820, %v1108, 0
      %v1134 = vsel %vm830, %v1122, 0
      %v1137 = vsel %vm830, %v1123, 0
      %1139 = vmatprep.subr.mxu0 %v1113
      %1140 = vmatpush1.msra.mxu0 %v1112
      %1141 = vmatprep.subr.mxu0 %v1115
      %1142 = vmatpush1.msra.mxu0 %v1114
      %1143 = vmatprep.subr.mxu0 %v1117
      %1144 = vmatpush1.msra.mxu0 %v1116
      %1145 = vmatprep.subr.mxu0 %v1119
      %1146 = vmatpush1.msra.mxu0 %v1118
      %1147 = vmatprep.subr.mxu0 %v1121
      %1148 = vmatpush1.msra.mxu0 %v1120
      %1149 = vmatprep.subr.mxu0 %v1137
      %1150 = vmatpush1.msra.mxu0 %v1134
      %1151 = vmatprep.subr.mxu0 0.0
      %1152 = vmatpush1.msra.mxu0 0.0
      %1153 = vmatprep.subr.mxu0 0.0
      %1154 = vmatpush1.msra.mxu0 0.0
      %1155 = vmatprep.subr.mxu0 0.0
      %1156 = vmatpush1.msra.mxu0 0.0
      %1157 = vmatprep.subr.mxu0 0.0
      %1158 = vmatpush1.msra.mxu0 0.0
      %1159 = vmatprep.subr.mxu0 0.0
      %1160 = vmatpush1.msra.mxu0 0.0
      %1161 = vmatprep.subr.mxu0 0.0
      %1162 = vmatpush1.msra.mxu0 0.0
      %1163 = vmatprep.subr.mxu0 0.0
      %1164 = vmatpush1.msra.mxu0 0.0
      %1165 = vmatprep.subr.mxu0 0.0
      %1166 = vmatpush1.msra.mxu0 0.0
      %1167 = vmatprep.subr.mxu0 0.0
      %1168 = vmatpush1.msra.mxu0 0.0
      %1169 = vmatprep.subr.mxu0 0.0
      %1170 = vmatpush1.msra.mxu0 0.0
      %1171 = vmatprep.subr.mxu0 0.0
      %1172 = vmatpush1.msra.mxu0 0.0
      %1173 = vmatprep.subr.mxu0 0.0
      %1174 = vmatpush1.msra.mxu0 0.0
      %1175 = vmatprep.subr.mxu0 0.0
      %1176 = vmatpush1.msra.mxu0 0.0
      %1177 = vmatprep.subr.mxu0 0.0
      %1178 = vmatpush1.msra.mxu0 0.0
      %1179 = vmatprep.subr.mxu0 0.0
      %1180 = vmatpush1.msra.mxu0 0.0
      %1181 = vmatprep.subr.mxu0 0.0
      %1182 = vmatpush1.msra.mxu0 0.0
      %1183 = vmatprep.subr.mxu0 0.0
      %1184 = vmatpush1.msra.mxu0 0.0
      %1185 = vmatprep.subr.mxu0 0.0
      %1186 = vmatpush1.msra.mxu0 0.0
      %1187 = vmatprep.subr.mxu0 0.0
      %1188 = vmatpush1.msra.mxu0 0.0
      %1189 = vmatprep.subr.mxu0 0.0
      %1190 = vmatpush1.msra.mxu0 0.0
      %1191 = vmatprep.subr.mxu0 0.0
      %1192 = vmatpush1.msra.mxu0 0.0
      %1193 = vmatprep.subr.mxu0 0.0
      %1194 = vmatpush1.msra.mxu0 0.0
      %1195 = vmatprep.subr.mxu0 0.0
      %1196 = vmatpush1.msra.mxu0 0.0
      %1197 = vmatprep.subr.mxu0 0.0
      %1198 = vmatpush1.msra.mxu0 0.0
      %1199 = vmatprep.subr.mxu0 0.0
      %1200 = vmatpush1.msra.mxu0 0.0
      %1201 = vmatprep.subr.mxu0 0.0
      %1202 = vmatpush1.msra.mxu0 0.0
      %1203 = vmatprep.mubr.f32.mxu0 0.0
      %1204 = vmatmul.mubr.f32.gmra.mrb[0].mxu0 %v1125
      %v1205 = vpop.f32.mrb[0].mxu0
      %v1206 = vadd.f32 0.0, %v1205
      %v1207 = vpop.f32.mrb[0].mxu0
      %v1208 = vadd.f32 0.0, %v1207
      %1209 = vmatprep.mubr.f32.mxu0 0.0
      %1210 = vmatmul.mubr.f32.gmra.mrb[0].mxu0 %v1128
      %v1211 = vpop.f32.mrb[0].mxu0
      %v1212 = vadd.f32 0.0, %v1211
      %v1213 = vpop.f32.mrb[0].mxu0
      %v1214 = vadd.f32 0.0, %v1213
      %1215 = vmatprep.mubr.f32.mxu0 0.0
      %1216 = vmatmul.mubr.f32.gmra.mrb[0].mxu0 %v1131
      %v1217 = vpop.f32.mrb[0].mxu0
      %v1218 = vadd.f32 0.0, %v1217
      %v1219 = vpop.f32.mrb[0].mxu0
      %v1220 = vadd.f32 0.0, %v1219
      %1221 = vdwg.mxu0
      %v1222 = vadd.f32 %v1002, %v1206
      %v1223 = vadd.f32 %v1004, %v1208
      %v1224 = vadd.f32 %v1008, %v1212
      %v1225 = vadd.f32 %v1010, %v1214
      %v1226 = vadd.f32 %v1014, %v1218
      %v1227 = vadd.f32 %v1016, %v1220
      %s1228 = scalar_lea.vmem %s1, 72
      %v1229 = vld [vmem:[%s1228] sm:$0xff]
      %v1230 = vld [vmem:[%s1228 + $0x8] sm:$0xff]
      %v1231 = vld [vmem:[%s1228 + $0x10] sm:$0xff]
      %v1233 = vsel %vm612, %v1229, 0
      %v1236 = vsel %vm612, %v1230, 0
      %v1239 = vsel %vm612, %v1231, 0
      %1241 = vmatprep.subr.mxu0 0.0
      %1242 = vmatpush1.msra.mxu0 %v603
      %1243 = vmatprep.subr.mxu0 0.0
      %1244 = vmatpush1.msra.mxu0 %v604
      %1245 = vmatprep.subr.mxu0 0.0
      %1246 = vmatpush1.msra.mxu0 %v605
      %1247 = vmatprep.subr.mxu0 0.0
      %1248 = vmatpush1.msra.mxu0 %v606
      %1249 = vmatprep.subr.mxu0 0.0
      %1250 = vmatpush1.msra.mxu0 %v607
      %1251 = vmatprep.subr.mxu0 0.0
      %1252 = vmatpush1.msra.mxu0 %v608
      %1253 = vmatprep.subr.mxu0 0.0
      %1254 = vmatpush1.msra.mxu0 0.0
      %1255 = vmatprep.subr.mxu0 0.0
      %1256 = vmatpush1.msra.mxu0 0.0
      %1257 = vmatprep.subr.mxu0 0.0
      %1258 = vmatpush1.msra.mxu0 0.0
      %1259 = vmatprep.subr.mxu0 0.0
      %1260 = vmatpush1.msra.mxu0 0.0
      %1261 = vmatprep.subr.mxu0 0.0
      %1262 = vmatpush1.msra.mxu0 0.0
      %1263 = vmatprep.subr.mxu0 0.0
      %1264 = vmatpush1.msra.mxu0 0.0
      %1265 = vmatprep.subr.mxu0 0.0
      %1266 = vmatpush1.msra.mxu0 0.0
      %1267 = vmatprep.subr.mxu0 0.0
      %1268 = vmatpush1.msra.mxu0 0.0
      %1269 = vmatprep.subr.mxu0 0.0
      %1270 = vmatpush1.msra.mxu0 0.0
      %1271 = vmatprep.subr.mxu0 0.0
      %1272 = vmatpush1.msra.mxu0 0.0
      %1273 = vmatprep.subr.mxu0 0.0
      %1274 = vmatpush1.msra.mxu0 0.0
      %1275 = vmatprep.subr.mxu0 0.0
      %1276 = vmatpush1.msra.mxu0 0.0
      %1277 = vmatprep.subr.mxu0 0.0
      %1278 = vmatpush1.msra.mxu0 0.0
      %1279 = vmatprep.subr.mxu0 0.0
      %1280 = vmatpush1.msra.mxu0 0.0
      %1281 = vmatprep.subr.mxu0 0.0
      %1282 = vmatpush1.msra.mxu0 0.0
      %1283 = vmatprep.subr.mxu0 0.0
      %1284 = vmatpush1.msra.mxu0 0.0
      %1285 = vmatprep.subr.mxu0 0.0
      %1286 = vmatpush1.msra.mxu0 0.0
      %1287 = vmatprep.subr.mxu0 0.0
      %1288 = vmatpush1.msra.mxu0 0.0
      %1289 = vmatprep.subr.mxu0 0.0
      %1290 = vmatpush1.msra.mxu0 0.0
      %1291 = vmatprep.subr.mxu0 0.0
      %1292 = vmatpush1.msra.mxu0 0.0
      %1293 = vmatprep.subr.mxu0 0.0
      %1294 = vmatpush1.msra.mxu0 0.0
      %1295 = vmatprep.subr.mxu0 0.0
      %1296 = vmatpush1.msra.mxu0 0.0
      %1297 = vmatprep.subr.mxu0 0.0
      %1298 = vmatpush1.msra.mxu0 0.0
      %1299 = vmatprep.subr.mxu0 0.0
      %1300 = vmatpush1.msra.mxu0 0.0
      %1301 = vmatprep.subr.mxu0 0.0
      %1302 = vmatpush1.msra.mxu0 0.0
      %1303 = vmatprep.subr.mxu0 0.0
      %1304 = vmatpush1.msra.mxu0 0.0
      %1305 = vmatprep.mubr.f32.mxu0 0.0
      %1306 = vmatmul.mubr.f32.gmra.mrb[0].mxu0 %v1233
      %v1307 = vpop.f32.mrb[0].mxu0
      %v1308 = vadd.f32 0.0, %v1307
      %v1309 = vpop.f32.mrb[0].mxu0
      %1310 = vmatprep.mubr.f32.mxu0 0.0
      %1311 = vmatmul.mubr.f32.gmra.mrb[0].mxu0 %v1236
      %v1312 = vpop.f32.mrb[0].mxu0
      %v1313 = vadd.f32 0.0, %v1312
      %v1314 = vpop.f32.mrb[0].mxu0
      %1315 = vmatprep.mubr.f32.mxu0 0.0
      %1316 = vmatmul.mubr.f32.gmra.mrb[0].mxu0 %v1239
      %v1317 = vpop.f32.mrb[0].mxu0
      %v1318 = vadd.f32 0.0, %v1317
      %v1319 = vpop.f32.mrb[0].mxu0
      %1320 = vdwg.mxu0
      %s1321 = scalar_lea.vmem %s2, 288
      %v1322 = vld [vmem:[%s1321] sm:$0xff]
      %v1323 = vld [vmem:[%s1321 + $0x8] sm:$0xff]
      %v1324 = vld [vmem:[%s1321 + $0x10] sm:$0xff]
      %v1325 = vld [vmem:[%s1321 + $0x18] sm:$0xff]
      %v1326 = vld [vmem:[%s1321 + $0x20] sm:$0xff]
      %v1327 = vld [vmem:[%s1321 + $0x28] sm:$0xff]
      %v1328 = vld [vmem:[%s1321 + $0x30] sm:$0xff]
      %v1329 = vld [vmem:[%s1321 + $0x38] sm:$0xff]
      %v1330 = vld [vmem:[%s1321 + $0x40] sm:$0xff]
      %v1331 = vld [vmem:[%s1321 + $0x48] sm:$0xff]
      %v1332 = vld [vmem:[%s1321 + $0x50] sm:$0x3]
      %v1333 = vld [vmem:[%s1321 + $0x58] sm:$0x3]
      %v1335 = vsel %vm820, %v1308, 0
      %v1338 = vsel %vm820, %v1313, 0
      %v1341 = vsel %vm820, %v1318, 0
      %v1344 = vsel %vm830, %v1332, 0
      %v1347 = vsel %vm830, %v1333, 0
      %1349 = vmatprep.subr.mxu0 %v1323
      %1350 = vmatpush1.msra.mxu0 %v1322
      %1351 = vmatprep.subr.mxu0 %v1325
      %1352 = vmatpush1.msra.mxu0 %v1324
      %1353 = vmatprep.subr.mxu0 %v1327
      %1354 = vmatpush1.msra.mxu0 %v1326
      %1355 = vmatprep.subr.mxu0 %v1329
      %1356 = vmatpush1.msra.mxu0 %v1328
      %1357 = vmatprep.subr.mxu0 %v1331
      %1358 = vmatpush1.msra.mxu0 %v1330
      %1359 = vmatprep.subr.mxu0 %v1347
      %1360 = vmatpush1.msra.mxu0 %v1344
      %1361 = vmatprep.subr.mxu0 0.0
      %1362 = vmatpush1.msra.mxu0 0.0
      %1363 = vmatprep.subr.mxu0 0.0
      %1364 = vmatpush1.msra.mxu0 0.0
      %1365 = vmatprep.subr.mxu0 0.0
      %1366 = vmatpush1.msra.mxu0 0.0
      %1367 = vmatprep.subr.mxu0 0.0
      %1368 = vmatpush1.msra.mxu0 0.0
      %1369 = vmatprep.subr.mxu0 0.0
      %1370 = vmatpush1.msra.mxu0 0.0
      %1371 = vmatprep.subr.mxu0 0.0
      %1372 = vmatpush1.msra.mxu0 0.0
      %1373 = vmatprep.subr.mxu0 0.0
      %1374 = vmatpush1.msra.mxu0 0.0
      %1375 = vmatprep.subr.mxu0 0.0
      %1376 = vmatpush1.msra.mxu0 0.0
      %1377 = vmatprep.subr.mxu0 0.0
      %1378 = vmatpush1.msra.mxu0 0.0
      %1379 = vmatprep.subr.mxu0 0.0
      %1380 = vmatpush1.msra.mxu0 0.0
      %1381 = vmatprep.subr.mxu0 0.0
      %1382 = vmatpush1.msra.mxu0 0.0
      %1383 = vmatprep.subr.mxu0 0.0
      %1384 = vmatpush1.msra.mxu0 0.0
      %1385 = vmatprep.subr.mxu0 0.0
      %1386 = vmatpush1.msra.mxu0 0.0
      %1387 = vmatprep.subr.mxu0 0.0
      %1388 = vmatpush1.msra.mxu0 0.0
      %1389 = vmatprep.subr.mxu0 0.0
      %1390 = vmatpush1.msra.mxu0 0.0
      %1391 = vmatprep.subr.mxu0 0.0
      %1392 = vmatpush1.msra.mxu0 0.0
      %1393 = vmatprep.subr.mxu0 0.0
      %1394 = vmatpush1.msra.mxu0 0.0
      %1395 = vmatprep.subr.mxu0 0.0
      %1396 = vmatpush1.msra.mxu0 0.0
      %1397 = vmatprep.subr.mxu0 0.0
      %1398 = vmatpush1.msra.mxu0 0.0
      %1399 = vmatprep.subr.mxu0 0.0
      %1400 = vmatpush1.msra.mxu0 0.0
      %1401 = vmatprep.subr.mxu0 0.0
      %1402 = vmatpush1.msra.mxu0 0.0
      %1403 = vmatprep.subr.mxu0 0.0
      %1404 = vmatpush1.msra.mxu0 0.0
      %1405 = vmatprep.subr.mxu0 0.0
      %1406 = vmatpush1.msra.mxu0 0.0
      %1407 = vmatprep.subr.mxu0 0.0
      %1408 = vmatpush1.msra.mxu0 0.0
      %1409 = vmatprep.subr.mxu0 0.0
      %1410 = vmatpush1.msra.mxu0 0.0
      %1411 = vmatprep.subr.mxu0 0.0
      %1412 = vmatpush1.msra.mxu0 0.0
      %1413 = vmatprep.mubr.f32.mxu0 0.0
      %1414 = vmatmul.mubr.f32.gmra.mrb[0].mxu0 %v1335
      %v1415 = vpop.f32.mrb[0].mxu0
      %v1416 = vadd.f32 0.0, %v1415
      %v1417 = vpop.f32.mrb[0].mxu0
      %v1418 = vadd.f32 0.0, %v1417
      %1419 = vmatprep.mubr.f32.mxu0 0.0
      %1420 = vmatmul.mubr.f32.gmra.mrb[0].mxu0 %v1338
      %v1421 = vpop.f32.mrb[0].mxu0
      %v1422 = vadd.f32 0.0, %v1421
      %v1423 = vpop.f32.mrb[0].mxu0
      %v1424 = vadd.f32 0.0, %v1423
      %1425 = vmatprep.mubr.f32.mxu0 0.0
      %1426 = vmatmul.mubr.f32.gmra.mrb[0].mxu0 %v1341
      %v1427 = vpop.f32.mrb[0].mxu0
      %v1428 = vadd.f32 0.0, %v1427
      %v1429 = vpop.f32.mrb[0].mxu0
      %v1430 = vadd.f32 0.0, %v1429
      %1431 = vdwg.mxu0
      %v1432 = vadd.f32 %v1222, %v1416
      %v1433 = vadd.f32 %v1223, %v1418
      %v1434 = vadd.f32 %v1224, %v1422
      %v1435 = vadd.f32 %v1225, %v1424
      %v1436 = vadd.f32 %v1226, %v1428
      %v1437 = vadd.f32 %v1227, %v1430
      %s1438 = scalar_lea.vmem %s1, 96
      %v1439 = vld [vmem:[%s1438] sm:$0xff]
      %v1440 = vld [vmem:[%s1438 + $0x8] sm:$0xff]
      %v1441 = vld [vmem:[%s1438 + $0x10] sm:$0xff]
      %v1443 = vsel %vm612, %v1439, 0
      %v1446 = vsel %vm612, %v1440, 0
      %v1449 = vsel %vm612, %v1441, 0
      %1451 = vmatprep.subr.mxu0 0.0
      %1452 = vmatpush1.msra.mxu0 %v603
      %1453 = vmatprep.subr.mxu0 0.0
      %1454 = vmatpush1.msra.mxu0 %v604
      %1455 = vmatprep.subr.mxu0 0.0
      %1456 = vmatpush1.msra.mxu0 %v605
      %1457 = vmatprep.subr.mxu0 0.0
      %1458 = vmatpush1.msra.mxu0 %v606
      %1459 = vmatprep.subr.mxu0 0.0
      %1460 = vmatpush1.msra.mxu0 %v607
      %1461 = vmatprep.subr.mxu0 0.0
      %1462 = vmatpush1.msra.mxu0 %v608
      %1463 = vmatprep.subr.mxu0 0.0
      %1464 = vmatpush1.msra.mxu0 0.0
      %1465 = vmatprep.subr.mxu0 0.0
      %1466 = vmatpush1.msra.mxu0 0.0
      %1467 = vmatprep.subr.mxu0 0.0
      %1468 = vmatpush1.msra.mxu0 0.0
      %1469 = vmatprep.subr.mxu0 0.0
      %1470 = vmatpush1.msra.mxu0 0.0
      %1471 = vmatprep.subr.mxu0 0.0
      %1472 = vmatpush1.msra.mxu0 0.0
      %1473 = vmatprep.subr.mxu0 0.0
      %1474 = vmatpush1.msra.mxu0 0.0
      %1475 = vmatprep.subr.mxu0 0.0
      %1476 = vmatpush1.msra.mxu0 0.0
      %1477 = vmatprep.subr.mxu0 0.0
      %1478 = vmatpush1.msra.mxu0 0.0
      %1479 = vmatprep.subr.mxu0 0.0
      %1480 = vmatpush1.msra.mxu0 0.0
      %1481 = vmatprep.subr.mxu0 0.0
      %1482 = vmatpush1.msra.mxu0 0.0
      %1483 = vmatprep.subr.mxu0 0.0
      %1484 = vmatpush1.msra.mxu0 0.0
      %1485 = vmatprep.subr.mxu0 0.0
      %1486 = vmatpush1.msra.mxu0 0.0
      %1487 = vmatprep.subr.mxu0 0.0
      %1488 = vmatpush1.msra.mxu0 0.0
      %1489 = vmatprep.subr.mxu0 0.0
      %1490 = vmatpush1.msra.mxu0 0.0
      %1491 = vmatprep.subr.mxu0 0.0
      %1492 = vmatpush1.msra.mxu0 0.0
      %1493 = vmatprep.subr.mxu0 0.0
      %1494 = vmatpush1.msra.mxu0 0.0
      %1495 = vmatprep.subr.mxu0 0.0
      %1496 = vmatpush1.msra.mxu0 0.0
      %1497 = vmatprep.subr.mxu0 0.0
      %1498 = vmatpush1.msra.mxu0 0.0
      %1499 = vmatprep.subr.mxu0 0.0
      %1500 = vmatpush1.msra.mxu0 0.0
      %1501 = vmatprep.subr.mxu0 0.0
      %1502 = vmatpush1.msra.mxu0 0.0
      %1503 = vmatprep.subr.mxu0 0.0
      %1504 = vmatpush1.msra.mxu0 0.0
      %1505 = vmatprep.subr.mxu0 0.0
      %1506 = vmatpush1.msra.mxu0 0.0
      %1507 = vmatprep.subr.mxu0 0.0
      %1508 = vmatpush1.msra.mxu0 0.0
      %1509 = vmatprep.subr.mxu0 0.0
      %1510 = vmatpush1.msra.mxu0 0.0
      %1511 = vmatprep.subr.mxu0 0.0
      %1512 = vmatpush1.msra.mxu0 0.0
      %1513 = vmatprep.subr.mxu0 0.0
      %1514 = vmatpush1.msra.mxu0 0.0
      %1515 = vmatprep.mubr.f32.mxu0 0.0
      %1516 = vmatmul.mubr.f32.gmra.mrb[0].mxu0 %v1443
      %v1517 = vpop.f32.mrb[0].mxu0
      %v1518 = vadd.f32 0.0, %v1517
      %v1519 = vpop.f32.mrb[0].mxu0
      %1520 = vmatprep.mubr.f32.mxu0 0.0
      %1521 = vmatmul.mubr.f32.gmra.mrb[0].mxu0 %v1446
      %v1522 = vpop.f32.mrb[0].mxu0
      %v1523 = vadd.f32 0.0, %v1522
      %v1524 = vpop.f32.mrb[0].mxu0
      %1525 = vmatprep.mubr.f32.mxu0 0.0
      %1526 = vmatmul.mubr.f32.gmra.mrb[0].mxu0 %v1449
      %v1527 = vpop.f32.mrb[0].mxu0
      %v1528 = vadd.f32 0.0, %v1527
      %v1529 = vpop.f32.mrb[0].mxu0
      %1530 = vdwg.mxu0
      %s1531 = scalar_lea.vmem %s2, 384
      %v1532 = vld [vmem:[%s1531] sm:$0xff]
      %v1533 = vld [vmem:[%s1531 + $0x8] sm:$0xff]
      %v1534 = vld [vmem:[%s1531 + $0x10] sm:$0xff]
      %v1535 = vld [vmem:[%s1531 + $0x18] sm:$0xff]
      %v1536 = vld [vmem:[%s1531 + $0x20] sm:$0xff]
      %v1537 = vld [vmem:[%s1531 + $0x28] sm:$0xff]
      %v1538 = vld [vmem:[%s1531 + $0x30] sm:$0xff]
      %v1539 = vld [vmem:[%s1531 + $0x38] sm:$0xff]
      %v1540 = vld [vmem:[%s1531 + $0x40] sm:$0xff]
      %v1541 = vld [vmem:[%s1531 + $0x48] sm:$0xff]
      %v1542 = vld [vmem:[%s1531 + $0x50] sm:$0x3]
      %v1543 = vld [vmem:[%s1531 + $0x58] sm:$0x3]
      %v1545 = vsel %vm820, %v1518, 0
      %v1548 = vsel %vm820, %v1523, 0
      %v1551 = vsel %vm820, %v1528, 0
      %v1554 = vsel %vm830, %v1542, 0
      %v1557 = vsel %vm830, %v1543, 0
      %1559 = vmatprep.subr.mxu0 %v1533
      %1560 = vmatpush1.msra.mxu0 %v1532
      %1561 = vmatprep.subr.mxu0 %v1535
      %1562 = vmatpush1.msra.mxu0 %v1534
      %1563 = vmatprep.subr.mxu0 %v1537
      %1564 = vmatpush1.msra.mxu0 %v1536
      %1565 = vmatprep.subr.mxu0 %v1539
      %1566 = vmatpush1.msra.mxu0 %v1538
      %1567 = vmatprep.subr.mxu0 %v1541
      %1568 = vmatpush1.msra.mxu0 %v1540
      %1569 = vmatprep.subr.mxu0 %v1557
      %1570 = vmatpush1.msra.mxu0 %v1554
      %1571 = vmatprep.subr.mxu0 0.0
      %1572 = vmatpush1.msra.mxu0 0.0
      %1573 = vmatprep.subr.mxu0 0.0
      %1574 = vmatpush1.msra.mxu0 0.0
      %1575 = vmatprep.subr.mxu0 0.0
      %1576 = vmatpush1.msra.mxu0 0.0
      %1577 = vmatprep.subr.mxu0 0.0
      %1578 = vmatpush1.msra.mxu0 0.0
      %1579 = vmatprep.subr.mxu0 0.0
      %1580 = vmatpush1.msra.mxu0 0.0
      %1581 = vmatprep.subr.mxu0 0.0
      %1582 = vmatpush1.msra.mxu0 0.0
      %1583 = vmatprep.subr.mxu0 0.0
      %1584 = vmatpush1.msra.mxu0 0.0
      %1585 = vmatprep.subr.mxu0 0.0
      %1586 = vmatpush1.msra.mxu0 0.0
      %1587 = vmatprep.subr.mxu0 0.0
      %1588 = vmatpush1.msra.mxu0 0.0
      %1589 = vmatprep.subr.mxu0 0.0
      %1590 = vmatpush1.msra.mxu0 0.0
      %1591 = vmatprep.subr.mxu0 0.0
      %1592 = vmatpush1.msra.mxu0 0.0
      %1593 = vmatprep.subr.mxu0 0.0
      %1594 = vmatpush1.msra.mxu0 0.0
      %1595 = vmatprep.subr.mxu0 0.0
      %1596 = vmatpush1.msra.mxu0 0.0
      %1597 = vmatprep.subr.mxu0 0.0
      %1598 = vmatpush1.msra.mxu0 0.0
      %1599 = vmatprep.subr.mxu0 0.0
      %1600 = vmatpush1.msra.mxu0 0.0
      %1601 = vmatprep.subr.mxu0 0.0
      %1602 = vmatpush1.msra.mxu0 0.0
      %1603 = vmatprep.subr.mxu0 0.0
      %1604 = vmatpush1.msra.mxu0 0.0
      %1605 = vmatprep.subr.mxu0 0.0
      %1606 = vmatpush1.msra.mxu0 0.0
      %1607 = vmatprep.subr.mxu0 0.0
      %1608 = vmatpush1.msra.mxu0 0.0
      %1609 = vmatprep.subr.mxu0 0.0
      %1610 = vmatpush1.msra.mxu0 0.0
      %1611 = vmatprep.subr.mxu0 0.0
      %1612 = vmatpush1.msra.mxu0 0.0
      %1613 = vmatprep.subr.mxu0 0.0
      %1614 = vmatpush1.msra.mxu0 0.0
      %1615 = vmatprep.subr.mxu0 0.0
      %1616 = vmatpush1.msra.mxu0 0.0
      %1617 = vmatprep.subr.mxu0 0.0
      %1618 = vmatpush1.msra.mxu0 0.0
      %1619 = vmatprep.subr.mxu0 0.0
      %1620 = vmatpush1.msra.mxu0 0.0
      %1621 = vmatprep.subr.mxu0 0.0
      %1622 = vmatpush1.msra.mxu0 0.0
      %1623 = vmatprep.mubr.f32.mxu0 0.0
      %1624 = vmatmul.mubr.f32.gmra.mrb[0].mxu0 %v1545
      %v1625 = vpop.f32.mrb[0].mxu0
      %v1626 = vadd.f32 0.0, %v1625
      %v1627 = vpop.f32.mrb[0].mxu0
      %v1628 = vadd.f32 0.0, %v1627
      %1629 = vmatprep.mubr.f32.mxu0 0.0
      %1630 = vmatmul.mubr.f32.gmra.mrb[0].mxu0 %v1548
      %v1631 = vpop.f32.mrb[0].mxu0
      %v1632 = vadd.f32 0.0, %v1631
      %v1633 = vpop.f32.mrb[0].mxu0
      %v1634 = vadd.f32 0.0, %v1633
      %1635 = vmatprep.mubr.f32.mxu0 0.0
      %1636 = vmatmul.mubr.f32.gmra.mrb[0].mxu0 %v1551
      %v1637 = vpop.f32.mrb[0].mxu0
      %v1638 = vadd.f32 0.0, %v1637
      %v1639 = vpop.f32.mrb[0].mxu0
      %v1640 = vadd.f32 0.0, %v1639
      %1641 = vdwg.mxu0
      %v1642 = vadd.f32 %v1432, %v1626
      %v1643 = vadd.f32 %v1433, %v1628
      %v1644 = vadd.f32 %v1434, %v1632
      %v1645 = vadd.f32 %v1435, %v1634
      %v1646 = vadd.f32 %v1436, %v1638
      %v1647 = vadd.f32 %v1437, %v1640
      %v1648 = vld [vmem:[%s3] sm:$0x3]
      %v1650 = vlaneseq
      %v1651 = vshrl.u32 %v1650, 7
      %v1652 = vsub.s32 0, %v1651
      %v1653 = vrot.slane %v1648, %v1652
      %v1654 = vlaneseq
      %v1655 = vshrl.u32 %v1654, 7
      %v1656 = vsub.s32 1, %v1655
      %v1657 = vrot.slane %v1648, %v1656
      %v1660 = vadd.f32 %v1642, %v1653
      %v1661 = vadd.f32 %v1643, %v1657
      %v1662 = vadd.f32 %v1644, %v1653
      %v1663 = vadd.f32 %v1645, %v1657
      %v1664 = vadd.f32 %v1646, %v1653
      %v1665 = vadd.f32 %v1647, %v1657
      %v1666 = vmax.f32 %v1660, 0.0
      %v1667 = vmax.f32 %v1661, 0.0
      %v1668 = vmax.f32 %v1662, 0.0
      %v1669 = vmax.f32 %v1663, 0.0
      %v1670 = vmax.f32 %v1664, 0.0
      %v1671 = vmax.f32 %v1665, 0.0
      %v1672 = vld [vmem:[%s4] sm:$0xff]
      %v1673 = vld [vmem:[%s4 + $0x8] sm:$0xf]
      %vm1674 = vcmask 195584
      %v1676 = vsel %vm1674, %v1672, 0
      %v1679 = vsel %vm1674, %v1673, 0
      %1681 = vmatprep.subr.mxu0 %v1667
      %1682 = vmatpush1.msra.mxu0 %v1666
      %1683 = vmatprep.subr.mxu0 %v1669
      %1684 = vmatpush1.msra.mxu0 %v1668
      %1685 = vmatprep.subr.mxu0 %v1671
      %1686 = vmatpush1.msra.mxu0 %v1670
      %1687 = vmatprep.subr.mxu0 0.0
      %1688 = vmatpush1.msra.mxu0 0.0
      %1689 = vmatprep.subr.mxu0 0.0
      %1690 = vmatpush1.msra.mxu0 0.0
      %1691 = vmatprep.subr.mxu0 0.0
      %1692 = vmatpush1.msra.mxu0 0.0
      %1693 = vmatprep.subr.mxu0 0.0
      %1694 = vmatpush1.msra.mxu0 0.0
      %1695 = vmatprep.subr.mxu0 0.0
      %1696 = vmatpush1.msra.mxu0 0.0
      %1697 = vmatprep.subr.mxu0 0.0
      %1698 = vmatpush1.msra.mxu0 0.0
      %1699 = vmatprep.subr.mxu0 0.0
      %1700 = vmatpush1.msra.mxu0 0.0
      %1701 = vmatprep.subr.mxu0 0.0
      %1702 = vmatpush1.msra.mxu0 0.0
      %1703 = vmatprep.subr.mxu0 0.0
      %1704 = vmatpush1.msra.mxu0 0.0
      %1705 = vmatprep.subr.mxu0 0.0
      %1706 = vmatpush1.msra.mxu0 0.0
      %1707 = vmatprep.subr.mxu0 0.0
      %1708 = vmatpush1.msra.mxu0 0.0
      %1709 = vmatprep.subr.mxu0 0.0
      %1710 = vmatpush1.msra.mxu0 0.0
      %1711 = vmatprep.subr.mxu0 0.0
      %1712 = vmatpush1.msra.mxu0 0.0
      %1713 = vmatprep.subr.mxu0 0.0
      %1714 = vmatpush1.msra.mxu0 0.0
      %1715 = vmatprep.subr.mxu0 0.0
      %1716 = vmatpush1.msra.mxu0 0.0
      %1717 = vmatprep.subr.mxu0 0.0
      %1718 = vmatpush1.msra.mxu0 0.0
      %1719 = vmatprep.subr.mxu0 0.0
      %1720 = vmatpush1.msra.mxu0 0.0
      %1721 = vmatprep.subr.mxu0 0.0
      %1722 = vmatpush1.msra.mxu0 0.0
      %1723 = vmatprep.subr.mxu0 0.0
      %1724 = vmatpush1.msra.mxu0 0.0
      %1725 = vmatprep.subr.mxu0 0.0
      %1726 = vmatpush1.msra.mxu0 0.0
      %1727 = vmatprep.subr.mxu0 0.0
      %1728 = vmatpush1.msra.mxu0 0.0
      %1729 = vmatprep.subr.mxu0 0.0
      %1730 = vmatpush1.msra.mxu0 0.0
      %1731 = vmatprep.subr.mxu0 0.0
      %1732 = vmatpush1.msra.mxu0 0.0
      %1733 = vmatprep.subr.mxu0 0.0
      %1734 = vmatpush1.msra.mxu0 0.0
      %1735 = vmatprep.subr.mxu0 0.0
      %1736 = vmatpush1.msra.mxu0 0.0
      %1737 = vmatprep.subr.mxu0 0.0
      %1738 = vmatpush1.msra.mxu0 0.0
      %1739 = vmatprep.subr.mxu0 0.0
      %1740 = vmatpush1.msra.mxu0 0.0
      %1741 = vmatprep.subr.mxu0 0.0
      %1742 = vmatpush1.msra.mxu0 0.0
      %1743 = vmatprep.subr.mxu0 0.0
      %1744 = vmatpush1.msra.mxu0 0.0
      %1745 = vmatprep.mubr.f32.mxu0 0.0
      %1746 = vmatmul.mubr.f32.gmra.mrb[0].mxu0 %v1676
      %v1747 = vpop.f32.mrb[0].mxu0
      %v1748 = vadd.f32 0.0, %v1747
      %v1749 = vpop.f32.mrb[0].mxu0
      %v1750 = vadd.f32 0.0, %v1749
      %1751 = vmatprep.mubr.f32.mxu0 0.0
      %1752 = vmatmul.mubr.f32.gmra.mrb[0].mxu0 %v1679
      %v1753 = vpop.f32.mrb[0].mxu0
      %v1754 = vadd.f32 0.0, %v1753
      %v1755 = vpop.f32.mrb[0].mxu0
      %v1756 = vadd.f32 0.0, %v1755
      %1757 = vdwg.mxu0
      %v1758 = vld [vmem:[%s5] sm:$0xff]
      %v1759 = vld [vmem:[%s5 + $0x8] sm:$0xff]
      %v1760 = vld [vmem:[%s5 + $0x10] sm:$0xff]
      %v1761 = vld [vmem:[%s5 + $0x18] sm:$0xff]
      %v1762 = vld [vmem:[%s5 + $0x20] sm:$0xff]
      %v1763 = vld [vmem:[%s5 + $0x28] sm:$0xff]
      %v1764 = vld [vmem:[%s5 + $0x30] sm:$0xff]
      %v1765 = vld [vmem:[%s5 + $0x38] sm:$0xff]
      %v1766 = vld [vmem:[%s5 + $0x40] sm:$0xff]
      %v1767 = vld [vmem:[%s5 + $0x48] sm:$0xff]
      %v1768 = vld [vmem:[%s5 + $0x50] sm:$0xff]
      %v1769 = vld [vmem:[%s5 + $0x58] sm:$0xff]
      %v1770 = vld [vmem:[%s5 + $0x60] sm:$0xff]
      %v1771 = vld [vmem:[%s5 + $0x68] sm:$0xff]
      %v1772 = vld [vmem:[%s5 + $0x70] sm:$0xff]
      %v1773 = vld [vmem:[%s5 + $0x78] sm:$0xff]
      %v1774 = vld [vmem:[%s5 + $0x80] sm:$0xff]
      %v1775 = vld [vmem:[%s5 + $0x88] sm:$0xff]
      %v1776 = vld [vmem:[%s5 + $0x90] sm:$0xff]
      %v1777 = vld [vmem:[%s5 + $0x98] sm:$0xff]
      %v1778 = vld [vmem:[%s5 + $0xa0] sm:$0xff]
      %v1779 = vld [vmem:[%s5 + $0xa8] sm:$0xff]
      %v1780 = vld [vmem:[%s5 + $0xb0] sm:$0xff]
      %v1781 = vld [vmem:[%s5 + $0xb8] sm:$0xff]
      %v1782 = vld [vmem:[%s5 + $0xc0] sm:$0xff]
      %v1783 = vld [vmem:[%s5 + $0xc8] sm:$0xff]
      %v1784 = vld [vmem:[%s5 + $0xd0] sm:$0xff]
      %v1785 = vld [vmem:[%s5 + $0xd8] sm:$0xff]
      %v1786 = vld [vmem:[%s5 + $0xe0] sm:$0xff]
      %v1787 = vld [vmem:[%s5 + $0xe8] sm:$0xff]
      %v1788 = vld [vmem:[%s5 + $0xf0] sm:$0xff]
      %v1789 = vld [vmem:[%s5 + $0xf8] sm:$0xff]
      %v1790 = vld [vmem:[%s5 + $0x100] sm:$0xff]
      %v1791 = vld [vmem:[%s5 + $0x108] sm:$0xff]
      %v1792 = vld [vmem:[%s5 + $0x110] sm:$0xff]
      %v1793 = vld [vmem:[%s5 + $0x118] sm:$0xff]
      %v1794 = vld [vmem:[%s5 + $0x120] sm:$0xff]
      %v1795 = vld [vmem:[%s5 + $0x128] sm:$0xff]
      %v1796 = vld [vmem:[%s5 + $0x130] sm:$0xff]
      %v1797 = vld [vmem:[%s5 + $0x138] sm:$0xff]
      %v1798 = vld [vmem:[%s5 + $0x140] sm:$0xff]
      %v1799 = vld [vmem:[%s5 + $0x148] sm:$0xff]
      %v1800 = vld [vmem:[%s5 + $0x150] sm:$0xff]
      %v1801 = vld [vmem:[%s5 + $0x158] sm:$0xff]
      %v1802 = vld [vmem:[%s5 + $0x160] sm:$0xff]
      %v1803 = vld [vmem:[%s5 + $0x168] sm:$0xff]
      %v1804 = vld [vmem:[%s5 + $0x170] sm:$0xff]
      %v1805 = vld [vmem:[%s5 + $0x178] sm:$0xff]
      %v1806 = vld [vmem:[%s5 + $0x180] sm:$0xff]
      %v1807 = vld [vmem:[%s5 + $0x188] sm:$0xff]
      %v1808 = vld [vmem:[%s5 + $0x190] sm:$0xff]
      %v1809 = vld [vmem:[%s5 + $0x198] sm:$0xff]
      %v1810 = vld [vmem:[%s5 + $0x1a0] sm:$0x3]
      %v1811 = vld [vmem:[%s5 + $0x1a8] sm:$0x3]
      %s1812 = scalar_lea.vmem %s4, 16
      %v1813 = vld [vmem:[%s1812] sm:$0xff]
      %v1814 = vld [vmem:[%s1812 + $0x8] sm:$0xf]
      %v1816 = vsel %vm1674, %v1813, 0
      %v1819 = vsel %vm1674, %v1814, 0
      %1821 = vmatprep.subr.mxu0 %v1667
      %1822 = vmatpush1.msra.mxu0 %v1666
      %1823 = vmatprep.subr.mxu0 %v1669
      %1824 = vmatpush1.msra.mxu0 %v1668
      %1825 = vmatprep.subr.mxu0 %v1671
      %1826 = vmatpush1.msra.mxu0 %v1670
      %1827 = vmatprep.subr.mxu0 0.0
      %1828 = vmatpush1.msra.mxu0 0.0
      %1829 = vmatprep.subr.mxu0 0.0
      %1830 = vmatpush1.msra.mxu0 0.0
      %1831 = vmatprep.subr.mxu0 0.0
      %1832 = vmatpush1.msra.mxu0 0.0
      %1833 = vmatprep.subr.mxu0 0.0
      %1834 = vmatpush1.msra.mxu0 0.0
      %1835 = vmatprep.subr.mxu0 0.0
      %1836 = vmatpush1.msra.mxu0 0.0
      %1837 = vmatprep.subr.mxu0 0.0
      %1838 = vmatpush1.msra.mxu0 0.0
      %1839 = vmatprep.subr.mxu0 0.0
      %1840 = vmatpush1.msra.mxu0 0.0
      %1841 = vmatprep.subr.mxu0 0.0
      %1842 = vmatpush1.msra.mxu0 0.0
      %1843 = vmatprep.subr.mxu0 0.0
      %1844 = vmatpush1.msra.mxu0 0.0
      %1845 = vmatprep.subr.mxu0 0.0
      %1846 = vmatpush1.msra.mxu0 0.0
      %1847 = vmatprep.subr.mxu0 0.0
      %1848 = vmatpush1.msra.mxu0 0.0
      %1849 = vmatprep.subr.mxu0 0.0
      %1850 = vmatpush1.msra.mxu0 0.0
      %1851 = vmatprep.subr.mxu0 0.0
      %1852 = vmatpush1.msra.mxu0 0.0
      %1853 = vmatprep.subr.mxu0 0.0
      %1854 = vmatpush1.msra.mxu0 0.0
      %1855 = vmatprep.subr.mxu0 0.0
      %1856 = vmatpush1.msra.mxu0 0.0
      %1857 = vmatprep.subr.mxu0 0.0
      %1858 = vmatpush1.msra.mxu0 0.0
      %1859 = vmatprep.subr.mxu0 0.0
      %1860 = vmatpush1.msra.mxu0 0.0
      %1861 = vmatprep.subr.mxu0 0.0
      %1862 = vmatpush1.msra.mxu0 0.0
      %1863 = vmatprep.subr.mxu0 0.0
      %1864 = vmatpush1.msra.mxu0 0.0
      %1865 = vmatprep.subr.mxu0 0.0
      %1866 = vmatpush1.msra.mxu0 0.0
      %1867 = vmatprep.subr.mxu0 0.0
      %1868 = vmatpush1.msra.mxu0 0.0
      %1869 = vmatprep.subr.mxu0 0.0
      %1870 = vmatpush1.msra.mxu0 0.0
      %1871 = vmatprep.subr.mxu0 0.0
      %1872 = vmatpush1.msra.mxu0 0.0
      %1873 = vmatprep.subr.mxu0 0.0
      %1874 = vmatpush1.msra.mxu0 0.0
      %1875 = vmatprep.subr.mxu0 0.0
      %1876 = vmatpush1.msra.mxu0 0.0
      %1877 = vmatprep.subr.mxu0 0.0
      %1878 = vmatpush1.msra.mxu0 0.0
      %1879 = vmatprep.subr.mxu0 0.0
      %1880 = vmatpush1.msra.mxu0 0.0
      %1881 = vmatprep.subr.mxu0 0.0
      %1882 = vmatpush1.msra.mxu0 0.0
      %1883 = vmatprep.subr.mxu0 0.0
      %1884 = vmatpush1.msra.mxu0 0.0
      %1885 = vmatprep.mubr.f32.mxu0 0.0
      %1886 = vmatmul.mubr.f32.gmra.mrb[0].mxu0 %v1816
      %v1887 = vpop.f32.mrb[0].mxu0
      %v1888 = vadd.f32 0.0, %v1887
      %v1889 = vpop.f32.mrb[0].mxu0
      %v1890 = vadd.f32 0.0, %v1889
      %1891 = vmatprep.mubr.f32.mxu0 0.0
      %1892 = vmatmul.mubr.f32.gmra.mrb[0].mxu0 %v1819
      %v1893 = vpop.f32.mrb[0].mxu0
      %v1894 = vadd.f32 0.0, %v1893
      %v1895 = vpop.f32.mrb[0].mxu0
      %v1896 = vadd.f32 0.0, %v1895
      %1897 = vdwg.mxu0
      %s1898 = scalar_lea.vmem %s5, 432
      %v1899 = vld [vmem:[%s1898] sm:$0xff]
      %v1900 = vld [vmem:[%s1898 + $0x8] sm:$0xff]
      %v1901 = vld [vmem:[%s1898 + $0x10] sm:$0xff]
      %v1902 = vld [vmem:[%s1898 + $0x18] sm:$0xff]
      %v1903 = vld [vmem:[%s1898 + $0x20] sm:$0xff]
      %v1904 = vld [vmem:[%s1898 + $0x28] sm:$0xff]
      %v1905 = vld [vmem:[%s1898 + $0x30] sm:$0xff]
      %v1906 = vld [vmem:[%s1898 + $0x38] sm:$0xff]
      %v1907 = vld [vmem:[%s1898 + $0x40] sm:$0xff]
      %v1908 = vld [vmem:[%s1898 + $0x48] sm:$0xff]
      %v1909 = vld [vmem:[%s1898 + $0x50] sm:$0xff]
      %v1910 = vld [vmem:[%s1898 + $0x58] sm:$0xff]
      %v1911 = vld [vmem:[%s1898 + $0x60] sm:$0xff]
      %v1912 = vld [vmem:[%s1898 + $0x68] sm:$0xff]
      %v1913 = vld [vmem:[%s1898 + $0x70] sm:$0xff]
      %v1914 = vld [vmem:[%s1898 + $0x78] sm:$0xff]
      %v1915 = vld [vmem:[%s1898 + $0x80] sm:$0xff]
      %v1916 = vld [vmem:[%s1898 + $0x88] sm:$0xff]
      %v1917 = vld [vmem:[%s1898 + $0x90] sm:$0xff]
      %v1918 = vld [vmem:[%s1898 + $0x98] sm:$0xff]
      %v1919 = vld [vmem:[%s1898 + $0xa0] sm:$0xff]
      %v1920 = vld [vmem:[%s1898 + $0xa8] sm:$0xff]
      %v1921 = vld [vmem:[%s1898 + $0xb0] sm:$0xff]
      %v1922 = vld [vmem:[%s1898 + $0xb8] sm:$0xff]
      %v1923 = vld [vmem:[%s1898 + $0xc0] sm:$0xff]
      %v1924 = vld [vmem:[%s1898 + $0xc8] sm:$0xff]
      %v1925 = vld [vmem:[%s1898 + $0xd0] sm:$0xff]
      %v1926 = vld [vmem:[%s1898 + $0xd8] sm:$0xff]
      %v1927 = vld [vmem:[%s1898 + $0xe0] sm:$0xff]
      %v1928 = vld [vmem:[%s1898 + $0xe8] sm:$0xff]
      %v1929 = vld [vmem:[%s1898 + $0xf0] sm:$0xff]
      %v1930 = vld [vmem:[%s1898 + $0xf8] sm:$0xff]
      %v1931 = vld [vmem:[%s1898 + $0x100] sm:$0xff]
      %v1932 = vld [vmem:[%s1898 + $0x108] sm:$0xff]
      %v1933 = vld [vmem:[%s1898 + $0x110] sm:$0xff]
      %v1934 = vld [vmem:[%s1898 + $0x118] sm:$0xff]
      %v1935 = vld [vmem:[%s1898 + $0x120] sm:$0xff]
      %v1936 = vld [vmem:[%s1898 + $0x128] sm:$0xff]
      %v1937 = vld [vmem:[%s1898 + $0x130] sm:$0xff]
      %v1938 = vld [vmem:[%s1898 + $0x138] sm:$0xff]
      %v1939 = vld [vmem:[%s1898 + $0x140] sm:$0xff]
      %v1940 = vld [vmem:[%s1898 + $0x148] sm:$0xff]
      %v1941 = vld [vmem:[%s1898 + $0x150] sm:$0xff]
      %v1942 = vld [vmem:[%s1898 + $0x158] sm:$0xff]
      %v1943 = vld [vmem:[%s1898 + $0x160] sm:$0xff]
      %v1944 = vld [vmem:[%s1898 + $0x168] sm:$0xff]
      %v1945 = vld [vmem:[%s1898 + $0x170] sm:$0xff]
      %v1946 = vld [vmem:[%s1898 + $0x178] sm:$0xff]
      %v1947 = vld [vmem:[%s1898 + $0x180] sm:$0xff]
      %v1948 = vld [vmem:[%s1898 + $0x188] sm:$0xff]
      %v1949 = vld [vmem:[%s1898 + $0x190] sm:$0xff]
      %v1950 = vld [vmem:[%s1898 + $0x198] sm:$0xff]
      %v1951 = vld [vmem:[%s1898 + $0x1a0] sm:$0x3]
      %v1952 = vld [vmem:[%s1898 + $0x1a8] sm:$0x3]
      %vm1953 = vcmask 670720
      %v1955 = vsel %vm1953, %v1890, 0
      %v1958 = vsel %vm1953, %v1896, 0
      %v1961 = vsel %vm830, %v1951, 0
      %v1964 = vsel %vm830, %v1952, 0
      %1966 = vmatprep.subr.mxu0 %v1900
      %1967 = vmatpush1.msra.mxu0 %v1899
      %1968 = vmatprep.subr.mxu0 %v1902
      %1969 = vmatpush1.msra.mxu0 %v1901
      %1970 = vmatprep.subr.mxu0 %v1904
      %1971 = vmatpush1.msra.mxu0 %v1903
      %1972 = vmatprep.subr.mxu0 %v1906
      %1973 = vmatpush1.msra.mxu0 %v1905
      %1974 = vmatprep.subr.mxu0 %v1908
      %1975 = vmatpush1.msra.mxu0 %v1907
      %1976 = vmatprep.subr.mxu0 %v1910
      %1977 = vmatpush1.msra.mxu0 %v1909
      %1978 = vmatprep.subr.mxu0 %v1912
      %1979 = vmatpush1.msra.mxu0 %v1911
      %1980 = vmatprep.subr.mxu0 %v1914
      %1981 = vmatpush1.msra.mxu0 %v1913
      %1982 = vmatprep.subr.mxu0 %v1916
      %1983 = vmatpush1.msra.mxu0 %v1915
      %1984 = vmatprep.subr.mxu0 %v1918
      %1985 = vmatpush1.msra.mxu0 %v1917
      %1986 = vmatprep.subr.mxu0 %v1920
      %1987 = vmatpush1.msra.mxu0 %v1919
      %1988 = vmatprep.subr.mxu0 %v1922
      %1989 = vmatpush1.msra.mxu0 %v1921
      %1990 = vmatprep.subr.mxu0 %v1924
      %1991 = vmatpush1.msra.mxu0 %v1923
      %1992 = vmatprep.subr.mxu0 %v1926
      %1993 = vmatpush1.msra.mxu0 %v1925
      %1994 = vmatprep.subr.mxu0 %v1928
      %1995 = vmatpush1.msra.mxu0 %v1927
      %1996 = vmatprep.subr.mxu0 %v1930
      %1997 = vmatpush1.msra.mxu0 %v1929
      %1998 = vmatprep.subr.mxu0 %v1932
      %1999 = vmatpush1.msra.mxu0 %v1931
      %2000 = vmatprep.subr.mxu0 %v1934
      %2001 = vmatpush1.msra.mxu0 %v1933
      %2002 = vmatprep.subr.mxu0 %v1936
      %2003 = vmatpush1.msra.mxu0 %v1935
      %2004 = vmatprep.subr.mxu0 %v1938
      %2005 = vmatpush1.msra.mxu0 %v1937
      %2006 = vmatprep.subr.mxu0 %v1940
      %2007 = vmatpush1.msra.mxu0 %v1939
      %2008 = vmatprep.subr.mxu0 %v1942
      %2009 = vmatpush1.msra.mxu0 %v1941
      %2010 = vmatprep.subr.mxu0 %v1944
      %2011 = vmatpush1.msra.mxu0 %v1943
      %2012 = vmatprep.subr.mxu0 %v1946
      %2013 = vmatpush1.msra.mxu0 %v1945
      %2014 = vmatprep.subr.mxu0 %v1948
      %2015 = vmatpush1.msra.mxu0 %v1947
      %2016 = vmatprep.subr.mxu0 %v1950
      %2017 = vmatpush1.msra.mxu0 %v1949
      %2018 = vmatprep.subr.mxu0 %v1964
      %2019 = vmatpush1.msra.mxu0 %v1961
      %2020 = vmatprep.subr.mxu0 0.0
      %2021 = vmatpush1.msra.mxu0 0.0
      %2022 = vmatprep.subr.mxu0 0.0
      %2023 = vmatpush1.msra.mxu0 0.0
      %2024 = vmatprep.subr.mxu0 0.0
      %2025 = vmatpush1.msra.mxu0 0.0
      %2026 = vmatprep.subr.mxu0 0.0
      %2027 = vmatpush1.msra.mxu0 0.0
      %2028 = vmatprep.subr.mxu0 0.0
      %2029 = vmatpush1.msra.mxu0 0.0
      %2030 = vmatprep.mubr.f32.mxu0 %v1955
      %2031 = vmatmul.mubr.f32.gmra.mrb[0].mxu0 %v1888
      %v2032 = vpop.f32.mrb[0].mxu0
      %v2033 = vadd.f32 0.0, %v2032
      %v2034 = vpop.f32.mrb[0].mxu0
      %v2035 = vadd.f32 0.0, %v2034
      %2036 = vmatprep.mubr.f32.mxu0 %v1958
      %2037 = vmatmul.mubr.f32.gmra.mrb[0].mxu0 %v1894
      %v2038 = vpop.f32.mrb[0].mxu0
      %v2039 = vadd.f32 0.0, %v2038
      %v2040 = vpop.f32.mrb[0].mxu0
      %v2041 = vadd.f32 0.0, %v2040
      %2042 = vdwg.mxu0
      %v2044 = vsel %vm1953, %v1750, 0
      %v2047 = vsel %vm1953, %v1756, 0
      %v2050 = vsel %vm830, %v1810, 0
      %v2053 = vsel %vm830, %v1811, 0
      %2055 = vmatprep.subr.mxu0 %v1759
      %2056 = vmatpush1.msra.mxu0 %v1758
      %2057 = vmatprep.subr.mxu0 %v1761
      %2058 = vmatpush1.msra.mxu0 %v1760
      %2059 = vmatprep.subr.mxu0 %v1763
      %2060 = vmatpush1.msra.mxu0 %v1762
      %2061 = vmatprep.subr.mxu0 %v1765
      %2062 = vmatpush1.msra.mxu0 %v1764
      %2063 = vmatprep.subr.mxu0 %v1767
      %2064 = vmatpush1.msra.mxu0 %v1766
      %2065 = vmatprep.subr.mxu0 %v1769
      %2066 = vmatpush1.msra.mxu0 %v1768
      %2067 = vmatprep.subr.mxu0 %v1771
      %2068 = vmatpush1.msra.mxu0 %v1770
      %2069 = vmatprep.subr.mxu0 %v1773
      %2070 = vmatpush1.msra.mxu0 %v1772
      %2071 = vmatprep.subr.mxu0 %v1775
      %2072 = vmatpush1.msra.mxu0 %v1774
      %2073 = vmatprep.subr.mxu0 %v1777
      %2074 = vmatpush1.msra.mxu0 %v1776
      %2075 = vmatprep.subr.mxu0 %v1779
      %2076 = vmatpush1.msra.mxu0 %v1778
      %2077 = vmatprep.subr.mxu0 %v1781
      %2078 = vmatpush1.msra.mxu0 %v1780
      %2079 = vmatprep.subr.mxu0 %v1783
      %2080 = vmatpush1.msra.mxu0 %v1782
      %2081 = vmatprep.subr.mxu0 %v1785
      %2082 = vmatpush1.msra.mxu0 %v1784
      %2083 = vmatprep.subr.mxu0 %v1787
      %2084 = vmatpush1.msra.mxu0 %v1786
      %2085 = vmatprep.subr.mxu0 %v1789
      %2086 = vmatpush1.msra.mxu0 %v1788
      %2087 = vmatprep.subr.mxu0 %v1791
      %2088 = vmatpush1.msra.mxu0 %v1790
      %2089 = vmatprep.subr.mxu0 %v1793
      %2090 = vmatpush1.msra.mxu0 %v1792
      %2091 = vmatprep.subr.mxu0 %v1795
      %2092 = vmatpush1.msra.mxu0 %v1794
      %2093 = vmatprep.subr.mxu0 %v1797
      %2094 = vmatpush1.msra.mxu0 %v1796
      %2095 = vmatprep.subr.mxu0 %v1799
      %2096 = vmatpush1.msra.mxu0 %v1798
      %2097 = vmatprep.subr.mxu0 %v1801
      %2098 = vmatpush1.msra.mxu0 %v1800
      %2099 = vmatprep.subr.mxu0 %v1803
      %2100 = vmatpush1.msra.mxu0 %v1802
      %2101 = vmatprep.subr.mxu0 %v1805
      %2102 = vmatpush1.msra.mxu0 %v1804
      %2103 = vmatprep.subr.mxu0 %v1807
      %2104 = vmatpush1.msra.mxu0 %v1806
      %2105 = vmatprep.subr.mxu0 %v1809
      %2106 = vmatpush1.msra.mxu0 %v1808
      %2107 = vmatprep.subr.mxu0 %v2053
      %2108 = vmatpush1.msra.mxu0 %v2050
      %2109 = vmatprep.subr.mxu0 0.0
      %2110 = vmatpush1.msra.mxu0 0.0
      %2111 = vmatprep.subr.mxu0 0.0
      %2112 = vmatpush1.msra.mxu0 0.0
      %2113 = vmatprep.subr.mxu0 0.0
      %2114 = vmatpush1.msra.mxu0 0.0
      %2115 = vmatprep.subr.mxu0 0.0
      %2116 = vmatpush1.msra.mxu0 0.0
      %2117 = vmatprep.subr.mxu0 0.0
      %2118 = vmatpush1.msra.mxu0 0.0
      %2119 = vmatprep.mubr.f32.mxu0 %v2044
      %2120 = vmatmul.mubr.f32.gmra.mrb[0].mxu0 %v1748
      %v2121 = vpop.f32.mrb[0].mxu0
      %v2122 = vadd.f32 %v2033, %v2121
      %v2123 = vpop.f32.mrb[0].mxu0
      %v2124 = vadd.f32 %v2035, %v2123
      %2125 = vmatprep.mubr.f32.mxu0 %v2047
      %2126 = vmatmul.mubr.f32.gmra.mrb[0].mxu0 %v1754
      %v2127 = vpop.f32.mrb[0].mxu0
      %v2128 = vadd.f32 %v2039, %v2127
      %v2129 = vpop.f32.mrb[0].mxu0
      %v2130 = vadd.f32 %v2041, %v2129
      %2131 = vdwg.mxu0
      %s2132 = scalar_lea.vmem %s4, 32
      %v2133 = vld [vmem:[%s2132] sm:$0xff]
      %v2134 = vld [vmem:[%s2132 + $0x8] sm:$0xf]
      %v2136 = vsel %vm1674, %v2133, 0
      %v2139 = vsel %vm1674, %v2134, 0
      %2141 = vmatprep.subr.mxu0 %v1667
      %2142 = vmatpush1.msra.mxu0 %v1666
      %2143 = vmatprep.subr.mxu0 %v1669
      %2144 = vmatpush1.msra.mxu0 %v1668
      %2145 = vmatprep.subr.mxu0 %v1671
      %2146 = vmatpush1.msra.mxu0 %v1670
      %2147 = vmatprep.subr.mxu0 0.0
      %2148 = vmatpush1.msra.mxu0 0.0
      %2149 = vmatprep.subr.mxu0 0.0
      %2150 = vmatpush1.msra.mxu0 0.0
      %2151 = vmatprep.subr.mxu0 0.0
      %2152 = vmatpush1.msra.mxu0 0.0
      %2153 = vmatprep.subr.mxu0 0.0
      %2154 = vmatpush1.msra.mxu0 0.0
      %2155 = vmatprep.subr.mxu0 0.0
      %2156 = vmatpush1.msra.mxu0 0.0
      %2157 = vmatprep.subr.mxu0 0.0
      %2158 = vmatpush1.msra.mxu0 0.0
      %2159 = vmatprep.subr.mxu0 0.0
      %2160 = vmatpush1.msra.mxu0 0.0
      %2161 = vmatprep.subr.mxu0 0.0
      %2162 = vmatpush1.msra.mxu0 0.0
      %2163 = vmatprep.subr.mxu0 0.0
      %2164 = vmatpush1.msra.mxu0 0.0
      %2165 = vmatprep.subr.mxu0 0.0
      %2166 = vmatpush1.msra.mxu0 0.0
      %2167 = vmatprep.subr.mxu0 0.0
      %2168 = vmatpush1.msra.mxu0 0.0
      %2169 = vmatprep.subr.mxu0 0.0
      %2170 = vmatpush1.msra.mxu0 0.0
      %2171 = vmatprep.subr.mxu0 0.0
      %2172 = vmatpush1.msra.mxu0 0.0
      %2173 = vmatprep.subr.mxu0 0.0
      %2174 = vmatpush1.msra.mxu0 0.0
      %2175 = vmatprep.subr.mxu0 0.0
      %2176 = vmatpush1.msra.mxu0 0.0
      %2177 = vmatprep.subr.mxu0 0.0
      %2178 = vmatpush1.msra.mxu0 0.0
      %2179 = vmatprep.subr.mxu0 0.0
      %2180 = vmatpush1.msra.mxu0 0.0
      %2181 = vmatprep.subr.mxu0 0.0
      %2182 = vmatpush1.msra.mxu0 0.0
      %2183 = vmatprep.subr.mxu0 0.0
      %2184 = vmatpush1.msra.mxu0 0.0
      %2185 = vmatprep.subr.mxu0 0.0
      %2186 = vmatpush1.msra.mxu0 0.0
      %2187 = vmatprep.subr.mxu0 0.0
      %2188 = vmatpush1.msra.mxu0 0.0
      %2189 = vmatprep.subr.mxu0 0.0
      %2190 = vmatpush1.msra.mxu0 0.0
      %2191 = vmatprep.subr.mxu0 0.0
      %2192 = vmatpush1.msra.mxu0 0.0
      %2193 = vmatprep.subr.mxu0 0.0
      %2194 = vmatpush1.msra.mxu0 0.0
      %2195 = vmatprep.subr.mxu0 0.0
      %2196 = vmatpush1.msra.mxu0 0.0
      %2197 = vmatprep.subr.mxu0 0.0
      %2198 = vmatpush1.msra.mxu0 0.0
      %2199 = vmatprep.subr.mxu0 0.0
      %2200 = vmatpush1.msra.mxu0 0.0
      %2201 = vmatprep.subr.mxu0 0.0
      %2202 = vmatpush1.msra.mxu0 0.0
      %2203 = vmatprep.subr.mxu0 0.0
      %2204 = vmatpush1.msra.mxu0 0.0
      %2205 = vmatprep.mubr.f32.mxu0 0.0
      %2206 = vmatmul.mubr.f32.gmra.mrb[0].mxu0 %v2136
      %v2207 = vpop.f32.mrb[0].mxu0
      %v2208 = vadd.f32 0.0, %v2207
      %v2209 = vpop.f32.mrb[0].mxu0
      %v2210 = vadd.f32 0.0, %v2209
      %2211 = vmatprep.mubr.f32.mxu0 0.0
      %2212 = vmatmul.mubr.f32.gmra.mrb[0].mxu0 %v2139
      %v2213 = vpop.f32.mrb[0].mxu0
      %v2214 = vadd.f32 0.0, %v2213
      %v2215 = vpop.f32.mrb[0].mxu0
      %v2216 = vadd.f32 0.0, %v2215
      %2217 = vdwg.mxu0
      %s2218 = scalar_lea.vmem %s5, 864
      %v2219 = vld [vmem:[%s2218] sm:$0xff]
      %v2220 = vld [vmem:[%s2218 + $0x8] sm:$0xff]
      %v2221 = vld [vmem:[%s2218 + $0x10] sm:$0xff]
      %v2222 = vld [vmem:[%s2218 + $0x18] sm:$0xff]
      %v2223 = vld [vmem:[%s2218 + $0x20] sm:$0xff]
      %v2224 = vld [vmem:[%s2218 + $0x28] sm:$0xff]
      %v2225 = vld [vmem:[%s2218 + $0x30] sm:$0xff]
      %v2226 = vld [vmem:[%s2218 + $0x38] sm:$0xff]
      %v2227 = vld [vmem:[%s2218 + $0x40] sm:$0xff]
      %v2228 = vld [vmem:[%s2218 + $0x48] sm:$0xff]
      %v2229 = vld [vmem:[%s2218 + $0x50] sm:$0xff]
      %v2230 = vld [vmem:[%s2218 + $0x58] sm:$0xff]
      %v2231 = vld [vmem:[%s2218 + $0x60] sm:$0xff]
      %v2232 = vld [vmem:[%s2218 + $0x68] sm:$0xff]
      %v2233 = vld [vmem:[%s2218 + $0x70] sm:$0xff]
      %v2234 = vld [vmem:[%s2218 + $0x78] sm:$0xff]
      %v2235 = vld [vmem:[%s2218 + $0x80] sm:$0xff]
      %v2236 = vld [vmem:[%s2218 + $0x88] sm:$0xff]
      %v2237 = vld [vmem:[%s2218 + $0x90] sm:$0xff]
      %v2238 = vld [vmem:[%s2218 + $0x98] sm:$0xff]
      %v2239 = vld [vmem:[%s2218 + $0xa0] sm:$0xff]
      %v2240 = vld [vmem:[%s2218 + $0xa8] sm:$0xff]
      %v2241 = vld [vmem:[%s2218 + $0xb0] sm:$0xff]
      %v2242 = vld [vmem:[%s2218 + $0xb8] sm:$0xff]
      %v2243 = vld [vmem:[%s2218 + $0xc0] sm:$0xff]
      %v2244 = vld [vmem:[%s2218 + $0xc8] sm:$0xff]
      %v2245 = vld [vmem:[%s2218 + $0xd0] sm:$0xff]
      %v2246 = vld [vmem:[%s2218 + $0xd8] sm:$0xff]
      %v2247 = vld [vmem:[%s2218 + $0xe0] sm:$0xff]
      %v2248 = vld [vmem:[%s2218 + $0xe8] sm:$0xff]
      %v2249 = vld [vmem:[%s2218 + $0xf0] sm:$0xff]
      %v2250 = vld [vmem:[%s2218 + $0xf8] sm:$0xff]
      %v2251 = vld [vmem:[%s2218 + $0x100] sm:$0xff]
      %v2252 = vld [vmem:[%s2218 + $0x108] sm:$0xff]
      %v2253 = vld [vmem:[%s2218 + $0x110] sm:$0xff]
      %v2254 = vld [vmem:[%s2218 + $0x118] sm:$0xff]
      %v2255 = vld [vmem:[%s2218 + $0x120] sm:$0xff]
      %v2256 = vld [vmem:[%s2218 + $0x128] sm:$0xff]
      %v2257 = vld [vmem:[%s2218 + $0x130] sm:$0xff]
      %v2258 = vld [vmem:[%s2218 + $0x138] sm:$0xff]
      %v2259 = vld [vmem:[%s2218 + $0x140] sm:$0xff]
      %v2260 = vld [vmem:[%s2218 + $0x148] sm:$0xff]
      %v2261 = vld [vmem:[%s2218 + $0x150] sm:$0xff]
      %v2262 = vld [vmem:[%s2218 + $0x158] sm:$0xff]
      %v2263 = vld [vmem:[%s2218 + $0x160] sm:$0xff]
      %v2264 = vld [vmem:[%s2218 + $0x168] sm:$0xff]
      %v2265 = vld [vmem:[%s2218 + $0x170] sm:$0xff]
      %v2266 = vld [vmem:[%s2218 + $0x178] sm:$0xff]
      %v2267 = vld [vmem:[%s2218 + $0x180] sm:$0xff]
      %v2268 = vld [vmem:[%s2218 + $0x188] sm:$0xff]
      %v2269 = vld [vmem:[%s2218 + $0x190] sm:$0xff]
      %v2270 = vld [vmem:[%s2218 + $0x198] sm:$0xff]
      %v2271 = vld [vmem:[%s2218 + $0x1a0] sm:$0x3]
      %v2272 = vld [vmem:[%s2218 + $0x1a8] sm:$0x3]
      %v2274 = vsel %vm1953, %v2210, 0
      %v2277 = vsel %vm1953, %v2216, 0
      %v2280 = vsel %vm830, %v2271, 0
      %v2283 = vsel %vm830, %v2272, 0
      %2285 = vmatprep.subr.mxu0 %v2220
      %2286 = vmatpush1.msra.mxu0 %v2219
      %2287 = vmatprep.subr.mxu0 %v2222
      %2288 = vmatpush1.msra.mxu0 %v2221
      %2289 = vmatprep.subr.mxu0 %v2224
      %2290 = vmatpush1.msra.mxu0 %v2223
      %2291 = vmatprep.subr.mxu0 %v2226
      %2292 = vmatpush1.msra.mxu0 %v2225
      %2293 = vmatprep.subr.mxu0 %v2228
      %2294 = vmatpush1.msra.mxu0 %v2227
      %2295 = vmatprep.subr.mxu0 %v2230
      %2296 = vmatpush1.msra.mxu0 %v2229
      %2297 = vmatprep.subr.mxu0 %v2232
      %2298 = vmatpush1.msra.mxu0 %v2231
      %2299 = vmatprep.subr.mxu0 %v2234
      %2300 = vmatpush1.msra.mxu0 %v2233
      %2301 = vmatprep.subr.mxu0 %v2236
      %2302 = vmatpush1.msra.mxu0 %v2235
      %2303 = vmatprep.subr.mxu0 %v2238
      %2304 = vmatpush1.msra.mxu0 %v2237
      %2305 = vmatprep.subr.mxu0 %v2240
      %2306 = vmatpush1.msra.mxu0 %v2239
      %2307 = vmatprep.subr.mxu0 %v2242
      %2308 = vmatpush1.msra.mxu0 %v2241
      %2309 = vmatprep.subr.mxu0 %v2244
      %2310 = vmatpush1.msra.mxu0 %v2243
      %2311 = vmatprep.subr.mxu0 %v2246
      %2312 = vmatpush1.msra.mxu0 %v2245
      %2313 = vmatprep.subr.mxu0 %v2248
      %2314 = vmatpush1.msra.mxu0 %v2247
      %2315 = vmatprep.subr.mxu0 %v2250
      %2316 = vmatpush1.msra.mxu0 %v2249
      %2317 = vmatprep.subr.mxu0 %v2252
      %2318 = vmatpush1.msra.mxu0 %v2251
      %2319 = vmatprep.subr.mxu0 %v2254
      %2320 = vmatpush1.msra.mxu0 %v2253
      %2321 = vmatprep.subr.mxu0 %v2256
      %2322 = vmatpush1.msra.mxu0 %v2255
      %2323 = vmatprep.subr.mxu0 %v2258
      %2324 = vmatpush1.msra.mxu0 %v2257
      %2325 = vmatprep.subr.mxu0 %v2260
      %2326 = vmatpush1.msra.mxu0 %v2259
      %2327 = vmatprep.subr.mxu0 %v2262
      %2328 = vmatpush1.msra.mxu0 %v2261
      %2329 = vmatprep.subr.mxu0 %v2264
      %2330 = vmatpush1.msra.mxu0 %v2263
      %2331 = vmatprep.subr.mxu0 %v2266
      %2332 = vmatpush1.msra.mxu0 %v2265
      %2333 = vmatprep.subr.mxu0 %v2268
      %2334 = vmatpush1.msra.mxu0 %v2267
      %2335 = vmatprep.subr.mxu0 %v2270
      %2336 = vmatpush1.msra.mxu0 %v2269
      %2337 = vmatprep.subr.mxu0 %v2283
      %2338 = vmatpush1.msra.mxu0 %v2280
      %2339 = vmatprep.subr.mxu0 0.0
      %2340 = vmatpush1.msra.mxu0 0.0
      %2341 = vmatprep.subr.mxu0 0.0
      %2342 = vmatpush1.msra.mxu0 0.0
      %2343 = vmatprep.subr.mxu0 0.0
      %2344 = vmatpush1.msra.mxu0 0.0
      %2345 = vmatprep.subr.mxu0 0.0
      %2346 = vmatpush1.msra.mxu0 0.0
      %2347 = vmatprep.subr.mxu0 0.0
      %2348 = vmatpush1.msra.mxu0 0.0
      %2349 = vmatprep.mubr.f32.mxu0 %v2274
      %2350 = vmatmul.mubr.f32.gmra.mrb[0].mxu0 %v2208
      %v2351 = vpop.f32.mrb[0].mxu0
      %v2352 = vadd.f32 0.0, %v2351
      %v2353 = vpop.f32.mrb[0].mxu0
      %v2354 = vadd.f32 0.0, %v2353
      %2355 = vmatprep.mubr.f32.mxu0 %v2277
      %2356 = vmatmul.mubr.f32.gmra.mrb[0].mxu0 %v2214
      %v2357 = vpop.f32.mrb[0].mxu0
      %v2358 = vadd.f32 0.0, %v2357
      %v2359 = vpop.f32.mrb[0].mxu0
      %v2360 = vadd.f32 0.0, %v2359
      %2361 = vdwg.mxu0
      %v2362 = vadd.f32 %v2122, %v2352
      %v2363 = vadd.f32 %v2124, %v2354
      %v2364 = vadd.f32 %v2128, %v2358
      %v2365 = vadd.f32 %v2130, %v2360
      %v2366 = vld [vmem:[%s6] sm:$0x3]
      %v2368 = vlaneseq
      %v2369 = vshrl.u32 %v2368, 7
      %v2370 = vsub.s32 0, %v2369
      %v2371 = vrot.slane %v2366, %v2370
      %v2372 = vlaneseq
      %v2373 = vshrl.u32 %v2372, 7
      %v2374 = vsub.s32 1, %v2373
      %v2375 = vrot.slane %v2366, %v2374
      %v2378 = vadd.f32 %v2362, %v2371
      %v2379 = vadd.f32 %v2363, %v2375
      %v2380 = vadd.f32 %v2364, %v2371
      %v2381 = vadd.f32 %v2365, %v2375
      %v2382 = vmax.f32 %v2378, 0.0
      %v2383 = vmax.f32 %v2379, 0.0
      %v2384 = vmax.f32 %v2380, 0.0
      %v2385 = vmax.f32 %v2381, 0.0
      %v2386 = vld [vmem:[%s7] sm:$0x3f]
      %vm2387 = vcmask 97280
      %v2389 = vsel %vm2387, %v2386, 0
      %vm2391 = vcmask 1043456
      %v2393 = vsel %vm2391, %v2384, 0
      %v2396 = vsel %vm2391, %v2385, 0
      %2398 = vmatprep.subr.mxu0 %v2383
      %2399 = vmatpush1.msra.mxu0 %v2382
      %2400 = vmatprep.subr.mxu0 %v2396
      %2401 = vmatpush1.msra.mxu0 %v2393
      %2402 = vmatprep.subr.mxu0 0.0
      %2403 = vmatpush1.msra.mxu0 0.0
      %2404 = vmatprep.subr.mxu0 0.0
      %2405 = vmatpush1.msra.mxu0 0.0
      %2406 = vmatprep.subr.mxu0 0.0
      %2407 = vmatpush1.msra.mxu0 0.0
      %2408 = vmatprep.subr.mxu0 0.0
      %2409 = vmatpush1.msra.mxu0 0.0
      %2410 = vmatprep.subr.mxu0 0.0
      %2411 = vmatpush1.msra.mxu0 0.0
      %2412 = vmatprep.subr.mxu0 0.0
      %2413 = vmatpush1.msra.mxu0 0.0
      %2414 = vmatprep.subr.mxu0 0.0
      %2415 = vmatpush1.msra.mxu0 0.0
      %2416 = vmatprep.subr.mxu0 0.0
      %2417 = vmatpush1.msra.mxu0 0.0
      %2418 = vmatprep.subr.mxu0 0.0
      %2419 = vmatpush1.msra.mxu0 0.0
      %2420 = vmatprep.subr.mxu0 0.0
      %2421 = vmatpush1.msra.mxu0 0.0
      %2422 = vmatprep.subr.mxu0 0.0
      %2423 = vmatpush1.msra.mxu0 0.0
      %2424 = vmatprep.subr.mxu0 0.0
      %2425 = vmatpush1.msra.mxu0 0.0
      %2426 = vmatprep.subr.mxu0 0.0
      %2427 = vmatpush1.msra.mxu0 0.0
      %2428 = vmatprep.subr.mxu0 0.0
      %2429 = vmatpush1.msra.mxu0 0.0
      %2430 = vmatprep.subr.mxu0 0.0
      %2431 = vmatpush1.msra.mxu0 0.0
      %2432 = vmatprep.subr.mxu0 0.0
      %2433 = vmatpush1.msra.mxu0 0.0
      %2434 = vmatprep.subr.mxu0 0.0
      %2435 = vmatpush1.msra.mxu0 0.0
      %2436 = vmatprep.subr.mxu0 0.0
      %2437 = vmatpush1.msra.mxu0 0.0
      %2438 = vmatprep.subr.mxu0 0.0
      %2439 = vmatpush1.msra.mxu0 0.0
      %2440 = vmatprep.subr.mxu0 0.0
      %2441 = vmatpush1.msra.mxu0 0.0
      %2442 = vmatprep.subr.mxu0 0.0
      %2443 = vmatpush1.msra.mxu0 0.0
      %2444 = vmatprep.subr.mxu0 0.0
      %2445 = vmatpush1.msra.mxu0 0.0
      %2446 = vmatprep.subr.mxu0 0.0
      %2447 = vmatpush1.msra.mxu0 0.0
      %2448 = vmatprep.subr.mxu0 0.0
      %2449 = vmatpush1.msra.mxu0 0.0
      %2450 = vmatprep.subr.mxu0 0.0
      %2451 = vmatpush1.msra.mxu0 0.0
      %2452 = vmatprep.subr.mxu0 0.0
      %2453 = vmatpush1.msra.mxu0 0.0
      %2454 = vmatprep.subr.mxu0 0.0
      %2455 = vmatpush1.msra.mxu0 0.0
      %2456 = vmatprep.subr.mxu0 0.0
      %2457 = vmatpush1.msra.mxu0 0.0
      %2458 = vmatprep.subr.mxu0 0.0
      %2459 = vmatpush1.msra.mxu0 0.0
      %2460 = vmatprep.subr.mxu0 0.0
      %2461 = vmatpush1.msra.mxu0 0.0
      %2462 = vmatprep.mubr.f32.mxu0 0.0
      %2463 = vmatmul.mubr.f32.gmra.mrb[0].mxu0 %v2389
      %v2464 = vpop.f32.mrb[0].mxu0
      %v2465 = vadd.f32 0.0, %v2464
      %v2466 = vpop.f32.mrb[0].mxu0
      %v2467 = vadd.f32 0.0, %v2466
      %2468 = vdwg.mxu0
      %v2469 = vld [vmem:[%s8] sm:$0xff]
      %v2470 = vld [vmem:[%s8 + $0x8] sm:$0xff]
      %v2471 = vld [vmem:[%s8 + $0x10] sm:$0xff]
      %v2472 = vld [vmem:[%s8 + $0x18] sm:$0xff]
      %v2473 = vld [vmem:[%s8 + $0x20] sm:$0xff]
      %v2474 = vld [vmem:[%s8 + $0x28] sm:$0xff]
      %v2475 = vld [vmem:[%s8 + $0x30] sm:$0xff]
      %v2476 = vld [vmem:[%s8 + $0x38] sm:$0xff]
      %v2477 = vld [vmem:[%s8 + $0x40] sm:$0xff]
      %v2478 = vld [vmem:[%s8 + $0x48] sm:$0xff]
      %v2479 = vld [vmem:[%s8 + $0x50] sm:$0xff]
      %v2480 = vld [vmem:[%s8 + $0x58] sm:$0xff]
      %v2481 = vld [vmem:[%s8 + $0x60] sm:$0xff]
      %v2482 = vld [vmem:[%s8 + $0x68] sm:$0xff]
      %v2483 = vld [vmem:[%s8 + $0x70] sm:$0xff]
      %v2484 = vld [vmem:[%s8 + $0x78] sm:$0xff]
      %v2485 = vld [vmem:[%s8 + $0x80] sm:$0xff]
      %v2486 = vld [vmem:[%s8 + $0x88] sm:$0xff]
      %v2487 = vld [vmem:[%s8 + $0x90] sm:$0xff]
      %v2488 = vld [vmem:[%s8 + $0x98] sm:$0xff]
      %v2489 = vld [vmem:[%s8 + $0xa0] sm:$0xff]
      %v2490 = vld [vmem:[%s8 + $0xa8] sm:$0xff]
      %v2491 = vld [vmem:[%s8 + $0xb0] sm:$0xff]
      %v2492 = vld [vmem:[%s8 + $0xb8] sm:$0xff]
      %v2493 = vld [vmem:[%s8 + $0xc0] sm:$0xff]
      %v2494 = vld [vmem:[%s8 + $0xc8] sm:$0xff]
      %v2495 = vld [vmem:[%s8 + $0xd0] sm:$0xff]
      %v2496 = vld [vmem:[%s8 + $0xd8] sm:$0xff]
      %v2497 = vld [vmem:[%s8 + $0xe0] sm:$0xff]
      %v2498 = vld [vmem:[%s8 + $0xe8] sm:$0xff]
      %v2499 = vld [vmem:[%s8 + $0xf0] sm:$0xff]
      %v2500 = vld [vmem:[%s8 + $0xf8] sm:$0xff]
      %v2501 = vld [vmem:[%s8 + $0x100] sm:$0xff]
      %v2502 = vld [vmem:[%s8 + $0x108] sm:$0xff]
      %v2503 = vld [vmem:[%s8 + $0x110] sm:$0xff]
      %v2504 = vld [vmem:[%s8 + $0x118] sm:$0xff]
      %v2505 = vld [vmem:[%s8 + $0x120] sm:$0xff]
      %v2506 = vld [vmem:[%s8 + $0x128] sm:$0xff]
      %v2507 = vld [vmem:[%s8 + $0x130] sm:$0xff]
      %v2508 = vld [vmem:[%s8 + $0x138] sm:$0xff]
      %v2509 = vld [vmem:[%s8 + $0x140] sm:$0xff]
      %v2510 = vld [vmem:[%s8 + $0x148] sm:$0xff]
      %v2511 = vld [vmem:[%s8 + $0x150] sm:$0xff]
      %v2512 = vld [vmem:[%s8 + $0x158] sm:$0xff]
      %v2513 = vld [vmem:[%s8 + $0x160] sm:$0xff]
      %v2514 = vld [vmem:[%s8 + $0x168] sm:$0xff]
      %v2515 = vld [vmem:[%s8 + $0x170] sm:$0xff]
      %v2516 = vld [vmem:[%s8 + $0x178] sm:$0xff]
      %v2517 = vld [vmem:[%s8 + $0x180] sm:$0xff]
      %v2518 = vld [vmem:[%s8 + $0x188] sm:$0xff]
      %v2519 = vld [vmem:[%s8 + $0x190] sm:$0xff]
      %v2520 = vld [vmem:[%s8 + $0x198] sm:$0xff]
      %v2521 = vld [vmem:[%s8 + $0x1a0] sm:$0xff]
      %v2522 = vld [vmem:[%s8 + $0x1a8] sm:$0xff]
      %v2523 = vld [vmem:[%s8 + $0x1b0] sm:$0xf]
      %v2524 = vld [vmem:[%s8 + $0x1b8] sm:$0xf]
      %s2525 = scalar_lea.vmem %s7, 8
      %v2526 = vld [vmem:[%s2525] sm:$0x3f]
      %v2528 = vsel %vm2387, %v2526, 0
      %2530 = vmatprep.subr.mxu0 %v2383
      %2531 = vmatpush1.msra.mxu0 %v2382
      %2532 = vmatprep.subr.mxu0 %v2396
      %2533 = vmatpush1.msra.mxu0 %v2393
      %2534 = vmatprep.subr.mxu0 0.0
      %2535 = vmatpush1.msra.mxu0 0.0
      %2536 = vmatprep.subr.mxu0 0.0
      %2537 = vmatpush1.msra.mxu0 0.0
      %2538 = vmatprep.subr.mxu0 0.0
      %2539 = vmatpush1.msra.mxu0 0.0
      %2540 = vmatprep.subr.mxu0 0.0
      %2541 = vmatpush1.msra.mxu0 0.0
      %2542 = vmatprep.subr.mxu0 0.0
      %2543 = vmatpush1.msra.mxu0 0.0
      %2544 = vmatprep.subr.mxu0 0.0
      %2545 = vmatpush1.msra.mxu0 0.0
      %2546 = vmatprep.subr.mxu0 0.0
      %2547 = vmatpush1.msra.mxu0 0.0
      %2548 = vmatprep.subr.mxu0 0.0
      %2549 = vmatpush1.msra.mxu0 0.0
      %2550 = vmatprep.subr.mxu0 0.0
      %2551 = vmatpush1.msra.mxu0 0.0
      %2552 = vmatprep.subr.mxu0 0.0
      %2553 = vmatpush1.msra.mxu0 0.0
      %2554 = vmatprep.subr.mxu0 0.0
      %2555 = vmatpush1.msra.mxu0 0.0
      %2556 = vmatprep.subr.mxu0 0.0
      %2557 = vmatpush1.msra.mxu0 0.0
      %2558 = vmatprep.subr.mxu0 0.0
      %2559 = vmatpush1.msra.mxu0 0.0
      %2560 = vmatprep.subr.mxu0 0.0
      %2561 = vmatpush1.msra.mxu0 0.0
      %2562 = vmatprep.subr.mxu0 0.0
      %2563 = vmatpush1.msra.mxu0 0.0
      %2564 = vmatprep.subr.mxu0 0.0
      %2565 = vmatpush1.msra.mxu0 0.0
      %2566 = vmatprep.subr.mxu0 0.0
      %2567 = vmatpush1.msra.mxu0 0.0
      %2568 = vmatprep.subr.mxu0 0.0
      %2569 = vmatpush1.msra.mxu0 0.0
      %2570 = vmatprep.subr.mxu0 0.0
      %2571 = vmatpush1.msra.mxu0 0.0
      %2572 = vmatprep.subr.mxu0 0.0
      %2573 = vmatpush1.msra.mxu0 0.0
      %2574 = vmatprep.subr.mxu0 0.0
      %2575 = vmatpush1.msra.mxu0 0.0
      %2576 = vmatprep.subr.mxu0 0.0
      %2577 = vmatpush1.msra.mxu0 0.0
      %2578 = vmatprep.subr.mxu0 0.0
      %2579 = vmatpush1.msra.mxu0 0.0
      %2580 = vmatprep.subr.mxu0 0.0
      %2581 = vmatpush1.msra.mxu0 0.0
      %2582 = vmatprep.subr.mxu0 0.0
      %2583 = vmatpush1.msra.mxu0 0.0
      %2584 = vmatprep.subr.mxu0 0.0
      %2585 = vmatpush1.msra.mxu0 0.0
      %2586 = vmatprep.subr.mxu0 0.0
      %2587 = vmatpush1.msra.mxu0 0.0
      %2588 = vmatprep.subr.mxu0 0.0
      %2589 = vmatpush1.msra.mxu0 0.0
      %2590 = vmatprep.subr.mxu0 0.0
      %2591 = vmatpush1.msra.mxu0 0.0
      %2592 = vmatprep.subr.mxu0 0.0
      %2593 = vmatpush1.msra.mxu0 0.0
      %2594 = vmatprep.mubr.f32.mxu0 0.0
      %2595 = vmatmul.mubr.f32.gmra.mrb[0].mxu0 %v2528
      %v2596 = vpop.f32.mrb[0].mxu0
      %v2597 = vadd.f32 0.0, %v2596
      %v2598 = vpop.f32.mrb[0].mxu0
      %v2599 = vadd.f32 0.0, %v2598
      %2600 = vdwg.mxu0
      %s2601 = scalar_lea.vmem %s8, 448
      %v2602 = vld [vmem:[%s2601] sm:$0xff]
      %v2603 = vld [vmem:[%s2601 + $0x8] sm:$0xff]
      %v2604 = vld [vmem:[%s2601 + $0x10] sm:$0xff]
      %v2605 = vld [vmem:[%s2601 + $0x18] sm:$0xff]
      %v2606 = vld [vmem:[%s2601 + $0x20] sm:$0xff]
      %v2607 = vld [vmem:[%s2601 + $0x28] sm:$0xff]
      %v2608 = vld [vmem:[%s2601 + $0x30] sm:$0xff]
      %v2609 = vld [vmem:[%s2601 + $0x38] sm:$0xff]
      %v2610 = vld [vmem:[%s2601 + $0x40] sm:$0xff]
      %v2611 = vld [vmem:[%s2601 + $0x48] sm:$0xff]
      %v2612 = vld [vmem:[%s2601 + $0x50] sm:$0xff]
      %v2613 = vld [vmem:[%s2601 + $0x58] sm:$0xff]
      %v2614 = vld [vmem:[%s2601 + $0x60] sm:$0xff]
      %v2615 = vld [vmem:[%s2601 + $0x68] sm:$0xff]
      %v2616 = vld [vmem:[%s2601 + $0x70] sm:$0xff]
      %v2617 = vld [vmem:[%s2601 + $0x78] sm:$0xff]
      %v2618 = vld [vmem:[%s2601 + $0x80] sm:$0xff]
      %v2619 = vld [vmem:[%s2601 + $0x88] sm:$0xff]
      %v2620 = vld [vmem:[%s2601 + $0x90] sm:$0xff]
      %v2621 = vld [vmem:[%s2601 + $0x98] sm:$0xff]
      %v2622 = vld [vmem:[%s2601 + $0xa0] sm:$0xff]
      %v2623 = vld [vmem:[%s2601 + $0xa8] sm:$0xff]
      %v2624 = vld [vmem:[%s2601 + $0xb0] sm:$0xff]
      %v2625 = vld [vmem:[%s2601 + $0xb8] sm:$0xff]
      %v2626 = vld [vmem:[%s2601 + $0xc0] sm:$0xff]
      %v2627 = vld [vmem:[%s2601 + $0xc8] sm:$0xff]
      %v2628 = vld [vmem:[%s2601 + $0xd0] sm:$0xff]
      %v2629 = vld [vmem:[%s2601 + $0xd8] sm:$0xff]
      %v2630 = vld [vmem:[%s2601 + $0xe0] sm:$0xff]
      %v2631 = vld [vmem:[%s2601 + $0xe8] sm:$0xff]
      %v2632 = vld [vmem:[%s2601 + $0xf0] sm:$0xff]
      %v2633 = vld [vmem:[%s2601 + $0xf8] sm:$0xff]
      %v2634 = vld [vmem:[%s2601 + $0x100] sm:$0xff]
      %v2635 = vld [vmem:[%s2601 + $0x108] sm:$0xff]
      %v2636 = vld [vmem:[%s2601 + $0x110] sm:$0xff]
      %v2637 = vld [vmem:[%s2601 + $0x118] sm:$0xff]
      %v2638 = vld [vmem:[%s2601 + $0x120] sm:$0xff]
      %v2639 = vld [vmem:[%s2601 + $0x128] sm:$0xff]
      %v2640 = vld [vmem:[%s2601 + $0x130] sm:$0xff]
      %v2641 = vld [vmem:[%s2601 + $0x138] sm:$0xff]
      %v2642 = vld [vmem:[%s2601 + $0x140] sm:$0xff]
      %v2643 = vld [vmem:[%s2601 + $0x148] sm:$0xff]
      %v2644 = vld [vmem:[%s2601 + $0x150] sm:$0xff]
      %v2645 = vld [vmem:[%s2601 + $0x158] sm:$0xff]
      %v2646 = vld [vmem:[%s2601 + $0x160] sm:$0xff]
      %v2647 = vld [vmem:[%s2601 + $0x168] sm:$0xff]
      %v2648 = vld [vmem:[%s2601 + $0x170] sm:$0xff]
      %v2649 = vld [vmem:[%s2601 + $0x178] sm:$0xff]
      %v2650 = vld [vmem:[%s2601 + $0x180] sm:$0xff]
      %v2651 = vld [vmem:[%s2601 + $0x188] sm:$0xff]
      %v2652 = vld [vmem:[%s2601 + $0x190] sm:$0xff]
      %v2653 = vld [vmem:[%s2601 + $0x198] sm:$0xff]
      %v2654 = vld [vmem:[%s2601 + $0x1a0] sm:$0xff]
      %v2655 = vld [vmem:[%s2601 + $0x1a8] sm:$0xff]
      %v2656 = vld [vmem:[%s2601 + $0x1b0] sm:$0xf]
      %v2657 = vld [vmem:[%s2601 + $0x1b8] sm:$0xf]
      %vm2658 = vcmask 752640
      %v2660 = vsel %vm2658, %v2599, 0
      %v2663 = vsel %vm2391, %v2656, 0
      %v2666 = vsel %vm2391, %v2657, 0
      %2668 = vmatprep.subr.mxu0 %v2603
      %2669 = vmatpush1.msra.mxu0 %v2602
      %2670 = vmatprep.subr.mxu0 %v2605
      %2671 = vmatpush1.msra.mxu0 %v2604
      %2672 = vmatprep.subr.mxu0 %v2607
      %2673 = vmatpush1.msra.mxu0 %v2606
      %2674 = vmatprep.subr.mxu0 %v2609
      %2675 = vmatpush1.msra.mxu0 %v2608
      %2676 = vmatprep.subr.mxu0 %v2611
      %2677 = vmatpush1.msra.mxu0 %v2610
      %2678 = vmatprep.subr.mxu0 %v2613
      %2679 = vmatpush1.msra.mxu0 %v2612
      %2680 = vmatprep.subr.mxu0 %v2615
      %2681 = vmatpush1.msra.mxu0 %v2614
      %2682 = vmatprep.subr.mxu0 %v2617
      %2683 = vmatpush1.msra.mxu0 %v2616
      %2684 = vmatprep.subr.mxu0 %v2619
      %2685 = vmatpush1.msra.mxu0 %v2618
      %2686 = vmatprep.subr.mxu0 %v2621
      %2687 = vmatpush1.msra.mxu0 %v2620
      %2688 = vmatprep.subr.mxu0 %v2623
      %2689 = vmatpush1.msra.mxu0 %v2622
      %2690 = vmatprep.subr.mxu0 %v2625
      %2691 = vmatpush1.msra.mxu0 %v2624
      %2692 = vmatprep.subr.mxu0 %v2627
      %2693 = vmatpush1.msra.mxu0 %v2626
      %2694 = vmatprep.subr.mxu0 %v2629
      %2695 = vmatpush1.msra.mxu0 %v2628
      %2696 = vmatprep.subr.mxu0 %v2631
      %2697 = vmatpush1.msra.mxu0 %v2630
      %2698 = vmatprep.subr.mxu0 %v2633
      %2699 = vmatpush1.msra.mxu0 %v2632
      %2700 = vmatprep.subr.mxu0 %v2635
      %2701 = vmatpush1.msra.mxu0 %v2634
      %2702 = vmatprep.subr.mxu0 %v2637
      %2703 = vmatpush1.msra.mxu0 %v2636
      %2704 = vmatprep.subr.mxu0 %v2639
      %2705 = vmatpush1.msra.mxu0 %v2638
      %2706 = vmatprep.subr.mxu0 %v2641
      %2707 = vmatpush1.msra.mxu0 %v2640
      %2708 = vmatprep.subr.mxu0 %v2643
      %2709 = vmatpush1.msra.mxu0 %v2642
      %2710 = vmatprep.subr.mxu0 %v2645
      %2711 = vmatpush1.msra.mxu0 %v2644
      %2712 = vmatprep.subr.mxu0 %v2647
      %2713 = vmatpush1.msra.mxu0 %v2646
      %2714 = vmatprep.subr.mxu0 %v2649
      %2715 = vmatpush1.msra.mxu0 %v2648
      %2716 = vmatprep.subr.mxu0 %v2651
      %2717 = vmatpush1.msra.mxu0 %v2650
      %2718 = vmatprep.subr.mxu0 %v2653
      %2719 = vmatpush1.msra.mxu0 %v2652
      %2720 = vmatprep.subr.mxu0 %v2655
      %2721 = vmatpush1.msra.mxu0 %v2654
      %2722 = vmatprep.subr.mxu0 %v2666
      %2723 = vmatpush1.msra.mxu0 %v2663
      %2724 = vmatprep.subr.mxu0 0.0
      %2725 = vmatpush1.msra.mxu0 0.0
      %2726 = vmatprep.subr.mxu0 0.0
      %2727 = vmatpush1.msra.mxu0 0.0
      %2728 = vmatprep.subr.mxu0 0.0
      %2729 = vmatpush1.msra.mxu0 0.0
      %2730 = vmatprep.subr.mxu0 0.0
      %2731 = vmatpush1.msra.mxu0 0.0
      %2732 = vmatprep.mubr.f32.mxu0 %v2660
      %2733 = vmatmul.mubr.f32.gmra.mrb[0].mxu0 %v2597
      %v2734 = vpop.f32.mrb[0].mxu0
      %v2735 = vadd.f32 0.0, %v2734
      %v2736 = vpop.f32.mrb[0].mxu0
      %v2737 = vadd.f32 0.0, %v2736
      %2738 = vdwg.mxu0
      %v2740 = vsel %vm2658, %v2467, 0
      %v2743 = vsel %vm2391, %v2523, 0
      %v2746 = vsel %vm2391, %v2524, 0
      %2748 = vmatprep.subr.mxu0 %v2470
      %2749 = vmatpush1.msra.mxu0 %v2469
      %2750 = vmatprep.subr.mxu0 %v2472
      %2751 = vmatpush1.msra.mxu0 %v2471
      %2752 = vmatprep.subr.mxu0 %v2474
      %2753 = vmatpush1.msra.mxu0 %v2473
      %2754 = vmatprep.subr.mxu0 %v2476
      %2755 = vmatpush1.msra.mxu0 %v2475
      %2756 = vmatprep.subr.mxu0 %v2478
      %2757 = vmatpush1.msra.mxu0 %v2477
      %2758 = vmatprep.subr.mxu0 %v2480
      %2759 = vmatpush1.msra.mxu0 %v2479
      %2760 = vmatprep.subr.mxu0 %v2482
      %2761 = vmatpush1.msra.mxu0 %v2481
      %2762 = vmatprep.subr.mxu0 %v2484
      %2763 = vmatpush1.msra.mxu0 %v2483
      %2764 = vmatprep.subr.mxu0 %v2486
      %2765 = vmatpush1.msra.mxu0 %v2485
      %2766 = vmatprep.subr.mxu0 %v2488
      %2767 = vmatpush1.msra.mxu0 %v2487
      %2768 = vmatprep.subr.mxu0 %v2490
      %2769 = vmatpush1.msra.mxu0 %v2489
      %2770 = vmatprep.subr.mxu0 %v2492
      %2771 = vmatpush1.msra.mxu0 %v2491
      %2772 = vmatprep.subr.mxu0 %v2494
      %2773 = vmatpush1.msra.mxu0 %v2493
      %2774 = vmatprep.subr.mxu0 %v2496
      %2775 = vmatpush1.msra.mxu0 %v2495
      %2776 = vmatprep.subr.mxu0 %v2498
      %2777 = vmatpush1.msra.mxu0 %v2497
      %2778 = vmatprep.subr.mxu0 %v2500
      %2779 = vmatpush1.msra.mxu0 %v2499
      %2780 = vmatprep.subr.mxu0 %v2502
      %2781 = vmatpush1.msra.mxu0 %v2501
      %2782 = vmatprep.subr.mxu0 %v2504
      %2783 = vmatpush1.msra.mxu0 %v2503
      %2784 = vmatprep.subr.mxu0 %v2506
      %2785 = vmatpush1.msra.mxu0 %v2505
      %2786 = vmatprep.subr.mxu0 %v2508
      %2787 = vmatpush1.msra.mxu0 %v2507
      %2788 = vmatprep.subr.mxu0 %v2510
      %2789 = vmatpush1.msra.mxu0 %v2509
      %2790 = vmatprep.subr.mxu0 %v2512
      %2791 = vmatpush1.msra.mxu0 %v2511
      %2792 = vmatprep.subr.mxu0 %v2514
      %2793 = vmatpush1.msra.mxu0 %v2513
      %2794 = vmatprep.subr.mxu0 %v2516
      %2795 = vmatpush1.msra.mxu0 %v2515
      %2796 = vmatprep.subr.mxu0 %v2518
      %2797 = vmatpush1.msra.mxu0 %v2517
      %2798 = vmatprep.subr.mxu0 %v2520
      %2799 = vmatpush1.msra.mxu0 %v2519
      %2800 = vmatprep.subr.mxu0 %v2522
      %2801 = vmatpush1.msra.mxu0 %v2521
      %2802 = vmatprep.subr.mxu0 %v2746
      %2803 = vmatpush1.msra.mxu0 %v2743
      %2804 = vmatprep.subr.mxu0 0.0
      %2805 = vmatpush1.msra.mxu0 0.0
      %2806 = vmatprep.subr.mxu0 0.0
      %2807 = vmatpush1.msra.mxu0 0.0
      %2808 = vmatprep.subr.mxu0 0.0
      %2809 = vmatpush1.msra.mxu0 0.0
      %2810 = vmatprep.subr.mxu0 0.0
      %2811 = vmatpush1.msra.mxu0 0.0
      %2812 = vmatprep.mubr.f32.mxu0 %v2740
      %2813 = vmatmul.mubr.f32.gmra.mrb[0].mxu0 %v2465
      %v2814 = vpop.f32.mrb[0].mxu0
      %v2815 = vadd.f32 %v2735, %v2814
      %v2816 = vpop.f32.mrb[0].mxu0
      %v2817 = vadd.f32 %v2737, %v2816
      %2818 = vdwg.mxu0
      %s2819 = scalar_lea.vmem %s7, 16
      %v2820 = vld [vmem:[%s2819] sm:$0x3f]
      %v2822 = vsel %vm2387, %v2820, 0
      %2824 = vmatprep.subr.mxu0 %v2383
      %2825 = vmatpush1.msra.mxu0 %v2382
      %2826 = vmatprep.subr.mxu0 %v2396
      %2827 = vmatpush1.msra.mxu0 %v2393
      %2828 = vmatprep.subr.mxu0 0.0
      %2829 = vmatpush1.msra.mxu0 0.0
      %2830 = vmatprep.subr.mxu0 0.0
      %2831 = vmatpush1.msra.mxu0 0.0
      %2832 = vmatprep.subr.mxu0 0.0
      %2833 = vmatpush1.msra.mxu0 0.0
      %2834 = vmatprep.subr.mxu0 0.0
      %2835 = vmatpush1.msra.mxu0 0.0
      %2836 = vmatprep.subr.mxu0 0.0
      %2837 = vmatpush1.msra.mxu0 0.0
      %2838 = vmatprep.subr.mxu0 0.0
      %2839 = vmatpush1.msra.mxu0 0.0
      %2840 = vmatprep.subr.mxu0 0.0
      %2841 = vmatpush1.msra.mxu0 0.0
      %2842 = vmatprep.subr.mxu0 0.0
      %2843 = vmatpush1.msra.mxu0 0.0
      %2844 = vmatprep.subr.mxu0 0.0
      %2845 = vmatpush1.msra.mxu0 0.0
      %2846 = vmatprep.subr.mxu0 0.0
      %2847 = vmatpush1.msra.mxu0 0.0
      %2848 = vmatprep.subr.mxu0 0.0
      %2849 = vmatpush1.msra.mxu0 0.0
      %2850 = vmatprep.subr.mxu0 0.0
      %2851 = vmatpush1.msra.mxu0 0.0
      %2852 = vmatprep.subr.mxu0 0.0
      %2853 = vmatpush1.msra.mxu0 0.0
      %2854 = vmatprep.subr.mxu0 0.0
      %2855 = vmatpush1.msra.mxu0 0.0
      %2856 = vmatprep.subr.mxu0 0.0
      %2857 = vmatpush1.msra.mxu0 0.0
      %2858 = vmatprep.subr.mxu0 0.0
      %2859 = vmatpush1.msra.mxu0 0.0
      %2860 = vmatprep.subr.mxu0 0.0
      %2861 = vmatpush1.msra.mxu0 0.0
      %2862 = vmatprep.subr.mxu0 0.0
      %2863 = vmatpush1.msra.mxu0 0.0
      %2864 = vmatprep.subr.mxu0 0.0
      %2865 = vmatpush1.msra.mxu0 0.0
      %2866 = vmatprep.subr.mxu0 0.0
      %2867 = vmatpush1.msra.mxu0 0.0
      %2868 = vmatprep.subr.mxu0 0.0
      %2869 = vmatpush1.msra.mxu0 0.0
      %2870 = vmatprep.subr.mxu0 0.0
      %2871 = vmatpush1.msra.mxu0 0.0
      %2872 = vmatprep.subr.mxu0 0.0
      %2873 = vmatpush1.msra.mxu0 0.0
      %2874 = vmatprep.subr.mxu0 0.0
      %2875 = vmatpush1.msra.mxu0 0.0
      %2876 = vmatprep.subr.mxu0 0.0
      %2877 = vmatpush1.msra.mxu0 0.0
      %2878 = vmatprep.subr.mxu0 0.0
      %2879 = vmatpush1.msra.mxu0 0.0
      %2880 = vmatprep.subr.mxu0 0.0
      %2881 = vmatpush1.msra.mxu0 0.0
      %2882 = vmatprep.subr.mxu0 0.0
      %2883 = vmatpush1.msra.mxu0 0.0
      %2884 = vmatprep.subr.mxu0 0.0
      %2885 = vmatpush1.msra.mxu0 0.0
      %2886 = vmatprep.subr.mxu0 0.0
      %2887 = vmatpush1.msra.mxu0 0.0
      %2888 = vmatprep.mubr.f32.mxu0 0.0
      %2889 = vmatmul.mubr.f32.gmra.mrb[0].mxu0 %v2822
      %v2890 = vpop.f32.mrb[0].mxu0
      %v2891 = vadd.f32 0.0, %v2890
      %v2892 = vpop.f32.mrb[0].mxu0
      %v2893 = vadd.f32 0.0, %v2892
      %2894 = vdwg.mxu0
      %s2895 = scalar_lea.vmem %s8, 896
      %v2896 = vld [vmem:[%s2895] sm:$0xff]
      %v2897 = vld [vmem:[%s2895 + $0x8] sm:$0xff]
      %v2898 = vld [vmem:[%s2895 + $0x10] sm:$0xff]
      %v2899 = vld [vmem:[%s2895 + $0x18] sm:$0xff]
      %v2900 = vld [vmem:[%s2895 + $0x20] sm:$0xff]
      %v2901 = vld [vmem:[%s2895 + $0x28] sm:$0xff]
      %v2902 = vld [vmem:[%s2895 + $0x30] sm:$0xff]
      %v2903 = vld [vmem:[%s2895 + $0x38] sm:$0xff]
      %v2904 = vld [vmem:[%s2895 + $0x40] sm:$0xff]
      %v2905 = vld [vmem:[%s2895 + $0x48] sm:$0xff]
      %v2906 = vld [vmem:[%s2895 + $0x50] sm:$0xff]
      %v2907 = vld [vmem:[%s2895 + $0x58] sm:$0xff]
      %v2908 = vld [vmem:[%s2895 + $0x60] sm:$0xff]
      %v2909 = vld [vmem:[%s2895 + $0x68] sm:$0xff]
      %v2910 = vld [vmem:[%s2895 + $0x70] sm:$0xff]
      %v2911 = vld [vmem:[%s2895 + $0x78] sm:$0xff]
      %v2912 = vld [vmem:[%s2895 + $0x80] sm:$0xff]
      %v2913 = vld [vmem:[%s2895 + $0x88] sm:$0xff]
      %v2914 = vld [vmem:[%s2895 + $0x90] sm:$0xff]
      %v2915 = vld [vmem:[%s2895 + $0x98] sm:$0xff]
      %v2916 = vld [vmem:[%s2895 + $0xa0] sm:$0xff]
      %v2917 = vld [vmem:[%s2895 + $0xa8] sm:$0xff]
      %v2918 = vld [vmem:[%s2895 + $0xb0] sm:$0xff]
      %v2919 = vld [vmem:[%s2895 + $0xb8] sm:$0xff]
      %v2920 = vld [vmem:[%s2895 + $0xc0] sm:$0xff]
      %v2921 = vld [vmem:[%s2895 + $0xc8] sm:$0xff]
      %v2922 = vld [vmem:[%s2895 + $0xd0] sm:$0xff]
      %v2923 = vld [vmem:[%s2895 + $0xd8] sm:$0xff]
      %v2924 = vld [vmem:[%s2895 + $0xe0] sm:$0xff]
      %v2925 = vld [vmem:[%s2895 + $0xe8] sm:$0xff]
      %v2926 = vld [vmem:[%s2895 + $0xf0] sm:$0xff]
      %v2927 = vld [vmem:[%s2895 + $0xf8] sm:$0xff]
      %v2928 = vld [vmem:[%s2895 + $0x100] sm:$0xff]
      %v2929 = vld [vmem:[%s2895 + $0x108] sm:$0xff]
      %v2930 = vld [vmem:[%s2895 + $0x110] sm:$0xff]
      %v2931 = vld [vmem:[%s2895 + $0x118] sm:$0xff]
      %v2932 = vld [vmem:[%s2895 + $0x120] sm:$0xff]
      %v2933 = vld [vmem:[%s2895 + $0x128] sm:$0xff]
      %v2934 = vld [vmem:[%s2895 + $0x130] sm:$0xff]
      %v2935 = vld [vmem:[%s2895 + $0x138] sm:$0xff]
      %v2936 = vld [vmem:[%s2895 + $0x140] sm:$0xff]
      %v2937 = vld [vmem:[%s2895 + $0x148] sm:$0xff]
      %v2938 = vld [vmem:[%s2895 + $0x150] sm:$0xff]
      %v2939 = vld [vmem:[%s2895 + $0x158] sm:$0xff]
      %v2940 = vld [vmem:[%s2895 + $0x160] sm:$0xff]
      %v2941 = vld [vmem:[%s2895 + $0x168] sm:$0xff]
      %v2942 = vld [vmem:[%s2895 + $0x170] sm:$0xff]
      %v2943 = vld [vmem:[%s2895 + $0x178] sm:$0xff]
      %v2944 = vld [vmem:[%s2895 + $0x180] sm:$0xff]
      %v2945 = vld [vmem:[%s2895 + $0x188] sm:$0xff]
      %v2946 = vld [vmem:[%s2895 + $0x190] sm:$0xff]
      %v2947 = vld [vmem:[%s2895 + $0x198] sm:$0xff]
      %v2948 = vld [vmem:[%s2895 + $0x1a0] sm:$0xff]
      %v2949 = vld [vmem:[%s2895 + $0x1a8] sm:$0xff]
      %v2950 = vld [vmem:[%s2895 + $0x1b0] sm:$0xf]
      %v2951 = vld [vmem:[%s2895 + $0x1b8] sm:$0xf]
      %v2953 = vsel %vm2658, %v2893, 0
      %v2956 = vsel %vm2391, %v2950, 0
      %v2959 = vsel %vm2391, %v2951, 0
      %2961 = vmatprep.subr.mxu0 %v2897
      %2962 = vmatpush1.msra.mxu0 %v2896
      %2963 = vmatprep.subr.mxu0 %v2899
      %2964 = vmatpush1.msra.mxu0 %v2898
      %2965 = vmatprep.subr.mxu0 %v2901
      %2966 = vmatpush1.msra.mxu0 %v2900
      %2967 = vmatprep.subr.mxu0 %v2903
      %2968 = vmatpush1.msra.mxu0 %v2902
      %2969 = vmatprep.subr.mxu0 %v2905
      %2970 = vmatpush1.msra.mxu0 %v2904
      %2971 = vmatprep.subr.mxu0 %v2907
      %2972 = vmatpush1.msra.mxu0 %v2906
      %2973 = vmatprep.subr.mxu0 %v2909
      %2974 = vmatpush1.msra.mxu0 %v2908
      %2975 = vmatprep.subr.mxu0 %v2911
      %2976 = vmatpush1.msra.mxu0 %v2910
      %2977 = vmatprep.subr.mxu0 %v2913
      %2978 = vmatpush1.msra.mxu0 %v2912
      %2979 = vmatprep.subr.mxu0 %v2915
      %2980 = vmatpush1.msra.mxu0 %v2914
      %2981 = vmatprep.subr.mxu0 %v2917
      %2982 = vmatpush1.msra.mxu0 %v2916
      %2983 = vmatprep.subr.mxu0 %v2919
      %2984 = vmatpush1.msra.mxu0 %v2918
      %2985 = vmatprep.subr.mxu0 %v2921
      %2986 = vmatpush1.msra.mxu0 %v2920
      %2987 = vmatprep.subr.mxu0 %v2923
      %2988 = vmatpush1.msra.mxu0 %v2922
      %2989 = vmatprep.subr.mxu0 %v2925
      %2990 = vmatpush1.msra.mxu0 %v2924
      %2991 = vmatprep.subr.mxu0 %v2927
      %2992 = vmatpush1.msra.mxu0 %v2926
      %2993 = vmatprep.subr.mxu0 %v2929
      %2994 = vmatpush1.msra.mxu0 %v2928
      %2995 = vmatprep.subr.mxu0 %v2931
      %2996 = vmatpush1.msra.mxu0 %v2930
      %2997 = vmatprep.subr.mxu0 %v2933
      %2998 = vmatpush1.msra.mxu0 %v2932
      %2999 = vmatprep.subr.mxu0 %v2935
      %3000 = vmatpush1.msra.mxu0 %v2934
      %3001 = vmatprep.subr.mxu0 %v2937
      %3002 = vmatpush1.msra.mxu0 %v2936
      %3003 = vmatprep.subr.mxu0 %v2939
      %3004 = vmatpush1.msra.mxu0 %v2938
      %3005 = vmatprep.subr.mxu0 %v2941
      %3006 = vmatpush1.msra.mxu0 %v2940
      %3007 = vmatprep.subr.mxu0 %v2943
      %3008 = vmatpush1.msra.mxu0 %v2942
      %3009 = vmatprep.subr.mxu0 %v2945
      %3010 = vmatpush1.msra.mxu0 %v2944
      %3011 = vmatprep.subr.mxu0 %v2947
      %3012 = vmatpush1.msra.mxu0 %v2946
      %3013 = vmatprep.subr.mxu0 %v2949
      %3014 = vmatpush1.msra.mxu0 %v2948
      %3015 = vmatprep.subr.mxu0 %v2959
      %3016 = vmatpush1.msra.mxu0 %v2956
      %3017 = vmatprep.subr.mxu0 0.0
      %3018 = vmatpush1.msra.mxu0 0.0
      %3019 = vmatprep.subr.mxu0 0.0
      %3020 = vmatpush1.msra.mxu0 0.0
      %3021 = vmatprep.subr.mxu0 0.0
      %3022 = vmatpush1.msra.mxu0 0.0
      %3023 = vmatprep.subr.mxu0 0.0
      %3024 = vmatpush1.msra.mxu0 0.0
      %3025 = vmatprep.mubr.f32.mxu0 %v2953
      %3026 = vmatmul.mubr.f32.gmra.mrb[0].mxu0 %v2891
      %v3027 = vpop.f32.mrb[0].mxu0
      %v3028 = vadd.f32 0.0, %v3027
      %v3029 = vpop.f32.mrb[0].mxu0
      %v3030 = vadd.f32 0.0, %v3029
      %3031 = vdwg.mxu0
      %v3032 = vadd.f32 %v2815, %v3028
      %v3033 = vadd.f32 %v2817, %v3030
      %v3034 = vld [vmem:[%s9] sm:$0x3]
      %v3036 = vlaneseq
      %v3037 = vshrl.u32 %v3036, 7
      %v3038 = vsub.s32 0, %v3037
      %v3039 = vrot.slane %v3034, %v3038
      %v3040 = vlaneseq
      %v3041 = vshrl.u32 %v3040, 7
      %v3042 = vsub.s32 1, %v3041
      %v3043 = vrot.slane %v3034, %v3042
      %v3046 = vadd.f32 %v3032, %v3039
      %v3047 = vadd.f32 %v3033, %v3043
      %v3048 = vmax.f32 %v3046, 0.0
      %v3049 = vmax.f32 %v3047, 0.0
      %v3050 = vld [vmem:[%s10] sm:$0xff]
      %v3051 = vld [vmem:[%s10 + $0x8] sm:$0xf]
      %vm3052 = vcmask 48128
      %v3054 = vsel %vm3052, %v3050, 0
      %v3057 = vsel %vm3052, %v3051, 0
      %vm3059 = vcmask 1045504
      %v3061 = vsel %vm3059, %v3048, 0
      %v3064 = vsel %vm3059, %v3049, 0
      %3066 = vmatprep.subr.mxu0 %v3064
      %3067 = vmatpush1.msra.mxu0 %v3061
      %3068 = vmatprep.subr.mxu0 0.0
      %3069 = vmatpush1.msra.mxu0 0.0
      %3070 = vmatprep.subr.mxu0 0.0
      %3071 = vmatpush1.msra.mxu0 0.0
      %3072 = vmatprep.subr.mxu0 0.0
      %3073 = vmatpush1.msra.mxu0 0.0
      %3074 = vmatprep.subr.mxu0 0.0
      %3075 = vmatpush1.msra.mxu0 0.0
      %3076 = vmatprep.subr.mxu0 0.0
      %3077 = vmatpush1.msra.mxu0 0.0
      %3078 = vmatprep.subr.mxu0 0.0
      %3079 = vmatpush1.msra.mxu0 0.0
      %3080 = vmatprep.subr.mxu0 0.0
      %3081 = vmatpush1.msra.mxu0 0.0
      %3082 = vmatprep.subr.mxu0 0.0
      %3083 = vmatpush1.msra.mxu0 0.0
      %3084 = vmatprep.subr.mxu0 0.0
      %3085 = vmatpush1.msra.mxu0 0.0
      %3086 = vmatprep.subr.mxu0 0.0
      %3087 = vmatpush1.msra.mxu0 0.0
      %3088 = vmatprep.subr.mxu0 0.0
      %3089 = vmatpush1.msra.mxu0 0.0
      %3090 = vmatprep.subr.mxu0 0.0
      %3091 = vmatpush1.msra.mxu0 0.0
      %3092 = vmatprep.subr.mxu0 0.0
      %3093 = vmatpush1.msra.mxu0 0.0
      %3094 = vmatprep.subr.mxu0 0.0
      %3095 = vmatpush1.msra.mxu0 0.0
      %3096 = vmatprep.subr.mxu0 0.0
      %3097 = vmatpush1.msra.mxu0 0.0
      %3098 = vmatprep.subr.mxu0 0.0
      %3099 = vmatpush1.msra.mxu0 0.0
      %3100 = vmatprep.subr.mxu0 0.0
      %3101 = vmatpush1.msra.mxu0 0.0
      %3102 = vmatprep.subr.mxu0 0.0
      %3103 = vmatpush1.msra.mxu0 0.0
      %3104 = vmatprep.subr.mxu0 0.0
      %3105 = vmatpush1.msra.mxu0 0.0
      %3106 = vmatprep.subr.mxu0 0.0
      %3107 = vmatpush1.msra.mxu0 0.0
      %3108 = vmatprep.subr.mxu0 0.0
      %3109 = vmatpush1.msra.mxu0 0.0
      %3110 = vmatprep.subr.mxu0 0.0
      %3111 = vmatpush1.msra.mxu0 0.0
      %3112 = vmatprep.subr.mxu0 0.0
      %3113 = vmatpush1.msra.mxu0 0.0
      %3114 = vmatprep.subr.mxu0 0.0
      %3115 = vmatpush1.msra.mxu0 0.0
      %3116 = vmatprep.subr.mxu0 0.0
      %3117 = vmatpush1.msra.mxu0 0.0
      %3118 = vmatprep.subr.mxu0 0.0
      %3119 = vmatpush1.msra.mxu0 0.0
      %3120 = vmatprep.subr.mxu0 0.0
      %3121 = vmatpush1.msra.mxu0 0.0
      %3122 = vmatprep.subr.mxu0 0.0
      %3123 = vmatpush1.msra.mxu0 0.0
      %3124 = vmatprep.subr.mxu0 0.0
      %3125 = vmatpush1.msra.mxu0 0.0
      %3126 = vmatprep.subr.mxu0 0.0
      %3127 = vmatpush1.msra.mxu0 0.0
      %3128 = vmatprep.subr.mxu0 0.0
      %3129 = vmatpush1.msra.mxu0 0.0
      %3130 = vmatprep.mubr.f32.mxu0 0.0
      %3131 = vmatmul.mubr.f32.gmra.mrb[0].mxu0 %v3054
      %v3132 = vpop.f32.mrb[0].mxu0
      %v3133 = vadd.f32 0.0, %v3132
      %v3134 = vpop.f32.mrb[0].mxu0
      %v3135 = vadd.f32 0.0, %v3134
      %3136 = vmatprep.mubr.f32.mxu0 0.0
      %3137 = vmatmul.mubr.f32.gmra.mrb[0].mxu0 %v3057
      %v3138 = vpop.f32.mrb[0].mxu0
      %v3139 = vadd.f32 0.0, %v3138
      %v3140 = vpop.f32.mrb[0].mxu0
      %v3141 = vadd.f32 0.0, %v3140
      %3142 = vdwg.mxu0
      %v3143 = vld [vmem:[%s11] sm:$0xff]
      %v3144 = vld [vmem:[%s11 + $0x8] sm:$0xff]
      %v3145 = vld [vmem:[%s11 + $0x10] sm:$0xff]
      %v3146 = vld [vmem:[%s11 + $0x18] sm:$0xff]
      %v3147 = vld [vmem:[%s11 + $0x20] sm:$0xff]
      %v3148 = vld [vmem:[%s11 + $0x28] sm:$0xff]
      %v3149 = vld [vmem:[%s11 + $0x30] sm:$0xff]
      %v3150 = vld [vmem:[%s11 + $0x38] sm:$0xff]
      %v3151 = vld [vmem:[%s11 + $0x40] sm:$0xff]
      %v3152 = vld [vmem:[%s11 + $0x48] sm:$0xff]
      %v3153 = vld [vmem:[%s11 + $0x50] sm:$0xff]
      %v3154 = vld [vmem:[%s11 + $0x58] sm:$0xff]
      %v3155 = vld [vmem:[%s11 + $0x60] sm:$0xff]
      %v3156 = vld [vmem:[%s11 + $0x68] sm:$0xff]
      %v3157 = vld [vmem:[%s11 + $0x70] sm:$0xff]
      %v3158 = vld [vmem:[%s11 + $0x78] sm:$0xff]
      %v3159 = vld [vmem:[%s11 + $0x80] sm:$0xff]
      %v3160 = vld [vmem:[%s11 + $0x88] sm:$0xff]
      %v3161 = vld [vmem:[%s11 + $0x90] sm:$0xff]
      %v3162 = vld [vmem:[%s11 + $0x98] sm:$0xff]
      %v3163 = vld [vmem:[%s11 + $0xa0] sm:$0xff]
      %v3164 = vld [vmem:[%s11 + $0xa8] sm:$0xff]
      %v3165 = vld [vmem:[%s11 + $0xb0] sm:$0xff]
      %v3166 = vld [vmem:[%s11 + $0xb8] sm:$0xff]
      %v3167 = vld [vmem:[%s11 + $0xc0] sm:$0xff]
      %v3168 = vld [vmem:[%s11 + $0xc8] sm:$0xff]
      %v3169 = vld [vmem:[%s11 + $0xd0] sm:$0xff]
      %v3170 = vld [vmem:[%s11 + $0xd8] sm:$0xff]
      %v3171 = vld [vmem:[%s11 + $0xe0] sm:$0xff]
      %v3172 = vld [vmem:[%s11 + $0xe8] sm:$0xff]
      %v3173 = vld [vmem:[%s11 + $0xf0] sm:$0xff]
      %v3174 = vld [vmem:[%s11 + $0xf8] sm:$0xff]
      %v3175 = vld [vmem:[%s11 + $0x100] sm:$0xff]
      %v3176 = vld [vmem:[%s11 + $0x108] sm:$0xff]
      %v3177 = vld [vmem:[%s11 + $0x110] sm:$0xff]
      %v3178 = vld [vmem:[%s11 + $0x118] sm:$0xff]
      %v3179 = vld [vmem:[%s11 + $0x120] sm:$0xff]
      %v3180 = vld [vmem:[%s11 + $0x128] sm:$0xff]
      %v3181 = vld [vmem:[%s11 + $0x130] sm:$0xff]
      %v3182 = vld [vmem:[%s11 + $0x138] sm:$0xff]
      %v3183 = vld [vmem:[%s11 + $0x140] sm:$0xff]
      %v3184 = vld [vmem:[%s11 + $0x148] sm:$0xff]
      %v3185 = vld [vmem:[%s11 + $0x150] sm:$0xff]
      %v3186 = vld [vmem:[%s11 + $0x158] sm:$0xff]
      %v3187 = vld [vmem:[%s11 + $0x160] sm:$0xf]
      %v3188 = vld [vmem:[%s11 + $0x168] sm:$0xf]
      %s3189 = scalar_lea.vmem %s10, 16
      %v3190 = vld [vmem:[%s3189] sm:$0xff]
      %v3191 = vld [vmem:[%s3189 + $0x8] sm:$0xf]
      %v3193 = vsel %vm3052, %v3190, 0
      %v3196 = vsel %vm3052, %v3191, 0
      %3198 = vmatprep.subr.mxu0 %v3064
      %3199 = vmatpush1.msra.mxu0 %v3061
      %3200 = vmatprep.subr.mxu0 0.0
      %3201 = vmatpush1.msra.mxu0 0.0
      %3202 = vmatprep.subr.mxu0 0.0
      %3203 = vmatpush1.msra.mxu0 0.0
      %3204 = vmatprep.subr.mxu0 0.0
      %3205 = vmatpush1.msra.mxu0 0.0
      %3206 = vmatprep.subr.mxu0 0.0
      %3207 = vmatpush1.msra.mxu0 0.0
      %3208 = vmatprep.subr.mxu0 0.0
      %3209 = vmatpush1.msra.mxu0 0.0
      %3210 = vmatprep.subr.mxu0 0.0
      %3211 = vmatpush1.msra.mxu0 0.0
      %3212 = vmatprep.subr.mxu0 0.0
      %3213 = vmatpush1.msra.mxu0 0.0
      %3214 = vmatprep.subr.mxu0 0.0
      %3215 = vmatpush1.msra.mxu0 0.0
      %3216 = vmatprep.subr.mxu0 0.0
      %3217 = vmatpush1.msra.mxu0 0.0
      %3218 = vmatprep.subr.mxu0 0.0
      %3219 = vmatpush1.msra.mxu0 0.0
      %3220 = vmatprep.subr.mxu0 0.0
      %3221 = vmatpush1.msra.mxu0 0.0
      %3222 = vmatprep.subr.mxu0 0.0
      %3223 = vmatpush1.msra.mxu0 0.0
      %3224 = vmatprep.subr.mxu0 0.0
      %3225 = vmatpush1.msra.mxu0 0.0
      %3226 = vmatprep.subr.mxu0 0.0
      %3227 = vmatpush1.msra.mxu0 0.0
      %3228 = vmatprep.subr.mxu0 0.0
      %3229 = vmatpush1.msra.mxu0 0.0
      %3230 = vmatprep.subr.mxu0 0.0
      %3231 = vmatpush1.msra.mxu0 0.0
      %3232 = vmatprep.subr.mxu0 0.0
      %3233 = vmatpush1.msra.mxu0 0.0
      %3234 = vmatprep.subr.mxu0 0.0
      %3235 = vmatpush1.msra.mxu0 0.0
      %3236 = vmatprep.subr.mxu0 0.0
      %3237 = vmatpush1.msra.mxu0 0.0
      %3238 = vmatprep.subr.mxu0 0.0
      %3239 = vmatpush1.msra.mxu0 0.0
      %3240 = vmatprep.subr.mxu0 0.0
      %3241 = vmatpush1.msra.mxu0 0.0
      %3242 = vmatprep.subr.mxu0 0.0
      %3243 = vmatpush1.msra.mxu0 0.0
      %3244 = vmatprep.subr.mxu0 0.0
      %3245 = vmatpush1.msra.mxu0 0.0
      %3246 = vmatprep.subr.mxu0 0.0
      %3247 = vmatpush1.msra.mxu0 0.0
      %3248 = vmatprep.subr.mxu0 0.0
      %3249 = vmatpush1.msra.mxu0 0.0
      %3250 = vmatprep.subr.mxu0 0.0
      %3251 = vmatpush1.msra.mxu0 0.0
      %3252 = vmatprep.subr.mxu0 0.0
      %3253 = vmatpush1.msra.mxu0 0.0
      %3254 = vmatprep.subr.mxu0 0.0
      %3255 = vmatpush1.msra.mxu0 0.0
      %3256 = vmatprep.subr.mxu0 0.0
      %3257 = vmatpush1.msra.mxu0 0.0
      %3258 = vmatprep.subr.mxu0 0.0
      %3259 = vmatpush1.msra.mxu0 0.0
      %3260 = vmatprep.subr.mxu0 0.0
      %3261 = vmatpush1.msra.mxu0 0.0
      %3262 = vmatprep.mubr.f32.mxu0 0.0
      %3263 = vmatmul.mubr.f32.gmra.mrb[0].mxu0 %v3193
      %v3264 = vpop.f32.mrb[0].mxu0
      %v3265 = vadd.f32 0.0, %v3264
      %v3266 = vpop.f32.mrb[0].mxu0
      %v3267 = vadd.f32 0.0, %v3266
      %3268 = vmatprep.mubr.f32.mxu0 0.0
      %3269 = vmatmul.mubr.f32.gmra.mrb[0].mxu0 %v3196
      %v3270 = vpop.f32.mrb[0].mxu0
      %v3271 = vadd.f32 0.0, %v3270
      %v3272 = vpop.f32.mrb[0].mxu0
      %v3273 = vadd.f32 0.0, %v3272
      %3274 = vdwg.mxu0
      %s3275 = scalar_lea.vmem %s11, 368
      %v3276 = vld [vmem:[%s3275] sm:$0xff]
      %v3277 = vld [vmem:[%s3275 + $0x8] sm:$0xff]
      %v3278 = vld [vmem:[%s3275 + $0x10] sm:$0xff]
      %v3279 = vld [vmem:[%s3275 + $0x18] sm:$0xff]
      %v3280 = vld [vmem:[%s3275 + $0x20] sm:$0xff]
      %v3281 = vld [vmem:[%s3275 + $0x28] sm:$0xff]
      %v3282 = vld [vmem:[%s3275 + $0x30] sm:$0xff]
      %v3283 = vld [vmem:[%s3275 + $0x38] sm:$0xff]
      %v3284 = vld [vmem:[%s3275 + $0x40] sm:$0xff]
      %v3285 = vld [vmem:[%s3275 + $0x48] sm:$0xff]
      %v3286 = vld [vmem:[%s3275 + $0x50] sm:$0xff]
      %v3287 = vld [vmem:[%s3275 + $0x58] sm:$0xff]
      %v3288 = vld [vmem:[%s3275 + $0x60] sm:$0xff]
      %v3289 = vld [vmem:[%s3275 + $0x68] sm:$0xff]
      %v3290 = vld [vmem:[%s3275 + $0x70] sm:$0xff]
      %v3291 = vld [vmem:[%s3275 + $0x78] sm:$0xff]
      %v3292 = vld [vmem:[%s3275 + $0x80] sm:$0xff]
      %v3293 = vld [vmem:[%s3275 + $0x88] sm:$0xff]
      %v3294 = vld [vmem:[%s3275 + $0x90] sm:$0xff]
      %v3295 = vld [vmem:[%s3275 + $0x98] sm:$0xff]
      %v3296 = vld [vmem:[%s3275 + $0xa0] sm:$0xff]
      %v3297 = vld [vmem:[%s3275 + $0xa8] sm:$0xff]
      %v3298 = vld [vmem:[%s3275 + $0xb0] sm:$0xff]
      %v3299 = vld [vmem:[%s3275 + $0xb8] sm:$0xff]
      %v3300 = vld [vmem:[%s3275 + $0xc0] sm:$0xff]
      %v3301 = vld [vmem:[%s3275 + $0xc8] sm:$0xff]
      %v3302 = vld [vmem:[%s3275 + $0xd0] sm:$0xff]
      %v3303 = vld [vmem:[%s3275 + $0xd8] sm:$0xff]
      %v3304 = vld [vmem:[%s3275 + $0xe0] sm:$0xff]
      %v3305 = vld [vmem:[%s3275 + $0xe8] sm:$0xff]
      %v3306 = vld [vmem:[%s3275 + $0xf0] sm:$0xff]
      %v3307 = vld [vmem:[%s3275 + $0xf8] sm:$0xff]
      %v3308 = vld [vmem:[%s3275 + $0x100] sm:$0xff]
      %v3309 = vld [vmem:[%s3275 + $0x108] sm:$0xff]
      %v3310 = vld [vmem:[%s3275 + $0x110] sm:$0xff]
      %v3311 = vld [vmem:[%s3275 + $0x118] sm:$0xff]
      %v3312 = vld [vmem:[%s3275 + $0x120] sm:$0xff]
      %v3313 = vld [vmem:[%s3275 + $0x128] sm:$0xff]
      %v3314 = vld [vmem:[%s3275 + $0x130] sm:$0xff]
      %v3315 = vld [vmem:[%s3275 + $0x138] sm:$0xff]
      %v3316 = vld [vmem:[%s3275 + $0x140] sm:$0xff]
      %v3317 = vld [vmem:[%s3275 + $0x148] sm:$0xff]
      %v3318 = vld [vmem:[%s3275 + $0x150] sm:$0xff]
      %v3319 = vld [vmem:[%s3275 + $0x158] sm:$0xff]
      %v3320 = vld [vmem:[%s3275 + $0x160] sm:$0xf]
      %v3321 = vld [vmem:[%s3275 + $0x168] sm:$0xf]
      %vm3322 = vcmask 424960
      %v3324 = vsel %vm3322, %v3267, 0
      %v3327 = vsel %vm3322, %v3273, 0
      %v3330 = vsel %vm2391, %v3320, 0
      %v3333 = vsel %vm2391, %v3321, 0
      %3335 = vmatprep.subr.mxu0 %v3277
      %3336 = vmatpush1.msra.mxu0 %v3276
      %3337 = vmatprep.subr.mxu0 %v3279
      %3338 = vmatpush1.msra.mxu0 %v3278
      %3339 = vmatprep.subr.mxu0 %v3281
      %3340 = vmatpush1.msra.mxu0 %v3280
      %3341 = vmatprep.subr.mxu0 %v3283
      %3342 = vmatpush1.msra.mxu0 %v3282
      %3343 = vmatprep.subr.mxu0 %v3285
      %3344 = vmatpush1.msra.mxu0 %v3284
      %3345 = vmatprep.subr.mxu0 %v3287
      %3346 = vmatpush1.msra.mxu0 %v3286
      %3347 = vmatprep.subr.mxu0 %v3289
      %3348 = vmatpush1.msra.mxu0 %v3288
      %3349 = vmatprep.subr.mxu0 %v3291
      %3350 = vmatpush1.msra.mxu0 %v3290
      %3351 = vmatprep.subr.mxu0 %v3293
      %3352 = vmatpush1.msra.mxu0 %v3292
      %3353 = vmatprep.subr.mxu0 %v3295
      %3354 = vmatpush1.msra.mxu0 %v3294
      %3355 = vmatprep.subr.mxu0 %v3297
      %3356 = vmatpush1.msra.mxu0 %v3296
      %3357 = vmatprep.subr.mxu0 %v3299
      %3358 = vmatpush1.msra.mxu0 %v3298
      %3359 = vmatprep.subr.mxu0 %v3301
      %3360 = vmatpush1.msra.mxu0 %v3300
      %3361 = vmatprep.subr.mxu0 %v3303
      %3362 = vmatpush1.msra.mxu0 %v3302
      %3363 = vmatprep.subr.mxu0 %v3305
      %3364 = vmatpush1.msra.mxu0 %v3304
      %3365 = vmatprep.subr.mxu0 %v3307
      %3366 = vmatpush1.msra.mxu0 %v3306
      %3367 = vmatprep.subr.mxu0 %v3309
      %3368 = vmatpush1.msra.mxu0 %v3308
      %3369 = vmatprep.subr.mxu0 %v3311
      %3370 = vmatpush1.msra.mxu0 %v3310
      %3371 = vmatprep.subr.mxu0 %v3313
      %3372 = vmatpush1.msra.mxu0 %v3312
      %3373 = vmatprep.subr.mxu0 %v3315
      %3374 = vmatpush1.msra.mxu0 %v3314
      %3375 = vmatprep.subr.mxu0 %v3317
      %3376 = vmatpush1.msra.mxu0 %v3316
      %3377 = vmatprep.subr.mxu0 %v3319
      %3378 = vmatpush1.msra.mxu0 %v3318
      %3379 = vmatprep.subr.mxu0 %v3333
      %3380 = vmatpush1.msra.mxu0 %v3330
      %3381 = vmatprep.subr.mxu0 0.0
      %3382 = vmatpush1.msra.mxu0 0.0
      %3383 = vmatprep.subr.mxu0 0.0
      %3384 = vmatpush1.msra.mxu0 0.0
      %3385 = vmatprep.subr.mxu0 0.0
      %3386 = vmatpush1.msra.mxu0 0.0
      %3387 = vmatprep.subr.mxu0 0.0
      %3388 = vmatpush1.msra.mxu0 0.0
      %3389 = vmatprep.subr.mxu0 0.0
      %3390 = vmatpush1.msra.mxu0 0.0
      %3391 = vmatprep.subr.mxu0 0.0
      %3392 = vmatpush1.msra.mxu0 0.0
      %3393 = vmatprep.subr.mxu0 0.0
      %3394 = vmatpush1.msra.mxu0 0.0
      %3395 = vmatprep.subr.mxu0 0.0
      %3396 = vmatpush1.msra.mxu0 0.0
      %3397 = vmatprep.subr.mxu0 0.0
      %3398 = vmatpush1.msra.mxu0 0.0
      %3399 = vmatprep.mubr.f32.mxu0 %v3324
      %3400 = vmatmul.mubr.f32.gmra.mrb[0].mxu0 %v3265
      %v3401 = vpop.f32.mrb[0].mxu0
      %v3402 = vadd.f32 0.0, %v3401
      %v3403 = vpop.f32.mrb[0].mxu0
      %v3404 = vadd.f32 0.0, %v3403
      %3405 = vmatprep.mubr.f32.mxu0 %v3327
      %3406 = vmatmul.mubr.f32.gmra.mrb[0].mxu0 %v3271
      %v3407 = vpop.f32.mrb[0].mxu0
      %v3408 = vadd.f32 0.0, %v3407
      %v3409 = vpop.f32.mrb[0].mxu0
      %v3410 = vadd.f32 0.0, %v3409
      %3411 = vdwg.mxu0
      %v3413 = vsel %vm3322, %v3135, 0
      %v3416 = vsel %vm3322, %v3141, 0
      %v3419 = vsel %vm2391, %v3187, 0
      %v3422 = vsel %vm2391, %v3188, 0
      %3424 = vmatprep.subr.mxu0 %v3144
      %3425 = vmatpush1.msra.mxu0 %v3143
      %3426 = vmatprep.subr.mxu0 %v3146
      %3427 = vmatpush1.msra.mxu0 %v3145
      %3428 = vmatprep.subr.mxu0 %v3148
      %3429 = vmatpush1.msra.mxu0 %v3147
      %3430 = vmatprep.subr.mxu0 %v3150
      %3431 = vmatpush1.msra.mxu0 %v3149
      %3432 = vmatprep.subr.mxu0 %v3152
      %3433 = vmatpush1.msra.mxu0 %v3151
      %3434 = vmatprep.subr.mxu0 %v3154
      %3435 = vmatpush1.msra.mxu0 %v3153
      %3436 = vmatprep.subr.mxu0 %v3156
      %3437 = vmatpush1.msra.mxu0 %v3155
      %3438 = vmatprep.subr.mxu0 %v3158
      %3439 = vmatpush1.msra.mxu0 %v3157
      %3440 = vmatprep.subr.mxu0 %v3160
      %3441 = vmatpush1.msra.mxu0 %v3159
      %3442 = vmatprep.subr.mxu0 %v3162
      %3443 = vmatpush1.msra.mxu0 %v3161
      %3444 = vmatprep.subr.mxu0 %v3164
      %3445 = vmatpush1.msra.mxu0 %v3163
      %3446 = vmatprep.subr.mxu0 %v3166
      %3447 = vmatpush1.msra.mxu0 %v3165
      %3448 = vmatprep.subr.mxu0 %v3168
      %3449 = vmatpush1.msra.mxu0 %v3167
      %3450 = vmatprep.subr.mxu0 %v3170
      %3451 = vmatpush1.msra.mxu0 %v3169
      %3452 = vmatprep.subr.mxu0 %v3172
      %3453 = vmatpush1.msra.mxu0 %v3171
      %3454 = vmatprep.subr.mxu0 %v3174
      %3455 = vmatpush1.msra.mxu0 %v3173
      %3456 = vmatprep.subr.mxu0 %v3176
      %3457 = vmatpush1.msra.mxu0 %v3175
      %3458 = vmatprep.subr.mxu0 %v3178
      %3459 = vmatpush1.msra.mxu0 %v3177
      %3460 = vmatprep.subr.mxu0 %v3180
      %3461 = vmatpush1.msra.mxu0 %v3179
      %3462 = vmatprep.subr.mxu0 %v3182
      %3463 = vmatpush1.msra.mxu0 %v3181
      %3464 = vmatprep.subr.mxu0 %v3184
      %3465 = vmatpush1.msra.mxu0 %v3183
      %3466 = vmatprep.subr.mxu0 %v3186
      %3467 = vmatpush1.msra.mxu0 %v3185
      %3468 = vmatprep.subr.mxu0 %v3422
      %3469 = vmatpush1.msra.mxu0 %v3419
      %3470 = vmatprep.subr.mxu0 0.0
      %3471 = vmatpush1.msra.mxu0 0.0
      %3472 = vmatprep.subr.mxu0 0.0
      %3473 = vmatpush1.msra.mxu0 0.0
      %3474 = vmatprep.subr.mxu0 0.0
      %3475 = vmatpush1.msra.mxu0 0.0
      %3476 = vmatprep.subr.mxu0 0.0
      %3477 = vmatpush1.msra.mxu0 0.0
      %3478 = vmatprep.subr.mxu0 0.0
      %3479 = vmatpush1.msra.mxu0 0.0
      %3480 = vmatprep.subr.mxu0 0.0
      %3481 = vmatpush1.msra.mxu0 0.0
      %3482 = vmatprep.subr.mxu0 0.0
      %3483 = vmatpush1.msra.mxu0 0.0
      %3484 = vmatprep.subr.mxu0 0.0
      %3485 = vmatpush1.msra.mxu0 0.0
      %3486 = vmatprep.subr.mxu0 0.0
      %3487 = vmatpush1.msra.mxu0 0.0
      %3488 = vmatprep.mubr.f32.mxu0 %v3413
      %3489 = vmatmul.mubr.f32.gmra.mrb[0].mxu0 %v3133
      %v3490 = vpop.f32.mrb[0].mxu0
      %v3491 = vadd.f32 %v3402, %v3490
      %v3492 = vpop.f32.mrb[0].mxu0
      %v3493 = vadd.f32 %v3404, %v3492
      %3494 = vmatprep.mubr.f32.mxu0 %v3416
      %3495 = vmatmul.mubr.f32.gmra.mrb[0].mxu0 %v3139
      %v3496 = vpop.f32.mrb[0].mxu0
      %v3497 = vadd.f32 %v3408, %v3496
      %v3498 = vpop.f32.mrb[0].mxu0
      %v3499 = vadd.f32 %v3410, %v3498
      %3500 = vdwg.mxu0
      %s3501 = scalar_lea.vmem %s10, 32
      %v3502 = vld [vmem:[%s3501] sm:$0xff]
      %v3503 = vld [vmem:[%s3501 + $0x8] sm:$0xf]
      %v3505 = vsel %vm3052, %v3502, 0
      %v3508 = vsel %vm3052, %v3503, 0
      %3510 = vmatprep.subr.mxu0 %v3064
      %3511 = vmatpush1.msra.mxu0 %v3061
      %3512 = vmatprep.subr.mxu0 0.0
      %3513 = vmatpush1.msra.mxu0 0.0
      %3514 = vmatprep.subr.mxu0 0.0
      %3515 = vmatpush1.msra.mxu0 0.0
      %3516 = vmatprep.subr.mxu0 0.0
      %3517 = vmatpush1.msra.mxu0 0.0
      %3518 = vmatprep.subr.mxu0 0.0
      %3519 = vmatpush1.msra.mxu0 0.0
      %3520 = vmatprep.subr.mxu0 0.0
      %3521 = vmatpush1.msra.mxu0 0.0
      %3522 = vmatprep.subr.mxu0 0.0
      %3523 = vmatpush1.msra.mxu0 0.0
      %3524 = vmatprep.subr.mxu0 0.0
      %3525 = vmatpush1.msra.mxu0 0.0
      %3526 = vmatprep.subr.mxu0 0.0
      %3527 = vmatpush1.msra.mxu0 0.0
      %3528 = vmatprep.subr.mxu0 0.0
      %3529 = vmatpush1.msra.mxu0 0.0
      %3530 = vmatprep.subr.mxu0 0.0
      %3531 = vmatpush1.msra.mxu0 0.0
      %3532 = vmatprep.subr.mxu0 0.0
      %3533 = vmatpush1.msra.mxu0 0.0
      %3534 = vmatprep.subr.mxu0 0.0
      %3535 = vmatpush1.msra.mxu0 0.0
      %3536 = vmatprep.subr.mxu0 0.0
      %3537 = vmatpush1.msra.mxu0 0.0
      %3538 = vmatprep.subr.mxu0 0.0
      %3539 = vmatpush1.msra.mxu0 0.0
      %3540 = vmatprep.subr.mxu0 0.0
      %3541 = vmatpush1.msra.mxu0 0.0
      %3542 = vmatprep.subr.mxu0 0.0
      %3543 = vmatpush1.msra.mxu0 0.0
      %3544 = vmatprep.subr.mxu0 0.0
      %3545 = vmatpush1.msra.mxu0 0.0
      %3546 = vmatprep.subr.mxu0 0.0
      %3547 = vmatpush1.msra.mxu0 0.0
      %3548 = vmatprep.subr.mxu0 0.0
      %3549 = vmatpush1.msra.mxu0 0.0
      %3550 = vmatprep.subr.mxu0 0.0
      %3551 = vmatpush1.msra.mxu0 0.0
      %3552 = vmatprep.subr.mxu0 0.0
      %3553 = vmatpush1.msra.mxu0 0.0
      %3554 = vmatprep.subr.mxu0 0.0
      %3555 = vmatpush1.msra.mxu0 0.0
      %3556 = vmatprep.subr.mxu0 0.0
      %3557 = vmatpush1.msra.mxu0 0.0
      %3558 = vmatprep.subr.mxu0 0.0
      %3559 = vmatpush1.msra.mxu0 0.0
      %3560 = vmatprep.subr.mxu0 0.0
      %3561 = vmatpush1.msra.mxu0 0.0
      %3562 = vmatprep.subr.mxu0 0.0
      %3563 = vmatpush1.msra.mxu0 0.0
      %3564 = vmatprep.subr.mxu0 0.0
      %3565 = vmatpush1.msra.mxu0 0.0
      %3566 = vmatprep.subr.mxu0 0.0
      %3567 = vmatpush1.msra.mxu0 0.0
      %3568 = vmatprep.subr.mxu0 0.0
      %3569 = vmatpush1.msra.mxu0 0.0
      %3570 = vmatprep.subr.mxu0 0.0
      %3571 = vmatpush1.msra.mxu0 0.0
      %3572 = vmatprep.subr.mxu0 0.0
      %3573 = vmatpush1.msra.mxu0 0.0
      %3574 = vmatprep.mubr.f32.mxu0 0.0
      %3575 = vmatmul.mubr.f32.gmra.mrb[0].mxu0 %v3505
      %v3576 = vpop.f32.mrb[0].mxu0
      %v3577 = vadd.f32 0.0, %v3576
      %v3578 = vpop.f32.mrb[0].mxu0
      %v3579 = vadd.f32 0.0, %v3578
      %3580 = vmatprep.mubr.f32.mxu0 0.0
      %3581 = vmatmul.mubr.f32.gmra.mrb[0].mxu0 %v3508
      %v3582 = vpop.f32.mrb[0].mxu0
      %v3583 = vadd.f32 0.0, %v3582
      %v3584 = vpop.f32.mrb[0].mxu0
      %v3585 = vadd.f32 0.0, %v3584
      %3586 = vdwg.mxu0
      %s3587 = scalar_lea.vmem %s11, 736
      %v3588 = vld [vmem:[%s3587] sm:$0xff]
      %v3589 = vld [vmem:[%s3587 + $0x8] sm:$0xff]
      %v3590 = vld [vmem:[%s3587 + $0x10] sm:$0xff]
      %v3591 = vld [vmem:[%s3587 + $0x18] sm:$0xff]
      %v3592 = vld [vmem:[%s3587 + $0x20] sm:$0xff]
      %v3593 = vld [vmem:[%s3587 + $0x28] sm:$0xff]
      %v3594 = vld [vmem:[%s3587 + $0x30] sm:$0xff]
      %v3595 = vld [vmem:[%s3587 + $0x38] sm:$0xff]
      %v3596 = vld [vmem:[%s3587 + $0x40] sm:$0xff]
      %v3597 = vld [vmem:[%s3587 + $0x48] sm:$0xff]
      %v3598 = vld [vmem:[%s3587 + $0x50] sm:$0xff]
      %v3599 = vld [vmem:[%s3587 + $0x58] sm:$0xff]
      %v3600 = vld [vmem:[%s3587 + $0x60] sm:$0xff]
      %v3601 = vld [vmem:[%s3587 + $0x68] sm:$0xff]
      %v3602 = vld [vmem:[%s3587 + $0x70] sm:$0xff]
      %v3603 = vld [vmem:[%s3587 + $0x78] sm:$0xff]
      %v3604 = vld [vmem:[%s3587 + $0x80] sm:$0xff]
      %v3605 = vld [vmem:[%s3587 + $0x88] sm:$0xff]
      %v3606 = vld [vmem:[%s3587 + $0x90] sm:$0xff]
      %v3607 = vld [vmem:[%s3587 + $0x98] sm:$0xff]
      %v3608 = vld [vmem:[%s3587 + $0xa0] sm:$0xff]
      %v3609 = vld [vmem:[%s3587 + $0xa8] sm:$0xff]
      %v3610 = vld [vmem:[%s3587 + $0xb0] sm:$0xff]
      %v3611 = vld [vmem:[%s3587 + $0xb8] sm:$0xff]
      %v3612 = vld [vmem:[%s3587 + $0xc0] sm:$0xff]
      %v3613 = vld [vmem:[%s3587 + $0xc8] sm:$0xff]
      %v3614 = vld [vmem:[%s3587 + $0xd0] sm:$0xff]
      %v3615 = vld [vmem:[%s3587 + $0xd8] sm:$0xff]
      %v3616 = vld [vmem:[%s3587 + $0xe0] sm:$0xff]
      %v3617 = vld [vmem:[%s3587 + $0xe8] sm:$0xff]
      %v3618 = vld [vmem:[%s3587 + $0xf0] sm:$0xff]
      %v3619 = vld [vmem:[%s3587 + $0xf8] sm:$0xff]
      %v3620 = vld [vmem:[%s3587 + $0x100] sm:$0xff]
      %v3621 = vld [vmem:[%s3587 + $0x108] sm:$0xff]
      %v3622 = vld [vmem:[%s3587 + $0x110] sm:$0xff]
      %v3623 = vld [vmem:[%s3587 + $0x118] sm:$0xff]
      %v3624 = vld [vmem:[%s3587 + $0x120] sm:$0xff]
      %v3625 = vld [vmem:[%s3587 + $0x128] sm:$0xff]
      %v3626 = vld [vmem:[%s3587 + $0x130] sm:$0xff]
      %v3627 = vld [vmem:[%s3587 + $0x138] sm:$0xff]
      %v3628 = vld [vmem:[%s3587 + $0x140] sm:$0xff]
      %v3629 = vld [vmem:[%s3587 + $0x148] sm:$0xff]
      %v3630 = vld [vmem:[%s3587 + $0x150] sm:$0xff]
      %v3631 = vld [vmem:[%s3587 + $0x158] sm:$0xff]
      %v3632 = vld [vmem:[%s3587 + $0x160] sm:$0xf]
      %v3633 = vld [vmem:[%s3587 + $0x168] sm:$0xf]
      %v3635 = vsel %vm3322, %v3579, 0
      %v3638 = vsel %vm3322, %v3585, 0
      %v3641 = vsel %vm2391, %v3632, 0
      %v3644 = vsel %vm2391, %v3633, 0
      %3646 = vmatprep.subr.mxu0 %v3589
      %3647 = vmatpush1.msra.mxu0 %v3588
      %3648 = vmatprep.subr.mxu0 %v3591
      %3649 = vmatpush1.msra.mxu0 %v3590
      %3650 = vmatprep.subr.mxu0 %v3593
      %3651 = vmatpush1.msra.mxu0 %v3592
      %3652 = vmatprep.subr.mxu0 %v3595
      %3653 = vmatpush1.msra.mxu0 %v3594
      %3654 = vmatprep.subr.mxu0 %v3597
      %3655 = vmatpush1.msra.mxu0 %v3596
      %3656 = vmatprep.subr.mxu0 %v3599
      %3657 = vmatpush1.msra.mxu0 %v3598
      %3658 = vmatprep.subr.mxu0 %v3601
      %3659 = vmatpush1.msra.mxu0 %v3600
      %3660 = vmatprep.subr.mxu0 %v3603
      %3661 = vmatpush1.msra.mxu0 %v3602
      %3662 = vmatprep.subr.mxu0 %v3605
      %3663 = vmatpush1.msra.mxu0 %v3604
      %3664 = vmatprep.subr.mxu0 %v3607
      %3665 = vmatpush1.msra.mxu0 %v3606
      %3666 = vmatprep.subr.mxu0 %v3609
      %3667 = vmatpush1.msra.mxu0 %v3608
      %3668 = vmatprep.subr.mxu0 %v3611
      %3669 = vmatpush1.msra.mxu0 %v3610
      %3670 = vmatprep.subr.mxu0 %v3613
      %3671 = vmatpush1.msra.mxu0 %v3612
      %3672 = vmatprep.subr.mxu0 %v3615
      %3673 = vmatpush1.msra.mxu0 %v3614
      %3674 = vmatprep.subr.mxu0 %v3617
      %3675 = vmatpush1.msra.mxu0 %v3616
      %3676 = vmatprep.subr.mxu0 %v3619
      %3677 = vmatpush1.msra.mxu0 %v3618
      %3678 = vmatprep.subr.mxu0 %v3621
      %3679 = vmatpush1.msra.mxu0 %v3620
      %3680 = vmatprep.subr.mxu0 %v3623
      %3681 = vmatpush1.msra.mxu0 %v3622
      %3682 = vmatprep.subr.mxu0 %v3625
      %3683 = vmatpush1.msra.mxu0 %v3624
      %3684 = vmatprep.subr.mxu0 %v3627
      %3685 = vmatpush1.msra.mxu0 %v3626
      %3686 = vmatprep.subr.mxu0 %v3629
      %3687 = vmatpush1.msra.mxu0 %v3628
      %3688 = vmatprep.subr.mxu0 %v3631
      %3689 = vmatpush1.msra.mxu0 %v3630
      %3690 = vmatprep.subr.mxu0 %v3644
      %3691 = vmatpush1.msra.mxu0 %v3641
      %3692 = vmatprep.subr.mxu0 0.0
      %3693 = vmatpush1.msra.mxu0 0.0
      %3694 = vmatprep.subr.mxu0 0.0
      %3695 = vmatpush1.msra.mxu0 0.0
      %3696 = vmatprep.subr.mxu0 0.0
      %3697 = vmatpush1.msra.mxu0 0.0
      %3698 = vmatprep.subr.mxu0 0.0
      %3699 = vmatpush1.msra.mxu0 0.0
      %3700 = vmatprep.subr.mxu0 0.0
      %3701 = vmatpush1.msra.mxu0 0.0
      %3702 = vmatprep.subr.mxu0 0.0
      %3703 = vmatpush1.msra.mxu0 0.0
      %3704 = vmatprep.subr.mxu0 0.0
      %3705 = vmatpush1.msra.mxu0 0.0
      %3706 = vmatprep.subr.mxu0 0.0
      %3707 = vmatpush1.msra.mxu0 0.0
      %3708 = vmatprep.subr.mxu0 0.0
      %3709 = vmatpush1.msra.mxu0 0.0
      %3710 = vmatprep.mubr.f32.mxu0 %v3635
      %3711 = vmatmul.mubr.f32.gmra.mrb[0].mxu0 %v3577
      %v3712 = vpop.f32.mrb[0].mxu0
      %v3713 = vadd.f32 0.0, %v3712
      %v3714 = vpop.f32.mrb[0].mxu0
      %v3715 = vadd.f32 0.0, %v3714
      %3716 = vmatprep.mubr.f32.mxu0 %v3638
      %3717 = vmatmul.mubr.f32.gmra.mrb[0].mxu0 %v3583
      %v3718 = vpop.f32.mrb[0].mxu0
      %v3719 = vadd.f32 0.0, %v3718
      %v3720 = vpop.f32.mrb[0].mxu0
      %v3721 = vadd.f32 0.0, %v3720
      %3722 = vdwg.mxu0
      %v3723 = vadd.f32 %v3491, %v3713
      %v3724 = vadd.f32 %v3493, %v3715
      %v3725 = vadd.f32 %v3497, %v3719
      %v3726 = vadd.f32 %v3499, %v3721
      %v3727 = vld [vmem:[%s12] sm:$0x3]
      %v3729 = vlaneseq
      %v3730 = vshrl.u32 %v3729, 7
      %v3731 = vsub.s32 0, %v3730
      %v3732 = vrot.slane %v3727, %v3731
      %v3733 = vlaneseq
      %v3734 = vshrl.u32 %v3733, 7
      %v3735 = vsub.s32 1, %v3734
      %v3736 = vrot.slane %v3727, %v3735
      %v3739 = vadd.f32 %v3723, %v3732
      %v3740 = vadd.f32 %v3724, %v3736
      %v3741 = vadd.f32 %v3725, %v3732
      %v3742 = vadd.f32 %v3726, %v3736
      %v3743 = vmax.f32 %v3739, 0.0
      %v3744 = vmax.f32 %v3740, 0.0
      %v3745 = vmax.f32 %v3741, 0.0
      %v3746 = vmax.f32 %v3742, 0.0
      %v3747 = vld [vmem:[%s13] sm:$0xff]
      %v3748 = vld [vmem:[%s13 + $0x8] sm:$0xff]
      %v3749 = vld [vmem:[%s13 + $0x10] sm:$0xff]
      %v3751 = vsel %vm2387, %v3747, 0
      %v3754 = vsel %vm2387, %v3748, 0
      %v3757 = vsel %vm2387, %v3749, 0
      %v3760 = vsel %vm2391, %v3745, 0
      %v3763 = vsel %vm2391, %v3746, 0
      %3765 = vmatprep.subr.mxu0 %v3744
      %3766 = vmatpush1.msra.mxu0 %v3743
      %3767 = vmatprep.subr.mxu0 %v3763
      %3768 = vmatpush1.msra.mxu0 %v3760
      %3769 = vmatprep.subr.mxu0 0.0
      %3770 = vmatpush1.msra.mxu0 0.0
      %3771 = vmatprep.subr.mxu0 0.0
      %3772 = vmatpush1.msra.mxu0 0.0
      %3773 = vmatprep.subr.mxu0 0.0
      %3774 = vmatpush1.msra.mxu0 0.0
      %3775 = vmatprep.subr.mxu0 0.0
      %3776 = vmatpush1.msra.mxu0 0.0
      %3777 = vmatprep.subr.mxu0 0.0
      %3778 = vmatpush1.msra.mxu0 0.0
      %3779 = vmatprep.subr.mxu0 0.0
      %3780 = vmatpush1.msra.mxu0 0.0
      %3781 = vmatprep.subr.mxu0 0.0
      %3782 = vmatpush1.msra.mxu0 0.0
      %3783 = vmatprep.subr.mxu0 0.0
      %3784 = vmatpush1.msra.mxu0 0.0
      %3785 = vmatprep.subr.mxu0 0.0
      %3786 = vmatpush1.msra.mxu0 0.0
      %3787 = vmatprep.subr.mxu0 0.0
      %3788 = vmatpush1.msra.mxu0 0.0
      %3789 = vmatprep.subr.mxu0 0.0
      %3790 = vmatpush1.msra.mxu0 0.0
      %3791 = vmatprep.subr.mxu0 0.0
      %3792 = vmatpush1.msra.mxu0 0.0
      %3793 = vmatprep.subr.mxu0 0.0
      %3794 = vmatpush1.msra.mxu0 0.0
      %3795 = vmatprep.subr.mxu0 0.0
      %3796 = vmatpush1.msra.mxu0 0.0
      %3797 = vmatprep.subr.mxu0 0.0
      %3798 = vmatpush1.msra.mxu0 0.0
      %3799 = vmatprep.subr.mxu0 0.0
      %3800 = vmatpush1.msra.mxu0 0.0
      %3801 = vmatprep.subr.mxu0 0.0
      %3802 = vmatpush1.msra.mxu0 0.0
      %3803 = vmatprep.subr.mxu0 0.0
      %3804 = vmatpush1.msra.mxu0 0.0
      %3805 = vmatprep.subr.mxu0 0.0
      %3806 = vmatpush1.msra.mxu0 0.0
      %3807 = vmatprep.subr.mxu0 0.0
      %3808 = vmatpush1.msra.mxu0 0.0
      %3809 = vmatprep.subr.mxu0 0.0
      %3810 = vmatpush1.msra.mxu0 0.0
      %3811 = vmatprep.subr.mxu0 0.0
      %3812 = vmatpush1.msra.mxu0 0.0
      %3813 = vmatprep.subr.mxu0 0.0
      %3814 = vmatpush1.msra.mxu0 0.0
      %3815 = vmatprep.subr.mxu0 0.0
      %3816 = vmatpush1.msra.mxu0 0.0
      %3817 = vmatprep.subr.mxu0 0.0
      %3818 = vmatpush1.msra.mxu0 0.0
      %3819 = vmatprep.subr.mxu0 0.0
      %3820 = vmatpush1.msra.mxu0 0.0
      %3821 = vmatprep.subr.mxu0 0.0
      %3822 = vmatpush1.msra.mxu0 0.0
      %3823 = vmatprep.subr.mxu0 0.0
      %3824 = vmatpush1.msra.mxu0 0.0
      %3825 = vmatprep.subr.mxu0 0.0
      %3826 = vmatpush1.msra.mxu0 0.0
      %3827 = vmatprep.subr.mxu0 0.0
      %3828 = vmatpush1.msra.mxu0 0.0
      %3829 = vmatprep.mubr.f32.mxu0 0.0
      %3830 = vmatmul.mubr.f32.gmra.mrb[0].mxu0 %v3751
      %v3831 = vpop.f32.mrb[0].mxu0
      %v3832 = vadd.f32 0.0, %v3831
      %v3833 = vpop.f32.mrb[0].mxu0
      %v3834 = vadd.f32 0.0, %v3833
      %3835 = vmatprep.mubr.f32.mxu0 0.0
      %3836 = vmatmul.mubr.f32.gmra.mrb[0].mxu0 %v3754
      %v3837 = vpop.f32.mrb[0].mxu0
      %v3838 = vadd.f32 0.0, %v3837
      %v3839 = vpop.f32.mrb[0].mxu0
      %v3840 = vadd.f32 0.0, %v3839
      %3841 = vmatprep.mubr.f32.mxu0 0.0
      %3842 = vmatmul.mubr.f32.gmra.mrb[0].mxu0 %v3757
      %v3843 = vpop.f32.mrb[0].mxu0
      %v3844 = vadd.f32 0.0, %v3843
      %v3845 = vpop.f32.mrb[0].mxu0
      %v3846 = vadd.f32 0.0, %v3845
      %3847 = vdwg.mxu0
      %v3848 = vld [vmem:[%s14] sm:$0xff]
      %v3849 = vld [vmem:[%s14 + $0x8] sm:$0xff]
      %v3850 = vld [vmem:[%s14 + $0x10] sm:$0xff]
      %v3851 = vld [vmem:[%s14 + $0x18] sm:$0xff]
      %v3852 = vld [vmem:[%s14 + $0x20] sm:$0xff]
      %v3853 = vld [vmem:[%s14 + $0x28] sm:$0xff]
      %v3854 = vld [vmem:[%s14 + $0x30] sm:$0xff]
      %v3855 = vld [vmem:[%s14 + $0x38] sm:$0xff]
      %v3856 = vld [vmem:[%s14 + $0x40] sm:$0xff]
      %v3857 = vld [vmem:[%s14 + $0x48] sm:$0xff]
      %v3858 = vld [vmem:[%s14 + $0x50] sm:$0xff]
      %v3859 = vld [vmem:[%s14 + $0x58] sm:$0xff]
      %v3860 = vld [vmem:[%s14 + $0x60] sm:$0xff]
      %v3861 = vld [vmem:[%s14 + $0x68] sm:$0xff]
      %v3862 = vld [vmem:[%s14 + $0x70] sm:$0xff]
      %v3863 = vld [vmem:[%s14 + $0x78] sm:$0xff]
      %v3864 = vld [vmem:[%s14 + $0x80] sm:$0xff]
      %v3865 = vld [vmem:[%s14 + $0x88] sm:$0xff]
      %v3866 = vld [vmem:[%s14 + $0x90] sm:$0xff]
      %v3867 = vld [vmem:[%s14 + $0x98] sm:$0xff]
      %v3868 = vld [vmem:[%s14 + $0xa0] sm:$0xff]
      %v3869 = vld [vmem:[%s14 + $0xa8] sm:$0xff]
      %v3870 = vld [vmem:[%s14 + $0xb0] sm:$0xff]
      %v3871 = vld [vmem:[%s14 + $0xb8] sm:$0xff]
      %v3872 = vld [vmem:[%s14 + $0xc0] sm:$0xff]
      %v3873 = vld [vmem:[%s14 + $0xc8] sm:$0xff]
      %v3874 = vld [vmem:[%s14 + $0xd0] sm:$0xff]
      %v3875 = vld [vmem:[%s14 + $0xd8] sm:$0xff]
      %v3876 = vld [vmem:[%s14 + $0xe0] sm:$0xff]
      %v3877 = vld [vmem:[%s14 + $0xe8] sm:$0xff]
      %v3878 = vld [vmem:[%s14 + $0xf0] sm:$0xff]
      %v3879 = vld [vmem:[%s14 + $0xf8] sm:$0xff]
      %v3880 = vld [vmem:[%s14 + $0x100] sm:$0xff]
      %v3881 = vld [vmem:[%s14 + $0x108] sm:$0xff]
      %v3882 = vld [vmem:[%s14 + $0x110] sm:$0xff]
      %v3883 = vld [vmem:[%s14 + $0x118] sm:$0xff]
      %v3884 = vld [vmem:[%s14 + $0x120] sm:$0xff]
      %v3885 = vld [vmem:[%s14 + $0x128] sm:$0xff]
      %v3886 = vld [vmem:[%s14 + $0x130] sm:$0xff]
      %v3887 = vld [vmem:[%s14 + $0x138] sm:$0xff]
      %v3888 = vld [vmem:[%s14 + $0x140] sm:$0xff]
      %v3889 = vld [vmem:[%s14 + $0x148] sm:$0xff]
      %v3890 = vld [vmem:[%s14 + $0x150] sm:$0xff]
      %v3891 = vld [vmem:[%s14 + $0x158] sm:$0xff]
      %v3892 = vld [vmem:[%s14 + $0x160] sm:$0xff]
      %v3893 = vld [vmem:[%s14 + $0x168] sm:$0xff]
      %v3894 = vld [vmem:[%s14 + $0x170] sm:$0xff]
      %v3895 = vld [vmem:[%s14 + $0x178] sm:$0xff]
      %v3896 = vld [vmem:[%s14 + $0x180] sm:$0xff]
      %v3897 = vld [vmem:[%s14 + $0x188] sm:$0xff]
      %v3898 = vld [vmem:[%s14 + $0x190] sm:$0xff]
      %v3899 = vld [vmem:[%s14 + $0x198] sm:$0xff]
      %v3900 = vld [vmem:[%s14 + $0x1a0] sm:$0xff]
      %v3901 = vld [vmem:[%s14 + $0x1a8] sm:$0xff]
      %v3902 = vld [vmem:[%s14 + $0x1b0] sm:$0xf]
      %v3903 = vld [vmem:[%s14 + $0x1b8] sm:$0xf]
      %s3904 = scalar_lea.vmem %s13, 24
      %v3905 = vld [vmem:[%s3904] sm:$0xff]
      %v3906 = vld [vmem:[%s3904 + $0x8] sm:$0xff]
      %v3907 = vld [vmem:[%s3904 + $0x10] sm:$0xff]
      %v3909 = vsel %vm2387, %v3905, 0
      %v3912 = vsel %vm2387, %v3906, 0
      %v3915 = vsel %vm2387, %v3907, 0
      %3917 = vmatprep.subr.mxu0 %v3744
      %3918 = vmatpush1.msra.mxu0 %v3743
      %3919 = vmatprep.subr.mxu0 %v3763
      %3920 = vmatpush1.msra.mxu0 %v3760
      %3921 = vmatprep.subr.mxu0 0.0
      %3922 = vmatpush1.msra.mxu0 0.0
      %3923 = vmatprep.subr.mxu0 0.0
      %3924 = vmatpush1.msra.mxu0 0.0
      %3925 = vmatprep.subr.mxu0 0.0
      %3926 = vmatpush1.msra.mxu0 0.0
      %3927 = vmatprep.subr.mxu0 0.0
      %3928 = vmatpush1.msra.mxu0 0.0
      %3929 = vmatprep.subr.mxu0 0.0
      %3930 = vmatpush1.msra.mxu0 0.0
      %3931 = vmatprep.subr.mxu0 0.0
      %3932 = vmatpush1.msra.mxu0 0.0
      %3933 = vmatprep.subr.mxu0 0.0
      %3934 = vmatpush1.msra.mxu0 0.0
      %3935 = vmatprep.subr.mxu0 0.0
      %3936 = vmatpush1.msra.mxu0 0.0
      %3937 = vmatprep.subr.mxu0 0.0
      %3938 = vmatpush1.msra.mxu0 0.0
      %3939 = vmatprep.subr.mxu0 0.0
      %3940 = vmatpush1.msra.mxu0 0.0
      %3941 = vmatprep.subr.mxu0 0.0
      %3942 = vmatpush1.msra.mxu0 0.0
      %3943 = vmatprep.subr.mxu0 0.0
      %3944 = vmatpush1.msra.mxu0 0.0
      %3945 = vmatprep.subr.mxu0 0.0
      %3946 = vmatpush1.msra.mxu0 0.0
      %3947 = vmatprep.subr.mxu0 0.0
      %3948 = vmatpush1.msra.mxu0 0.0
      %3949 = vmatprep.subr.mxu0 0.0
      %3950 = vmatpush1.msra.mxu0 0.0
      %3951 = vmatprep.subr.mxu0 0.0
      %3952 = vmatpush1.msra.mxu0 0.0
      %3953 = vmatprep.subr.mxu0 0.0
      %3954 = vmatpush1.msra.mxu0 0.0
      %3955 = vmatprep.subr.mxu0 0.0
      %3956 = vmatpush1.msra.mxu0 0.0
      %3957 = vmatprep.subr.mxu0 0.0
      %3958 = vmatpush1.msra.mxu0 0.0
      %3959 = vmatprep.subr.mxu0 0.0
      %3960 = vmatpush1.msra.mxu0 0.0
      %3961 = vmatprep.subr.mxu0 0.0
      %3962 = vmatpush1.msra.mxu0 0.0
      %3963 = vmatprep.subr.mxu0 0.0
      %3964 = vmatpush1.msra.mxu0 0.0
      %3965 = vmatprep.subr.mxu0 0.0
      %3966 = vmatpush1.msra.mxu0 0.0
      %3967 = vmatprep.subr.mxu0 0.0
      %3968 = vmatpush1.msra.mxu0 0.0
      %3969 = vmatprep.subr.mxu0 0.0
      %3970 = vmatpush1.msra.mxu0 0.0
      %3971 = vmatprep.subr.mxu0 0.0
      %3972 = vmatpush1.msra.mxu0 0.0
      %3973 = vmatprep.subr.mxu0 0.0
      %3974 = vmatpush1.msra.mxu0 0.0
      %3975 = vmatprep.subr.mxu0 0.0
      %3976 = vmatpush1.msra.mxu0 0.0
      %3977 = vmatprep.subr.mxu0 0.0
      %3978 = vmatpush1.msra.mxu0 0.0
      %3979 = vmatprep.subr.mxu0 0.0
      %3980 = vmatpush1.msra.mxu0 0.0
      %3981 = vmatprep.mubr.f32.mxu0 0.0
      %3982 = vmatmul.mubr.f32.gmra.mrb[0].mxu0 %v3909
      %v3983 = vpop.f32.mrb[0].mxu0
      %v3984 = vadd.f32 0.0, %v3983
      %v3985 = vpop.f32.mrb[0].mxu0
      %v3986 = vadd.f32 0.0, %v3985
      %3987 = vmatprep.mubr.f32.mxu0 0.0
      %3988 = vmatmul.mubr.f32.gmra.mrb[0].mxu0 %v3912
      %v3989 = vpop.f32.mrb[0].mxu0
      %v3990 = vadd.f32 0.0, %v3989
      %v3991 = vpop.f32.mrb[0].mxu0
      %v3992 = vadd.f32 0.0, %v3991
      %3993 = vmatprep.mubr.f32.mxu0 0.0
      %3994 = vmatmul.mubr.f32.gmra.mrb[0].mxu0 %v3915
      %v3995 = vpop.f32.mrb[0].mxu0
      %v3996 = vadd.f32 0.0, %v3995
      %v3997 = vpop.f32.mrb[0].mxu0
      %v3998 = vadd.f32 0.0, %v3997
      %3999 = vdwg.mxu0
      %s4000 = scalar_lea.vmem %s14, 448
      %v4001 = vld [vmem:[%s4000] sm:$0xff]
      %v4002 = vld [vmem:[%s4000 + $0x8] sm:$0xff]
      %v4003 = vld [vmem:[%s4000 + $0x10] sm:$0xff]
      %v4004 = vld [vmem:[%s4000 + $0x18] sm:$0xff]
      %v4005 = vld [vmem:[%s4000 + $0x20] sm:$0xff]
      %v4006 = vld [vmem:[%s4000 + $0x28] sm:$0xff]
      %v4007 = vld [vmem:[%s4000 + $0x30] sm:$0xff]
      %v4008 = vld [vmem:[%s4000 + $0x38] sm:$0xff]
      %v4009 = vld [vmem:[%s4000 + $0x40] sm:$0xff]
      %v4010 = vld [vmem:[%s4000 + $0x48] sm:$0xff]
      %v4011 = vld [vmem:[%s4000 + $0x50] sm:$0xff]
      %v4012 = vld [vmem:[%s4000 + $0x58] sm:$0xff]
      %v4013 = vld [vmem:[%s4000 + $0x60] sm:$0xff]
      %v4014 = vld [vmem:[%s4000 + $0x68] sm:$0xff]
      %v4015 = vld [vmem:[%s4000 + $0x70] sm:$0xff]
      %v4016 = vld [vmem:[%s4000 + $0x78] sm:$0xff]
      %v4017 = vld [vmem:[%s4000 + $0x80] sm:$0xff]
      %v4018 = vld [vmem:[%s4000 + $0x88] sm:$0xff]
      %v4019 = vld [vmem:[%s4000 + $0x90] sm:$0xff]
      %v4020 = vld [vmem:[%s4000 + $0x98] sm:$0xff]
      %v4021 = vld [vmem:[%s4000 + $0xa0] sm:$0xff]
      %v4022 = vld [vmem:[%s4000 + $0xa8] sm:$0xff]
      %v4023 = vld [vmem:[%s4000 + $0xb0] sm:$0xff]
      %v4024 = vld [vmem:[%s4000 + $0xb8] sm:$0xff]
      %v4025 = vld [vmem:[%s4000 + $0xc0] sm:$0xff]
      %v4026 = vld [vmem:[%s4000 + $0xc8] sm:$0xff]
      %v4027 = vld [vmem:[%s4000 + $0xd0] sm:$0xff]
      %v4028 = vld [vmem:[%s4000 + $0xd8] sm:$0xff]
      %v4029 = vld [vmem:[%s4000 + $0xe0] sm:$0xff]
      %v4030 = vld [vmem:[%s4000 + $0xe8] sm:$0xff]
      %v4031 = vld [vmem:[%s4000 + $0xf0] sm:$0xff]
      %v4032 = vld [vmem:[%s4000 + $0xf8] sm:$0xff]
      %v4033 = vld [vmem:[%s4000 + $0x100] sm:$0xff]
      %v4034 = vld [vmem:[%s4000 + $0x108] sm:$0xff]
      %v4035 = vld [vmem:[%s4000 + $0x110] sm:$0xff]
      %v4036 = vld [vmem:[%s4000 + $0x118] sm:$0xff]
      %v4037 = vld [vmem:[%s4000 + $0x120] sm:$0xff]
      %v4038 = vld [vmem:[%s4000 + $0x128] sm:$0xff]
      %v4039 = vld [vmem:[%s4000 + $0x130] sm:$0xff]
      %v4040 = vld [vmem:[%s4000 + $0x138] sm:$0xff]
      %v4041 = vld [vmem:[%s4000 + $0x140] sm:$0xff]
      %v4042 = vld [vmem:[%s4000 + $0x148] sm:$0xff]
      %v4043 = vld [vmem:[%s4000 + $0x150] sm:$0xff]
      %v4044 = vld [vmem:[%s4000 + $0x158] sm:$0xff]
      %v4045 = vld [vmem:[%s4000 + $0x160] sm:$0xff]
      %v4046 = vld [vmem:[%s4000 + $0x168] sm:$0xff]
      %v4047 = vld [vmem:[%s4000 + $0x170] sm:$0xff]
      %v4048 = vld [vmem:[%s4000 + $0x178] sm:$0xff]
      %v4049 = vld [vmem:[%s4000 + $0x180] sm:$0xff]
      %v4050 = vld [vmem:[%s4000 + $0x188] sm:$0xff]
      %v4051 = vld [vmem:[%s4000 + $0x190] sm:$0xff]
      %v4052 = vld [vmem:[%s4000 + $0x198] sm:$0xff]
      %v4053 = vld [vmem:[%s4000 + $0x1a0] sm:$0xff]
      %v4054 = vld [vmem:[%s4000 + $0x1a8] sm:$0xff]
      %v4055 = vld [vmem:[%s4000 + $0x1b0] sm:$0xf]
      %v4056 = vld [vmem:[%s4000 + $0x1b8] sm:$0xf]
      %v4058 = vsel %vm2658, %v3986, 0
      %v4061 = vsel %vm2658, %v3992, 0
      %v4064 = vsel %vm2658, %v3998, 0
      %v4067 = vsel %vm2391, %v4055, 0
      %v4070 = vsel %vm2391, %v4056, 0
      %4072 = vmatprep.subr.mxu0 %v4002
      %4073 = vmatpush1.msra.mxu0 %v4001
      %4074 = vmatprep.subr.mxu0 %v4004
      %4075 = vmatpush1.msra.mxu0 %v4003
      %4076 = vmatprep.subr.mxu0 %v4006
      %4077 = vmatpush1.msra.mxu0 %v4005
      %4078 = vmatprep.subr.mxu0 %v4008
      %4079 = vmatpush1.msra.mxu0 %v4007
      %4080 = vmatprep.subr.mxu0 %v4010
      %4081 = vmatpush1.msra.mxu0 %v4009
      %4082 = vmatprep.subr.mxu0 %v4012
      %4083 = vmatpush1.msra.mxu0 %v4011
      %4084 = vmatprep.subr.mxu0 %v4014
      %4085 = vmatpush1.msra.mxu0 %v4013
      %4086 = vmatprep.subr.mxu0 %v4016
      %4087 = vmatpush1.msra.mxu0 %v4015
      %4088 = vmatprep.subr.mxu0 %v4018
      %4089 = vmatpush1.msra.mxu0 %v4017
      %4090 = vmatprep.subr.mxu0 %v4020
      %4091 = vmatpush1.msra.mxu0 %v4019
      %4092 = vmatprep.subr.mxu0 %v4022
      %4093 = vmatpush1.msra.mxu0 %v4021
      %4094 = vmatprep.subr.mxu0 %v4024
      %4095 = vmatpush1.msra.mxu0 %v4023
      %4096 = vmatprep.subr.mxu0 %v4026
      %4097 = vmatpush1.msra.mxu0 %v4025
      %4098 = vmatprep.subr.mxu0 %v4028
      %4099 = vmatpush1.msra.mxu0 %v4027
      %4100 = vmatprep.subr.mxu0 %v4030
      %4101 = vmatpush1.msra.mxu0 %v4029
      %4102 = vmatprep.subr.mxu0 %v4032
      %4103 = vmatpush1.msra.mxu0 %v4031
      %4104 = vmatprep.subr.mxu0 %v4034
      %4105 = vmatpush1.msra.mxu0 %v4033
      %4106 = vmatprep.subr.mxu0 %v4036
      %4107 = vmatpush1.msra.mxu0 %v4035
      %4108 = vmatprep.subr.mxu0 %v4038
      %4109 = vmatpush1.msra.mxu0 %v4037
      %4110 = vmatprep.subr.mxu0 %v4040
      %4111 = vmatpush1.msra.mxu0 %v4039
      %4112 = vmatprep.subr.mxu0 %v4042
      %4113 = vmatpush1.msra.mxu0 %v4041
      %4114 = vmatprep.subr.mxu0 %v4044
      %4115 = vmatpush1.msra.mxu0 %v4043
      %4116 = vmatprep.subr.mxu0 %v4046
      %4117 = vmatpush1.msra.mxu0 %v4045
      %4118 = vmatprep.subr.mxu0 %v4048
      %4119 = vmatpush1.msra.mxu0 %v4047
      %4120 = vmatprep.subr.mxu0 %v4050
      %4121 = vmatpush1.msra.mxu0 %v4049
      %4122 = vmatprep.subr.mxu0 %v4052
      %4123 = vmatpush1.msra.mxu0 %v4051
      %4124 = vmatprep.subr.mxu0 %v4054
      %4125 = vmatpush1.msra.mxu0 %v4053
      %4126 = vmatprep.subr.mxu0 %v4070
      %4127 = vmatpush1.msra.mxu0 %v4067
      %4128 = vmatprep.subr.mxu0 0.0
      %4129 = vmatpush1.msra.mxu0 0.0
      %4130 = vmatprep.subr.mxu0 0.0
      %4131 = vmatpush1.msra.mxu0 0.0
      %4132 = vmatprep.subr.mxu0 0.0
      %4133 = vmatpush1.msra.mxu0 0.0
      %4134 = vmatprep.subr.mxu0 0.0
      %4135 = vmatpush1.msra.mxu0 0.0
      %4136 = vmatprep.mubr.f32.mxu0 %v4058
      %4137 = vmatmul.mubr.f32.gmra.mrb[0].mxu0 %v3984
      %v4138 = vpop.f32.mrb[0].mxu0
      %v4139 = vadd.f32 0.0, %v4138
      %v4140 = vpop.f32.mrb[0].mxu0
      %v4141 = vadd.f32 0.0, %v4140
      %4142 = vmatprep.mubr.f32.mxu0 %v4061
      %4143 = vmatmul.mubr.f32.gmra.mrb[0].mxu0 %v3990
      %v4144 = vpop.f32.mrb[0].mxu0
      %v4145 = vadd.f32 0.0, %v4144
      %v4146 = vpop.f32.mrb[0].mxu0
      %v4147 = vadd.f32 0.0, %v4146
      %4148 = vmatprep.mubr.f32.mxu0 %v4064
      %4149 = vmatmul.mubr.f32.gmra.mrb[0].mxu0 %v3996
      %v4150 = vpop.f32.mrb[0].mxu0
      %v4151 = vadd.f32 0.0, %v4150
      %v4152 = vpop.f32.mrb[0].mxu0
      %v4153 = vadd.f32 0.0, %v4152
      %4154 = vdwg.mxu0
      %v4156 = vsel %vm2658, %v3834, 0
      %v4159 = vsel %vm2658, %v3840, 0
      %v4162 = vsel %vm2658, %v3846, 0
      %v4165 = vsel %vm2391, %v3902, 0
      %v4168 = vsel %vm2391, %v3903, 0
      %4170 = vmatprep.subr.mxu0 %v3849
      %4171 = vmatpush1.msra.mxu0 %v3848
      %4172 = vmatprep.subr.mxu0 %v3851
      %4173 = vmatpush1.msra.mxu0 %v3850
      %4174 = vmatprep.subr.mxu0 %v3853
      %4175 = vmatpush1.msra.mxu0 %v3852
      %4176 = vmatprep.subr.mxu0 %v3855
      %4177 = vmatpush1.msra.mxu0 %v3854
      %4178 = vmatprep.subr.mxu0 %v3857
      %4179 = vmatpush1.msra.mxu0 %v3856
      %4180 = vmatprep.subr.mxu0 %v3859
      %4181 = vmatpush1.msra.mxu0 %v3858
      %4182 = vmatprep.subr.mxu0 %v3861
      %4183 = vmatpush1.msra.mxu0 %v3860
      %4184 = vmatprep.subr.mxu0 %v3863
      %4185 = vmatpush1.msra.mxu0 %v3862
      %4186 = vmatprep.subr.mxu0 %v3865
      %4187 = vmatpush1.msra.mxu0 %v3864
      %4188 = vmatprep.subr.mxu0 %v3867
      %4189 = vmatpush1.msra.mxu0 %v3866
      %4190 = vmatprep.subr.mxu0 %v3869
      %4191 = vmatpush1.msra.mxu0 %v3868
      %4192 = vmatprep.subr.mxu0 %v3871
      %4193 = vmatpush1.msra.mxu0 %v3870
      %4194 = vmatprep.subr.mxu0 %v3873
      %4195 = vmatpush1.msra.mxu0 %v3872
      %4196 = vmatprep.subr.mxu0 %v3875
      %4197 = vmatpush1.msra.mxu0 %v3874
      %4198 = vmatprep.subr.mxu0 %v3877
      %4199 = vmatpush1.msra.mxu0 %v3876
      %4200 = vmatprep.subr.mxu0 %v3879
      %4201 = vmatpush1.msra.mxu0 %v3878
      %4202 = vmatprep.subr.mxu0 %v3881
      %4203 = vmatpush1.msra.mxu0 %v3880
      %4204 = vmatprep.subr.mxu0 %v3883
      %4205 = vmatpush1.msra.mxu0 %v3882
      %4206 = vmatprep.subr.mxu0 %v3885
      %4207 = vmatpush1.msra.mxu0 %v3884
      %4208 = vmatprep.subr.mxu0 %v3887
      %4209 = vmatpush1.msra.mxu0 %v3886
      %4210 = vmatprep.subr.mxu0 %v3889
      %4211 = vmatpush1.msra.mxu0 %v3888
      %4212 = vmatprep.subr.mxu0 %v3891
      %4213 = vmatpush1.msra.mxu0 %v3890
      %4214 = vmatprep.subr.mxu0 %v3893
      %4215 = vmatpush1.msra.mxu0 %v3892
      %4216 = vmatprep.subr.mxu0 %v3895
      %4217 = vmatpush1.msra.mxu0 %v3894
      %4218 = vmatprep.subr.mxu0 %v3897
      %4219 = vmatpush1.msra.mxu0 %v3896
      %4220 = vmatprep.subr.mxu0 %v3899
      %4221 = vmatpush1.msra.mxu0 %v3898
      %4222 = vmatprep.subr.mxu0 %v3901
      %4223 = vmatpush1.msra.mxu0 %v3900
      %4224 = vmatprep.subr.mxu0 %v4168
      %4225 = vmatpush1.msra.mxu0 %v4165
      %4226 = vmatprep.subr.mxu0 0.0
      %4227 = vmatpush1.msra.mxu0 0.0
      %4228 = vmatprep.subr.mxu0 0.0
      %4229 = vmatpush1.msra.mxu0 0.0
      %4230 = vmatprep.subr.mxu0 0.0
      %4231 = vmatpush1.msra.mxu0 0.0
      %4232 = vmatprep.subr.mxu0 0.0
      %4233 = vmatpush1.msra.mxu0 0.0
      %4234 = vmatprep.mubr.f32.mxu0 %v4156
      %4235 = vmatmul.mubr.f32.gmra.mrb[0].mxu0 %v3832
      %v4236 = vpop.f32.mrb[0].mxu0
      %v4237 = vadd.f32 %v4139, %v4236
      %v4238 = vpop.f32.mrb[0].mxu0
      %v4239 = vadd.f32 %v4141, %v4238
      %4240 = vmatprep.mubr.f32.mxu0 %v4159
      %4241 = vmatmul.mubr.f32.gmra.mrb[0].mxu0 %v3838
      %v4242 = vpop.f32.mrb[0].mxu0
      %v4243 = vadd.f32 %v4145, %v4242
      %v4244 = vpop.f32.mrb[0].mxu0
      %v4245 = vadd.f32 %v4147, %v4244
      %4246 = vmatprep.mubr.f32.mxu0 %v4162
      %4247 = vmatmul.mubr.f32.gmra.mrb[0].mxu0 %v3844
      %v4248 = vpop.f32.mrb[0].mxu0
      %v4249 = vadd.f32 %v4151, %v4248
      %v4250 = vpop.f32.mrb[0].mxu0
      %v4251 = vadd.f32 %v4153, %v4250
      %4252 = vdwg.mxu0
      %s4253 = scalar_lea.vmem %s13, 48
      %v4254 = vld [vmem:[%s4253] sm:$0xff]
      %v4255 = vld [vmem:[%s4253 + $0x8] sm:$0xff]
      %v4256 = vld [vmem:[%s4253 + $0x10] sm:$0xff]
      %v4258 = vsel %vm2387, %v4254, 0
      %v4261 = vsel %vm2387, %v4255, 0
      %v4264 = vsel %vm2387, %v4256, 0
      %4266 = vmatprep.subr.mxu0 %v3744
      %4267 = vmatpush1.msra.mxu0 %v3743
      %4268 = vmatprep.subr.mxu0 %v3763
      %4269 = vmatpush1.msra.mxu0 %v3760
      %4270 = vmatprep.subr.mxu0 0.0
      %4271 = vmatpush1.msra.mxu0 0.0
      %4272 = vmatprep.subr.mxu0 0.0
      %4273 = vmatpush1.msra.mxu0 0.0
      %4274 = vmatprep.subr.mxu0 0.0
      %4275 = vmatpush1.msra.mxu0 0.0
      %4276 = vmatprep.subr.mxu0 0.0
      %4277 = vmatpush1.msra.mxu0 0.0
      %4278 = vmatprep.subr.mxu0 0.0
      %4279 = vmatpush1.msra.mxu0 0.0
      %4280 = vmatprep.subr.mxu0 0.0
      %4281 = vmatpush1.msra.mxu0 0.0
      %4282 = vmatprep.subr.mxu0 0.0
      %4283 = vmatpush1.msra.mxu0 0.0
      %4284 = vmatprep.subr.mxu0 0.0
      %4285 = vmatpush1.msra.mxu0 0.0
      %4286 = vmatprep.subr.mxu0 0.0
      %4287 = vmatpush1.msra.mxu0 0.0
      %4288 = vmatprep.subr.mxu0 0.0
      %4289 = vmatpush1.msra.mxu0 0.0
      %4290 = vmatprep.subr.mxu0 0.0
      %4291 = vmatpush1.msra.mxu0 0.0
      %4292 = vmatprep.subr.mxu0 0.0
      %4293 = vmatpush1.msra.mxu0 0.0
      %4294 = vmatprep.subr.mxu0 0.0
      %4295 = vmatpush1.msra.mxu0 0.0
      %4296 = vmatprep.subr.mxu0 0.0
      %4297 = vmatpush1.msra.mxu0 0.0
      %4298 = vmatprep.subr.mxu0 0.0
      %4299 = vmatpush1.msra.mxu0 0.0
      %4300 = vmatprep.subr.mxu0 0.0
      %4301 = vmatpush1.msra.mxu0 0.0
      %4302 = vmatprep.subr.mxu0 0.0
      %4303 = vmatpush1.msra.mxu0 0.0
      %4304 = vmatprep.subr.mxu0 0.0
      %4305 = vmatpush1.msra.mxu0 0.0
      %4306 = vmatprep.subr.mxu0 0.0
      %4307 = vmatpush1.msra.mxu0 0.0
      %4308 = vmatprep.subr.mxu0 0.0
      %4309 = vmatpush1.msra.mxu0 0.0
      %4310 = vmatprep.subr.mxu0 0.0
      %4311 = vmatpush1.msra.mxu0 0.0
      %4312 = vmatprep.subr.mxu0 0.0
      %4313 = vmatpush1.msra.mxu0 0.0
      %4314 = vmatprep.subr.mxu0 0.0
      %4315 = vmatpush1.msra.mxu0 0.0
      %4316 = vmatprep.subr.mxu0 0.0
      %4317 = vmatpush1.msra.mxu0 0.0
      %4318 = vmatprep.subr.mxu0 0.0
      %4319 = vmatpush1.msra.mxu0 0.0
      %4320 = vmatprep.subr.mxu0 0.0
      %4321 = vmatpush1.msra.mxu0 0.0
      %4322 = vmatprep.subr.mxu0 0.0
      %4323 = vmatpush1.msra.mxu0 0.0
      %4324 = vmatprep.subr.mxu0 0.0
      %4325 = vmatpush1.msra.mxu0 0.0
      %4326 = vmatprep.subr.mxu0 0.0
      %4327 = vmatpush1.msra.mxu0 0.0
      %4328 = vmatprep.subr.mxu0 0.0
      %4329 = vmatpush1.msra.mxu0 0.0
      %4330 = vmatprep.mubr.f32.mxu0 0.0
      %4331 = vmatmul.mubr.f32.gmra.mrb[0].mxu0 %v4258
      %v4332 = vpop.f32.mrb[0].mxu0
      %v4333 = vadd.f32 0.0, %v4332
      %v4334 = vpop.f32.mrb[0].mxu0
      %v4335 = vadd.f32 0.0, %v4334
      %4336 = vmatprep.mubr.f32.mxu0 0.0
      %4337 = vmatmul.mubr.f32.gmra.mrb[0].mxu0 %v4261
      %v4338 = vpop.f32.mrb[0].mxu0
      %v4339 = vadd.f32 0.0, %v4338
      %v4340 = vpop.f32.mrb[0].mxu0
      %v4341 = vadd.f32 0.0, %v4340
      %4342 = vmatprep.mubr.f32.mxu0 0.0
      %4343 = vmatmul.mubr.f32.gmra.mrb[0].mxu0 %v4264
      %v4344 = vpop.f32.mrb[0].mxu0
      %v4345 = vadd.f32 0.0, %v4344
      %v4346 = vpop.f32.mrb[0].mxu0
      %v4347 = vadd.f32 0.0, %v4346
      %4348 = vdwg.mxu0
      %s4349 = scalar_lea.vmem %s14, 896
      %v4350 = vld [vmem:[%s4349] sm:$0xff]
      %v4351 = vld [vmem:[%s4349 + $0x8] sm:$0xff]
      %v4352 = vld [vmem:[%s4349 + $0x10] sm:$0xff]
      %v4353 = vld [vmem:[%s4349 + $0x18] sm:$0xff]
      %v4354 = vld [vmem:[%s4349 + $0x20] sm:$0xff]
      %v4355 = vld [vmem:[%s4349 + $0x28] sm:$0xff]
      %v4356 = vld [vmem:[%s4349 + $0x30] sm:$0xff]
      %v4357 = vld [vmem:[%s4349 + $0x38] sm:$0xff]
      %v4358 = vld [vmem:[%s4349 + $0x40] sm:$0xff]
      %v4359 = vld [vmem:[%s4349 + $0x48] sm:$0xff]
      %v4360 = vld [vmem:[%s4349 + $0x50] sm:$0xff]
      %v4361 = vld [vmem:[%s4349 + $0x58] sm:$0xff]
      %v4362 = vld [vmem:[%s4349 + $0x60] sm:$0xff]
      %v4363 = vld [vmem:[%s4349 + $0x68] sm:$0xff]
      %v4364 = vld [vmem:[%s4349 + $0x70] sm:$0xff]
      %v4365 = vld [vmem:[%s4349 + $0x78] sm:$0xff]
      %v4366 = vld [vmem:[%s4349 + $0x80] sm:$0xff]
      %v4367 = vld [vmem:[%s4349 + $0x88] sm:$0xff]
      %v4368 = vld [vmem:[%s4349 + $0x90] sm:$0xff]
      %v4369 = vld [vmem:[%s4349 + $0x98] sm:$0xff]
      %v4370 = vld [vmem:[%s4349 + $0xa0] sm:$0xff]
      %v4371 = vld [vmem:[%s4349 + $0xa8] sm:$0xff]
      %v4372 = vld [vmem:[%s4349 + $0xb0] sm:$0xff]
      %v4373 = vld [vmem:[%s4349 + $0xb8] sm:$0xff]
      %v4374 = vld [vmem:[%s4349 + $0xc0] sm:$0xff]
      %v4375 = vld [vmem:[%s4349 + $0xc8] sm:$0xff]
      %v4376 = vld [vmem:[%s4349 + $0xd0] sm:$0xff]
      %v4377 = vld [vmem:[%s4349 + $0xd8] sm:$0xff]
      %v4378 = vld [vmem:[%s4349 + $0xe0] sm:$0xff]
      %v4379 = vld [vmem:[%s4349 + $0xe8] sm:$0xff]
      %v4380 = vld [vmem:[%s4349 + $0xf0] sm:$0xff]
      %v4381 = vld [vmem:[%s4349 + $0xf8] sm:$0xff]
      %v4382 = vld [vmem:[%s4349 + $0x100] sm:$0xff]
      %v4383 = vld [vmem:[%s4349 + $0x108] sm:$0xff]
      %v4384 = vld [vmem:[%s4349 + $0x110] sm:$0xff]
      %v4385 = vld [vmem:[%s4349 + $0x118] sm:$0xff]
      %v4386 = vld [vmem:[%s4349 + $0x120] sm:$0xff]
      %v4387 = vld [vmem:[%s4349 + $0x128] sm:$0xff]
      %v4388 = vld [vmem:[%s4349 + $0x130] sm:$0xff]
      %v4389 = vld [vmem:[%s4349 + $0x138] sm:$0xff]
      %v4390 = vld [vmem:[%s4349 + $0x140] sm:$0xff]
      %v4391 = vld [vmem:[%s4349 + $0x148] sm:$0xff]
      %v4392 = vld [vmem:[%s4349 + $0x150] sm:$0xff]
      %v4393 = vld [vmem:[%s4349 + $0x158] sm:$0xff]
      %v4394 = vld [vmem:[%s4349 + $0x160] sm:$0xff]
      %v4395 = vld [vmem:[%s4349 + $0x168] sm:$0xff]
      %v4396 = vld [vmem:[%s4349 + $0x170] sm:$0xff]
      %v4397 = vld [vmem:[%s4349 + $0x178] sm:$0xff]
      %v4398 = vld [vmem:[%s4349 + $0x180] sm:$0xff]
      %v4399 = vld [vmem:[%s4349 + $0x188] sm:$0xff]
      %v4400 = vld [vmem:[%s4349 + $0x190] sm:$0xff]
      %v4401 = vld [vmem:[%s4349 + $0x198] sm:$0xff]
      %v4402 = vld [vmem:[%s4349 + $0x1a0] sm:$0xff]
      %v4403 = vld [vmem:[%s4349 + $0x1a8] sm:$0xff]
      %v4404 = vld [vmem:[%s4349 + $0x1b0] sm:$0xf]
      %v4405 = vld [vmem:[%s4349 + $0x1b8] sm:$0xf]
      %v4407 = vsel %vm2658, %v4335, 0
      %v4410 = vsel %vm2658, %v4341, 0
      %v4413 = vsel %vm2658, %v4347, 0
      %v4416 = vsel %vm2391, %v4404, 0
      %v4419 = vsel %vm2391, %v4405, 0
      %4421 = vmatprep.subr.mxu0 %v4351
      %4422 = vmatpush1.msra.mxu0 %v4350
      %4423 = vmatprep.subr.mxu0 %v4353
      %4424 = vmatpush1.msra.mxu0 %v4352
      %4425 = vmatprep.subr.mxu0 %v4355
      %4426 = vmatpush1.msra.mxu0 %v4354
      %4427 = vmatprep.subr.mxu0 %v4357
      %4428 = vmatpush1.msra.mxu0 %v4356
      %4429 = vmatprep.subr.mxu0 %v4359
      %4430 = vmatpush1.msra.mxu0 %v4358
      %4431 = vmatprep.subr.mxu0 %v4361
      %4432 = vmatpush1.msra.mxu0 %v4360
      %4433 = vmatprep.subr.mxu0 %v4363
      %4434 = vmatpush1.msra.mxu0 %v4362
      %4435 = vmatprep.subr.mxu0 %v4365
      %4436 = vmatpush1.msra.mxu0 %v4364
      %4437 = vmatprep.subr.mxu0 %v4367
      %4438 = vmatpush1.msra.mxu0 %v4366
      %4439 = vmatprep.subr.mxu0 %v4369
      %4440 = vmatpush1.msra.mxu0 %v4368
      %4441 = vmatprep.subr.mxu0 %v4371
      %4442 = vmatpush1.msra.mxu0 %v4370
      %4443 = vmatprep.subr.mxu0 %v4373
      %4444 = vmatpush1.msra.mxu0 %v4372
      %4445 = vmatprep.subr.mxu0 %v4375
      %4446 = vmatpush1.msra.mxu0 %v4374
      %4447 = vmatprep.subr.mxu0 %v4377
      %4448 = vmatpush1.msra.mxu0 %v4376
      %4449 = vmatprep.subr.mxu0 %v4379
      %4450 = vmatpush1.msra.mxu0 %v4378
      %4451 = vmatprep.subr.mxu0 %v4381
      %4452 = vmatpush1.msra.mxu0 %v4380
      %4453 = vmatprep.subr.mxu0 %v4383
      %4454 = vmatpush1.msra.mxu0 %v4382
      %4455 = vmatprep.subr.mxu0 %v4385
      %4456 = vmatpush1.msra.mxu0 %v4384
      %4457 = vmatprep.subr.mxu0 %v4387
      %4458 = vmatpush1.msra.mxu0 %v4386
      %4459 = vmatprep.subr.mxu0 %v4389
      %4460 = vmatpush1.msra.mxu0 %v4388
      %4461 = vmatprep.subr.mxu0 %v4391
      %4462 = vmatpush1.msra.mxu0 %v4390
      %4463 = vmatprep.subr.mxu0 %v4393
      %4464 = vmatpush1.msra.mxu0 %v4392
      %4465 = vmatprep.subr.mxu0 %v4395
      %4466 = vmatpush1.msra.mxu0 %v4394
      %4467 = vmatprep.subr.mxu0 %v4397
      %4468 = vmatpush1.msra.mxu0 %v4396
      %4469 = vmatprep.subr.mxu0 %v4399
      %4470 = vmatpush1.msra.mxu0 %v4398
      %4471 = vmatprep.subr.mxu0 %v4401
      %4472 = vmatpush1.msra.mxu0 %v4400
      %4473 = vmatprep.subr.mxu0 %v4403
      %4474 = vmatpush1.msra.mxu0 %v4402
      %4475 = vmatprep.subr.mxu0 %v4419
      %4476 = vmatpush1.msra.mxu0 %v4416
      %4477 = vmatprep.subr.mxu0 0.0
      %4478 = vmatpush1.msra.mxu0 0.0
      %4479 = vmatprep.subr.mxu0 0.0
      %4480 = vmatpush1.msra.mxu0 0.0
      %4481 = vmatprep.subr.mxu0 0.0
      %4482 = vmatpush1.msra.mxu0 0.0
      %4483 = vmatprep.subr.mxu0 0.0
      %4484 = vmatpush1.msra.mxu0 0.0
      %4485 = vmatprep.mubr.f32.mxu0 %v4407
      %4486 = vmatmul.mubr.f32.gmra.mrb[0].mxu0 %v4333
      %v4487 = vpop.f32.mrb[0].mxu0
      %v4488 = vadd.f32 0.0, %v4487
      %v4489 = vpop.f32.mrb[0].mxu0
      %v4490 = vadd.f32 0.0, %v4489
      %4491 = vmatprep.mubr.f32.mxu0 %v4410
      %4492 = vmatmul.mubr.f32.gmra.mrb[0].mxu0 %v4339
      %v4493 = vpop.f32.mrb[0].mxu0
      %v4494 = vadd.f32 0.0, %v4493
      %v4495 = vpop.f32.mrb[0].mxu0
      %v4496 = vadd.f32 0.0, %v4495
      %4497 = vmatprep.mubr.f32.mxu0 %v4413
      %4498 = vmatmul.mubr.f32.gmra.mrb[0].mxu0 %v4345
      %v4499 = vpop.f32.mrb[0].mxu0
      %v4500 = vadd.f32 0.0, %v4499
      %v4501 = vpop.f32.mrb[0].mxu0
      %v4502 = vadd.f32 0.0, %v4501
      %4503 = vdwg.mxu0
      %v4504 = vadd.f32 %v4237, %v4488
      %v4505 = vadd.f32 %v4239, %v4490
      %v4506 = vadd.f32 %v4243, %v4494
      %v4507 = vadd.f32 %v4245, %v4496
      %v4508 = vadd.f32 %v4249, %v4500
      %v4509 = vadd.f32 %v4251, %v4502
      %v4510 = vld [vmem:[%s15] sm:$0x3]
      %v4512 = vlaneseq
      %v4513 = vshrl.u32 %v4512, 7
      %v4514 = vsub.s32 0, %v4513
      %v4515 = vrot.slane %v4510, %v4514
      %v4516 = vlaneseq
      %v4517 = vshrl.u32 %v4516, 7
      %v4518 = vsub.s32 1, %v4517
      %v4519 = vrot.slane %v4510, %v4518
      %v4522 = vadd.f32 %v4504, %v4515
      %v4523 = vadd.f32 %v4505, %v4519
      %v4524 = vadd.f32 %v4506, %v4515
      %v4525 = vadd.f32 %v4507, %v4519
      %v4526 = vadd.f32 %v4508, %v4515
      %v4527 = vadd.f32 %v4509, %v4519
      %v4528 = vmax.f32 %v4522, 0.0
      %v4529 = vmax.f32 %v4523, 0.0
      %v4530 = vmax.f32 %v4524, 0.0
      %v4531 = vmax.f32 %v4525, 0.0
      %v4532 = vmax.f32 %v4526, 0.0
      %v4533 = vmax.f32 %v4527, 0.0
      %v4534 = vld [vmem:[%s16] sm:$0xff]
      %v4535 = vld [vmem:[%s16 + $0x8] sm:$0xff]
      %v4536 = vld [vmem:[%s16 + $0x10] sm:$0xff]
      %v4537 = vld [vmem:[%s16 + $0x18] sm:$0xff]
      %v4538 = vld [vmem:[%s16 + $0x20] sm:$0xff]
      %v4539 = vld [vmem:[%s16 + $0x28] sm:$0xff]
      %v4541 = vsel %vm1674, %v4534, 0
      %v4544 = vsel %vm1674, %v4535, 0
      %v4547 = vsel %vm1674, %v4536, 0
      %v4550 = vsel %vm1674, %v4537, 0
      %v4553 = vsel %vm1674, %v4538, 0
      %v4556 = vsel %vm1674, %v4539, 0
      %4558 = vmatprep.subr.mxu0 %v4529
      %4559 = vmatpush1.msra.mxu0 %v4528
      %4560 = vmatprep.subr.mxu0 %v4531
      %4561 = vmatpush1.msra.mxu0 %v4530
      %4562 = vmatprep.subr.mxu0 %v4533
      %4563 = vmatpush1.msra.mxu0 %v4532
      %4564 = vmatprep.subr.mxu0 0.0
      %4565 = vmatpush1.msra.mxu0 0.0
      %4566 = vmatprep.subr.mxu0 0.0
      %4567 = vmatpush1.msra.mxu0 0.0
      %4568 = vmatprep.subr.mxu0 0.0
      %4569 = vmatpush1.msra.mxu0 0.0
      %4570 = vmatprep.subr.mxu0 0.0
      %4571 = vmatpush1.msra.mxu0 0.0
      %4572 = vmatprep.subr.mxu0 0.0
      %4573 = vmatpush1.msra.mxu0 0.0
      %4574 = vmatprep.subr.mxu0 0.0
      %4575 = vmatpush1.msra.mxu0 0.0
      %4576 = vmatprep.subr.mxu0 0.0
      %4577 = vmatpush1.msra.mxu0 0.0
      %4578 = vmatprep.subr.mxu0 0.0
      %4579 = vmatpush1.msra.mxu0 0.0
      %4580 = vmatprep.subr.mxu0 0.0
      %4581 = vmatpush1.msra.mxu0 0.0
      %4582 = vmatprep.subr.mxu0 0.0
      %4583 = vmatpush1.msra.mxu0 0.0
      %4584 = vmatprep.subr.mxu0 0.0
      %4585 = vmatpush1.msra.mxu0 0.0
      %4586 = vmatprep.subr.mxu0 0.0
      %4587 = vmatpush1.msra.mxu0 0.0
      %4588 = vmatprep.subr.mxu0 0.0
      %4589 = vmatpush1.msra.mxu0 0.0
      %4590 = vmatprep.subr.mxu0 0.0
      %4591 = vmatpush1.msra.mxu0 0.0
      %4592 = vmatprep.subr.mxu0 0.0
      %4593 = vmatpush1.msra.mxu0 0.0
      %4594 = vmatprep.subr.mxu0 0.0
      %4595 = vmatpush1.msra.mxu0 0.0
      %4596 = vmatprep.subr.mxu0 0.0
      %4597 = vmatpush1.msra.mxu0 0.0
      %4598 = vmatprep.subr.mxu0 0.0
      %4599 = vmatpush1.msra.mxu0 0.0
      %4600 = vmatprep.subr.mxu0 0.0
      %4601 = vmatpush1.msra.mxu0 0.0
      %4602 = vmatprep.subr.mxu0 0.0
      %4603 = vmatpush1.msra.mxu0 0.0
      %4604 = vmatprep.subr.mxu0 0.0
      %4605 = vmatpush1.msra.mxu0 0.0
      %4606 = vmatprep.subr.mxu0 0.0
      %4607 = vmatpush1.msra.mxu0 0.0
      %4608 = vmatprep.subr.mxu0 0.0
      %4609 = vmatpush1.msra.mxu0 0.0
      %4610 = vmatprep.subr.mxu0 0.0
      %4611 = vmatpush1.msra.mxu0 0.0
      %4612 = vmatprep.subr.mxu0 0.0
      %4613 = vmatpush1.msra.mxu0 0.0
      %4614 = vmatprep.subr.mxu0 0.0
      %4615 = vmatpush1.msra.mxu0 0.0
      %4616 = vmatprep.subr.mxu0 0.0
      %4617 = vmatpush1.msra.mxu0 0.0
      %4618 = vmatprep.subr.mxu0 0.0
      %4619 = vmatpush1.msra.mxu0 0.0
      %4620 = vmatprep.subr.mxu0 0.0
      %4621 = vmatpush1.msra.mxu0 0.0
      %4622 = vmatprep.mubr.f32.mxu0 0.0
      %4623 = vmatmul.mubr.f32.gmra.mrb[0].mxu0 %v4541
      %v4624 = vpop.f32.mrb[0].mxu0
      %v4625 = vadd.f32 0.0, %v4624
      %v4626 = vpop.f32.mrb[0].mxu0
      %v4627 = vadd.f32 0.0, %v4626
      %4628 = vmatprep.mubr.f32.mxu0 0.0
      %4629 = vmatmul.mubr.f32.gmra.mrb[0].mxu0 %v4544
      %v4630 = vpop.f32.mrb[0].mxu0
      %v4631 = vadd.f32 0.0, %v4630
      %v4632 = vpop.f32.mrb[0].mxu0
      %v4633 = vadd.f32 0.0, %v4632
      %4634 = vmatprep.mubr.f32.mxu0 0.0
      %4635 = vmatmul.mubr.f32.gmra.mrb[0].mxu0 %v4547
      %v4636 = vpop.f32.mrb[0].mxu0
      %v4637 = vadd.f32 0.0, %v4636
      %v4638 = vpop.f32.mrb[0].mxu0
      %v4639 = vadd.f32 0.0, %v4638
      %4640 = vmatprep.mubr.f32.mxu0 0.0
      %4641 = vmatmul.mubr.f32.gmra.mrb[0].mxu0 %v4550
      %v4642 = vpop.f32.mrb[0].mxu0
      %v4643 = vadd.f32 0.0, %v4642
      %v4644 = vpop.f32.mrb[0].mxu0
      %v4645 = vadd.f32 0.0, %v4644
      %4646 = vmatprep.mubr.f32.mxu0 0.0
      %4647 = vmatmul.mubr.f32.gmra.mrb[0].mxu0 %v4553
      %v4648 = vpop.f32.mrb[0].mxu0
      %v4649 = vadd.f32 0.0, %v4648
      %v4650 = vpop.f32.mrb[0].mxu0
      %v4651 = vadd.f32 0.0, %v4650
      %4652 = vmatprep.mubr.f32.mxu0 0.0
      %4653 = vmatmul.mubr.f32.gmra.mrb[0].mxu0 %v4556
      %v4654 = vpop.f32.mrb[0].mxu0
      %v4655 = vadd.f32 0.0, %v4654
      %v4656 = vpop.f32.mrb[0].mxu0
      %v4657 = vadd.f32 0.0, %v4656
      %4658 = vdwg.mxu0
      %v4659 = vld [vmem:[%s17] sm:$0xff]
      %v4660 = vld [vmem:[%s17 + $0x8] sm:$0xff]
      %v4661 = vld [vmem:[%s17 + $0x10] sm:$0xff]
      %v4662 = vld [vmem:[%s17 + $0x18] sm:$0xff]
      %v4663 = vld [vmem:[%s17 + $0x20] sm:$0xff]
      %v4664 = vld [vmem:[%s17 + $0x28] sm:$0xff]
      %v4665 = vld [vmem:[%s17 + $0x30] sm:$0xff]
      %v4666 = vld [vmem:[%s17 + $0x38] sm:$0xff]
      %v4667 = vld [vmem:[%s17 + $0x40] sm:$0xff]
      %v4668 = vld [vmem:[%s17 + $0x48] sm:$0xff]
      %v4669 = vld [vmem:[%s17 + $0x50] sm:$0xff]
      %v4670 = vld [vmem:[%s17 + $0x58] sm:$0xff]
      %v4671 = vld [vmem:[%s17 + $0x60] sm:$0xff]
      %v4672 = vld [vmem:[%s17 + $0x68] sm:$0xff]
      %v4673 = vld [vmem:[%s17 + $0x70] sm:$0xff]
      %v4674 = vld [vmem:[%s17 + $0x78] sm:$0xff]
      %v4675 = vld [vmem:[%s17 + $0x80] sm:$0xff]
      %v4676 = vld [vmem:[%s17 + $0x88] sm:$0xff]
      %v4677 = vld [vmem:[%s17 + $0x90] sm:$0xff]
      %v4678 = vld [vmem:[%s17 + $0x98] sm:$0xff]
      %v4679 = vld [vmem:[%s17 + $0xa0] sm:$0xff]
      %v4680 = vld [vmem:[%s17 + $0xa8] sm:$0xff]
      %v4681 = vld [vmem:[%s17 + $0xb0] sm:$0xff]
      %v4682 = vld [vmem:[%s17 + $0xb8] sm:$0xff]
      %v4683 = vld [vmem:[%s17 + $0xc0] sm:$0xff]
      %v4684 = vld [vmem:[%s17 + $0xc8] sm:$0xff]
      %v4685 = vld [vmem:[%s17 + $0xd0] sm:$0x3]
      %s4686 = scalar_lea.vmem %s16, 48
      %v4687 = vld [vmem:[%s4686] sm:$0xff]
      %v4688 = vld [vmem:[%s4686 + $0x8] sm:$0xff]
      %v4689 = vld [vmem:[%s4686 + $0x10] sm:$0xff]
      %v4690 = vld [vmem:[%s4686 + $0x18] sm:$0xff]
      %v4691 = vld [vmem:[%s4686 + $0x20] sm:$0xff]
      %v4692 = vld [vmem:[%s4686 + $0x28] sm:$0xff]
      %v4694 = vsel %vm1674, %v4687, 0
      %v4697 = vsel %vm1674, %v4688, 0
      %v4700 = vsel %vm1674, %v4689, 0
      %v4703 = vsel %vm1674, %v4690, 0
      %v4706 = vsel %vm1674, %v4691, 0
      %v4709 = vsel %vm1674, %v4692, 0
      %4711 = vmatprep.subr.mxu0 %v4529
      %4712 = vmatpush1.msra.mxu0 %v4528
      %4713 = vmatprep.subr.mxu0 %v4531
      %4714 = vmatpush1.msra.mxu0 %v4530
      %4715 = vmatprep.subr.mxu0 %v4533
      %4716 = vmatpush1.msra.mxu0 %v4532
      %4717 = vmatprep.subr.mxu0 0.0
      %4718 = vmatpush1.msra.mxu0 0.0
      %4719 = vmatprep.subr.mxu0 0.0
      %4720 = vmatpush1.msra.mxu0 0.0
      %4721 = vmatprep.subr.mxu0 0.0
      %4722 = vmatpush1.msra.mxu0 0.0
      %4723 = vmatprep.subr.mxu0 0.0
      %4724 = vmatpush1.msra.mxu0 0.0
      %4725 = vmatprep.subr.mxu0 0.0
      %4726 = vmatpush1.msra.mxu0 0.0
      %4727 = vmatprep.subr.mxu0 0.0
      %4728 = vmatpush1.msra.mxu0 0.0
      %4729 = vmatprep.subr.mxu0 0.0
      %4730 = vmatpush1.msra.mxu0 0.0
      %4731 = vmatprep.subr.mxu0 0.0
      %4732 = vmatpush1.msra.mxu0 0.0
      %4733 = vmatprep.subr.mxu0 0.0
      %4734 = vmatpush1.msra.mxu0 0.0
      %4735 = vmatprep.subr.mxu0 0.0
      %4736 = vmatpush1.msra.mxu0 0.0
      %4737 = vmatprep.subr.mxu0 0.0
      %4738 = vmatpush1.msra.mxu0 0.0
      %4739 = vmatprep.subr.mxu0 0.0
      %4740 = vmatpush1.msra.mxu0 0.0
      %4741 = vmatprep.subr.mxu0 0.0
      %4742 = vmatpush1.msra.mxu0 0.0
      %4743 = vmatprep.subr.mxu0 0.0
      %4744 = vmatpush1.msra.mxu0 0.0
      %4745 = vmatprep.subr.mxu0 0.0
      %4746 = vmatpush1.msra.mxu0 0.0
      %4747 = vmatprep.subr.mxu0 0.0
      %4748 = vmatpush1.msra.mxu0 0.0
      %4749 = vmatprep.subr.mxu0 0.0
      %4750 = vmatpush1.msra.mxu0 0.0
      %4751 = vmatprep.subr.mxu0 0.0
      %4752 = vmatpush1.msra.mxu0 0.0
      %4753 = vmatprep.subr.mxu0 0.0
      %4754 = vmatpush1.msra.mxu0 0.0
      %4755 = vmatprep.subr.mxu0 0.0
      %4756 = vmatpush1.msra.mxu0 0.0
      %4757 = vmatprep.subr.mxu0 0.0
      %4758 = vmatpush1.msra.mxu0 0.0
      %4759 = vmatprep.subr.mxu0 0.0
      %4760 = vmatpush1.msra.mxu0 0.0
      %4761 = vmatprep.subr.mxu0 0.0
      %4762 = vmatpush1.msra.mxu0 0.0
      %4763 = vmatprep.subr.mxu0 0.0
      %4764 = vmatpush1.msra.mxu0 0.0
      %4765 = vmatprep.subr.mxu0 0.0
      %4766 = vmatpush1.msra.mxu0 0.0
      %4767 = vmatprep.subr.mxu0 0.0
      %4768 = vmatpush1.msra.mxu0 0.0
      %4769 = vmatprep.subr.mxu0 0.0
      %4770 = vmatpush1.msra.mxu0 0.0
      %4771 = vmatprep.subr.mxu0 0.0
      %4772 = vmatpush1.msra.mxu0 0.0
      %4773 = vmatprep.subr.mxu0 0.0
      %4774 = vmatpush1.msra.mxu0 0.0
      %4775 = vmatprep.mubr.f32.mxu0 0.0
      %4776 = vmatmul.mubr.f32.gmra.mrb[0].mxu0 %v4694
      %v4777 = vpop.f32.mrb[0].mxu0
      %v4778 = vadd.f32 0.0, %v4777
      %v4779 = vpop.f32.mrb[0].mxu0
      %v4780 = vadd.f32 0.0, %v4779
      %4781 = vmatprep.mubr.f32.mxu0 0.0
      %4782 = vmatmul.mubr.f32.gmra.mrb[0].mxu0 %v4697
      %v4783 = vpop.f32.mrb[0].mxu0
      %v4784 = vadd.f32 0.0, %v4783
      %v4785 = vpop.f32.mrb[0].mxu0
      %v4786 = vadd.f32 0.0, %v4785
      %4787 = vmatprep.mubr.f32.mxu0 0.0
      %4788 = vmatmul.mubr.f32.gmra.mrb[0].mxu0 %v4700
      %v4789 = vpop.f32.mrb[0].mxu0
      %v4790 = vadd.f32 0.0, %v4789
      %v4791 = vpop.f32.mrb[0].mxu0
      %v4792 = vadd.f32 0.0, %v4791
      %4793 = vmatprep.mubr.f32.mxu0 0.0
      %4794 = vmatmul.mubr.f32.gmra.mrb[0].mxu0 %v4703
      %v4795 = vpop.f32.mrb[0].mxu0
      %v4796 = vadd.f32 0.0, %v4795
      %v4797 = vpop.f32.mrb[0].mxu0
      %v4798 = vadd.f32 0.0, %v4797
      %4799 = vmatprep.mubr.f32.mxu0 0.0
      %4800 = vmatmul.mubr.f32.gmra.mrb[0].mxu0 %v4706
      %v4801 = vpop.f32.mrb[0].mxu0
      %v4802 = vadd.f32 0.0, %v4801
      %v4803 = vpop.f32.mrb[0].mxu0
      %v4804 = vadd.f32 0.0, %v4803
      %4805 = vmatprep.mubr.f32.mxu0 0.0
      %4806 = vmatmul.mubr.f32.gmra.mrb[0].mxu0 %v4709
      %v4807 = vpop.f32.mrb[0].mxu0
      %v4808 = vadd.f32 0.0, %v4807
      %v4809 = vpop.f32.mrb[0].mxu0
      %v4810 = vadd.f32 0.0, %v4809
      %4811 = vdwg.mxu0
      %s4812 = scalar_lea.vmem %s17, 216
      %v4813 = vld [vmem:[%s4812] sm:$0xff]
      %v4814 = vld [vmem:[%s4812 + $0x8] sm:$0xff]
      %v4815 = vld [vmem:[%s4812 + $0x10] sm:$0xff]
      %v4816 = vld [vmem:[%s4812 + $0x18] sm:$0xff]
      %v4817 = vld [vmem:[%s4812 + $0x20] sm:$0xff]
      %v4818 = vld [vmem:[%s4812 + $0x28] sm:$0xff]
      %v4819 = vld [vmem:[%s4812 + $0x30] sm:$0xff]
      %v4820 = vld [vmem:[%s4812 + $0x38] sm:$0xff]
      %v4821 = vld [vmem:[%s4812 + $0x40] sm:$0xff]
      %v4822 = vld [vmem:[%s4812 + $0x48] sm:$0xff]
      %v4823 = vld [vmem:[%s4812 + $0x50] sm:$0xff]
      %v4824 = vld [vmem:[%s4812 + $0x58] sm:$0xff]
      %v4825 = vld [vmem:[%s4812 + $0x60] sm:$0xff]
      %v4826 = vld [vmem:[%s4812 + $0x68] sm:$0xff]
      %v4827 = vld [vmem:[%s4812 + $0x70] sm:$0xff]
      %v4828 = vld [vmem:[%s4812 + $0x78] sm:$0xff]
      %v4829 = vld [vmem:[%s4812 + $0x80] sm:$0xff]
      %v4830 = vld [vmem:[%s4812 + $0x88] sm:$0xff]
      %v4831 = vld [vmem:[%s4812 + $0x90] sm:$0xff]
      %v4832 = vld [vmem:[%s4812 + $0x98] sm:$0xff]
      %v4833 = vld [vmem:[%s4812 + $0xa0] sm:$0xff]
      %v4834 = vld [vmem:[%s4812 + $0xa8] sm:$0xff]
      %v4835 = vld [vmem:[%s4812 + $0xb0] sm:$0xff]
      %v4836 = vld [vmem:[%s4812 + $0xb8] sm:$0xff]
      %v4837 = vld [vmem:[%s4812 + $0xc0] sm:$0xff]
      %v4838 = vld [vmem:[%s4812 + $0xc8] sm:$0xff]
      %v4839 = vld [vmem:[%s4812 + $0xd0] sm:$0x3]
      %v4841 = vsel %vm1953, %v4780, 0
      %v4844 = vsel %vm1953, %v4786, 0
      %v4847 = vsel %vm1953, %v4792, 0
      %v4850 = vsel %vm1953, %v4798, 0
      %v4853 = vsel %vm1953, %v4804, 0
      %v4856 = vsel %vm1953, %v4810, 0
      %v4859 = vsel %vm830, %v4839, 0
      %4861 = vmatprep.subr.mxu0 0.0
      %4862 = vmatpush1.msra.mxu0 %v4813
      %4863 = vmatprep.subr.mxu0 0.0
      %4864 = vmatpush1.msra.mxu0 %v4814
      %4865 = vmatprep.subr.mxu0 0.0
      %4866 = vmatpush1.msra.mxu0 %v4815
      %4867 = vmatprep.subr.mxu0 0.0
      %4868 = vmatpush1.msra.mxu0 %v4816
      %4869 = vmatprep.subr.mxu0 0.0
      %4870 = vmatpush1.msra.mxu0 %v4817
      %4871 = vmatprep.subr.mxu0 0.0
      %4872 = vmatpush1.msra.mxu0 %v4818
      %4873 = vmatprep.subr.mxu0 0.0
      %4874 = vmatpush1.msra.mxu0 %v4819
      %4875 = vmatprep.subr.mxu0 0.0
      %4876 = vmatpush1.msra.mxu0 %v4820
      %4877 = vmatprep.subr.mxu0 0.0
      %4878 = vmatpush1.msra.mxu0 %v4821
      %4879 = vmatprep.subr.mxu0 0.0
      %4880 = vmatpush1.msra.mxu0 %v4822
      %4881 = vmatprep.subr.mxu0 0.0
      %4882 = vmatpush1.msra.mxu0 %v4823
      %4883 = vmatprep.subr.mxu0 0.0
      %4884 = vmatpush1.msra.mxu0 %v4824
      %4885 = vmatprep.subr.mxu0 0.0
      %4886 = vmatpush1.msra.mxu0 %v4825
      %4887 = vmatprep.subr.mxu0 0.0
      %4888 = vmatpush1.msra.mxu0 %v4826
      %4889 = vmatprep.subr.mxu0 0.0
      %4890 = vmatpush1.msra.mxu0 %v4827
      %4891 = vmatprep.subr.mxu0 0.0
      %4892 = vmatpush1.msra.mxu0 %v4828
      %4893 = vmatprep.subr.mxu0 0.0
      %4894 = vmatpush1.msra.mxu0 %v4829
      %4895 = vmatprep.subr.mxu0 0.0
      %4896 = vmatpush1.msra.mxu0 %v4830
      %4897 = vmatprep.subr.mxu0 0.0
      %4898 = vmatpush1.msra.mxu0 %v4831
      %4899 = vmatprep.subr.mxu0 0.0
      %4900 = vmatpush1.msra.mxu0 %v4832
      %4901 = vmatprep.subr.mxu0 0.0
      %4902 = vmatpush1.msra.mxu0 %v4833
      %4903 = vmatprep.subr.mxu0 0.0
      %4904 = vmatpush1.msra.mxu0 %v4834
      %4905 = vmatprep.subr.mxu0 0.0
      %4906 = vmatpush1.msra.mxu0 %v4835
      %4907 = vmatprep.subr.mxu0 0.0
      %4908 = vmatpush1.msra.mxu0 %v4836
      %4909 = vmatprep.subr.mxu0 0.0
      %4910 = vmatpush1.msra.mxu0 %v4837
      %4911 = vmatprep.subr.mxu0 0.0
      %4912 = vmatpush1.msra.mxu0 %v4838
      %4913 = vmatprep.subr.mxu0 0.0
      %4914 = vmatpush1.msra.mxu0 %v4859
      %4915 = vmatprep.subr.mxu0 0.0
      %4916 = vmatpush1.msra.mxu0 0.0
      %4917 = vmatprep.subr.mxu0 0.0
      %4918 = vmatpush1.msra.mxu0 0.0
      %4919 = vmatprep.subr.mxu0 0.0
      %4920 = vmatpush1.msra.mxu0 0.0
      %4921 = vmatprep.subr.mxu0 0.0
      %4922 = vmatpush1.msra.mxu0 0.0
      %4923 = vmatprep.subr.mxu0 0.0
      %4924 = vmatpush1.msra.mxu0 0.0
      %4925 = vmatprep.mubr.f32.mxu0 %v4841
      %4926 = vmatmul.mubr.f32.gmra.mrb[0].mxu0 %v4778
      %v4927 = vpop.f32.mrb[0].mxu0
      %v4928 = vadd.f32 0.0, %v4927
      %v4929 = vpop.f32.mrb[0].mxu0
      %4930 = vmatprep.mubr.f32.mxu0 %v4844
      %4931 = vmatmul.mubr.f32.gmra.mrb[0].mxu0 %v4784
      %v4932 = vpop.f32.mrb[0].mxu0
      %v4933 = vadd.f32 0.0, %v4932
      %v4934 = vpop.f32.mrb[0].mxu0
      %4935 = vmatprep.mubr.f32.mxu0 %v4847
      %4936 = vmatmul.mubr.f32.gmra.mrb[0].mxu0 %v4790
      %v4937 = vpop.f32.mrb[0].mxu0
      %v4938 = vadd.f32 0.0, %v4937
      %v4939 = vpop.f32.mrb[0].mxu0
      %4940 = vmatprep.mubr.f32.mxu0 %v4850
      %4941 = vmatmul.mubr.f32.gmra.mrb[0].mxu0 %v4796
      %v4942 = vpop.f32.mrb[0].mxu0
      %v4943 = vadd.f32 0.0, %v4942
      %v4944 = vpop.f32.mrb[0].mxu0
      %4945 = vmatprep.mubr.f32.mxu0 %v4853
      %4946 = vmatmul.mubr.f32.gmra.mrb[0].mxu0 %v4802
      %v4947 = vpop.f32.mrb[0].mxu0
      %v4948 = vadd.f32 0.0, %v4947
      %v4949 = vpop.f32.mrb[0].mxu0
      %4950 = vmatprep.mubr.f32.mxu0 %v4856
      %4951 = vmatmul.mubr.f32.gmra.mrb[0].mxu0 %v4808
      %v4952 = vpop.f32.mrb[0].mxu0
      %v4953 = vadd.f32 0.0, %v4952
      %v4954 = vpop.f32.mrb[0].mxu0
      %4955 = vdwg.mxu0
      %v4957 = vsel %vm1953, %v4627, 0
      %v4960 = vsel %vm1953, %v4633, 0
      %v4963 = vsel %vm1953, %v4639, 0
      %v4966 = vsel %vm1953, %v4645, 0
      %v4969 = vsel %vm1953, %v4651, 0
      %v4972 = vsel %vm1953, %v4657, 0
      %v4975 = vsel %vm830, %v4685, 0
      %4977 = vmatprep.subr.mxu0 0.0
      %4978 = vmatpush1.msra.mxu0 %v4659
      %4979 = vmatprep.subr.mxu0 0.0
      %4980 = vmatpush1.msra.mxu0 %v4660
      %4981 = vmatprep.subr.mxu0 0.0
      %4982 = vmatpush1.msra.mxu0 %v4661
      %4983 = vmatprep.subr.mxu0 0.0
      %4984 = vmatpush1.msra.mxu0 %v4662
      %4985 = vmatprep.subr.mxu0 0.0
      %4986 = vmatpush1.msra.mxu0 %v4663
      %4987 = vmatprep.subr.mxu0 0.0
      %4988 = vmatpush1.msra.mxu0 %v4664
      %4989 = vmatprep.subr.mxu0 0.0
      %4990 = vmatpush1.msra.mxu0 %v4665
      %4991 = vmatprep.subr.mxu0 0.0
      %4992 = vmatpush1.msra.mxu0 %v4666
      %4993 = vmatprep.subr.mxu0 0.0
      %4994 = vmatpush1.msra.mxu0 %v4667
      %4995 = vmatprep.subr.mxu0 0.0
      %4996 = vmatpush1.msra.mxu0 %v4668
      %4997 = vmatprep.subr.mxu0 0.0
      %4998 = vmatpush1.msra.mxu0 %v4669
      %4999 = vmatprep.subr.mxu0 0.0
      %5000 = vmatpush1.msra.mxu0 %v4670
      %5001 = vmatprep.subr.mxu0 0.0
      %5002 = vmatpush1.msra.mxu0 %v4671
      %5003 = vmatprep.subr.mxu0 0.0
      %5004 = vmatpush1.msra.mxu0 %v4672
      %5005 = vmatprep.subr.mxu0 0.0
      %5006 = vmatpush1.msra.mxu0 %v4673
      %5007 = vmatprep.subr.mxu0 0.0
      %5008 = vmatpush1.msra.mxu0 %v4674
      %5009 = vmatprep.subr.mxu0 0.0
      %5010 = vmatpush1.msra.mxu0 %v4675
      %5011 = vmatprep.subr.mxu0 0.0
      %5012 = vmatpush1.msra.mxu0 %v4676
      %5013 = vmatprep.subr.mxu0 0.0
      %5014 = vmatpush1.msra.mxu0 %v4677
      %5015 = vmatprep.subr.mxu0 0.0
      %5016 = vmatpush1.msra.mxu0 %v4678
      %5017 = vmatprep.subr.mxu0 0.0
      %5018 = vmatpush1.msra.mxu0 %v4679
      %5019 = vmatprep.subr.mxu0 0.0
      %5020 = vmatpush1.msra.mxu0 %v4680
      %5021 = vmatprep.subr.mxu0 0.0
      %5022 = vmatpush1.msra.mxu0 %v4681
      %5023 = vmatprep.subr.mxu0 0.0
      %5024 = vmatpush1.msra.mxu0 %v4682
      %5025 = vmatprep.subr.mxu0 0.0
      %5026 = vmatpush1.msra.mxu0 %v4683
      %5027 = vmatprep.subr.mxu0 0.0
      %5028 = vmatpush1.msra.mxu0 %v4684
      %5029 = vmatprep.subr.mxu0 0.0
      %5030 = vmatpush1.msra.mxu0 %v4975
      %5031 = vmatprep.subr.mxu0 0.0
      %5032 = vmatpush1.msra.mxu0 0.0
      %5033 = vmatprep.subr.mxu0 0.0
      %5034 = vmatpush1.msra.mxu0 0.0
      %5035 = vmatprep.subr.mxu0 0.0
      %5036 = vmatpush1.msra.mxu0 0.0
      %5037 = vmatprep.subr.mxu0 0.0
      %5038 = vmatpush1.msra.mxu0 0.0
      %5039 = vmatprep.subr.mxu0 0.0
      %5040 = vmatpush1.msra.mxu0 0.0
      %5041 = vmatprep.mubr.f32.mxu0 %v4957
      %5042 = vmatmul.mubr.f32.gmra.mrb[0].mxu0 %v4625
      %v5043 = vpop.f32.mrb[0].mxu0
      %v5044 = vadd.f32 %v4928, %v5043
      %v5045 = vpop.f32.mrb[0].mxu0
      %5046 = vmatprep.mubr.f32.mxu0 %v4960
      %5047 = vmatmul.mubr.f32.gmra.mrb[0].mxu0 %v4631
      %v5048 = vpop.f32.mrb[0].mxu0
      %v5049 = vadd.f32 %v4933, %v5048
      %v5050 = vpop.f32.mrb[0].mxu0
      %5051 = vmatprep.mubr.f32.mxu0 %v4963
      %5052 = vmatmul.mubr.f32.gmra.mrb[0].mxu0 %v4637
      %v5053 = vpop.f32.mrb[0].mxu0
      %v5054 = vadd.f32 %v4938, %v5053
      %v5055 = vpop.f32.mrb[0].mxu0
      %5056 = vmatprep.mubr.f32.mxu0 %v4966
      %5057 = vmatmul.mubr.f32.gmra.mrb[0].mxu0 %v4643
      %v5058 = vpop.f32.mrb[0].mxu0
      %v5059 = vadd.f32 %v4943, %v5058
      %v5060 = vpop.f32.mrb[0].mxu0
      %5061 = vmatprep.mubr.f32.mxu0 %v4969
      %5062 = vmatmul.mubr.f32.gmra.mrb[0].mxu0 %v4649
      %v5063 = vpop.f32.mrb[0].mxu0
      %v5064 = vadd.f32 %v4948, %v5063
      %v5065 = vpop.f32.mrb[0].mxu0
      %5066 = vmatprep.mubr.f32.mxu0 %v4972
      %5067 = vmatmul.mubr.f32.gmra.mrb[0].mxu0 %v4655
      %v5068 = vpop.f32.mrb[0].mxu0
      %v5069 = vadd.f32 %v4953, %v5068
      %v5070 = vpop.f32.mrb[0].mxu0
      %5071 = vdwg.mxu0
      %s5072 = scalar_lea.vmem %s16, 96
      %v5073 = vld [vmem:[%s5072] sm:$0xff]
      %v5074 = vld [vmem:[%s5072 + $0x8] sm:$0xff]
      %v5075 = vld [vmem:[%s5072 + $0x10] sm:$0xff]
      %v5076 = vld [vmem:[%s5072 + $0x18] sm:$0xff]
      %v5077 = vld [vmem:[%s5072 + $0x20] sm:$0xff]
      %v5078 = vld [vmem:[%s5072 + $0x28] sm:$0xff]
      %v5080 = vsel %vm1674, %v5073, 0
      %v5083 = vsel %vm1674, %v5074, 0
      %v5086 = vsel %vm1674, %v5075, 0
      %v5089 = vsel %vm1674, %v5076, 0
      %v5092 = vsel %vm1674, %v5077, 0
      %v5095 = vsel %vm1674, %v5078, 0
      %5097 = vmatprep.subr.mxu0 %v4529
      %5098 = vmatpush1.msra.mxu0 %v4528
      %5099 = vmatprep.subr.mxu0 %v4531
      %5100 = vmatpush1.msra.mxu0 %v4530
      %5101 = vmatprep.subr.mxu0 %v4533
      %5102 = vmatpush1.msra.mxu0 %v4532
      %5103 = vmatprep.subr.mxu0 0.0
      %5104 = vmatpush1.msra.mxu0 0.0
      %5105 = vmatprep.subr.mxu0 0.0
      %5106 = vmatpush1.msra.mxu0 0.0
      %5107 = vmatprep.subr.mxu0 0.0
      %5108 = vmatpush1.msra.mxu0 0.0
      %5109 = vmatprep.subr.mxu0 0.0
      %5110 = vmatpush1.msra.mxu0 0.0
      %5111 = vmatprep.subr.mxu0 0.0
      %5112 = vmatpush1.msra.mxu0 0.0
      %5113 = vmatprep.subr.mxu0 0.0
      %5114 = vmatpush1.msra.mxu0 0.0
      %5115 = vmatprep.subr.mxu0 0.0
      %5116 = vmatpush1.msra.mxu0 0.0
      %5117 = vmatprep.subr.mxu0 0.0
      %5118 = vmatpush1.msra.mxu0 0.0
      %5119 = vmatprep.subr.mxu0 0.0
      %5120 = vmatpush1.msra.mxu0 0.0
      %5121 = vmatprep.subr.mxu0 0.0
      %5122 = vmatpush1.msra.mxu0 0.0
      %5123 = vmatprep.subr.mxu0 0.0
      %5124 = vmatpush1.msra.mxu0 0.0
      %5125 = vmatprep.subr.mxu0 0.0
      %5126 = vmatpush1.msra.mxu0 0.0
      %5127 = vmatprep.subr.mxu0 0.0
      %5128 = vmatpush1.msra.mxu0 0.0
      %5129 = vmatprep.subr.mxu0 0.0
      %5130 = vmatpush1.msra.mxu0 0.0
      %5131 = vmatprep.subr.mxu0 0.0
      %5132 = vmatpush1.msra.mxu0 0.0
      %5133 = vmatprep.subr.mxu0 0.0
      %5134 = vmatpush1.msra.mxu0 0.0
      %5135 = vmatprep.subr.mxu0 0.0
      %5136 = vmatpush1.msra.mxu0 0.0
      %5137 = vmatprep.subr.mxu0 0.0
      %5138 = vmatpush1.msra.mxu0 0.0
      %5139 = vmatprep.subr.mxu0 0.0
      %5140 = vmatpush1.msra.mxu0 0.0
      %5141 = vmatprep.subr.mxu0 0.0
      %5142 = vmatpush1.msra.mxu0 0.0
      %5143 = vmatprep.subr.mxu0 0.0
      %5144 = vmatpush1.msra.mxu0 0.0
      %5145 = vmatprep.subr.mxu0 0.0
      %5146 = vmatpush1.msra.mxu0 0.0
      %5147 = vmatprep.subr.mxu0 0.0
      %5148 = vmatpush1.msra.mxu0 0.0
      %5149 = vmatprep.subr.mxu0 0.0
      %5150 = vmatpush1.msra.mxu0 0.0
      %5151 = vmatprep.subr.mxu0 0.0
      %5152 = vmatpush1.msra.mxu0 0.0
      %5153 = vmatprep.subr.mxu0 0.0
      %5154 = vmatpush1.msra.mxu0 0.0
      %5155 = vmatprep.subr.mxu0 0.0
      %5156 = vmatpush1.msra.mxu0 0.0
      %5157 = vmatprep.subr.mxu0 0.0
      %5158 = vmatpush1.msra.mxu0 0.0
      %5159 = vmatprep.subr.mxu0 0.0
      %5160 = vmatpush1.msra.mxu0 0.0
      %5161 = vmatprep.mubr.f32.mxu0 0.0
      %5162 = vmatmul.mubr.f32.gmra.mrb[0].mxu0 %v5080
      %v5163 = vpop.f32.mrb[0].mxu0
      %v5164 = vadd.f32 0.0, %v5163
      %v5165 = vpop.f32.mrb[0].mxu0
      %v5166 = vadd.f32 0.0, %v5165
      %5167 = vmatprep.mubr.f32.mxu0 0.0
      %5168 = vmatmul.mubr.f32.gmra.mrb[0].mxu0 %v5083
      %v5169 = vpop.f32.mrb[0].mxu0
      %v5170 = vadd.f32 0.0, %v5169
      %v5171 = vpop.f32.mrb[0].mxu0
      %v5172 = vadd.f32 0.0, %v5171
      %5173 = vmatprep.mubr.f32.mxu0 0.0
      %5174 = vmatmul.mubr.f32.gmra.mrb[0].mxu0 %v5086
      %v5175 = vpop.f32.mrb[0].mxu0
      %v5176 = vadd.f32 0.0, %v5175
      %v5177 = vpop.f32.mrb[0].mxu0
      %v5178 = vadd.f32 0.0, %v5177
      %5179 = vmatprep.mubr.f32.mxu0 0.0
      %5180 = vmatmul.mubr.f32.gmra.mrb[0].mxu0 %v5089
      %v5181 = vpop.f32.mrb[0].mxu0
      %v5182 = vadd.f32 0.0, %v5181
      %v5183 = vpop.f32.mrb[0].mxu0
      %v5184 = vadd.f32 0.0, %v5183
      %5185 = vmatprep.mubr.f32.mxu0 0.0
      %5186 = vmatmul.mubr.f32.gmra.mrb[0].mxu0 %v5092
      %v5187 = vpop.f32.mrb[0].mxu0
      %v5188 = vadd.f32 0.0, %v5187
      %v5189 = vpop.f32.mrb[0].mxu0
      %v5190 = vadd.f32 0.0, %v5189
      %5191 = vmatprep.mubr.f32.mxu0 0.0
      %5192 = vmatmul.mubr.f32.gmra.mrb[0].mxu0 %v5095
      %v5193 = vpop.f32.mrb[0].mxu0
      %v5194 = vadd.f32 0.0, %v5193
      %v5195 = vpop.f32.mrb[0].mxu0
      %v5196 = vadd.f32 0.0, %v5195
      %5197 = vdwg.mxu0
      %s5198 = scalar_lea.vmem %s17, 432
      %v5199 = vld [vmem:[%s5198] sm:$0xff]
      %v5200 = vld [vmem:[%s5198 + $0x8] sm:$0xff]
      %v5201 = vld [vmem:[%s5198 + $0x10] sm:$0xff]
      %v5202 = vld [vmem:[%s5198 + $0x18] sm:$0xff]
      %v5203 = vld [vmem:[%s5198 + $0x20] sm:$0xff]
      %v5204 = vld [vmem:[%s5198 + $0x28] sm:$0xff]
      %v5205 = vld [vmem:[%s5198 + $0x30] sm:$0xff]
      %v5206 = vld [vmem:[%s5198 + $0x38] sm:$0xff]
      %v5207 = vld [vmem:[%s5198 + $0x40] sm:$0xff]
      %v5208 = vld [vmem:[%s5198 + $0x48] sm:$0xff]
      %v5209 = vld [vmem:[%s5198 + $0x50] sm:$0xff]
      %v5210 = vld [vmem:[%s5198 + $0x58] sm:$0xff]
      %v5211 = vld [vmem:[%s5198 + $0x60] sm:$0xff]
      %v5212 = vld [vmem:[%s5198 + $0x68] sm:$0xff]
      %v5213 = vld [vmem:[%s5198 + $0x70] sm:$0xff]
      %v5214 = vld [vmem:[%s5198 + $0x78] sm:$0xff]
      %v5215 = vld [vmem:[%s5198 + $0x80] sm:$0xff]
      %v5216 = vld [vmem:[%s5198 + $0x88] sm:$0xff]
      %v5217 = vld [vmem:[%s5198 + $0x90] sm:$0xff]
      %v5218 = vld [vmem:[%s5198 + $0x98] sm:$0xff]
      %v5219 = vld [vmem:[%s5198 + $0xa0] sm:$0xff]
      %v5220 = vld [vmem:[%s5198 + $0xa8] sm:$0xff]
      %v5221 = vld [vmem:[%s5198 + $0xb0] sm:$0xff]
      %v5222 = vld [vmem:[%s5198 + $0xb8] sm:$0xff]
      %v5223 = vld [vmem:[%s5198 + $0xc0] sm:$0xff]
      %v5224 = vld [vmem:[%s5198 + $0xc8] sm:$0xff]
      %v5225 = vld [vmem:[%s5198 + $0xd0] sm:$0x3]
      %v5227 = vsel %vm1953, %v5166, 0
      %v5230 = vsel %vm1953, %v5172, 0
      %v5233 = vsel %vm1953, %v5178, 0
      %v5236 = vsel %vm1953, %v5184, 0
      %v5239 = vsel %vm1953, %v5190, 0
      %v5242 = vsel %vm1953, %v5196, 0
      %v5245 = vsel %vm830, %v5225, 0
      %5247 = vmatprep.subr.mxu0 0.0
      %5248 = vmatpush1.msra.mxu0 %v5199
      %5249 = vmatprep.subr.mxu0 0.0
      %5250 = vmatpush1.msra.mxu0 %v5200
      %5251 = vmatprep.subr.mxu0 0.0
      %5252 = vmatpush1.msra.mxu0 %v5201
      %5253 = vmatprep.subr.mxu0 0.0
      %5254 = vmatpush1.msra.mxu0 %v5202
      %5255 = vmatprep.subr.mxu0 0.0
      %5256 = vmatpush1.msra.mxu0 %v5203
      %5257 = vmatprep.subr.mxu0 0.0
      %5258 = vmatpush1.msra.mxu0 %v5204
      %5259 = vmatprep.subr.mxu0 0.0
      %5260 = vmatpush1.msra.mxu0 %v5205
      %5261 = vmatprep.subr.mxu0 0.0
      %5262 = vmatpush1.msra.mxu0 %v5206
      %5263 = vmatprep.subr.mxu0 0.0
      %5264 = vmatpush1.msra.mxu0 %v5207
      %5265 = vmatprep.subr.mxu0 0.0
      %5266 = vmatpush1.msra.mxu0 %v5208
      %5267 = vmatprep.subr.mxu0 0.0
      %5268 = vmatpush1.msra.mxu0 %v5209
      %5269 = vmatprep.subr.mxu0 0.0
      %5270 = vmatpush1.msra.mxu0 %v5210
      %5271 = vmatprep.subr.mxu0 0.0
      %5272 = vmatpush1.msra.mxu0 %v5211
      %5273 = vmatprep.subr.mxu0 0.0
      %5274 = vmatpush1.msra.mxu0 %v5212
      %5275 = vmatprep.subr.mxu0 0.0
      %5276 = vmatpush1.msra.mxu0 %v5213
      %5277 = vmatprep.subr.mxu0 0.0
      %5278 = vmatpush1.msra.mxu0 %v5214
      %5279 = vmatprep.subr.mxu0 0.0
      %5280 = vmatpush1.msra.mxu0 %v5215
      %5281 = vmatprep.subr.mxu0 0.0
      %5282 = vmatpush1.msra.mxu0 %v5216
      %5283 = vmatprep.subr.mxu0 0.0
      %5284 = vmatpush1.msra.mxu0 %v5217
      %5285 = vmatprep.subr.mxu0 0.0
      %5286 = vmatpush1.msra.mxu0 %v5218
      %5287 = vmatprep.subr.mxu0 0.0
      %5288 = vmatpush1.msra.mxu0 %v5219
      %5289 = vmatprep.subr.mxu0 0.0
      %5290 = vmatpush1.msra.mxu0 %v5220
      %5291 = vmatprep.subr.mxu0 0.0
      %5292 = vmatpush1.msra.mxu0 %v5221
      %5293 = vmatprep.subr.mxu0 0.0
      %5294 = vmatpush1.msra.mxu0 %v5222
      %5295 = vmatprep.subr.mxu0 0.0
      %5296 = vmatpush1.msra.mxu0 %v5223
      %5297 = vmatprep.subr.mxu0 0.0
      %5298 = vmatpush1.msra.mxu0 %v5224
      %5299 = vmatprep.subr.mxu0 0.0
      %5300 = vmatpush1.msra.mxu0 %v5245
      %5301 = vmatprep.subr.mxu0 0.0
      %5302 = vmatpush1.msra.mxu0 0.0
      %5303 = vmatprep.subr.mxu0 0.0
      %5304 = vmatpush1.msra.mxu0 0.0
      %5305 = vmatprep.subr.mxu0 0.0
      %5306 = vmatpush1.msra.mxu0 0.0
      %5307 = vmatprep.subr.mxu0 0.0
      %5308 = vmatpush1.msra.mxu0 0.0
      %5309 = vmatprep.subr.mxu0 0.0
      %5310 = vmatpush1.msra.mxu0 0.0
      %5311 = vmatprep.mubr.f32.mxu0 %v5227
      %5312 = vmatmul.mubr.f32.gmra.mrb[0].mxu0 %v5164
      %v5313 = vpop.f32.mrb[0].mxu0
      %v5314 = vadd.f32 0.0, %v5313
      %v5315 = vpop.f32.mrb[0].mxu0
      %5316 = vmatprep.mubr.f32.mxu0 %v5230
      %5317 = vmatmul.mubr.f32.gmra.mrb[0].mxu0 %v5170
      %v5318 = vpop.f32.mrb[0].mxu0
      %v5319 = vadd.f32 0.0, %v5318
      %v5320 = vpop.f32.mrb[0].mxu0
      %5321 = vmatprep.mubr.f32.mxu0 %v5233
      %5322 = vmatmul.mubr.f32.gmra.mrb[0].mxu0 %v5176
      %v5323 = vpop.f32.mrb[0].mxu0
      %v5324 = vadd.f32 0.0, %v5323
      %v5325 = vpop.f32.mrb[0].mxu0
      %5326 = vmatprep.mubr.f32.mxu0 %v5236
      %5327 = vmatmul.mubr.f32.gmra.mrb[0].mxu0 %v5182
      %v5328 = vpop.f32.mrb[0].mxu0
      %v5329 = vadd.f32 0.0, %v5328
      %v5330 = vpop.f32.mrb[0].mxu0
      %5331 = vmatprep.mubr.f32.mxu0 %v5239
      %5332 = vmatmul.mubr.f32.gmra.mrb[0].mxu0 %v5188
      %v5333 = vpop.f32.mrb[0].mxu0
      %v5334 = vadd.f32 0.0, %v5333
      %v5335 = vpop.f32.mrb[0].mxu0
      %5336 = vmatprep.mubr.f32.mxu0 %v5242
      %5337 = vmatmul.mubr.f32.gmra.mrb[0].mxu0 %v5194
      %v5338 = vpop.f32.mrb[0].mxu0
      %v5339 = vadd.f32 0.0, %v5338
      %v5340 = vpop.f32.mrb[0].mxu0
      %5341 = vdwg.mxu0
      %v5342 = vadd.f32 %v5044, %v5314
      %v5343 = vadd.f32 %v5049, %v5319
      %v5344 = vadd.f32 %v5054, %v5324
      %v5345 = vadd.f32 %v5059, %v5329
      %v5346 = vadd.f32 %v5064, %v5334
      %v5347 = vadd.f32 %v5069, %v5339
      %s5348 = scalar_lea.vmem %s16, 144
      %v5349 = vld [vmem:[%s5348] sm:$0xff]
      %v5350 = vld [vmem:[%s5348 + $0x8] sm:$0xff]
      %v5351 = vld [vmem:[%s5348 + $0x10] sm:$0xff]
      %v5352 = vld [vmem:[%s5348 + $0x18] sm:$0xff]
      %v5353 = vld [vmem:[%s5348 + $0x20] sm:$0xff]
      %v5354 = vld [vmem:[%s5348 + $0x28] sm:$0xff]
      %v5356 = vsel %vm1674, %v5349, 0
      %v5359 = vsel %vm1674, %v5350, 0
      %v5362 = vsel %vm1674, %v5351, 0
      %v5365 = vsel %vm1674, %v5352, 0
      %v5368 = vsel %vm1674, %v5353, 0
      %v5371 = vsel %vm1674, %v5354, 0
      %5373 = vmatprep.subr.mxu0 %v4529
      %5374 = vmatpush1.msra.mxu0 %v4528
      %5375 = vmatprep.subr.mxu0 %v4531
      %5376 = vmatpush1.msra.mxu0 %v4530
      %5377 = vmatprep.subr.mxu0 %v4533
      %5378 = vmatpush1.msra.mxu0 %v4532
      %5379 = vmatprep.subr.mxu0 0.0
      %5380 = vmatpush1.msra.mxu0 0.0
      %5381 = vmatprep.subr.mxu0 0.0
      %5382 = vmatpush1.msra.mxu0 0.0
      %5383 = vmatprep.subr.mxu0 0.0
      %5384 = vmatpush1.msra.mxu0 0.0
      %5385 = vmatprep.subr.mxu0 0.0
      %5386 = vmatpush1.msra.mxu0 0.0
      %5387 = vmatprep.subr.mxu0 0.0
      %5388 = vmatpush1.msra.mxu0 0.0
      %5389 = vmatprep.subr.mxu0 0.0
      %5390 = vmatpush1.msra.mxu0 0.0
      %5391 = vmatprep.subr.mxu0 0.0
      %5392 = vmatpush1.msra.mxu0 0.0
      %5393 = vmatprep.subr.mxu0 0.0
      %5394 = vmatpush1.msra.mxu0 0.0
      %5395 = vmatprep.subr.mxu0 0.0
      %5396 = vmatpush1.msra.mxu0 0.0
      %5397 = vmatprep.subr.mxu0 0.0
      %5398 = vmatpush1.msra.mxu0 0.0
      %5399 = vmatprep.subr.mxu0 0.0
      %5400 = vmatpush1.msra.mxu0 0.0
      %5401 = vmatprep.subr.mxu0 0.0
      %5402 = vmatpush1.msra.mxu0 0.0
      %5403 = vmatprep.subr.mxu0 0.0
      %5404 = vmatpush1.msra.mxu0 0.0
      %5405 = vmatprep.subr.mxu0 0.0
      %5406 = vmatpush1.msra.mxu0 0.0
      %5407 = vmatprep.subr.mxu0 0.0
      %5408 = vmatpush1.msra.mxu0 0.0
      %5409 = vmatprep.subr.mxu0 0.0
      %5410 = vmatpush1.msra.mxu0 0.0
      %5411 = vmatprep.subr.mxu0 0.0
      %5412 = vmatpush1.msra.mxu0 0.0
      %5413 = vmatprep.subr.mxu0 0.0
      %5414 = vmatpush1.msra.mxu0 0.0
      %5415 = vmatprep.subr.mxu0 0.0
      %5416 = vmatpush1.msra.mxu0 0.0
      %5417 = vmatprep.subr.mxu0 0.0
      %5418 = vmatpush1.msra.mxu0 0.0
      %5419 = vmatprep.subr.mxu0 0.0
      %5420 = vmatpush1.msra.mxu0 0.0
      %5421 = vmatprep.subr.mxu0 0.0
      %5422 = vmatpush1.msra.mxu0 0.0
      %5423 = vmatprep.subr.mxu0 0.0
      %5424 = vmatpush1.msra.mxu0 0.0
      %5425 = vmatprep.subr.mxu0 0.0
      %5426 = vmatpush1.msra.mxu0 0.0
      %5427 = vmatprep.subr.mxu0 0.0
      %5428 = vmatpush1.msra.mxu0 0.0
      %5429 = vmatprep.subr.mxu0 0.0
      %5430 = vmatpush1.msra.mxu0 0.0
      %5431 = vmatprep.subr.mxu0 0.0
      %5432 = vmatpush1.msra.mxu0 0.0
      %5433 = vmatprep.subr.mxu0 0.0
      %5434 = vmatpush1.msra.mxu0 0.0
      %5435 = vmatprep.subr.mxu0 0.0
      %5436 = vmatpush1.msra.mxu0 0.0
      %5437 = vmatprep.mubr.f32.mxu0 0.0
      %5438 = vmatmul.mubr.f32.gmra.mrb[0].mxu0 %v5356
      %v5439 = vpop.f32.mrb[0].mxu0
      %v5440 = vadd.f32 0.0, %v5439
      %v5441 = vpop.f32.mrb[0].mxu0
      %v5442 = vadd.f32 0.0, %v5441
      %5443 = vmatprep.mubr.f32.mxu0 0.0
      %5444 = vmatmul.mubr.f32.gmra.mrb[0].mxu0 %v5359
      %v5445 = vpop.f32.mrb[0].mxu0
      %v5446 = vadd.f32 0.0, %v5445
      %v5447 = vpop.f32.mrb[0].mxu0
      %v5448 = vadd.f32 0.0, %v5447
      %5449 = vmatprep.mubr.f32.mxu0 0.0
      %5450 = vmatmul.mubr.f32.gmra.mrb[0].mxu0 %v5362
      %v5451 = vpop.f32.mrb[0].mxu0
      %v5452 = vadd.f32 0.0, %v5451
      %v5453 = vpop.f32.mrb[0].mxu0
      %v5454 = vadd.f32 0.0, %v5453
      %5455 = vmatprep.mubr.f32.mxu0 0.0
      %5456 = vmatmul.mubr.f32.gmra.mrb[0].mxu0 %v5365
      %v5457 = vpop.f32.mrb[0].mxu0
      %v5458 = vadd.f32 0.0, %v5457
      %v5459 = vpop.f32.mrb[0].mxu0
      %v5460 = vadd.f32 0.0, %v5459
      %5461 = vmatprep.mubr.f32.mxu0 0.0
      %5462 = vmatmul.mubr.f32.gmra.mrb[0].mxu0 %v5368
      %v5463 = vpop.f32.mrb[0].mxu0
      %v5464 = vadd.f32 0.0, %v5463
      %v5465 = vpop.f32.mrb[0].mxu0
      %v5466 = vadd.f32 0.0, %v5465
      %5467 = vmatprep.mubr.f32.mxu0 0.0
      %5468 = vmatmul.mubr.f32.gmra.mrb[0].mxu0 %v5371
      %v5469 = vpop.f32.mrb[0].mxu0
      %v5470 = vadd.f32 0.0, %v5469
      %v5471 = vpop.f32.mrb[0].mxu0
      %v5472 = vadd.f32 0.0, %v5471
      %5473 = vdwg.mxu0
      %s5474 = scalar_lea.vmem %s17, 648
      %v5475 = vld [vmem:[%s5474] sm:$0xff]
      %v5476 = vld [vmem:[%s5474 + $0x8] sm:$0xff]
      %v5477 = vld [vmem:[%s5474 + $0x10] sm:$0xff]
      %v5478 = vld [vmem:[%s5474 + $0x18] sm:$0xff]
      %v5479 = vld [vmem:[%s5474 + $0x20] sm:$0xff]
      %v5480 = vld [vmem:[%s5474 + $0x28] sm:$0xff]
      %v5481 = vld [vmem:[%s5474 + $0x30] sm:$0xff]
      %v5482 = vld [vmem:[%s5474 + $0x38] sm:$0xff]
      %v5483 = vld [vmem:[%s5474 + $0x40] sm:$0xff]
      %v5484 = vld [vmem:[%s5474 + $0x48] sm:$0xff]
      %v5485 = vld [vmem:[%s5474 + $0x50] sm:$0xff]
      %v5486 = vld [vmem:[%s5474 + $0x58] sm:$0xff]
      %v5487 = vld [vmem:[%s5474 + $0x60] sm:$0xff]
      %v5488 = vld [vmem:[%s5474 + $0x68] sm:$0xff]
      %v5489 = vld [vmem:[%s5474 + $0x70] sm:$0xff]
      %v5490 = vld [vmem:[%s5474 + $0x78] sm:$0xff]
      %v5491 = vld [vmem:[%s5474 + $0x80] sm:$0xff]
      %v5492 = vld [vmem:[%s5474 + $0x88] sm:$0xff]
      %v5493 = vld [vmem:[%s5474 + $0x90] sm:$0xff]
      %v5494 = vld [vmem:[%s5474 + $0x98] sm:$0xff]
      %v5495 = vld [vmem:[%s5474 + $0xa0] sm:$0xff]
      %v5496 = vld [vmem:[%s5474 + $0xa8] sm:$0xff]
      %v5497 = vld [vmem:[%s5474 + $0xb0] sm:$0xff]
      %v5498 = vld [vmem:[%s5474 + $0xb8] sm:$0xff]
      %v5499 = vld [vmem:[%s5474 + $0xc0] sm:$0xff]
      %v5500 = vld [vmem:[%s5474 + $0xc8] sm:$0xff]
      %v5501 = vld [vmem:[%s5474 + $0xd0] sm:$0x3]
      %v5503 = vsel %vm1953, %v5442, 0
      %v5506 = vsel %vm1953, %v5448, 0
      %v5509 = vsel %vm1953, %v5454, 0
      %v5512 = vsel %vm1953, %v5460, 0
      %v5515 = vsel %vm1953, %v5466, 0
      %v5518 = vsel %vm1953, %v5472, 0
      %v5521 = vsel %vm830, %v5501, 0
      %5523 = vmatprep.subr.mxu0 0.0
      %5524 = vmatpush1.msra.mxu0 %v5475
      %5525 = vmatprep.subr.mxu0 0.0
      %5526 = vmatpush1.msra.mxu0 %v5476
      %5527 = vmatprep.subr.mxu0 0.0
      %5528 = vmatpush1.msra.mxu0 %v5477
      %5529 = vmatprep.subr.mxu0 0.0
      %5530 = vmatpush1.msra.mxu0 %v5478
      %5531 = vmatprep.subr.mxu0 0.0
      %5532 = vmatpush1.msra.mxu0 %v5479
      %5533 = vmatprep.subr.mxu0 0.0
      %5534 = vmatpush1.msra.mxu0 %v5480
      %5535 = vmatprep.subr.mxu0 0.0
      %5536 = vmatpush1.msra.mxu0 %v5481
      %5537 = vmatprep.subr.mxu0 0.0
      %5538 = vmatpush1.msra.mxu0 %v5482
      %5539 = vmatprep.subr.mxu0 0.0
      %5540 = vmatpush1.msra.mxu0 %v5483
      %5541 = vmatprep.subr.mxu0 0.0
      %5542 = vmatpush1.msra.mxu0 %v5484
      %5543 = vmatprep.subr.mxu0 0.0
      %5544 = vmatpush1.msra.mxu0 %v5485
      %5545 = vmatprep.subr.mxu0 0.0
      %5546 = vmatpush1.msra.mxu0 %v5486
      %5547 = vmatprep.subr.mxu0 0.0
      %5548 = vmatpush1.msra.mxu0 %v5487
      %5549 = vmatprep.subr.mxu0 0.0
      %5550 = vmatpush1.msra.mxu0 %v5488
      %5551 = vmatprep.subr.mxu0 0.0
      %5552 = vmatpush1.msra.mxu0 %v5489
      %5553 = vmatprep.subr.mxu0 0.0
      %5554 = vmatpush1.msra.mxu0 %v5490
      %5555 = vmatprep.subr.mxu0 0.0
      %5556 = vmatpush1.msra.mxu0 %v5491
      %5557 = vmatprep.subr.mxu0 0.0
      %5558 = vmatpush1.msra.mxu0 %v5492
      %5559 = vmatprep.subr.mxu0 0.0
      %5560 = vmatpush1.msra.mxu0 %v5493
      %5561 = vmatprep.subr.mxu0 0.0
      %5562 = vmatpush1.msra.mxu0 %v5494
      %5563 = vmatprep.subr.mxu0 0.0
      %5564 = vmatpush1.msra.mxu0 %v5495
      %5565 = vmatprep.subr.mxu0 0.0
      %5566 = vmatpush1.msra.mxu0 %v5496
      %5567 = vmatprep.subr.mxu0 0.0
      %5568 = vmatpush1.msra.mxu0 %v5497
      %5569 = vmatprep.subr.mxu0 0.0
      %5570 = vmatpush1.msra.mxu0 %v5498
      %5571 = vmatprep.subr.mxu0 0.0
      %5572 = vmatpush1.msra.mxu0 %v5499
      %5573 = vmatprep.subr.mxu0 0.0
      %5574 = vmatpush1.msra.mxu0 %v5500
      %5575 = vmatprep.subr.mxu0 0.0
      %5576 = vmatpush1.msra.mxu0 %v5521
      %5577 = vmatprep.subr.mxu0 0.0
      %5578 = vmatpush1.msra.mxu0 0.0
      %5579 = vmatprep.subr.mxu0 0.0
      %5580 = vmatpush1.msra.mxu0 0.0
      %5581 = vmatprep.subr.mxu0 0.0
      %5582 = vmatpush1.msra.mxu0 0.0
      %5583 = vmatprep.subr.mxu0 0.0
      %5584 = vmatpush1.msra.mxu0 0.0
      %5585 = vmatprep.subr.mxu0 0.0
      %5586 = vmatpush1.msra.mxu0 0.0
      %5587 = vmatprep.mubr.f32.mxu0 %v5503
      %5588 = vmatmul.mubr.f32.gmra.mrb[0].mxu0 %v5440
      %v5589 = vpop.f32.mrb[0].mxu0
      %v5590 = vadd.f32 0.0, %v5589
      %v5591 = vpop.f32.mrb[0].mxu0
      %5592 = vmatprep.mubr.f32.mxu0 %v5506
      %5593 = vmatmul.mubr.f32.gmra.mrb[0].mxu0 %v5446
      %v5594 = vpop.f32.mrb[0].mxu0
      %v5595 = vadd.f32 0.0, %v5594
      %v5596 = vpop.f32.mrb[0].mxu0
      %5597 = vmatprep.mubr.f32.mxu0 %v5509
      %5598 = vmatmul.mubr.f32.gmra.mrb[0].mxu0 %v5452
      %v5599 = vpop.f32.mrb[0].mxu0
      %v5600 = vadd.f32 0.0, %v5599
      %v5601 = vpop.f32.mrb[0].mxu0
      %5602 = vmatprep.mubr.f32.mxu0 %v5512
      %5603 = vmatmul.mubr.f32.gmra.mrb[0].mxu0 %v5458
      %v5604 = vpop.f32.mrb[0].mxu0
      %v5605 = vadd.f32 0.0, %v5604
      %v5606 = vpop.f32.mrb[0].mxu0
      %5607 = vmatprep.mubr.f32.mxu0 %v5515
      %5608 = vmatmul.mubr.f32.gmra.mrb[0].mxu0 %v5464
      %v5609 = vpop.f32.mrb[0].mxu0
      %v5610 = vadd.f32 0.0, %v5609
      %v5611 = vpop.f32.mrb[0].mxu0
      %5612 = vmatprep.mubr.f32.mxu0 %v5518
      %5613 = vmatmul.mubr.f32.gmra.mrb[0].mxu0 %v5470
      %v5614 = vpop.f32.mrb[0].mxu0
      %v5615 = vadd.f32 0.0, %v5614
      %v5616 = vpop.f32.mrb[0].mxu0
      %5617 = vdwg.mxu0
      %v5618 = vadd.f32 %v5342, %v5590
      %v5619 = vadd.f32 %v5343, %v5595
      %v5620 = vadd.f32 %v5344, %v5600
      %v5621 = vadd.f32 %v5345, %v5605
      %v5622 = vadd.f32 %v5346, %v5610
      %v5623 = vadd.f32 %v5347, %v5615
      %s5624 = scalar_lea.vmem %s16, 192
      %v5625 = vld [vmem:[%s5624] sm:$0xff]
      %v5626 = vld [vmem:[%s5624 + $0x8] sm:$0xff]
      %v5627 = vld [vmem:[%s5624 + $0x10] sm:$0xff]
      %v5628 = vld [vmem:[%s5624 + $0x18] sm:$0xff]
      %v5629 = vld [vmem:[%s5624 + $0x20] sm:$0xff]
      %v5630 = vld [vmem:[%s5624 + $0x28] sm:$0xff]
      %v5632 = vsel %vm1674, %v5625, 0
      %v5635 = vsel %vm1674, %v5626, 0
      %v5638 = vsel %vm1674, %v5627, 0
      %v5641 = vsel %vm1674, %v5628, 0
      %v5644 = vsel %vm1674, %v5629, 0
      %v5647 = vsel %vm1674, %v5630, 0
      %5649 = vmatprep.subr.mxu0 %v4529
      %5650 = vmatpush1.msra.mxu0 %v4528
      %5651 = vmatprep.subr.mxu0 %v4531
      %5652 = vmatpush1.msra.mxu0 %v4530
      %5653 = vmatprep.subr.mxu0 %v4533
      %5654 = vmatpush1.msra.mxu0 %v4532
      %5655 = vmatprep.subr.mxu0 0.0
      %5656 = vmatpush1.msra.mxu0 0.0
      %5657 = vmatprep.subr.mxu0 0.0
      %5658 = vmatpush1.msra.mxu0 0.0
      %5659 = vmatprep.subr.mxu0 0.0
      %5660 = vmatpush1.msra.mxu0 0.0
      %5661 = vmatprep.subr.mxu0 0.0
      %5662 = vmatpush1.msra.mxu0 0.0
      %5663 = vmatprep.subr.mxu0 0.0
      %5664 = vmatpush1.msra.mxu0 0.0
      %5665 = vmatprep.subr.mxu0 0.0
      %5666 = vmatpush1.msra.mxu0 0.0
      %5667 = vmatprep.subr.mxu0 0.0
      %5668 = vmatpush1.msra.mxu0 0.0
      %5669 = vmatprep.subr.mxu0 0.0
      %5670 = vmatpush1.msra.mxu0 0.0
      %5671 = vmatprep.subr.mxu0 0.0
      %5672 = vmatpush1.msra.mxu0 0.0
      %5673 = vmatprep.subr.mxu0 0.0
      %5674 = vmatpush1.msra.mxu0 0.0
      %5675 = vmatprep.subr.mxu0 0.0
      %5676 = vmatpush1.msra.mxu0 0.0
      %5677 = vmatprep.subr.mxu0 0.0
      %5678 = vmatpush1.msra.mxu0 0.0
      %5679 = vmatprep.subr.mxu0 0.0
      %5680 = vmatpush1.msra.mxu0 0.0
      %5681 = vmatprep.subr.mxu0 0.0
      %5682 = vmatpush1.msra.mxu0 0.0
      %5683 = vmatprep.subr.mxu0 0.0
      %5684 = vmatpush1.msra.mxu0 0.0
      %5685 = vmatprep.subr.mxu0 0.0
      %5686 = vmatpush1.msra.mxu0 0.0
      %5687 = vmatprep.subr.mxu0 0.0
      %5688 = vmatpush1.msra.mxu0 0.0
      %5689 = vmatprep.subr.mxu0 0.0
      %5690 = vmatpush1.msra.mxu0 0.0
      %5691 = vmatprep.subr.mxu0 0.0
      %5692 = vmatpush1.msra.mxu0 0.0
      %5693 = vmatprep.subr.mxu0 0.0
      %5694 = vmatpush1.msra.mxu0 0.0
      %5695 = vmatprep.subr.mxu0 0.0
      %5696 = vmatpush1.msra.mxu0 0.0
      %5697 = vmatprep.subr.mxu0 0.0
      %5698 = vmatpush1.msra.mxu0 0.0
      %5699 = vmatprep.subr.mxu0 0.0
      %5700 = vmatpush1.msra.mxu0 0.0
      %5701 = vmatprep.subr.mxu0 0.0
      %5702 = vmatpush1.msra.mxu0 0.0
      %5703 = vmatprep.subr.mxu0 0.0
      %5704 = vmatpush1.msra.mxu0 0.0
      %5705 = vmatprep.subr.mxu0 0.0
      %5706 = vmatpush1.msra.mxu0 0.0
      %5707 = vmatprep.subr.mxu0 0.0
      %5708 = vmatpush1.msra.mxu0 0.0
      %5709 = vmatprep.subr.mxu0 0.0
      %5710 = vmatpush1.msra.mxu0 0.0
      %5711 = vmatprep.subr.mxu0 0.0
      %5712 = vmatpush1.msra.mxu0 0.0
      %5713 = vmatprep.mubr.f32.mxu0 0.0
      %5714 = vmatmul.mubr.f32.gmra.mrb[0].mxu0 %v5632
      %v5715 = vpop.f32.mrb[0].mxu0
      %v5716 = vadd.f32 0.0, %v5715
      %v5717 = vpop.f32.mrb[0].mxu0
      %v5718 = vadd.f32 0.0, %v5717
      %5719 = vmatprep.mubr.f32.mxu0 0.0
      %5720 = vmatmul.mubr.f32.gmra.mrb[0].mxu0 %v5635
      %v5721 = vpop.f32.mrb[0].mxu0
      %v5722 = vadd.f32 0.0, %v5721
      %v5723 = vpop.f32.mrb[0].mxu0
      %v5724 = vadd.f32 0.0, %v5723
      %5725 = vmatprep.mubr.f32.mxu0 0.0
      %5726 = vmatmul.mubr.f32.gmra.mrb[0].mxu0 %v5638
      %v5727 = vpop.f32.mrb[0].mxu0
      %v5728 = vadd.f32 0.0, %v5727
      %v5729 = vpop.f32.mrb[0].mxu0
      %v5730 = vadd.f32 0.0, %v5729
      %5731 = vmatprep.mubr.f32.mxu0 0.0
      %5732 = vmatmul.mubr.f32.gmra.mrb[0].mxu0 %v5641
      %v5733 = vpop.f32.mrb[0].mxu0
      %v5734 = vadd.f32 0.0, %v5733
      %v5735 = vpop.f32.mrb[0].mxu0
      %v5736 = vadd.f32 0.0, %v5735
      %5737 = vmatprep.mubr.f32.mxu0 0.0
      %5738 = vmatmul.mubr.f32.gmra.mrb[0].mxu0 %v5644
      %v5739 = vpop.f32.mrb[0].mxu0
      %v5740 = vadd.f32 0.0, %v5739
      %v5741 = vpop.f32.mrb[0].mxu0
      %v5742 = vadd.f32 0.0, %v5741
      %5743 = vmatprep.mubr.f32.mxu0 0.0
      %5744 = vmatmul.mubr.f32.gmra.mrb[0].mxu0 %v5647
      %v5745 = vpop.f32.mrb[0].mxu0
      %v5746 = vadd.f32 0.0, %v5745
      %v5747 = vpop.f32.mrb[0].mxu0
      %v5748 = vadd.f32 0.0, %v5747
      %5749 = vdwg.mxu0
      %s5750 = scalar_lea.vmem %s17, 864
      %v5751 = vld [vmem:[%s5750] sm:$0xff]
      %v5752 = vld [vmem:[%s5750 + $0x8] sm:$0xff]
      %v5753 = vld [vmem:[%s5750 + $0x10] sm:$0xff]
      %v5754 = vld [vmem:[%s5750 + $0x18] sm:$0xff]
      %v5755 = vld [vmem:[%s5750 + $0x20] sm:$0xff]
      %v5756 = vld [vmem:[%s5750 + $0x28] sm:$0xff]
      %v5757 = vld [vmem:[%s5750 + $0x30] sm:$0xff]
      %v5758 = vld [vmem:[%s5750 + $0x38] sm:$0xff]
      %v5759 = vld [vmem:[%s5750 + $0x40] sm:$0xff]
      %v5760 = vld [vmem:[%s5750 + $0x48] sm:$0xff]
      %v5761 = vld [vmem:[%s5750 + $0x50] sm:$0xff]
      %v5762 = vld [vmem:[%s5750 + $0x58] sm:$0xff]
      %v5763 = vld [vmem:[%s5750 + $0x60] sm:$0xff]
      %v5764 = vld [vmem:[%s5750 + $0x68] sm:$0xff]
      %v5765 = vld [vmem:[%s5750 + $0x70] sm:$0xff]
      %v5766 = vld [vmem:[%s5750 + $0x78] sm:$0xff]
      %v5767 = vld [vmem:[%s5750 + $0x80] sm:$0xff]
      %v5768 = vld [vmem:[%s5750 + $0x88] sm:$0xff]
      %v5769 = vld [vmem:[%s5750 + $0x90] sm:$0xff]
      %v5770 = vld [vmem:[%s5750 + $0x98] sm:$0xff]
      %v5771 = vld [vmem:[%s5750 + $0xa0] sm:$0xff]
      %v5772 = vld [vmem:[%s5750 + $0xa8] sm:$0xff]
      %v5773 = vld [vmem:[%s5750 + $0xb0] sm:$0xff]
      %v5774 = vld [vmem:[%s5750 + $0xb8] sm:$0xff]
      %v5775 = vld [vmem:[%s5750 + $0xc0] sm:$0xff]
      %v5776 = vld [vmem:[%s5750 + $0xc8] sm:$0xff]
      %v5777 = vld [vmem:[%s5750 + $0xd0] sm:$0x3]
      %v5779 = vsel %vm1953, %v5718, 0
      %v5782 = vsel %vm1953, %v5724, 0
      %v5785 = vsel %vm1953, %v5730, 0
      %v5788 = vsel %vm1953, %v5736, 0
      %v5791 = vsel %vm1953, %v5742, 0
      %v5794 = vsel %vm1953, %v5748, 0
      %v5797 = vsel %vm830, %v5777, 0
      %5799 = vmatprep.subr.mxu0 0.0
      %5800 = vmatpush1.msra.mxu0 %v5751
      %5801 = vmatprep.subr.mxu0 0.0
      %5802 = vmatpush1.msra.mxu0 %v5752
      %5803 = vmatprep.subr.mxu0 0.0
      %5804 = vmatpush1.msra.mxu0 %v5753
      %5805 = vmatprep.subr.mxu0 0.0
      %5806 = vmatpush1.msra.mxu0 %v5754
      %5807 = vmatprep.subr.mxu0 0.0
      %5808 = vmatpush1.msra.mxu0 %v5755
      %5809 = vmatprep.subr.mxu0 0.0
      %5810 = vmatpush1.msra.mxu0 %v5756
      %5811 = vmatprep.subr.mxu0 0.0
      %5812 = vmatpush1.msra.mxu0 %v5757
      %5813 = vmatprep.subr.mxu0 0.0
      %5814 = vmatpush1.msra.mxu0 %v5758
      %5815 = vmatprep.subr.mxu0 0.0
      %5816 = vmatpush1.msra.mxu0 %v5759
      %5817 = vmatprep.subr.mxu0 0.0
      %5818 = vmatpush1.msra.mxu0 %v5760
      %5819 = vmatprep.subr.mxu0 0.0
      %5820 = vmatpush1.msra.mxu0 %v5761
      %5821 = vmatprep.subr.mxu0 0.0
      %5822 = vmatpush1.msra.mxu0 %v5762
      %5823 = vmatprep.subr.mxu0 0.0
      %5824 = vmatpush1.msra.mxu0 %v5763
      %5825 = vmatprep.subr.mxu0 0.0
      %5826 = vmatpush1.msra.mxu0 %v5764
      %5827 = vmatprep.subr.mxu0 0.0
      %5828 = vmatpush1.msra.mxu0 %v5765
      %5829 = vmatprep.subr.mxu0 0.0
      %5830 = vmatpush1.msra.mxu0 %v5766
      %5831 = vmatprep.subr.mxu0 0.0
      %5832 = vmatpush1.msra.mxu0 %v5767
      %5833 = vmatprep.subr.mxu0 0.0
      %5834 = vmatpush1.msra.mxu0 %v5768
      %5835 = vmatprep.subr.mxu0 0.0
      %5836 = vmatpush1.msra.mxu0 %v5769
      %5837 = vmatprep.subr.mxu0 0.0
      %5838 = vmatpush1.msra.mxu0 %v5770
      %5839 = vmatprep.subr.mxu0 0.0
      %5840 = vmatpush1.msra.mxu0 %v5771
      %5841 = vmatprep.subr.mxu0 0.0
      %5842 = vmatpush1.msra.mxu0 %v5772
      %5843 = vmatprep.subr.mxu0 0.0
      %5844 = vmatpush1.msra.mxu0 %v5773
      %5845 = vmatprep.subr.mxu0 0.0
      %5846 = vmatpush1.msra.mxu0 %v5774
      %5847 = vmatprep.subr.mxu0 0.0
      %5848 = vmatpush1.msra.mxu0 %v5775
      %5849 = vmatprep.subr.mxu0 0.0
      %5850 = vmatpush1.msra.mxu0 %v5776
      %5851 = vmatprep.subr.mxu0 0.0
      %5852 = vmatpush1.msra.mxu0 %v5797
      %5853 = vmatprep.subr.mxu0 0.0
      %5854 = vmatpush1.msra.mxu0 0.0
      %5855 = vmatprep.subr.mxu0 0.0
      %5856 = vmatpush1.msra.mxu0 0.0
      %5857 = vmatprep.subr.mxu0 0.0
      %5858 = vmatpush1.msra.mxu0 0.0
      %5859 = vmatprep.subr.mxu0 0.0
      %5860 = vmatpush1.msra.mxu0 0.0
      %5861 = vmatprep.subr.mxu0 0.0
      %5862 = vmatpush1.msra.mxu0 0.0
      %5863 = vmatprep.mubr.f32.mxu0 %v5779
      %5864 = vmatmul.mubr.f32.gmra.mrb[0].mxu0 %v5716
      %v5865 = vpop.f32.mrb[0].mxu0
      %v5866 = vadd.f32 0.0, %v5865
      %v5867 = vpop.f32.mrb[0].mxu0
      %5868 = vmatprep.mubr.f32.mxu0 %v5782
      %5869 = vmatmul.mubr.f32.gmra.mrb[0].mxu0 %v5722
      %v5870 = vpop.f32.mrb[0].mxu0
      %v5871 = vadd.f32 0.0, %v5870
      %v5872 = vpop.f32.mrb[0].mxu0
      %5873 = vmatprep.mubr.f32.mxu0 %v5785
      %5874 = vmatmul.mubr.f32.gmra.mrb[0].mxu0 %v5728
      %v5875 = vpop.f32.mrb[0].mxu0
      %v5876 = vadd.f32 0.0, %v5875
      %v5877 = vpop.f32.mrb[0].mxu0
      %5878 = vmatprep.mubr.f32.mxu0 %v5788
      %5879 = vmatmul.mubr.f32.gmra.mrb[0].mxu0 %v5734
      %v5880 = vpop.f32.mrb[0].mxu0
      %v5881 = vadd.f32 0.0, %v5880
      %v5882 = vpop.f32.mrb[0].mxu0
      %5883 = vmatprep.mubr.f32.mxu0 %v5791
      %5884 = vmatmul.mubr.f32.gmra.mrb[0].mxu0 %v5740
      %v5885 = vpop.f32.mrb[0].mxu0
      %v5886 = vadd.f32 0.0, %v5885
      %v5887 = vpop.f32.mrb[0].mxu0
      %5888 = vmatprep.mubr.f32.mxu0 %v5794
      %5889 = vmatmul.mubr.f32.gmra.mrb[0].mxu0 %v5746
      %v5890 = vpop.f32.mrb[0].mxu0
      %v5891 = vadd.f32 0.0, %v5890
      %v5892 = vpop.f32.mrb[0].mxu0
      %5893 = vdwg.mxu0
      %v5894 = vadd.f32 %v5618, %v5866
      %v5895 = vadd.f32 %v5619, %v5871
      %v5896 = vadd.f32 %v5620, %v5876
      %v5897 = vadd.f32 %v5621, %v5881
      %v5898 = vadd.f32 %v5622, %v5886
      %v5899 = vadd.f32 %v5623, %v5891
      %v5900 = vld [vmem:[%s18] sm:$0x1]
      %v5902 = vlaneseq
      %v5903 = vshrl.u32 %v5902, 7
      %v5904 = vsub.s32 0, %v5903
      %v5905 = vrot.slane %v5900, %v5904
      %v5907 = vadd.f32 %v5894, %v5905
      %v5908 = vadd.f32 %v5895, %v5905
      %v5909 = vadd.f32 %v5896, %v5905
      %v5910 = vadd.f32 %v5897, %v5905
      %v5911 = vadd.f32 %v5898, %v5905
      %v5912 = vadd.f32 %v5899, %v5905
      %v5913 = vmax.f32 %v5907, 0.0
      %v5914 = vmax.f32 %v5908, 0.0
      %v5915 = vmax.f32 %v5909, 0.0
      %v5916 = vmax.f32 %v5910, 0.0
      %v5917 = vmax.f32 %v5911, 0.0
      %v5918 = vmax.f32 %v5912, 0.0
      %5919 = vst.msk [vmem:[%s602] sm:$0xff] %vm820, %v5913
      %5920 = vst.msk [vmem:[%s602 + $0x8] sm:$0xff] %vm820, %v5914
      %5921 = vst.msk [vmem:[%s602 + $0x10] sm:$0xff] %vm820, %v5915
      %5922 = vst.msk [vmem:[%s602 + $0x18] sm:$0xff] %vm820, %v5916
      %5923 = vst.msk [vmem:[%s602 + $0x20] sm:$0xff] %vm820, %v5917
      %5924 = vst.msk [vmem:[%s602 + $0x28] sm:$0xff] %vm820, %v5918
      %p5925 = scmp.lt.s32.totalorder %s30, 1
      %s5926 = scalar_select %p5925, %s30, 1
      %s5927 = smul.addr %s5926, 6
      %s5928 = smul.addr %s5927, 8
      %s5929 = scalar_lea.vmem %s19, %s5928
      // Predicated region
      $region97: #{convae_forward.1} parent=95 // pred_check
        %p5930 = pneg %p452
      $region98: #{convae_forward.1} parent=95 // pred_check_branch
        %5932 = sbr.rel (%p5930) target = $region100
      $region99: #{convae_forward.1} parent=95 // pred_region
        _
      $region100: #{convae_forward.1} parent=95 // pred_fallthru
        _
    $region96: #{convae_forward.1} parent=5 // pred_fallthru
      _
    %p5933 = scmp.le.s32.totalorder 2, %s25
    // Predicated region
    $region101: #{convae_forward.1} parent=5 // pred_check
      %p5934 = pneg %p5933
    $region102: #{convae_forward.1} parent=5 // pred_check_branch
      %5936 = sbr.rel (%p5934) target = $region104
    $region103: #{convae_forward.1} parent=5 // pred_region
      %s5937 = ssub.s32 %s25, 2
      // Predicated region
      $region105: #{convae_forward.1} parent=103 // pred_check
        %p5938 = pneg %p458
      $region106: #{convae_forward.1} parent=103 // pred_check_branch
        %5940 = sbr.rel (%p5938) target = $region108
      $region107: #{convae_forward.1} parent=103 // pred_region
        %p5941 = scmp.lt.s32.totalorder %s31, 1
        %s5942 = scalar_select %p5941, %s31, 1
        %s5943 = smul.addr %s5942, 6
        %s5944 = smul.addr %s5943, 8
        %s5945 = scalar_lea.vmem %s19, %s5944
      $region108: #{convae_forward.1} parent=103 // pred_fallthru
        _
    $region104: #{convae_forward.1} parent=5 // pred_fallthru
      _
  $region6: #{convae_forward.1} parent=0 // loop_footer
    %s29 = sadd.s32 1, %s25
  $region7: #{convae_forward.1} parent=0 // loop_footer_branch
    %24 = sbr.rel target = $region3
  $region8: #{convae_forward.1} parent=0 // loop_exit
    _

</llo_original>
